<compile_context>
chip_gen: v7x
topology: tpu7x:2x2x1
jax: 0.10.0
libtpu: 0.0.40
codegen_flags: <defaults>
</compile_context>

<pallas_src>
import functools

import jax
import jax.numpy as jnp
from jax.experimental import pallas as pl
from jax.experimental.pallas import tpu as pltpu

PG = 32    # rows reserved per image per parity group (>= (H2+1)*(W2+1))
K1P = 32   # conv1 im2col feature dim (3*3*3 = 27) zero-padded to 32


# ----------------------------------------------------------------------------
# Fused forward kernel.
# ----------------------------------------------------------------------------
def _critic_kernel(p1_ref, m1_ref, w1_ref, b1_ref, w2_ref, b2_ref,
                   wf1_ref, bf1_ref, wf2_ref, bf2_ref, wout_ref, bout_ref,
                   o_ref, ag_ref, *, tb, h_out, w_out):
    gw = w_out + 1                   # padded parity-group grid width (H2+1 x W2+1 grid)
    rows = tb * PG                   # activation rows handled this grid step
    stride = rows + 8                # per-group row stride inside ag_ref (slack for shifts)
    c2 = w2_ref.shape[2]             # 32 conv2 output channels

    # ---- conv1: four parity-group GEMMs, bias + tanh, zero the padding rows ----
    ag_ref[...] = jnp.zeros(ag_ref.shape, ag_ref.dtype)
    w1 = w1_ref[...]
    b1 = b1_ref[...]
    for g in range(4):
        a = jnp.dot(p1_ref[g], w1, preferred_element_type=jnp.float32) + b1
        a = jnp.tanh(a) * m1_ref[g]                       # (rows, 64); mask=0 on pad rows
        ag_ref[g * stride:g * stride + rows, :] = a

    # ---- conv2: 9 taps == 9 constant-row-shifted GEMMs over the parity groups ----
    acc = jnp.zeros((rows, c2), jnp.float32)
    for kh in range(3):
        for kw in range(3):
            g = (kh % 2) * 2 + (kw % 2)
            off = (kh // 2) * gw + (kw // 2)
            base = g * stride + off
            blk = ag_ref[base:base + rows, :]             # (rows, 64)
            acc = acc + jnp.dot(blk, w2_ref[kh * 3 + kw],
                                preferred_element_type=jnp.float32)
    a2 = jnp.tanh(acc + b2_ref[...])                      # (rows, 32); valid row b*PG+ho*gw+wo

    # ---- flatten + fc1: one-hot row gather on the MXU, accumulate per pixel ----
    row_id = jax.lax.broadcasted_iota(jnp.int32, (tb, rows), 0)
    col_id = jax.lax.broadcasted_iota(jnp.int32, (tb, rows), 1)
    base_id = row_id * PG
    h = jnp.zeros((tb, wf1_ref.shape[1]), jnp.float32)
    for ho in range(h_out):
        for wo in range(w_out):
            sel = (col_id == base_id + (ho * gw + wo)).astype(jnp.float32)
            pix = jnp.dot(sel, a2, preferred_element_type=jnp.float32)     # (tb, 32)
            p = ho * w_out + wo                            # flat layout (ho, wo, c)
            h = h + jnp.dot(pix, wf1_ref[p * c2:(p + 1) * c2, :],
                            preferred_element_type=jnp.float32)
    h = jnp.tanh(h + bf1_ref[...])                        # (tb, 642)

    # ---- fc2 + value head ----
    h = jnp.tanh(jnp.dot(h, wf2_ref[...], preferred_element_type=jnp.float32)
                 + bf2_ref[...])                          # (tb, 128)
    v = jnp.dot(h, wout_ref[...], preferred_element_type=jnp.float32) + bout_ref[...]
    o_ref[...] = v.astype(o_ref.dtype)


# ----------------------------------------------------------------------------
# Host-side glue (XLA): conv1 im2col into parity groups + validity mask.
# ----------------------------------------------------------------------------
def _conv_geometry(h, w, k=3, stride=2, pad=1):
    h1 = (h + 2 * pad - k) // stride + 1
    w1 = (w + 2 * pad - k) // stride + 1
    h2 = (h1 + 2 * pad - k) // stride + 1
    w2 = (w1 + 2 * pad - k) // stride + 1
    return h1, w1, h2, w2


def _build_conv1_patch_groups(x, h1, w1, h2, w2, k=3, stride=2, pad=1):
    """im2col for conv1, rows laid out on the padded (H2+1)x(W2+1) parity grids."""
    B, C, H, W = x.shape
    gh, gw = h2 + 1, w2 + 1
    xp = jnp.pad(x, ((0, 0), (0, 0), (pad, pad), (pad, pad)))
    taps = []
    for kh in range(k):
        for kw in range(k):
            taps.append(xp[:, :, kh:kh + stride * (h1 - 1) + 1:stride,
                               kw:kw + stride * (w1 - 1) + 1:stride])       # (B, C, h1, w1)
    patches = jnp.stack(taps, axis=-1)                                      # (B, C, h1, w1, 9)
    patches = patches.transpose(0, 2, 3, 1, 4).reshape(B, h1, w1, C * k * k)  # feat (c, kh, kw)
    patches = jnp.pad(patches, ((0, 0), (1, 1), (1, 1), (0, 0)))            # padded conv1 grid
    groups = []
    for r in range(2):
        for s in range(2):
            g = patches[:, r:r + 2 * gh:2, s:s + 2 * gw:2, :]               # (B, gh, gw, 27)
            groups.append(g.reshape(B, gh * gw, C * k * k))
    p1 = jnp.stack(groups, axis=0)                                          # (4, B, gh*gw, 27)
    p1 = jnp.pad(p1, ((0, 0), (0, 0), (0, PG - gh * gw), (0, K1P - C * k * k)))
    return p1.reshape(4, B * PG, K1P)


def _build_group_mask(B, h1, w1, h2, w2):
    """1.0 where a parity-grid row is a real conv1 output, 0.0 on padding/filler rows."""
    gh, gw = h2 + 1, w2 + 1
    masks = []
    for r in range(2):
        for s in range(2):
            ph = 2 * jnp.arange(gh) + r
            pw = 2 * jnp.arange(gw) + s
            mi = ((ph >= 1) & (ph <= h1)).astype(jnp.float32)
            mj = ((pw >= 1) & (pw <= w1)).astype(jnp.float32)
            m = (mi[:, None] * mj[None, :]).reshape(gh * gw)
            masks.append(jnp.pad(m, (0, PG - gh * gw)))
    mask = jnp.stack(masks, axis=0)                        # (4, PG)
    mask = jnp.broadcast_to(mask[:, None, :], (4, B, PG))
    return mask.reshape(4, B * PG, 1)


# ----------------------------------------------------------------------------
# Parameters: PyTorch-style init + one-time GEMM-ready repacking (hoisted).
# ----------------------------------------------------------------------------
def _uniform(key, shape, fan_in):
    bound = 1.0 / jnp.sqrt(jnp.float32(fan_in))
    return jax.random.uniform(key, shape, jnp.float32, -bound, bound)


def init_params(key, flat_dim):
    ks = jax.random.split(key, 10)
    p = {}
    p["conv1_w"] = _uniform(ks[0], (64, 3, 3, 3), 3 * 9)
    p["conv1_b"] = _uniform(ks[1], (64,), 3 * 9)
    p["conv2_w"] = _uniform(ks[2], (32, 64, 3, 3), 64 * 9)
    p["conv2_b"] = _uniform(ks[3], (32,), 64 * 9)
    p["fc1_w"] = _uniform(ks[4], (642, flat_dim), flat_dim)   # PyTorch (out, in)
    p["fc1_b"] = _uniform(ks[5], (642,), flat_dim)
    p["fc2_w"] = _uniform(ks[6], (128, 642), 642)
    p["fc2_b"] = _uniform(ks[7], (128,), 642)
    p["out_w"] = _uniform(ks[8], (1, 128), 128)
    p["out_b"] = _uniform(ks[9], (1,), 128)
    return p


def prepare_params(params, h_out, w_out):
    """One-time repack of PyTorch-layout weights into GEMM-ready layouts."""
    c1_w = params["conv1_w"]                                   # (64, 3, 3, 3)
    oc1, ic1, kh, kw = c1_w.shape
    w1 = c1_w.reshape(oc1, ic1 * kh * kw).T                    # (27, 64), rows (c, kh, kw)
    w1 = jnp.pad(w1, ((0, K1P - ic1 * kh * kw), (0, 0)))       # (32, 64)
    b1 = params["conv1_b"].reshape(1, oc1)

    c2_w = params["conv2_w"]                                   # (32, 64, 3, 3)
    oc2 = c2_w.shape[0]
    w2 = jnp.transpose(c2_w, (2, 3, 1, 0)).reshape(kh * kw, oc1, oc2)   # (9, 64, 32)
    b2 = params["conv2_b"].reshape(1, oc2)

    flat = oc2 * h_out * w_out
    nf1 = params["fc1_w"].shape[0]
    # torch flatten order is (c, ho, wo); the kernel feeds (ho, wo, c) -> permute once here.
    wf1 = params["fc1_w"].reshape(nf1, oc2, h_out, w_out)
    wf1 = wf1.transpose(0, 2, 3, 1).reshape(nf1, flat).T       # (flat, 642)
    bf1 = params["fc1_b"].reshape(1, nf1)

    wf2 = params["fc2_w"].T                                    # (642, 128)
    bf2 = params["fc2_b"].reshape(1, params["fc2_w"].shape[0])
    wout = params["out_w"].T                                   # (128, 1)
    bout = params["out_b"].reshape(1, 1)
    return dict(w1=w1, b1=b1, w2=w2, b2=b2, wf1=wf1, bf1=bf1,
                wf2=wf2, bf2=bf2, wout=wout, bout=bout)


# ----------------------------------------------------------------------------
# Full forward pass: one fused pallas_call.
# ----------------------------------------------------------------------------
def critic_forward(prep, x):
    """x: (B, 3, H, W) float32 NCHW -> torch.squeeze(V(x))."""
    B, _, H, W = x.shape
    h1, w1, h2, w2 = _conv_geometry(H, W)
    assert h1 % 2 == 0 and w1 % 2 == 0, "conv1 output must be even for the parity layout"
    assert (h2 + 1) * (w2 + 1) <= PG and w2 + 2 <= 8, "PG too small for this image size"

    p1 = _build_conv1_patch_groups(x.astype(jnp.float32), h1, w1, h2, w2)   # (4, B*PG, K1P)
    m1 = _build_group_mask(B, h1, w1, h2, w2)                               # (4, B*PG, 1)

    # Batch tile: whole batch if small, else chunks of 8 images per grid step.
    tb = B if B <= 8 else (8 if B % 8 == 0 else B)
    nsteps = B // tb
    rows = tb * PG
    nf1 = prep["wf1"].shape[1]
    c2 = prep["w2"].shape[2]
    npix = h2 * w2

    kernel = functools.partial(_critic_kernel, tb=tb, h_out=h2, w_out=w2)

    flops = 2 * nsteps * (4 * rows * K1P * 64 + 9 * rows * 64 * c2
                          + npix * (tb * rows * c2 + tb * c2 * nf1)
                          + tb * nf1 * 128 + tb * 128)
    transcendentals = nsteps * (4 * rows * 64 + rows * c2 + tb * nf1 + tb * 128)
    bytes_accessed = 4 * (int(p1.size) + int(m1.size)
                          + sum(int(v.size) for v in prep.values()) + B)

    out = pl.pallas_call(
        kernel,
        out_shape=jax.ShapeDtypeStruct((B, 1), jnp.float32),
        grid_spec=pltpu.PrefetchScalarGridSpec(
            num_scalar_prefetch=0,
            grid=(nsteps,),
            in_specs=[
                pl.BlockSpec((4, rows, K1P), lambda i: (0, i, 0)),   # conv1 patches
                pl.BlockSpec((4, rows, 1), lambda i: (0, i, 0)),     # validity mask
                pl.BlockSpec(prep["w1"].shape, lambda i: (0, 0)),
                pl.BlockSpec(prep["b1"].shape, lambda i: (0, 0)),
                pl.BlockSpec(prep["w2"].shape, lambda i: (0, 0, 0)),
                pl.BlockSpec(prep["b2"].shape, lambda i: (0, 0)),
                pl.BlockSpec(prep["wf1"].shape, lambda i: (0, 0)),
                pl.BlockSpec(prep["bf1"].shape, lambda i: (0, 0)),
                pl.BlockSpec(prep["wf2"].shape, lambda i: (0, 0)),
                pl.BlockSpec(prep["bf2"].shape, lambda i: (0, 0)),
                pl.BlockSpec(prep["wout"].shape, lambda i: (0, 0)),
                pl.BlockSpec(prep["bout"].shape, lambda i: (0, 0)),
            ],
            out_specs=pl.BlockSpec((tb, 1), lambda i: (i, 0)),
            scratch_shapes=[
                pltpu.VMEM((4 * (rows + 8), prep["w1"].shape[1]), jnp.float32),
            ],
        ),
        compiler_params=pltpu.CompilerParams(
            dimension_semantics=("parallel",)),
        cost_estimate=pl.CostEstimate(flops=flops,
                                      transcendentals=transcendentals,
                                      bytes_accessed=bytes_accessed),
    )(p1, m1, prep["w1"], prep["b1"], prep["w2"], prep["b2"],
      prep["wf1"], prep["bf1"], prep["wf2"], prep["bf2"],
      prep["wout"], prep["bout"])

    return jnp.squeeze(out)   # torch.squeeze semantics (drops batch dim too if B == 1)


if __name__ == "__main__":
    B, C, H, W = 2, 3, 16, 16
    flat_dim = 32 * (H // 4) * (W // 4)   # 512 -> Linear(input_shape, 642)

    key = jax.random.PRNGKey(0)
    k_in, k_par = jax.random.split(key)
    x = jax.random.normal(k_in, (B, C, H, W), dtype=jnp.float32)
    params = init_params(k_par, flat_dim)

    _, _, H2, W2 = _conv_geometry(H, W)
    prep = prepare_params(params, H2, W2)

    fwd = jax.jit(critic_forward)
    out = fwd(prep, x)
    jax.block_until_ready(out)
    assert out.shape == (B,), out.shape
    print("KERNEL_OK")
</pallas_src>

<mosaic_0001>
module attributes {stable_mosaic.version = 11 : i64} {
  func.func @_critic_kernel(%arg0: i32, %arg1: memref<4x64x32xf32, #tpu.memory_space<vmem>>, %arg2: memref<4x64x1xf32, #tpu.memory_space<vmem>>, %arg3: memref<32x64xf32, #tpu.memory_space<vmem>>, %arg4: memref<1x64xf32, #tpu.memory_space<vmem>>, %arg5: memref<9x64x32xf32, #tpu.memory_space<vmem>>, %arg6: memref<1x32xf32, #tpu.memory_space<vmem>>, %arg7: memref<512x642xf32, #tpu.memory_space<vmem>>, %arg8: memref<1x642xf32, #tpu.memory_space<vmem>>, %arg9: memref<642x128xf32, #tpu.memory_space<vmem>>, %arg10: memref<1x128xf32, #tpu.memory_space<vmem>>, %arg11: memref<128x1xf32, #tpu.memory_space<vmem>>, %arg12: memref<1x1xf32, #tpu.memory_space<vmem>>, %arg13: memref<2x1xf32, #tpu.memory_space<vmem>>, %arg14: memref<288x64xf32, #tpu.memory_space<vmem>>) attributes {dimension_semantics = [#tpu.dimension_semantics<parallel>], iteration_bounds = array<i64: 1>, scalar_prefetch = 0 : i64, scratch_operands = 1 : i64, tpu.core_type = #tpu.core_type<tc>, window_params = [{transform_indices = @transform_0, window_bounds = array<i64: 4, 64, 32>}, {transform_indices = @transform_1, window_bounds = array<i64: 4, 64, 1>}, {pipeline_mode = #tpu.pipeline_mode<synchronous>, transform_indices = @transform_2, window_bounds = array<i64: 32, 64>}, {pipeline_mode = #tpu.pipeline_mode<synchronous>, transform_indices = @transform_3, window_bounds = array<i64: 1, 64>}, {pipeline_mode = #tpu.pipeline_mode<synchronous>, transform_indices = @transform_4, window_bounds = array<i64: 9, 64, 32>}, {pipeline_mode = #tpu.pipeline_mode<synchronous>, transform_indices = @transform_5, window_bounds = array<i64: 1, 32>}, {pipeline_mode = #tpu.pipeline_mode<synchronous>, transform_indices = @transform_6, window_bounds = array<i64: 512, 642>}, {pipeline_mode = #tpu.pipeline_mode<synchronous>, transform_indices = @transform_7, window_bounds = array<i64: 1, 642>}, {pipeline_mode = #tpu.pipeline_mode<synchronous>, transform_indices = @transform_8, window_bounds = array<i64: 642, 128>}, {pipeline_mode = #tpu.pipeline_mode<synchronous>, transform_indices = @transform_9, window_bounds = array<i64: 1, 128>}, {pipeline_mode = #tpu.pipeline_mode<synchronous>, transform_indices = @transform_10, window_bounds = array<i64: 128, 1>}, {pipeline_mode = #tpu.pipeline_mode<synchronous>, transform_indices = @transform_11, window_bounds = array<i64: 1, 1>}, {transform_indices = @transform_12, window_bounds = array<i64: 2, 1>}]} {
    %cst = arith.constant 0.000000e+00 : f32
    %0 = vector.broadcast %cst : f32 to vector<288x64xf32>
    %c0 = arith.constant 0 : index
    %c0_0 = arith.constant 0 : index
    %1 = vector.load %arg14[%c0, %c0_0] : memref<288x64xf32, #tpu.memory_space<vmem>>, vector<288x64xf32>
    tpu.vector_store %arg14[%c0, %c0_0], %0 {strides = array<i32>} : memref<288x64xf32, #tpu.memory_space<vmem>>, vector<288x64xf32>,
    %c0_1 = arith.constant 0 : index
    %c0_2 = arith.constant 0 : index
    %2 = vector.load %arg3[%c0_1, %c0_2] : memref<32x64xf32, #tpu.memory_space<vmem>>, vector<32x64xf32>
    %c0_3 = arith.constant 0 : index
    %c0_4 = arith.constant 0 : index
    %3 = vector.load %arg4[%c0_3, %c0_4] : memref<1x64xf32, #tpu.memory_space<vmem>>, vector<1x64xf32>
    %c0_5 = arith.constant 0 : index
    %c0_6 = arith.constant 0 : index
    %c0_7 = arith.constant 0 : index
    %4 = vector.load %arg1[%c0_5, %c0_6, %c0_7] : memref<4x64x32xf32, #tpu.memory_space<vmem>>, vector<1x64x32xf32>
    %5 = vector.shape_cast %4 : vector<1x64x32xf32> to vector<64x32xf32>
    %cst_8 = arith.constant dense<0.000000e+00> : vector<64x64xf32>
    %6 = tpu.matmul %5, %2, %cst_8 {dimension_numbers = #tpu.dot_dimension_numbers<[1], [0], [0], [1], [0, 0, 1, 1], [], []>} : vector<64x32xf32>, vector<32x64xf32>, vector<64x64xf32> -> vector<64x64xf32>
    %7 = vector.broadcast %3 : vector<1x64xf32> to vector<64x64xf32>
    %8 = arith.addf %6, %7 : vector<64x64xf32>
    %9 = math.tanh %8 : vector<64x64xf32>
    %c0_9 = arith.constant 0 : index
    %c0_10 = arith.constant 0 : index
    %c0_11 = arith.constant 0 : index
    %10 = vector.load %arg2[%c0_9, %c0_10, %c0_11] : memref<4x64x1xf32, #tpu.memory_space<vmem>>, vector<1x64x1xf32>
    %11 = vector.shape_cast %10 : vector<1x64x1xf32> to vector<64x1xf32>
    %12 = vector.broadcast %11 : vector<64x1xf32> to vector<64x64xf32>
    %13 = arith.mulf %9, %12 : vector<64x64xf32>
    %c0_12 = arith.constant 0 : index
    %c0_13 = arith.constant 0 : index
    %14 = vector.load %arg14[%c0_12, %c0_13] : memref<288x64xf32, #tpu.memory_space<vmem>>, vector<64x64xf32>
    tpu.vector_store %arg14[%c0_12, %c0_13], %13 {strides = array<i32>} : memref<288x64xf32, #tpu.memory_space<vmem>>, vector<64x64xf32>,
    %c1 = arith.constant 1 : index
    %c0_14 = arith.constant 0 : index
    %c0_15 = arith.constant 0 : index
    %15 = vector.load %arg1[%c1, %c0_14, %c0_15] : memref<4x64x32xf32, #tpu.memory_space<vmem>>, vector<1x64x32xf32>
    %16 = vector.shape_cast %15 : vector<1x64x32xf32> to vector<64x32xf32>
    %cst_16 = arith.constant dense<0.000000e+00> : vector<64x64xf32>
    %17 = tpu.matmul %16, %2, %cst_16 {dimension_numbers = #tpu.dot_dimension_numbers<[1], [0], [0], [1], [0, 0, 1, 1], [], []>} : vector<64x32xf32>, vector<32x64xf32>, vector<64x64xf32> -> vector<64x64xf32>
    %18 = vector.broadcast %3 : vector<1x64xf32> to vector<64x64xf32>
    %19 = arith.addf %17, %18 : vector<64x64xf32>
    %20 = math.tanh %19 : vector<64x64xf32>
    %c1_17 = arith.constant 1 : index
    %c0_18 = arith.constant 0 : index
    %c0_19 = arith.constant 0 : index
    %21 = vector.load %arg2[%c1_17, %c0_18, %c0_19] : memref<4x64x1xf32, #tpu.memory_space<vmem>>, vector<1x64x1xf32>
    %22 = vector.shape_cast %21 : vector<1x64x1xf32> to vector<64x1xf32>
    %23 = vector.broadcast %22 : vector<64x1xf32> to vector<64x64xf32>
    %24 = arith.mulf %20, %23 : vector<64x64xf32>
    %c72 = arith.constant 72 : index
    %c0_20 = arith.constant 0 : index
    %25 = vector.load %arg14[%c72, %c0_20] : memref<288x64xf32, #tpu.memory_space<vmem>>, vector<64x64xf32>
    tpu.vector_store %arg14[%c72, %c0_20], %24 {strides = array<i32>} : memref<288x64xf32, #tpu.memory_space<vmem>>, vector<64x64xf32>,
    %c2 = arith.constant 2 : index
    %c0_21 = arith.constant 0 : index
    %c0_22 = arith.constant 0 : index
    %26 = vector.load %arg1[%c2, %c0_21, %c0_22] : memref<4x64x32xf32, #tpu.memory_space<vmem>>, vector<1x64x32xf32>
    %27 = vector.shape_cast %26 : vector<1x64x32xf32> to vector<64x32xf32>
    %cst_23 = arith.constant dense<0.000000e+00> : vector<64x64xf32>
    %28 = tpu.matmul %27, %2, %cst_23 {dimension_numbers = #tpu.dot_dimension_numbers<[1], [0], [0], [1], [0, 0, 1, 1], [], []>} : vector<64x32xf32>, vector<32x64xf32>, vector<64x64xf32> -> vector<64x64xf32>
    %29 = vector.broadcast %3 : vector<1x64xf32> to vector<64x64xf32>
    %30 = arith.addf %28, %29 : vector<64x64xf32>
    %31 = math.tanh %30 : vector<64x64xf32>
    %c2_24 = arith.constant 2 : index
    %c0_25 = arith.constant 0 : index
    %c0_26 = arith.constant 0 : index
    %32 = vector.load %arg2[%c2_24, %c0_25, %c0_26] : memref<4x64x1xf32, #tpu.memory_space<vmem>>, vector<1x64x1xf32>
    %33 = vector.shape_cast %32 : vector<1x64x1xf32> to vector<64x1xf32>
    %34 = vector.broadcast %33 : vector<64x1xf32> to vector<64x64xf32>
    %35 = arith.mulf %31, %34 : vector<64x64xf32>
    %c144 = arith.constant 144 : index
    %c0_27 = arith.constant 0 : index
    %36 = vector.load %arg14[%c144, %c0_27] : memref<288x64xf32, #tpu.memory_space<vmem>>, vector<64x64xf32>
    tpu.vector_store %arg14[%c144, %c0_27], %35 {strides = array<i32>} : memref<288x64xf32, #tpu.memory_space<vmem>>, vector<64x64xf32>,
    %c3 = arith.constant 3 : index
    %c0_28 = arith.constant 0 : index
    %c0_29 = arith.constant 0 : index
    %37 = vector.load %arg1[%c3, %c0_28, %c0_29] : memref<4x64x32xf32, #tpu.memory_space<vmem>>, vector<1x64x32xf32>
    %38 = vector.shape_cast %37 : vector<1x64x32xf32> to vector<64x32xf32>
    %cst_30 = arith.constant dense<0.000000e+00> : vector<64x64xf32>
    %39 = tpu.matmul %38, %2, %cst_30 {dimension_numbers = #tpu.dot_dimension_numbers<[1], [0], [0], [1], [0, 0, 1, 1], [], []>} : vector<64x32xf32>, vector<32x64xf32>, vector<64x64xf32> -> vector<64x64xf32>
    %40 = vector.broadcast %3 : vector<1x64xf32> to vector<64x64xf32>
    %41 = arith.addf %39, %40 : vector<64x64xf32>
    %42 = math.tanh %41 : vector<64x64xf32>
    %c3_31 = arith.constant 3 : index
    %c0_32 = arith.constant 0 : index
    %c0_33 = arith.constant 0 : index
    %43 = vector.load %arg2[%c3_31, %c0_32, %c0_33] : memref<4x64x1xf32, #tpu.memory_space<vmem>>, vector<1x64x1xf32>
    %44 = vector.shape_cast %43 : vector<1x64x1xf32> to vector<64x1xf32>
    %45 = vector.broadcast %44 : vector<64x1xf32> to vector<64x64xf32>
    %46 = arith.mulf %42, %45 : vector<64x64xf32>
    %c216 = arith.constant 216 : index
    %c0_34 = arith.constant 0 : index
    %47 = vector.load %arg14[%c216, %c0_34] : memref<288x64xf32, #tpu.memory_space<vmem>>, vector<64x64xf32>
    tpu.vector_store %arg14[%c216, %c0_34], %46 {strides = array<i32>} : memref<288x64xf32, #tpu.memory_space<vmem>>, vector<64x64xf32>,
    %cst_35 = arith.constant 0.000000e+00 : f32
    %48 = vector.broadcast %cst_35 : f32 to vector<64x32xf32>
    %c0_36 = arith.constant 0 : index
    %c0_37 = arith.constant 0 : index
    %49 = vector.load %arg14[%c0_36, %c0_37] : memref<288x64xf32, #tpu.memory_space<vmem>>, vector<64x64xf32>
    %c0_38 = arith.constant 0 : index
    %c0_39 = arith.constant 0 : index
    %c0_40 = arith.constant 0 : index
    %50 = vector.load %arg5[%c0_38, %c0_39, %c0_40] : memref<9x64x32xf32, #tpu.memory_space<vmem>>, vector<1x64x32xf32>
    %51 = vector.shape_cast %50 : vector<1x64x32xf32> to vector<64x32xf32>
    %cst_41 = arith.constant dense<0.000000e+00> : vector<64x32xf32>
    %52 = tpu.matmul %49, %51, %cst_41 {dimension_numbers = #tpu.dot_dimension_numbers<[1], [0], [0], [1], [0, 0, 1, 1], [], []>} : vector<64x64xf32>, vector<64x32xf32>, vector<64x32xf32> -> vector<64x32xf32>
    %53 = arith.addf %48, %52 : vector<64x32xf32>
    %c72_42 = arith.constant 72 : index
    %c0_43 = arith.constant 0 : index
    %54 = vector.load %arg14[%c72_42, %c0_43] : memref<288x64xf32, #tpu.memory_space<vmem>>, vector<64x64xf32>
    %c1_44 = arith.constant 1 : index
    %c0_45 = arith.constant 0 : index
    %c0_46 = arith.constant 0 : index
    %55 = vector.load %arg5[%c1_44, %c0_45, %c0_46] : memref<9x64x32xf32, #tpu.memory_space<vmem>>, vector<1x64x32xf32>
    %56 = vector.shape_cast %55 : vector<1x64x32xf32> to vector<64x32xf32>
    %cst_47 = arith.constant dense<0.000000e+00> : vector<64x32xf32>
    %57 = tpu.matmul %54, %56, %cst_47 {dimension_numbers = #tpu.dot_dimension_numbers<[1], [0], [0], [1], [0, 0, 1, 1], [], []>} : vector<64x64xf32>, vector<64x32xf32>, vector<64x32xf32> -> vector<64x32xf32>
    %58 = arith.addf %53, %57 : vector<64x32xf32>
    %c1_48 = arith.constant 1 : index
    %c0_49 = arith.constant 0 : index
    %59 = vector.load %arg14[%c1_48, %c0_49] : memref<288x64xf32, #tpu.memory_space<vmem>>, vector<64x64xf32>
    %c2_50 = arith.constant 2 : index
    %c0_51 = arith.constant 0 : index
    %c0_52 = arith.constant 0 : index
    %60 = vector.load %arg5[%c2_50, %c0_51, %c0_52] : memref<9x64x32xf32, #tpu.memory_space<vmem>>, vector<1x64x32xf32>
    %61 = vector.shape_cast %60 : vector<1x64x32xf32> to vector<64x32xf32>
    %cst_53 = arith.constant dense<0.000000e+00> : vector<64x32xf32>
    %62 = tpu.matmul %59, %61, %cst_53 {dimension_numbers = #tpu.dot_dimension_numbers<[1], [0], [0], [1], [0, 0, 1, 1], [], []>} : vector<64x64xf32>, vector<64x32xf32>, vector<64x32xf32> -> vector<64x32xf32>
    %63 = arith.addf %58, %62 : vector<64x32xf32>
    %c144_54 = arith.constant 144 : index
    %c0_55 = arith.constant 0 : index
    %64 = vector.load %arg14[%c144_54, %c0_55] : memref<288x64xf32, #tpu.memory_space<vmem>>, vector<64x64xf32>
    %c3_56 = arith.constant 3 : index
    %c0_57 = arith.constant 0 : index
    %c0_58 = arith.constant 0 : index
    %65 = vector.load %arg5[%c3_56, %c0_57, %c0_58] : memref<9x64x32xf32, #tpu.memory_space<vmem>>, vector<1x64x32xf32>
    %66 = vector.shape_cast %65 : vector<1x64x32xf32> to vector<64x32xf32>
    %cst_59 = arith.constant dense<0.000000e+00> : vector<64x32xf32>
    %67 = tpu.matmul %64, %66, %cst_59 {dimension_numbers = #tpu.dot_dimension_numbers<[1], [0], [0], [1], [0, 0, 1, 1], [], []>} : vector<64x64xf32>, vector<64x32xf32>, vector<64x32xf32> -> vector<64x32xf32>
    %68 = arith.addf %63, %67 : vector<64x32xf32>
    %c216_60 = arith.constant 216 : index
    %c0_61 = arith.constant 0 : index
    %69 = vector.load %arg14[%c216_60, %c0_61] : memref<288x64xf32, #tpu.memory_space<vmem>>, vector<64x64xf32>
    %c4 = arith.constant 4 : index
    %c0_62 = arith.constant 0 : index
    %c0_63 = arith.constant 0 : index
    %70 = vector.load %arg5[%c4, %c0_62, %c0_63] : memref<9x64x32xf32, #tpu.memory_space<vmem>>, vector<1x64x32xf32>
    %71 = vector.shape_cast %70 : vector<1x64x32xf32> to vector<64x32xf32>
    %cst_64 = arith.constant dense<0.000000e+00> : vector<64x32xf32>
    %72 = tpu.matmul %69, %71, %cst_64 {dimension_numbers = #tpu.dot_dimension_numbers<[1], [0], [0], [1], [0, 0, 1, 1], [], []>} : vector<64x64xf32>, vector<64x32xf32>, vector<64x32xf32> -> vector<64x32xf32>
    %73 = arith.addf %68, %72 : vector<64x32xf32>
    %c145 = arith.constant 145 : index
    %c0_65 = arith.constant 0 : index
    %74 = vector.load %arg14[%c145, %c0_65] : memref<288x64xf32, #tpu.memory_space<vmem>>, vector<64x64xf32>
    %c5 = arith.constant 5 : index
    %c0_66 = arith.constant 0 : index
    %c0_67 = arith.constant 0 : index
    %75 = vector.load %arg5[%c5, %c0_66, %c0_67] : memref<9x64x32xf32, #tpu.memory_space<vmem>>, vector<1x64x32xf32>
    %76 = vector.shape_cast %75 : vector<1x64x32xf32> to vector<64x32xf32>
    %cst_68 = arith.constant dense<0.000000e+00> : vector<64x32xf32>
    %77 = tpu.matmul %74, %76, %cst_68 {dimension_numbers = #tpu.dot_dimension_numbers<[1], [0], [0], [1], [0, 0, 1, 1], [], []>} : vector<64x64xf32>, vector<64x32xf32>, vector<64x32xf32> -> vector<64x32xf32>
    %78 = arith.addf %73, %77 : vector<64x32xf32>
    %c5_69 = arith.constant 5 : index
    %c0_70 = arith.constant 0 : index
    %79 = vector.load %arg14[%c5_69, %c0_70] : memref<288x64xf32, #tpu.memory_space<vmem>>, vector<64x64xf32>
    %c6 = arith.constant 6 : index
    %c0_71 = arith.constant 0 : index
    %c0_72 = arith.constant 0 : index
    %80 = vector.load %arg5[%c6, %c0_71, %c0_72] : memref<9x64x32xf32, #tpu.memory_space<vmem>>, vector<1x64x32xf32>
    %81 = vector.shape_cast %80 : vector<1x64x32xf32> to vector<64x32xf32>
    %cst_73 = arith.constant dense<0.000000e+00> : vector<64x32xf32>
    %82 = tpu.matmul %79, %81, %cst_73 {dimension_numbers = #tpu.dot_dimension_numbers<[1], [0], [0], [1], [0, 0, 1, 1], [], []>} : vector<64x64xf32>, vector<64x32xf32>, vector<64x32xf32> -> vector<64x32xf32>
    %83 = arith.addf %78, %82 : vector<64x32xf32>
    %c77 = arith.constant 77 : index
    %c0_74 = arith.constant 0 : index
    %84 = vector.load %arg14[%c77, %c0_74] : memref<288x64xf32, #tpu.memory_space<vmem>>, vector<64x64xf32>
    %c7 = arith.constant 7 : index
    %c0_75 = arith.constant 0 : index
    %c0_76 = arith.constant 0 : index
    %85 = vector.load %arg5[%c7, %c0_75, %c0_76] : memref<9x64x32xf32, #tpu.memory_space<vmem>>, vector<1x64x32xf32>
    %86 = vector.shape_cast %85 : vector<1x64x32xf32> to vector<64x32xf32>
    %cst_77 = arith.constant dense<0.000000e+00> : vector<64x32xf32>
    %87 = tpu.matmul %84, %86, %cst_77 {dimension_numbers = #tpu.dot_dimension_numbers<[1], [0], [0], [1], [0, 0, 1, 1], [], []>} : vector<64x64xf32>, vector<64x32xf32>, vector<64x32xf32> -> vector<64x32xf32>
    %88 = arith.addf %83, %87 : vector<64x32xf32>
    %c6_78 = arith.constant 6 : index
    %c0_79 = arith.constant 0 : index
    %89 = vector.load %arg14[%c6_78, %c0_79] : memref<288x64xf32, #tpu.memory_space<vmem>>, vector<64x64xf32>
    %c8 = arith.constant 8 : index
    %c0_80 = arith.constant 0 : index
    %c0_81 = arith.constant 0 : index
    %90 = vector.load %arg5[%c8, %c0_80, %c0_81] : memref<9x64x32xf32, #tpu.memory_space<vmem>>, vector<1x64x32xf32>
    %91 = vector.shape_cast %90 : vector<1x64x32xf32> to vector<64x32xf32>
    %cst_82 = arith.constant dense<0.000000e+00> : vector<64x32xf32>
    %92 = tpu.matmul %89, %91, %cst_82 {dimension_numbers = #tpu.dot_dimension_numbers<[1], [0], [0], [1], [0, 0, 1, 1], [], []>} : vector<64x64xf32>, vector<64x32xf32>, vector<64x32xf32> -> vector<64x32xf32>
    %93 = arith.addf %88, %92 : vector<64x32xf32>
    %c0_83 = arith.constant 0 : index
    %c0_84 = arith.constant 0 : index
    %94 = vector.load %arg6[%c0_83, %c0_84] : memref<1x32xf32, #tpu.memory_space<vmem>>, vector<1x32xf32>
    %95 = vector.broadcast %94 : vector<1x32xf32> to vector<64x32xf32>
    %96 = arith.addf %93, %95 : vector<64x32xf32>
    %97 = math.tanh %96 : vector<64x32xf32>
    %98 = tpu.iota {dimensions = array<i32: 0>} : vector<2x64xi32>
    %99 = tpu.iota {dimensions = array<i32: 1>} : vector<2x64xi32>
    %c32_i32 = arith.constant 32 : i32
    %100 = vector.broadcast %c32_i32 : i32 to vector<2x64xi32>
    %101 = arith.muli %98, %100 : vector<2x64xi32>
    %cst_85 = arith.constant 0.000000e+00 : f32
    %102 = vector.broadcast %cst_85 : f32 to vector<2x642xf32>
    %c0_i32 = arith.constant 0 : i32
    %103 = vector.broadcast %c0_i32 : i32 to vector<2x64xi32>
    %104 = arith.addi %101, %103 : vector<2x64xi32>
    %105 = arith.cmpi eq, %99, %104 : vector<2x64xi32>
    %106 = arith.extui %105 : vector<2x64xi1> to vector<2x64xi32>
    %107 = arith.sitofp %106 : vector<2x64xi32> to vector<2x64xf32>
    %cst_86 = arith.constant dense<0.000000e+00> : vector<2x32xf32>
    %108 = tpu.matmul %107, %97, %cst_86 {dimension_numbers = #tpu.dot_dimension_numbers<[1], [0], [0], [1], [0, 0, 1, 1], [], []>} : vector<2x64xf32>, vector<64x32xf32>, vector<2x32xf32> -> vector<2x32xf32>
    %c0_87 = arith.constant 0 : index
    %c0_88 = arith.constant 0 : index
    %109 = vector.load %arg7[%c0_87, %c0_88] : memref<512x642xf32, #tpu.memory_space<vmem>>, vector<32x642xf32>
    %cst_89 = arith.constant dense<0.000000e+00> : vector<2x642xf32>
    %110 = tpu.matmul %108, %109, %cst_89 {dimension_numbers = #tpu.dot_dimension_numbers<[1], [0], [0], [1], [0, 0, 1, 1], [], []>} : vector<2x32xf32>, vector<32x642xf32>, vector<2x642xf32> -> vector<2x642xf32>
    %111 = arith.addf %102, %110 : vector<2x642xf32>
    %c1_i32 = arith.constant 1 : i32
    %112 = vector.broadcast %c1_i32 : i32 to vector<2x64xi32>
    %113 = arith.addi %101, %112 : vector<2x64xi32>
    %114 = arith.cmpi eq, %99, %113 : vector<2x64xi32>
    %115 = arith.extui %114 : vector<2x64xi1> to vector<2x64xi32>
    %116 = arith.sitofp %115 : vector<2x64xi32> to vector<2x64xf32>
    %cst_90 = arith.constant dense<0.000000e+00> : vector<2x32xf32>
    %117 = tpu.matmul %116, %97, %cst_90 {dimension_numbers = #tpu.dot_dimension_numbers<[1], [0], [0], [1], [0, 0, 1, 1], [], []>} : vector<2x64xf32>, vector<64x32xf32>, vector<2x32xf32> -> vector<2x32xf32>
    %c32 = arith.constant 32 : index
    %c0_91 = arith.constant 0 : index
    %118 = vector.load %arg7[%c32, %c0_91] : memref<512x642xf32, #tpu.memory_space<vmem>>, vector<32x642xf32>
    %cst_92 = arith.constant dense<0.000000e+00> : vector<2x642xf32>
    %119 = tpu.matmul %117, %118, %cst_92 {dimension_numbers = #tpu.dot_dimension_numbers<[1], [0], [0], [1], [0, 0, 1, 1], [], []>} : vector<2x32xf32>, vector<32x642xf32>, vector<2x642xf32> -> vector<2x642xf32>
    %120 = arith.addf %111, %119 : vector<2x642xf32>
    %c2_i32 = arith.constant 2 : i32
    %121 = vector.broadcast %c2_i32 : i32 to vector<2x64xi32>
    %122 = arith.addi %101, %121 : vector<2x64xi32>
    %123 = arith.cmpi eq, %99, %122 : vector<2x64xi32>
    %124 = arith.extui %123 : vector<2x64xi1> to vector<2x64xi32>
    %125 = arith.sitofp %124 : vector<2x64xi32> to vector<2x64xf32>
    %cst_93 = arith.constant dense<0.000000e+00> : vector<2x32xf32>
    %126 = tpu.matmul %125, %97, %cst_93 {dimension_numbers = #tpu.dot_dimension_numbers<[1], [0], [0], [1], [0, 0, 1, 1], [], []>} : vector<2x64xf32>, vector<64x32xf32>, vector<2x32xf32> -> vector<2x32xf32>
    %c64 = arith.constant 64 : index
    %c0_94 = arith.constant 0 : index
    %127 = vector.load %arg7[%c64, %c0_94] : memref<512x642xf32, #tpu.memory_space<vmem>>, vector<32x642xf32>
    %cst_95 = arith.constant dense<0.000000e+00> : vector<2x642xf32>
    %128 = tpu.matmul %126, %127, %cst_95 {dimension_numbers = #tpu.dot_dimension_numbers<[1], [0], [0], [1], [0, 0, 1, 1], [], []>} : vector<2x32xf32>, vector<32x642xf32>, vector<2x642xf32> -> vector<2x642xf32>
    %129 = arith.addf %120, %128 : vector<2x642xf32>
    %c3_i32 = arith.constant 3 : i32
    %130 = vector.broadcast %c3_i32 : i32 to vector<2x64xi32>
    %131 = arith.addi %101, %130 : vector<2x64xi32>
    %132 = arith.cmpi eq, %99, %131 : vector<2x64xi32>
    %133 = arith.extui %132 : vector<2x64xi1> to vector<2x64xi32>
    %134 = arith.sitofp %133 : vector<2x64xi32> to vector<2x64xf32>
    %cst_96 = arith.constant dense<0.000000e+00> : vector<2x32xf32>
    %135 = tpu.matmul %134, %97, %cst_96 {dimension_numbers = #tpu.dot_dimension_numbers<[1], [0], [0], [1], [0, 0, 1, 1], [], []>} : vector<2x64xf32>, vector<64x32xf32>, vector<2x32xf32> -> vector<2x32xf32>
    %c96 = arith.constant 96 : index
    %c0_97 = arith.constant 0 : index
    %136 = vector.load %arg7[%c96, %c0_97] : memref<512x642xf32, #tpu.memory_space<vmem>>, vector<32x642xf32>
    %cst_98 = arith.constant dense<0.000000e+00> : vector<2x642xf32>
    %137 = tpu.matmul %135, %136, %cst_98 {dimension_numbers = #tpu.dot_dimension_numbers<[1], [0], [0], [1], [0, 0, 1, 1], [], []>} : vector<2x32xf32>, vector<32x642xf32>, vector<2x642xf32> -> vector<2x642xf32>
    %138 = arith.addf %129, %137 : vector<2x642xf32>
    %c5_i32 = arith.constant 5 : i32
    %139 = vector.broadcast %c5_i32 : i32 to vector<2x64xi32>
    %140 = arith.addi %101, %139 : vector<2x64xi32>
    %141 = arith.cmpi eq, %99, %140 : vector<2x64xi32>
    %142 = arith.extui %141 : vector<2x64xi1> to vector<2x64xi32>
    %143 = arith.sitofp %142 : vector<2x64xi32> to vector<2x64xf32>
    %cst_99 = arith.constant dense<0.000000e+00> : vector<2x32xf32>
    %144 = tpu.matmul %143, %97, %cst_99 {dimension_numbers = #tpu.dot_dimension_numbers<[1], [0], [0], [1], [0, 0, 1, 1], [], []>} : vector<2x64xf32>, vector<64x32xf32>, vector<2x32xf32> -> vector<2x32xf32>
    %c128 = arith.constant 128 : index
    %c0_100 = arith.constant 0 : index
    %145 = vector.load %arg7[%c128, %c0_100] : memref<512x642xf32, #tpu.memory_space<vmem>>, vector<32x642xf32>
    %cst_101 = arith.constant dense<0.000000e+00> : vector<2x642xf32>
    %146 = tpu.matmul %144, %145, %cst_101 {dimension_numbers = #tpu.dot_dimension_numbers<[1], [0], [0], [1], [0, 0, 1, 1], [], []>} : vector<2x32xf32>, vector<32x642xf32>, vector<2x642xf32> -> vector<2x642xf32>
    %147 = arith.addf %138, %146 : vector<2x642xf32>
    %c6_i32 = arith.constant 6 : i32
    %148 = vector.broadcast %c6_i32 : i32 to vector<2x64xi32>
    %149 = arith.addi %101, %148 : vector<2x64xi32>
    %150 = arith.cmpi eq, %99, %149 : vector<2x64xi32>
    %151 = arith.extui %150 : vector<2x64xi1> to vector<2x64xi32>
    %152 = arith.sitofp %151 : vector<2x64xi32> to vector<2x64xf32>
    %cst_102 = arith.constant dense<0.000000e+00> : vector<2x32xf32>
    %153 = tpu.matmul %152, %97, %cst_102 {dimension_numbers = #tpu.dot_dimension_numbers<[1], [0], [0], [1], [0, 0, 1, 1], [], []>} : vector<2x64xf32>, vector<64x32xf32>, vector<2x32xf32> -> vector<2x32xf32>
    %c160 = arith.constant 160 : index
    %c0_103 = arith.constant 0 : index
    %154 = vector.load %arg7[%c160, %c0_103] : memref<512x642xf32, #tpu.memory_space<vmem>>, vector<32x642xf32>
    %cst_104 = arith.constant dense<0.000000e+00> : vector<2x642xf32>
    %155 = tpu.matmul %153, %154, %cst_104 {dimension_numbers = #tpu.dot_dimension_numbers<[1], [0], [0], [1], [0, 0, 1, 1], [], []>} : vector<2x32xf32>, vector<32x642xf32>, vector<2x642xf32> -> vector<2x642xf32>
    %156 = arith.addf %147, %155 : vector<2x642xf32>
    %c7_i32 = arith.constant 7 : i32
    %157 = vector.broadcast %c7_i32 : i32 to vector<2x64xi32>
    %158 = arith.addi %101, %157 : vector<2x64xi32>
    %159 = arith.cmpi eq, %99, %158 : vector<2x64xi32>
    %160 = arith.extui %159 : vector<2x64xi1> to vector<2x64xi32>
    %161 = arith.sitofp %160 : vector<2x64xi32> to vector<2x64xf32>
    %cst_105 = arith.constant dense<0.000000e+00> : vector<2x32xf32>
    %162 = tpu.matmul %161, %97, %cst_105 {dimension_numbers = #tpu.dot_dimension_numbers<[1], [0], [0], [1], [0, 0, 1, 1], [], []>} : vector<2x64xf32>, vector<64x32xf32>, vector<2x32xf32> -> vector<2x32xf32>
    %c192 = arith.constant 192 : index
    %c0_106 = arith.constant 0 : index
    %163 = vector.load %arg7[%c192, %c0_106] : memref<512x642xf32, #tpu.memory_space<vmem>>, vector<32x642xf32>
    %cst_107 = arith.constant dense<0.000000e+00> : vector<2x642xf32>
    %164 = tpu.matmul %162, %163, %cst_107 {dimension_numbers = #tpu.dot_dimension_numbers<[1], [0], [0], [1], [0, 0, 1, 1], [], []>} : vector<2x32xf32>, vector<32x642xf32>, vector<2x642xf32> -> vector<2x642xf32>
    %165 = arith.addf %156, %164 : vector<2x642xf32>
    %c8_i32 = arith.constant 8 : i32
    %166 = vector.broadcast %c8_i32 : i32 to vector<2x64xi32>
    %167 = arith.addi %101, %166 : vector<2x64xi32>
    %168 = arith.cmpi eq, %99, %167 : vector<2x64xi32>
    %169 = arith.extui %168 : vector<2x64xi1> to vector<2x64xi32>
    %170 = arith.sitofp %169 : vector<2x64xi32> to vector<2x64xf32>
    %cst_108 = arith.constant dense<0.000000e+00> : vector<2x32xf32>
    %171 = tpu.matmul %170, %97, %cst_108 {dimension_numbers = #tpu.dot_dimension_numbers<[1], [0], [0], [1], [0, 0, 1, 1], [], []>} : vector<2x64xf32>, vector<64x32xf32>, vector<2x32xf32> -> vector<2x32xf32>
    %c224 = arith.constant 224 : index
    %c0_109 = arith.constant 0 : index
    %172 = vector.load %arg7[%c224, %c0_109] : memref<512x642xf32, #tpu.memory_space<vmem>>, vector<32x642xf32>
    %cst_110 = arith.constant dense<0.000000e+00> : vector<2x642xf32>
    %173 = tpu.matmul %171, %172, %cst_110 {dimension_numbers = #tpu.dot_dimension_numbers<[1], [0], [0], [1], [0, 0, 1, 1], [], []>} : vector<2x32xf32>, vector<32x642xf32>, vector<2x642xf32> -> vector<2x642xf32>
    %174 = arith.addf %165, %173 : vector<2x642xf32>
    %c10_i32 = arith.constant 10 : i32
    %175 = vector.broadcast %c10_i32 : i32 to vector<2x64xi32>
    %176 = arith.addi %101, %175 : vector<2x64xi32>
    %177 = arith.cmpi eq, %99, %176 : vector<2x64xi32>
    %178 = arith.extui %177 : vector<2x64xi1> to vector<2x64xi32>
    %179 = arith.sitofp %178 : vector<2x64xi32> to vector<2x64xf32>
    %cst_111 = arith.constant dense<0.000000e+00> : vector<2x32xf32>
    %180 = tpu.matmul %179, %97, %cst_111 {dimension_numbers = #tpu.dot_dimension_numbers<[1], [0], [0], [1], [0, 0, 1, 1], [], []>} : vector<2x64xf32>, vector<64x32xf32>, vector<2x32xf32> -> vector<2x32xf32>
    %c256 = arith.constant 256 : index
    %c0_112 = arith.constant 0 : index
    %181 = vector.load %arg7[%c256, %c0_112] : memref<512x642xf32, #tpu.memory_space<vmem>>, vector<32x642xf32>
    %cst_113 = arith.constant dense<0.000000e+00> : vector<2x642xf32>
    %182 = tpu.matmul %180, %181, %cst_113 {dimension_numbers = #tpu.dot_dimension_numbers<[1], [0], [0], [1], [0, 0, 1, 1], [], []>} : vector<2x32xf32>, vector<32x642xf32>, vector<2x642xf32> -> vector<2x642xf32>
    %183 = arith.addf %174, %182 : vector<2x642xf32>
    %c11_i32 = arith.constant 11 : i32
    %184 = vector.broadcast %c11_i32 : i32 to vector<2x64xi32>
    %185 = arith.addi %101, %184 : vector<2x64xi32>
    %186 = arith.cmpi eq, %99, %185 : vector<2x64xi32>
    %187 = arith.extui %186 : vector<2x64xi1> to vector<2x64xi32>
    %188 = arith.sitofp %187 : vector<2x64xi32> to vector<2x64xf32>
    %cst_114 = arith.constant dense<0.000000e+00> : vector<2x32xf32>
    %189 = tpu.matmul %188, %97, %cst_114 {dimension_numbers = #tpu.dot_dimension_numbers<[1], [0], [0], [1], [0, 0, 1, 1], [], []>} : vector<2x64xf32>, vector<64x32xf32>, vector<2x32xf32> -> vector<2x32xf32>
    %c288 = arith.constant 288 : index
    %c0_115 = arith.constant 0 : index
    %190 = vector.load %arg7[%c288, %c0_115] : memref<512x642xf32, #tpu.memory_space<vmem>>, vector<32x642xf32>
    %cst_116 = arith.constant dense<0.000000e+00> : vector<2x642xf32>
    %191 = tpu.matmul %189, %190, %cst_116 {dimension_numbers = #tpu.dot_dimension_numbers<[1], [0], [0], [1], [0, 0, 1, 1], [], []>} : vector<2x32xf32>, vector<32x642xf32>, vector<2x642xf32> -> vector<2x642xf32>
    %192 = arith.addf %183, %191 : vector<2x642xf32>
    %c12_i32 = arith.constant 12 : i32
    %193 = vector.broadcast %c12_i32 : i32 to vector<2x64xi32>
    %194 = arith.addi %101, %193 : vector<2x64xi32>
    %195 = arith.cmpi eq, %99, %194 : vector<2x64xi32>
    %196 = arith.extui %195 : vector<2x64xi1> to vector<2x64xi32>
    %197 = arith.sitofp %196 : vector<2x64xi32> to vector<2x64xf32>
    %cst_117 = arith.constant dense<0.000000e+00> : vector<2x32xf32>
    %198 = tpu.matmul %197, %97, %cst_117 {dimension_numbers = #tpu.dot_dimension_numbers<[1], [0], [0], [1], [0, 0, 1, 1], [], []>} : vector<2x64xf32>, vector<64x32xf32>, vector<2x32xf32> -> vector<2x32xf32>
    %c320 = arith.constant 320 : index
    %c0_118 = arith.constant 0 : index
    %199 = vector.load %arg7[%c320, %c0_118] : memref<512x642xf32, #tpu.memory_space<vmem>>, vector<32x642xf32>
    %cst_119 = arith.constant dense<0.000000e+00> : vector<2x642xf32>
    %200 = tpu.matmul %198, %199, %cst_119 {dimension_numbers = #tpu.dot_dimension_numbers<[1], [0], [0], [1], [0, 0, 1, 1], [], []>} : vector<2x32xf32>, vector<32x642xf32>, vector<2x642xf32> -> vector<2x642xf32>
    %201 = arith.addf %192, %200 : vector<2x642xf32>
    %c13_i32 = arith.constant 13 : i32
    %202 = vector.broadcast %c13_i32 : i32 to vector<2x64xi32>
    %203 = arith.addi %101, %202 : vector<2x64xi32>
    %204 = arith.cmpi eq, %99, %203 : vector<2x64xi32>
    %205 = arith.extui %204 : vector<2x64xi1> to vector<2x64xi32>
    %206 = arith.sitofp %205 : vector<2x64xi32> to vector<2x64xf32>
    %cst_120 = arith.constant dense<0.000000e+00> : vector<2x32xf32>
    %207 = tpu.matmul %206, %97, %cst_120 {dimension_numbers = #tpu.dot_dimension_numbers<[1], [0], [0], [1], [0, 0, 1, 1], [], []>} : vector<2x64xf32>, vector<64x32xf32>, vector<2x32xf32> -> vector<2x32xf32>
    %c352 = arith.constant 352 : index
    %c0_121 = arith.constant 0 : index
    %208 = vector.load %arg7[%c352, %c0_121] : memref<512x642xf32, #tpu.memory_space<vmem>>, vector<32x642xf32>
    %cst_122 = arith.constant dense<0.000000e+00> : vector<2x642xf32>
    %209 = tpu.matmul %207, %208, %cst_122 {dimension_numbers = #tpu.dot_dimension_numbers<[1], [0], [0], [1], [0, 0, 1, 1], [], []>} : vector<2x32xf32>, vector<32x642xf32>, vector<2x642xf32> -> vector<2x642xf32>
    %210 = arith.addf %201, %209 : vector<2x642xf32>
    %c15_i32 = arith.constant 15 : i32
    %211 = vector.broadcast %c15_i32 : i32 to vector<2x64xi32>
    %212 = arith.addi %101, %211 : vector<2x64xi32>
    %213 = arith.cmpi eq, %99, %212 : vector<2x64xi32>
    %214 = arith.extui %213 : vector<2x64xi1> to vector<2x64xi32>
    %215 = arith.sitofp %214 : vector<2x64xi32> to vector<2x64xf32>
    %cst_123 = arith.constant dense<0.000000e+00> : vector<2x32xf32>
    %216 = tpu.matmul %215, %97, %cst_123 {dimension_numbers = #tpu.dot_dimension_numbers<[1], [0], [0], [1], [0, 0, 1, 1], [], []>} : vector<2x64xf32>, vector<64x32xf32>, vector<2x32xf32> -> vector<2x32xf32>
    %c384 = arith.constant 384 : index
    %c0_124 = arith.constant 0 : index
    %217 = vector.load %arg7[%c384, %c0_124] : memref<512x642xf32, #tpu.memory_space<vmem>>, vector<32x642xf32>
    %cst_125 = arith.constant dense<0.000000e+00> : vector<2x642xf32>
    %218 = tpu.matmul %216, %217, %cst_125 {dimension_numbers = #tpu.dot_dimension_numbers<[1], [0], [0], [1], [0, 0, 1, 1], [], []>} : vector<2x32xf32>, vector<32x642xf32>, vector<2x642xf32> -> vector<2x642xf32>
    %219 = arith.addf %210, %218 : vector<2x642xf32>
    %c16_i32 = arith.constant 16 : i32
    %220 = vector.broadcast %c16_i32 : i32 to vector<2x64xi32>
    %221 = arith.addi %101, %220 : vector<2x64xi32>
    %222 = arith.cmpi eq, %99, %221 : vector<2x64xi32>
    %223 = arith.extui %222 : vector<2x64xi1> to vector<2x64xi32>
    %224 = arith.sitofp %223 : vector<2x64xi32> to vector<2x64xf32>
    %cst_126 = arith.constant dense<0.000000e+00> : vector<2x32xf32>
    %225 = tpu.matmul %224, %97, %cst_126 {dimension_numbers = #tpu.dot_dimension_numbers<[1], [0], [0], [1], [0, 0, 1, 1], [], []>} : vector<2x64xf32>, vector<64x32xf32>, vector<2x32xf32> -> vector<2x32xf32>
    %c416 = arith.constant 416 : index
    %c0_127 = arith.constant 0 : index
    %226 = vector.load %arg7[%c416, %c0_127] : memref<512x642xf32, #tpu.memory_space<vmem>>, vector<32x642xf32>
    %cst_128 = arith.constant dense<0.000000e+00> : vector<2x642xf32>
    %227 = tpu.matmul %225, %226, %cst_128 {dimension_numbers = #tpu.dot_dimension_numbers<[1], [0], [0], [1], [0, 0, 1, 1], [], []>} : vector<2x32xf32>, vector<32x642xf32>, vector<2x642xf32> -> vector<2x642xf32>
    %228 = arith.addf %219, %227 : vector<2x642xf32>
    %c17_i32 = arith.constant 17 : i32
    %229 = vector.broadcast %c17_i32 : i32 to vector<2x64xi32>
    %230 = arith.addi %101, %229 : vector<2x64xi32>
    %231 = arith.cmpi eq, %99, %230 : vector<2x64xi32>
    %232 = arith.extui %231 : vector<2x64xi1> to vector<2x64xi32>
    %233 = arith.sitofp %232 : vector<2x64xi32> to vector<2x64xf32>
    %cst_129 = arith.constant dense<0.000000e+00> : vector<2x32xf32>
    %234 = tpu.matmul %233, %97, %cst_129 {dimension_numbers = #tpu.dot_dimension_numbers<[1], [0], [0], [1], [0, 0, 1, 1], [], []>} : vector<2x64xf32>, vector<64x32xf32>, vector<2x32xf32> -> vector<2x32xf32>
    %c448 = arith.constant 448 : index
    %c0_130 = arith.constant 0 : index
    %235 = vector.load %arg7[%c448, %c0_130] : memref<512x642xf32, #tpu.memory_space<vmem>>, vector<32x642xf32>
    %cst_131 = arith.constant dense<0.000000e+00> : vector<2x642xf32>
    %236 = tpu.matmul %234, %235, %cst_131 {dimension_numbers = #tpu.dot_dimension_numbers<[1], [0], [0], [1], [0, 0, 1, 1], [], []>} : vector<2x32xf32>, vector<32x642xf32>, vector<2x642xf32> -> vector<2x642xf32>
    %237 = arith.addf %228, %236 : vector<2x642xf32>
    %c18_i32 = arith.constant 18 : i32
    %238 = vector.broadcast %c18_i32 : i32 to vector<2x64xi32>
    %239 = arith.addi %101, %238 : vector<2x64xi32>
    %240 = arith.cmpi eq, %99, %239 : vector<2x64xi32>
    %241 = arith.extui %240 : vector<2x64xi1> to vector<2x64xi32>
    %242 = arith.sitofp %241 : vector<2x64xi32> to vector<2x64xf32>
    %cst_132 = arith.constant dense<0.000000e+00> : vector<2x32xf32>
    %243 = tpu.matmul %242, %97, %cst_132 {dimension_numbers = #tpu.dot_dimension_numbers<[1], [0], [0], [1], [0, 0, 1, 1], [], []>} : vector<2x64xf32>, vector<64x32xf32>, vector<2x32xf32> -> vector<2x32xf32>
    %c480 = arith.constant 480 : index
    %c0_133 = arith.constant 0 : index
    %244 = vector.load %arg7[%c480, %c0_133] : memref<512x642xf32, #tpu.memory_space<vmem>>, vector<32x642xf32>
    %cst_134 = arith.constant dense<0.000000e+00> : vector<2x642xf32>
    %245 = tpu.matmul %243, %244, %cst_134 {dimension_numbers = #tpu.dot_dimension_numbers<[1], [0], [0], [1], [0, 0, 1, 1], [], []>} : vector<2x32xf32>, vector<32x642xf32>, vector<2x642xf32> -> vector<2x642xf32>
    %246 = arith.addf %237, %245 : vector<2x642xf32>
    %c0_135 = arith.constant 0 : index
    %c0_136 = arith.constant 0 : index
    %247 = vector.load %arg8[%c0_135, %c0_136] : memref<1x642xf32, #tpu.memory_space<vmem>>, vector<1x642xf32>
    %248 = vector.broadcast %247 : vector<1x642xf32> to vector<2x642xf32>
    %249 = arith.addf %246, %248 : vector<2x642xf32>
    %250 = math.tanh %249 : vector<2x642xf32>
    %c0_137 = arith.constant 0 : index
    %c0_138 = arith.constant 0 : index
    %251 = vector.load %arg9[%c0_137, %c0_138] : memref<642x128xf32, #tpu.memory_space<vmem>>, vector<642x128xf32>
    %cst_139 = arith.constant dense<0.000000e+00> : vector<2x128xf32>
    %252 = tpu.matmul %250, %251, %cst_139 {dimension_numbers = #tpu.dot_dimension_numbers<[1], [0], [0], [1], [0, 0, 1, 1], [], []>} : vector<2x642xf32>, vector<642x128xf32>, vector<2x128xf32> -> vector<2x128xf32>
    %c0_140 = arith.constant 0 : index
    %c0_141 = arith.constant 0 : index
    %253 = vector.load %arg10[%c0_140, %c0_141] : memref<1x128xf32, #tpu.memory_space<vmem>>, vector<1x128xf32>
    %254 = vector.broadcast %253 : vector<1x128xf32> to vector<2x128xf32>
    %255 = arith.addf %252, %254 : vector<2x128xf32>
    %256 = math.tanh %255 : vector<2x128xf32>
    %c0_142 = arith.constant 0 : index
    %c0_143 = arith.constant 0 : index
    %257 = vector.load %arg11[%c0_142, %c0_143] : memref<128x1xf32, #tpu.memory_space<vmem>>, vector<128x1xf32>
    %cst_144 = arith.constant dense<0.000000e+00> : vector<2x1xf32>
    %258 = tpu.matmul %256, %257, %cst_144 {dimension_numbers = #tpu.dot_dimension_numbers<[1], [0], [0], [1], [0, 0, 1, 1], [], []>} : vector<2x128xf32>, vector<128x1xf32>, vector<2x1xf32> -> vector<2x1xf32>
    %c0_145 = arith.constant 0 : index
    %c0_146 = arith.constant 0 : index
    %259 = vector.load %arg12[%c0_145, %c0_146] : memref<1x1xf32, #tpu.memory_space<vmem>>, vector<1x1xf32>
    %260 = vector.broadcast %259 : vector<1x1xf32> to vector<2x1xf32>
    %261 = arith.addf %258, %260 : vector<2x1xf32>
    %c0_147 = arith.constant 0 : index
    %c0_148 = arith.constant 0 : index
    %262 = vector.load %arg13[%c0_147, %c0_148] : memref<2x1xf32, #tpu.memory_space<vmem>>, vector<2x1xf32>
    tpu.vector_store %arg13[%c0_147, %c0_148], %261 {strides = array<i32>} : memref<2x1xf32, #tpu.memory_space<vmem>>, vector<2x1xf32>,
    return
  }
  func.func @transform_0(%arg0: i32) -> (i32, i32, i32) {
    %c0_i32 = arith.constant 0 : i32
    %c0_i32_0 = arith.constant 0 : i32
    %c0_i32_1 = arith.constant 0 : i32
    return %c0_i32, %arg0, %c0_i32_0 : i32, i32, i32
  }
  func.func @transform_1(%arg0: i32) -> (i32, i32, i32) {
    %c0_i32 = arith.constant 0 : i32
    %c0_i32_0 = arith.constant 0 : i32
    %c0_i32_1 = arith.constant 0 : i32
    return %c0_i32, %arg0, %c0_i32_0 : i32, i32, i32
  }
  func.func @transform_2(%arg0: i32) -> (i32, i32) {
    %c0_i32 = arith.constant 0 : i32
    %c0_i32_0 = arith.constant 0 : i32
    %c0_i32_1 = arith.constant 0 : i32
    return %c0_i32, %c0_i32_0 : i32, i32
  }
  func.func @transform_3(%arg0: i32) -> (i32, i32) {
    %c0_i32 = arith.constant 0 : i32
    %c0_i32_0 = arith.constant 0 : i32
    %c0_i32_1 = arith.constant 0 : i32
    return %c0_i32, %c0_i32_0 : i32, i32
  }
  func.func @transform_4(%arg0: i32) -> (i32, i32, i32) {
    %c0_i32 = arith.constant 0 : i32
    %c0_i32_0 = arith.constant 0 : i32
    %c0_i32_1 = arith.constant 0 : i32
    %c0_i32_2 = arith.constant 0 : i32
    return %c0_i32, %c0_i32_0, %c0_i32_1 : i32, i32, i32
  }
  func.func @transform_5(%arg0: i32) -> (i32, i32) {
    %c0_i32 = arith.constant 0 : i32
    %c0_i32_0 = arith.constant 0 : i32
    %c0_i32_1 = arith.constant 0 : i32
    return %c0_i32, %c0_i32_0 : i32, i32
  }
  func.func @transform_6(%arg0: i32) -> (i32, i32) {
    %c0_i32 = arith.constant 0 : i32
    %c0_i32_0 = arith.constant 0 : i32
    %c0_i32_1 = arith.constant 0 : i32
    return %c0_i32, %c0_i32_0 : i32, i32
  }
  func.func @transform_7(%arg0: i32) -> (i32, i32) {
    %c0_i32 = arith.constant 0 : i32
    %c0_i32_0 = arith.constant 0 : i32
    %c0_i32_1 = arith.constant 0 : i32
    return %c0_i32, %c0_i32_0 : i32, i32
  }
  func.func @transform_8(%arg0: i32) -> (i32, i32) {
    %c0_i32 = arith.constant 0 : i32
    %c0_i32_0 = arith.constant 0 : i32
    %c0_i32_1 = arith.constant 0 : i32
    return %c0_i32, %c0_i32_0 : i32, i32
  }
  func.func @transform_9(%arg0: i32) -> (i32, i32) {
    %c0_i32 = arith.constant 0 : i32
    %c0_i32_0 = arith.constant 0 : i32
    %c0_i32_1 = arith.constant 0 : i32
    return %c0_i32, %c0_i32_0 : i32, i32
  }
  func.func @transform_10(%arg0: i32) -> (i32, i32) {
    %c0_i32 = arith.constant 0 : i32
    %c0_i32_0 = arith.constant 0 : i32
    %c0_i32_1 = arith.constant 0 : i32
    return %c0_i32, %c0_i32_0 : i32, i32
  }
  func.func @transform_11(%arg0: i32) -> (i32, i32) {
    %c0_i32 = arith.constant 0 : i32
    %c0_i32_0 = arith.constant 0 : i32
    %c0_i32_1 = arith.constant 0 : i32
    return %c0_i32, %c0_i32_0 : i32, i32
  }
  func.func @transform_12(%arg0: i32) -> (i32, i32) {
    %c0_i32 = arith.constant 0 : i32
    %c0_i32_0 = arith.constant 0 : i32
    return %arg0, %c0_i32 : i32, i32
  }
}

</mosaic_0001>

<llo_original>
// kernel: critic_forward.1
$region0: #{critic_forward.1}
  #allocation0 [shape = 'u32[]', space=smem, size = 0x4, offset = 0x4, fixed_abs, tag = 'smem constant byte address 0x4 - core index']
  #allocation1 [shape = 'u32[144,128]{1,0:T(1,128)}', space=vmem, size = 0x12000, scoped, tag = 'internal scratch']
  #allocation2 [shape = 'f32[288,64]{1,0:T(8,128)}', space=vmem, size = 0x24000, scoped, tag = 'scratch operand']
  #allocation3 [shape = 'f32[1,1]{1,0:T(1,128)S(1)}', space=vmem, size = 0x200, scoped, tag = 'scoped memory for critic_forward.1']
  %s0 = inlined_call_operand.vmem [shape: f32[4,64,32], index: 0, kind: input, shape index: {}]
  %s1 = inlined_call_operand.vmem [shape: f32[4,64,1], index: 1, kind: input, shape index: {}]
  %s2 = inlined_call_operand.vmem [shape: f32[32,64], index: 2, kind: input, shape index: {}]
  %s3 = inlined_call_operand.vmem [shape: f32[1,64], index: 3, kind: input, shape index: {}]
  %s4 = inlined_call_operand.vmem [shape: f32[9,64,32], index: 4, kind: input, shape index: {}]
  %s5 = inlined_call_operand.vmem [shape: f32[1,32], index: 5, kind: input, shape index: {}]
  %s6 = inlined_call_operand.vmem [shape: f32[512,642], index: 6, kind: input, shape index: {}]
  %s7 = inlined_call_operand.vmem [shape: f32[1,642], index: 7, kind: input, shape index: {}]
  %s8 = inlined_call_operand.vmem [shape: f32[642,128], index: 8, kind: input, shape index: {}]
  %s9 = inlined_call_operand.vmem [shape: f32[1,128], index: 9, kind: input, shape index: {}]
  %s10 = inlined_call_operand.vmem [shape: f32[128,1], index: 10, kind: input, shape index: {}]
  %s11 = inlined_call_operand.<no memory space> [shape: f32[1,1], index: 11, kind: input, shape index: {}]
  %s12 = inlined_call_operand.vmem [shape: f32[2,1], index: 12, kind: output, shape index: {}]
  %s13 = sld [smem:[#allocation0]]
  $region58: #{critic_forward.1} parent=0
    _
  %s15 = ssub.s32 1, %s13
  %s16 = scalar_select 0, %s15, %s13
  %v17 = vstv %s11
  %18 = vst [vmem:[#allocation3] sm:$0x1] %v17
  // Predicated region
  $region2: #{critic_forward.1} parent=0 // pred_check
    _
  $region3: #{critic_forward.1} parent=0 // pred_check_branch
    %20 = sbr.rel (0) target = $region5
  $region4: #{critic_forward.1} parent=0 // pred_region
    _
  $region5: #{critic_forward.1} parent=0 // pred_fallthru
    _
  // Predicated region
  $region6: #{critic_forward.1} parent=0 // pred_check
    _
  $region7: #{critic_forward.1} parent=0 // pred_check_branch
    %22 = sbr.rel (0) target = $region9
  $region8: #{critic_forward.1} parent=0 // pred_region
    _
  $region9: #{critic_forward.1} parent=0 // pred_fallthru
    _
  // Predicated region
  $region10: #{critic_forward.1} parent=0 // pred_check
    _
  $region11: #{critic_forward.1} parent=0 // pred_check_branch
    %24 = sbr.rel (0) target = $region13
  $region12: #{critic_forward.1} parent=0 // pred_region
    _
  $region13: #{critic_forward.1} parent=0 // pred_fallthru
    _
  // Predicated region
  $region14: #{critic_forward.1} parent=0 // pred_check
    _
  $region15: #{critic_forward.1} parent=0 // pred_check_branch
    %26 = sbr.rel (0) target = $region17
  $region16: #{critic_forward.1} parent=0 // pred_region
    _
  $region17: #{critic_forward.1} parent=0 // pred_fallthru
    _
  // Predicated region
  $region18: #{critic_forward.1} parent=0 // pred_check
    _
  $region19: #{critic_forward.1} parent=0 // pred_check_branch
    %28 = sbr.rel (0) target = $region21
  $region20: #{critic_forward.1} parent=0 // pred_region
    _
  $region21: #{critic_forward.1} parent=0 // pred_fallthru
    _
  // Predicated region
  $region22: #{critic_forward.1} parent=0 // pred_check
    _
  $region23: #{critic_forward.1} parent=0 // pred_check_branch
    %30 = sbr.rel (0) target = $region25
  $region24: #{critic_forward.1} parent=0 // pred_region
    _
  $region25: #{critic_forward.1} parent=0 // pred_fallthru
    _
  // Predicated region
  $region26: #{critic_forward.1} parent=0 // pred_check
    _
  $region27: #{critic_forward.1} parent=0 // pred_check_branch
    %32 = sbr.rel (0) target = $region29
  $region28: #{critic_forward.1} parent=0 // pred_region
    _
  $region29: #{critic_forward.1} parent=0 // pred_fallthru
    _
  // Predicated region
  $region30: #{critic_forward.1} parent=0 // pred_check
    _
  $region31: #{critic_forward.1} parent=0 // pred_check_branch
    %34 = sbr.rel (0) target = $region33
  $region32: #{critic_forward.1} parent=0 // pred_region
    _
  $region33: #{critic_forward.1} parent=0 // pred_fallthru
    _
  // Predicated region
  $region34: #{critic_forward.1} parent=0 // pred_check
    _
  $region35: #{critic_forward.1} parent=0 // pred_check_branch
    %36 = sbr.rel (0) target = $region37
  $region36: #{critic_forward.1} parent=0 // pred_region
    _
  $region37: #{critic_forward.1} parent=0 // pred_fallthru
    _
  // Predicated region
  $region38: #{critic_forward.1} parent=0 // pred_check
    _
  $region39: #{critic_forward.1} parent=0 // pred_check_branch
    %38 = sbr.rel (0) target = $region41
  $region40: #{critic_forward.1} parent=0 // pred_region
    _
  $region41: #{critic_forward.1} parent=0 // pred_fallthru
    _
  // Predicated region
  $region42: #{critic_forward.1} parent=0 // pred_check
    _
  $region43: #{critic_forward.1} parent=0 // pred_check_branch
    %40 = sbr.rel (0) target = $region45
  $region44: #{critic_forward.1} parent=0 // pred_region
    _
  $region45: #{critic_forward.1} parent=0 // pred_fallthru
    _
  // Predicated region
  $region46: #{critic_forward.1} parent=0 // pred_check
    _
  $region47: #{critic_forward.1} parent=0 // pred_check_branch
    %42 = sbr.rel (0) target = $region49
  $region48: #{critic_forward.1} parent=0 // pred_region
    _
  $region49: #{critic_forward.1} parent=0 // pred_fallthru
    _
  %vm43 = vcmask 523264
  %44 = vst.msk [vmem:[#allocation2] sm:$0xff] %vm43, 0.0
  %45 = vst.msk [vmem:[#allocation2 + $0x8] sm:$0xff] %vm43, 0.0
  %46 = vst.msk [vmem:[#allocation2 + $0x10] sm:$0xff] %vm43, 0.0
  %47 = vst.msk [vmem:[#allocation2 + $0x18] sm:$0xff] %vm43, 0.0
  %48 = vst.msk [vmem:[#allocation2 + $0x20] sm:$0xff] %vm43, 0.0
  %49 = vst.msk [vmem:[#allocation2 + $0x28] sm:$0xff] %vm43, 0.0
  %50 = vst.msk [vmem:[#allocation2 + $0x30] sm:$0xff] %vm43, 0.0
  %51 = vst.msk [vmem:[#allocation2 + $0x38] sm:$0xff] %vm43, 0.0
  %52 = vst.msk [vmem:[#allocation2 + $0x40] sm:$0xff] %vm43, 0.0
  %53 = vst.msk [vmem:[#allocation2 + $0x48] sm:$0xff] %vm43, 0.0
  %54 = vst.msk [vmem:[#allocation2 + $0x50] sm:$0xff] %vm43, 0.0
  %55 = vst.msk [vmem:[#allocation2 + $0x58] sm:$0xff] %vm43, 0.0
  %56 = vst.msk [vmem:[#allocation2 + $0x60] sm:$0xff] %vm43, 0.0
  %57 = vst.msk [vmem:[#allocation2 + $0x68] sm:$0xff] %vm43, 0.0
  %58 = vst.msk [vmem:[#allocation2 + $0x70] sm:$0xff] %vm43, 0.0
  %59 = vst.msk [vmem:[#allocation2 + $0x78] sm:$0xff] %vm43, 0.0
  %60 = vst.msk [vmem:[#allocation2 + $0x80] sm:$0xff] %vm43, 0.0
  %61 = vst.msk [vmem:[#allocation2 + $0x88] sm:$0xff] %vm43, 0.0
  %62 = vst.msk [vmem:[#allocation2 + $0x90] sm:$0xff] %vm43, 0.0
  %63 = vst.msk [vmem:[#allocation2 + $0x98] sm:$0xff] %vm43, 0.0
  %64 = vst.msk [vmem:[#allocation2 + $0xa0] sm:$0xff] %vm43, 0.0
  %65 = vst.msk [vmem:[#allocation2 + $0xa8] sm:$0xff] %vm43, 0.0
  %66 = vst.msk [vmem:[#allocation2 + $0xb0] sm:$0xff] %vm43, 0.0
  %67 = vst.msk [vmem:[#allocation2 + $0xb8] sm:$0xff] %vm43, 0.0
  %68 = vst.msk [vmem:[#allocation2 + $0xc0] sm:$0xff] %vm43, 0.0
  %69 = vst.msk [vmem:[#allocation2 + $0xc8] sm:$0xff] %vm43, 0.0
  %70 = vst.msk [vmem:[#allocation2 + $0xd0] sm:$0xff] %vm43, 0.0
  %71 = vst.msk [vmem:[#allocation2 + $0xd8] sm:$0xff] %vm43, 0.0
  %72 = vst.msk [vmem:[#allocation2 + $0xe0] sm:$0xff] %vm43, 0.0
  %73 = vst.msk [vmem:[#allocation2 + $0xe8] sm:$0xff] %vm43, 0.0
  %74 = vst.msk [vmem:[#allocation2 + $0xf0] sm:$0xff] %vm43, 0.0
  %75 = vst.msk [vmem:[#allocation2 + $0xf8] sm:$0xff] %vm43, 0.0
  %76 = vst.msk [vmem:[#allocation2 + $0x100] sm:$0xff] %vm43, 0.0
  %77 = vst.msk [vmem:[#allocation2 + $0x108] sm:$0xff] %vm43, 0.0
  %78 = vst.msk [vmem:[#allocation2 + $0x110] sm:$0xff] %vm43, 0.0
  %79 = vst.msk [vmem:[#allocation2 + $0x118] sm:$0xff] %vm43, 0.0
  %v80 = vld [vmem:[%s2] sm:$0xff]
  %v81 = vld [vmem:[%s2 + $0x8] sm:$0xff]
  %v82 = vld [vmem:[%s2 + $0x10] sm:$0xff]
  %v83 = vld [vmem:[%s2 + $0x18] sm:$0xff]
  %v84 = vld [vmem:[%s3] sm:$0x1]
  %v85 = vld [vmem:[%s0] sm:$0xff]
  %v86 = vld [vmem:[%s0 + $0x8] sm:$0xff]
  %v87 = vld [vmem:[%s0 + $0x10] sm:$0xff]
  %v88 = vld [vmem:[%s0 + $0x18] sm:$0xff]
  %v89 = vld [vmem:[%s0 + $0x20] sm:$0xff]
  %v90 = vld [vmem:[%s0 + $0x28] sm:$0xff]
  %v91 = vld [vmem:[%s0 + $0x30] sm:$0xff]
  %v92 = vld [vmem:[%s0 + $0x38] sm:$0xff]
  %v94 = vlaneseq
  %v95 = vshrl.u32 %v94, 7
  %v96 = vsub.s32 0, %v95
  %v97 = vrot.slane %v84, %v96
  %vm99 = vcmask 261120
  %v101 = vsel %vm99, %v85, 0
  %v104 = vsel %vm99, %v86, 0
  %v107 = vsel %vm99, %v87, 0
  %v110 = vsel %vm99, %v88, 0
  %v113 = vsel %vm99, %v89, 0
  %v116 = vsel %vm99, %v90, 0
  %v119 = vsel %vm99, %v91, 0
  %v122 = vsel %vm99, %v92, 0
  %124 = vmatprep.subr.mxu0 0.0
  %125 = vmatpush1.msra.mxu0 %v80
  %126 = vmatprep.subr.mxu0 0.0
  %127 = vmatpush1.msra.mxu0 %v81
  %128 = vmatprep.subr.mxu0 0.0
  %129 = vmatpush1.msra.mxu0 %v82
  %130 = vmatprep.subr.mxu0 0.0
  %131 = vmatpush1.msra.mxu0 %v83
  %132 = vmatprep.subr.mxu0 0.0
  %133 = vmatpush1.msra.mxu0 0.0
  %134 = vmatprep.subr.mxu0 0.0
  %135 = vmatpush1.msra.mxu0 0.0
  %136 = vmatprep.subr.mxu0 0.0
  %137 = vmatpush1.msra.mxu0 0.0
  %138 = vmatprep.subr.mxu0 0.0
  %139 = vmatpush1.msra.mxu0 0.0
  %140 = vmatprep.subr.mxu0 0.0
  %141 = vmatpush1.msra.mxu0 0.0
  %142 = vmatprep.subr.mxu0 0.0
  %143 = vmatpush1.msra.mxu0 0.0
  %144 = vmatprep.subr.mxu0 0.0
  %145 = vmatpush1.msra.mxu0 0.0
  %146 = vmatprep.subr.mxu0 0.0
  %147 = vmatpush1.msra.mxu0 0.0
  %148 = vmatprep.subr.mxu0 0.0
  %149 = vmatpush1.msra.mxu0 0.0
  %150 = vmatprep.subr.mxu0 0.0
  %151 = vmatpush1.msra.mxu0 0.0
  %152 = vmatprep.subr.mxu0 0.0
  %153 = vmatpush1.msra.mxu0 0.0
  %154 = vmatprep.subr.mxu0 0.0
  %155 = vmatpush1.msra.mxu0 0.0
  %156 = vmatprep.subr.mxu0 0.0
  %157 = vmatpush1.msra.mxu0 0.0
  %158 = vmatprep.subr.mxu0 0.0
  %159 = vmatpush1.msra.mxu0 0.0
  %160 = vmatprep.subr.mxu0 0.0
  %161 = vmatpush1.msra.mxu0 0.0
  %162 = vmatprep.subr.mxu0 0.0
  %163 = vmatpush1.msra.mxu0 0.0
  %164 = vmatprep.subr.mxu0 0.0
  %165 = vmatpush1.msra.mxu0 0.0
  %166 = vmatprep.subr.mxu0 0.0
  %167 = vmatpush1.msra.mxu0 0.0
  %168 = vmatprep.subr.mxu0 0.0
  %169 = vmatpush1.msra.mxu0 0.0
  %170 = vmatprep.subr.mxu0 0.0
  %171 = vmatpush1.msra.mxu0 0.0
  %172 = vmatprep.subr.mxu0 0.0
  %173 = vmatpush1.msra.mxu0 0.0
  %174 = vmatprep.subr.mxu0 0.0
  %175 = vmatpush1.msra.mxu0 0.0
  %176 = vmatprep.subr.mxu0 0.0
  %177 = vmatpush1.msra.mxu0 0.0
  %178 = vmatprep.subr.mxu0 0.0
  %179 = vmatpush1.msra.mxu0 0.0
  %180 = vmatprep.subr.mxu0 0.0
  %181 = vmatpush1.msra.mxu0 0.0
  %182 = vmatprep.subr.mxu0 0.0
  %183 = vmatpush1.msra.mxu0 0.0
  %184 = vmatprep.subr.mxu0 0.0
  %185 = vmatpush1.msra.mxu0 0.0
  %186 = vmatprep.subr.mxu0 0.0
  %187 = vmatpush1.msra.mxu0 0.0
  %188 = vmatprep.mubr.f32.mxu0 0.0
  %189 = vmatmul.mubr.f32.gmra.mrb[0].mxu0 %v101
  %v190 = vpop.f32.mrb[0].mxu0
  %v191 = vadd.f32 %v97, %v190
  %v192 = vpop.f32.mrb[0].mxu0
  %193 = vmatprep.mubr.f32.mxu0 0.0
  %194 = vmatmul.mubr.f32.gmra.mrb[0].mxu0 %v104
  %v195 = vpop.f32.mrb[0].mxu0
  %v196 = vadd.f32 %v97, %v195
  %v197 = vpop.f32.mrb[0].mxu0
  %198 = vmatprep.mubr.f32.mxu0 0.0
  %199 = vmatmul.mubr.f32.gmra.mrb[0].mxu0 %v107
  %v200 = vpop.f32.mrb[0].mxu0
  %v201 = vadd.f32 %v97, %v200
  %v202 = vpop.f32.mrb[0].mxu0
  %203 = vmatprep.mubr.f32.mxu0 0.0
  %204 = vmatmul.mubr.f32.gmra.mrb[0].mxu0 %v110
  %v205 = vpop.f32.mrb[0].mxu0
  %v206 = vadd.f32 %v97, %v205
  %v207 = vpop.f32.mrb[0].mxu0
  %208 = vmatprep.mubr.f32.mxu0 0.0
  %209 = vmatmul.mubr.f32.gmra.mrb[0].mxu0 %v113
  %v210 = vpop.f32.mrb[0].mxu0
  %v211 = vadd.f32 %v97, %v210
  %v212 = vpop.f32.mrb[0].mxu0
  %213 = vmatprep.mubr.f32.mxu0 0.0
  %214 = vmatmul.mubr.f32.gmra.mrb[0].mxu0 %v116
  %v215 = vpop.f32.mrb[0].mxu0
  %v216 = vadd.f32 %v97, %v215
  %v217 = vpop.f32.mrb[0].mxu0
  %218 = vmatprep.mubr.f32.mxu0 0.0
  %219 = vmatmul.mubr.f32.gmra.mrb[0].mxu0 %v119
  %v220 = vpop.f32.mrb[0].mxu0
  %v221 = vadd.f32 %v97, %v220
  %v222 = vpop.f32.mrb[0].mxu0
  %223 = vmatprep.mubr.f32.mxu0 0.0
  %224 = vmatmul.mubr.f32.gmra.mrb[0].mxu0 %v122
  %v225 = vpop.f32.mrb[0].mxu0
  %v226 = vadd.f32 %v97, %v225
  %v227 = vpop.f32.mrb[0].mxu0
  %228 = vdwg.mxu0
  %v229 = vtanh.pop %v191
  %v230 = vtanh.pop %v196
  %v231 = vtanh.pop %v201
  %v232 = vtanh.pop %v206
  %v233 = vtanh.pop %v211
  %v234 = vtanh.pop %v216
  %v235 = vtanh.pop %v221
  %v236 = vtanh.pop %v226
  %v237 = vld [vmem:[%s1] sm:$0xff]
  %v238 = vld [vmem:[%s1 + $0x8] sm:$0xff]
  %v239 = vld [vmem:[%s1 + $0x10] sm:$0xff]
  %v240 = vld [vmem:[%s1 + $0x18] sm:$0xff]
  %v241 = vld [vmem:[%s1 + $0x20] sm:$0xff]
  %v242 = vld [vmem:[%s1 + $0x28] sm:$0xff]
  %v243 = vld [vmem:[%s1 + $0x30] sm:$0xff]
  %v244 = vld [vmem:[%s1 + $0x38] sm:$0xff]
  %246 = vset.pattern.permute.xlu0 0
  %247 = vperm.xlu0 %246, %v237
  %v248 = vpop.permute.xlu0 %247
  %251 = vset.pattern.permute.xlu0 0
  %252 = vperm.xlu0 %251, %v238
  %v253 = vpop.permute.xlu0 %252
  %256 = vset.pattern.permute.xlu0 0
  %257 = vperm.xlu0 %256, %v239
  %v258 = vpop.permute.xlu0 %257
  %261 = vset.pattern.permute.xlu0 0
  %262 = vperm.xlu0 %261, %v240
  %v263 = vpop.permute.xlu0 %262
  %266 = vset.pattern.permute.xlu0 0
  %267 = vperm.xlu0 %266, %v241
  %v268 = vpop.permute.xlu0 %267
  %271 = vset.pattern.permute.xlu0 0
  %272 = vperm.xlu0 %271, %v242
  %v273 = vpop.permute.xlu0 %272
  %276 = vset.pattern.permute.xlu0 0
  %277 = vperm.xlu0 %276, %v243
  %v278 = vpop.permute.xlu0 %277
  %281 = vset.pattern.permute.xlu0 0
  %282 = vperm.xlu0 %281, %v244
  %v283 = vpop.permute.xlu0 %282
  %v285 = vmul.f32 %v229, %v248
  %v286 = vmul.f32 %v230, %v253
  %v287 = vmul.f32 %v231, %v258
  %v288 = vmul.f32 %v232, %v263
  %v289 = vmul.f32 %v233, %v268
  %v290 = vmul.f32 %v234, %v273
  %v291 = vmul.f32 %v235, %v278
  %v292 = vmul.f32 %v236, %v283
  %293 = vst.msk [vmem:[#allocation2] sm:$0xff] %vm43, %v285
  %294 = vst.msk [vmem:[#allocation2 + $0x8] sm:$0xff] %vm43, %v286
  %295 = vst.msk [vmem:[#allocation2 + $0x10] sm:$0xff] %vm43, %v287
  %296 = vst.msk [vmem:[#allocation2 + $0x18] sm:$0xff] %vm43, %v288
  %297 = vst.msk [vmem:[#allocation2 + $0x20] sm:$0xff] %vm43, %v289
  %298 = vst.msk [vmem:[#allocation2 + $0x28] sm:$0xff] %vm43, %v290
  %299 = vst.msk [vmem:[#allocation2 + $0x30] sm:$0xff] %vm43, %v291
  %300 = vst.msk [vmem:[#allocation2 + $0x38] sm:$0xff] %vm43, %v292
  %s301 = scalar_lea.vmem %s0, 64
  %v302 = vld [vmem:[%s301] sm:$0xff]
  %v303 = vld [vmem:[%s301 + $0x8] sm:$0xff]
  %v304 = vld [vmem:[%s301 + $0x10] sm:$0xff]
  %v305 = vld [vmem:[%s301 + $0x18] sm:$0xff]
  %v306 = vld [vmem:[%s301 + $0x20] sm:$0xff]
  %v307 = vld [vmem:[%s301 + $0x28] sm:$0xff]
  %v308 = vld [vmem:[%s301 + $0x30] sm:$0xff]
  %v309 = vld [vmem:[%s301 + $0x38] sm:$0xff]
  %v311 = vsel %vm99, %v302, 0
  %v314 = vsel %vm99, %v303, 0
  %v317 = vsel %vm99, %v304, 0
  %v320 = vsel %vm99, %v305, 0
  %v323 = vsel %vm99, %v306, 0
  %v326 = vsel %vm99, %v307, 0
  %v329 = vsel %vm99, %v308, 0
  %v332 = vsel %vm99, %v309, 0
  %334 = vmatprep.subr.mxu0 0.0
  %335 = vmatpush1.msra.mxu0 %v80
  %336 = vmatprep.subr.mxu0 0.0
  %337 = vmatpush1.msra.mxu0 %v81
  %338 = vmatprep.subr.mxu0 0.0
  %339 = vmatpush1.msra.mxu0 %v82
  %340 = vmatprep.subr.mxu0 0.0
  %341 = vmatpush1.msra.mxu0 %v83
  %342 = vmatprep.subr.mxu0 0.0
  %343 = vmatpush1.msra.mxu0 0.0
  %344 = vmatprep.subr.mxu0 0.0
  %345 = vmatpush1.msra.mxu0 0.0
  %346 = vmatprep.subr.mxu0 0.0
  %347 = vmatpush1.msra.mxu0 0.0
  %348 = vmatprep.subr.mxu0 0.0
  %349 = vmatpush1.msra.mxu0 0.0
  %350 = vmatprep.subr.mxu0 0.0
  %351 = vmatpush1.msra.mxu0 0.0
  %352 = vmatprep.subr.mxu0 0.0
  %353 = vmatpush1.msra.mxu0 0.0
  %354 = vmatprep.subr.mxu0 0.0
  %355 = vmatpush1.msra.mxu0 0.0
  %356 = vmatprep.subr.mxu0 0.0
  %357 = vmatpush1.msra.mxu0 0.0
  %358 = vmatprep.subr.mxu0 0.0
  %359 = vmatpush1.msra.mxu0 0.0
  %360 = vmatprep.subr.mxu0 0.0
  %361 = vmatpush1.msra.mxu0 0.0
  %362 = vmatprep.subr.mxu0 0.0
  %363 = vmatpush1.msra.mxu0 0.0
  %364 = vmatprep.subr.mxu0 0.0
  %365 = vmatpush1.msra.mxu0 0.0
  %366 = vmatprep.subr.mxu0 0.0
  %367 = vmatpush1.msra.mxu0 0.0
  %368 = vmatprep.subr.mxu0 0.0
  %369 = vmatpush1.msra.mxu0 0.0
  %370 = vmatprep.subr.mxu0 0.0
  %371 = vmatpush1.msra.mxu0 0.0
  %372 = vmatprep.subr.mxu0 0.0
  %373 = vmatpush1.msra.mxu0 0.0
  %374 = vmatprep.subr.mxu0 0.0
  %375 = vmatpush1.msra.mxu0 0.0
  %376 = vmatprep.subr.mxu0 0.0
  %377 = vmatpush1.msra.mxu0 0.0
  %378 = vmatprep.subr.mxu0 0.0
  %379 = vmatpush1.msra.mxu0 0.0
  %380 = vmatprep.subr.mxu0 0.0
  %381 = vmatpush1.msra.mxu0 0.0
  %382 = vmatprep.subr.mxu0 0.0
  %383 = vmatpush1.msra.mxu0 0.0
  %384 = vmatprep.subr.mxu0 0.0
  %385 = vmatpush1.msra.mxu0 0.0
  %386 = vmatprep.subr.mxu0 0.0
  %387 = vmatpush1.msra.mxu0 0.0
  %388 = vmatprep.subr.mxu0 0.0
  %389 = vmatpush1.msra.mxu0 0.0
  %390 = vmatprep.subr.mxu0 0.0
  %391 = vmatpush1.msra.mxu0 0.0
  %392 = vmatprep.subr.mxu0 0.0
  %393 = vmatpush1.msra.mxu0 0.0
  %394 = vmatprep.subr.mxu0 0.0
  %395 = vmatpush1.msra.mxu0 0.0
  %396 = vmatprep.subr.mxu0 0.0
  %397 = vmatpush1.msra.mxu0 0.0
  %398 = vmatprep.mubr.f32.mxu0 0.0
  %399 = vmatmul.mubr.f32.gmra.mrb[0].mxu0 %v311
  %v400 = vpop.f32.mrb[0].mxu0
  %v401 = vadd.f32 %v97, %v400
  %v402 = vpop.f32.mrb[0].mxu0
  %403 = vmatprep.mubr.f32.mxu0 0.0
  %404 = vmatmul.mubr.f32.gmra.mrb[0].mxu0 %v314
  %v405 = vpop.f32.mrb[0].mxu0
  %v406 = vadd.f32 %v97, %v405
  %v407 = vpop.f32.mrb[0].mxu0
  %408 = vmatprep.mubr.f32.mxu0 0.0
  %409 = vmatmul.mubr.f32.gmra.mrb[0].mxu0 %v317
  %v410 = vpop.f32.mrb[0].mxu0
  %v411 = vadd.f32 %v97, %v410
  %v412 = vpop.f32.mrb[0].mxu0
  %413 = vmatprep.mubr.f32.mxu0 0.0
  %414 = vmatmul.mubr.f32.gmra.mrb[0].mxu0 %v320
  %v415 = vpop.f32.mrb[0].mxu0
  %v416 = vadd.f32 %v97, %v415
  %v417 = vpop.f32.mrb[0].mxu0
  %418 = vmatprep.mubr.f32.mxu0 0.0
  %419 = vmatmul.mubr.f32.gmra.mrb[0].mxu0 %v323
  %v420 = vpop.f32.mrb[0].mxu0
  %v421 = vadd.f32 %v97, %v420
  %v422 = vpop.f32.mrb[0].mxu0
  %423 = vmatprep.mubr.f32.mxu0 0.0
  %424 = vmatmul.mubr.f32.gmra.mrb[0].mxu0 %v326
  %v425 = vpop.f32.mrb[0].mxu0
  %v426 = vadd.f32 %v97, %v425
  %v427 = vpop.f32.mrb[0].mxu0
  %428 = vmatprep.mubr.f32.mxu0 0.0
  %429 = vmatmul.mubr.f32.gmra.mrb[0].mxu0 %v329
  %v430 = vpop.f32.mrb[0].mxu0
  %v431 = vadd.f32 %v97, %v430
  %v432 = vpop.f32.mrb[0].mxu0
  %433 = vmatprep.mubr.f32.mxu0 0.0
  %434 = vmatmul.mubr.f32.gmra.mrb[0].mxu0 %v332
  %v435 = vpop.f32.mrb[0].mxu0
  %v436 = vadd.f32 %v97, %v435
  %v437 = vpop.f32.mrb[0].mxu0
  %438 = vdwg.mxu0
  %v439 = vtanh.pop %v401
  %v440 = vtanh.pop %v406
  %v441 = vtanh.pop %v411
  %v442 = vtanh.pop %v416
  %v443 = vtanh.pop %v421
  %v444 = vtanh.pop %v426
  %v445 = vtanh.pop %v431
  %v446 = vtanh.pop %v436
  %s447 = scalar_lea.vmem %s1, 64
  %v448 = vld [vmem:[%s447] sm:$0xff]
  %v449 = vld [vmem:[%s447 + $0x8] sm:$0xff]
  %v450 = vld [vmem:[%s447 + $0x10] sm:$0xff]
  %v451 = vld [vmem:[%s447 + $0x18] sm:$0xff]
  %v452 = vld [vmem:[%s447 + $0x20] sm:$0xff]
  %v453 = vld [vmem:[%s447 + $0x28] sm:$0xff]
  %v454 = vld [vmem:[%s447 + $0x30] sm:$0xff]
  %v455 = vld [vmem:[%s447 + $0x38] sm:$0xff]
  %457 = vset.pattern.permute.xlu0 0
  %458 = vperm.xlu0 %457, %v448
  %v459 = vpop.permute.xlu0 %458
  %462 = vset.pattern.permute.xlu0 0
  %463 = vperm.xlu0 %462, %v449
  %v464 = vpop.permute.xlu0 %463
  %467 = vset.pattern.permute.xlu0 0
  %468 = vperm.xlu0 %467, %v450
  %v469 = vpop.permute.xlu0 %468
  %472 = vset.pattern.permute.xlu0 0
  %473 = vperm.xlu0 %472, %v451
  %v474 = vpop.permute.xlu0 %473
  %477 = vset.pattern.permute.xlu0 0
  %478 = vperm.xlu0 %477, %v452
  %v479 = vpop.permute.xlu0 %478
  %482 = vset.pattern.permute.xlu0 0
  %483 = vperm.xlu0 %482, %v453
  %v484 = vpop.permute.xlu0 %483
  %487 = vset.pattern.permute.xlu0 0
  %488 = vperm.xlu0 %487, %v454
  %v489 = vpop.permute.xlu0 %488
  %492 = vset.pattern.permute.xlu0 0
  %493 = vperm.xlu0 %492, %v455
  %v494 = vpop.permute.xlu0 %493
  %v496 = vmul.f32 %v439, %v459
  %v497 = vmul.f32 %v440, %v464
  %v498 = vmul.f32 %v441, %v469
  %v499 = vmul.f32 %v442, %v474
  %v500 = vmul.f32 %v443, %v479
  %v501 = vmul.f32 %v444, %v484
  %v502 = vmul.f32 %v445, %v489
  %v503 = vmul.f32 %v446, %v494
  %504 = vst.msk [vmem:[#allocation2 + $0x48] sm:$0xff] %vm43, %v496
  %505 = vst.msk [vmem:[#allocation2 + $0x50] sm:$0xff] %vm43, %v497
  %506 = vst.msk [vmem:[#allocation2 + $0x58] sm:$0xff] %vm43, %v498
  %507 = vst.msk [vmem:[#allocation2 + $0x60] sm:$0xff] %vm43, %v499
  %508 = vst.msk [vmem:[#allocation2 + $0x68] sm:$0xff] %vm43, %v500
  %509 = vst.msk [vmem:[#allocation2 + $0x70] sm:$0xff] %vm43, %v501
  %510 = vst.msk [vmem:[#allocation2 + $0x78] sm:$0xff] %vm43, %v502
  %511 = vst.msk [vmem:[#allocation2 + $0x80] sm:$0xff] %vm43, %v503
  %s512 = scalar_lea.vmem %s0, 128
  %v513 = vld [vmem:[%s512] sm:$0xff]
  %v514 = vld [vmem:[%s512 + $0x8] sm:$0xff]
  %v515 = vld [vmem:[%s512 + $0x10] sm:$0xff]
  %v516 = vld [vmem:[%s512 + $0x18] sm:$0xff]
  %v517 = vld [vmem:[%s512 + $0x20] sm:$0xff]
  %v518 = vld [vmem:[%s512 + $0x28] sm:$0xff]
  %v519 = vld [vmem:[%s512 + $0x30] sm:$0xff]
  %v520 = vld [vmem:[%s512 + $0x38] sm:$0xff]
  %v522 = vsel %vm99, %v513, 0
  %v525 = vsel %vm99, %v514, 0
  %v528 = vsel %vm99, %v515, 0
  %v531 = vsel %vm99, %v516, 0
  %v534 = vsel %vm99, %v517, 0
  %v537 = vsel %vm99, %v518, 0
  %v540 = vsel %vm99, %v519, 0
  %v543 = vsel %vm99, %v520, 0
  %545 = vmatprep.subr.mxu0 0.0
  %546 = vmatpush1.msra.mxu0 %v80
  %547 = vmatprep.subr.mxu0 0.0
  %548 = vmatpush1.msra.mxu0 %v81
  %549 = vmatprep.subr.mxu0 0.0
  %550 = vmatpush1.msra.mxu0 %v82
  %551 = vmatprep.subr.mxu0 0.0
  %552 = vmatpush1.msra.mxu0 %v83
  %553 = vmatprep.subr.mxu0 0.0
  %554 = vmatpush1.msra.mxu0 0.0
  %555 = vmatprep.subr.mxu0 0.0
  %556 = vmatpush1.msra.mxu0 0.0
  %557 = vmatprep.subr.mxu0 0.0
  %558 = vmatpush1.msra.mxu0 0.0
  %559 = vmatprep.subr.mxu0 0.0
  %560 = vmatpush1.msra.mxu0 0.0
  %561 = vmatprep.subr.mxu0 0.0
  %562 = vmatpush1.msra.mxu0 0.0
  %563 = vmatprep.subr.mxu0 0.0
  %564 = vmatpush1.msra.mxu0 0.0
  %565 = vmatprep.subr.mxu0 0.0
  %566 = vmatpush1.msra.mxu0 0.0
  %567 = vmatprep.subr.mxu0 0.0
  %568 = vmatpush1.msra.mxu0 0.0
  %569 = vmatprep.subr.mxu0 0.0
  %570 = vmatpush1.msra.mxu0 0.0
  %571 = vmatprep.subr.mxu0 0.0
  %572 = vmatpush1.msra.mxu0 0.0
  %573 = vmatprep.subr.mxu0 0.0
  %574 = vmatpush1.msra.mxu0 0.0
  %575 = vmatprep.subr.mxu0 0.0
  %576 = vmatpush1.msra.mxu0 0.0
  %577 = vmatprep.subr.mxu0 0.0
  %578 = vmatpush1.msra.mxu0 0.0
  %579 = vmatprep.subr.mxu0 0.0
  %580 = vmatpush1.msra.mxu0 0.0
  %581 = vmatprep.subr.mxu0 0.0
  %582 = vmatpush1.msra.mxu0 0.0
  %583 = vmatprep.subr.mxu0 0.0
  %584 = vmatpush1.msra.mxu0 0.0
  %585 = vmatprep.subr.mxu0 0.0
  %586 = vmatpush1.msra.mxu0 0.0
  %587 = vmatprep.subr.mxu0 0.0
  %588 = vmatpush1.msra.mxu0 0.0
  %589 = vmatprep.subr.mxu0 0.0
  %590 = vmatpush1.msra.mxu0 0.0
  %591 = vmatprep.subr.mxu0 0.0
  %592 = vmatpush1.msra.mxu0 0.0
  %593 = vmatprep.subr.mxu0 0.0
  %594 = vmatpush1.msra.mxu0 0.0
  %595 = vmatprep.subr.mxu0 0.0
  %596 = vmatpush1.msra.mxu0 0.0
  %597 = vmatprep.subr.mxu0 0.0
  %598 = vmatpush1.msra.mxu0 0.0
  %599 = vmatprep.subr.mxu0 0.0
  %600 = vmatpush1.msra.mxu0 0.0
  %601 = vmatprep.subr.mxu0 0.0
  %602 = vmatpush1.msra.mxu0 0.0
  %603 = vmatprep.subr.mxu0 0.0
  %604 = vmatpush1.msra.mxu0 0.0
  %605 = vmatprep.subr.mxu0 0.0
  %606 = vmatpush1.msra.mxu0 0.0
  %607 = vmatprep.subr.mxu0 0.0
  %608 = vmatpush1.msra.mxu0 0.0
  %609 = vmatprep.mubr.f32.mxu0 0.0
  %610 = vmatmul.mubr.f32.gmra.mrb[0].mxu0 %v522
  %v611 = vpop.f32.mrb[0].mxu0
  %v612 = vadd.f32 %v97, %v611
  %v613 = vpop.f32.mrb[0].mxu0
  %614 = vmatprep.mubr.f32.mxu0 0.0
  %615 = vmatmul.mubr.f32.gmra.mrb[0].mxu0 %v525
  %v616 = vpop.f32.mrb[0].mxu0
  %v617 = vadd.f32 %v97, %v616
  %v618 = vpop.f32.mrb[0].mxu0
  %619 = vmatprep.mubr.f32.mxu0 0.0
  %620 = vmatmul.mubr.f32.gmra.mrb[0].mxu0 %v528
  %v621 = vpop.f32.mrb[0].mxu0
  %v622 = vadd.f32 %v97, %v621
  %v623 = vpop.f32.mrb[0].mxu0
  %624 = vmatprep.mubr.f32.mxu0 0.0
  %625 = vmatmul.mubr.f32.gmra.mrb[0].mxu0 %v531
  %v626 = vpop.f32.mrb[0].mxu0
  %v627 = vadd.f32 %v97, %v626
  %v628 = vpop.f32.mrb[0].mxu0
  %629 = vmatprep.mubr.f32.mxu0 0.0
  %630 = vmatmul.mubr.f32.gmra.mrb[0].mxu0 %v534
  %v631 = vpop.f32.mrb[0].mxu0
  %v632 = vadd.f32 %v97, %v631
  %v633 = vpop.f32.mrb[0].mxu0
  %634 = vmatprep.mubr.f32.mxu0 0.0
  %635 = vmatmul.mubr.f32.gmra.mrb[0].mxu0 %v537
  %v636 = vpop.f32.mrb[0].mxu0
  %v637 = vadd.f32 %v97, %v636
  %v638 = vpop.f32.mrb[0].mxu0
  %639 = vmatprep.mubr.f32.mxu0 0.0
  %640 = vmatmul.mubr.f32.gmra.mrb[0].mxu0 %v540
  %v641 = vpop.f32.mrb[0].mxu0
  %v642 = vadd.f32 %v97, %v641
  %v643 = vpop.f32.mrb[0].mxu0
  %644 = vmatprep.mubr.f32.mxu0 0.0
  %645 = vmatmul.mubr.f32.gmra.mrb[0].mxu0 %v543
  %v646 = vpop.f32.mrb[0].mxu0
  %v647 = vadd.f32 %v97, %v646
  %v648 = vpop.f32.mrb[0].mxu0
  %649 = vdwg.mxu0
  %v650 = vtanh.pop %v612
  %v651 = vtanh.pop %v617
  %v652 = vtanh.pop %v622
  %v653 = vtanh.pop %v627
  %v654 = vtanh.pop %v632
  %v655 = vtanh.pop %v637
  %v656 = vtanh.pop %v642
  %v657 = vtanh.pop %v647
  %s658 = scalar_lea.vmem %s1, 128
  %v659 = vld [vmem:[%s658] sm:$0xff]
  %v660 = vld [vmem:[%s658 + $0x8] sm:$0xff]
  %v661 = vld [vmem:[%s658 + $0x10] sm:$0xff]
  %v662 = vld [vmem:[%s658 + $0x18] sm:$0xff]
  %v663 = vld [vmem:[%s658 + $0x20] sm:$0xff]
  %v664 = vld [vmem:[%s658 + $0x28] sm:$0xff]
  %v665 = vld [vmem:[%s658 + $0x30] sm:$0xff]
  %v666 = vld [vmem:[%s658 + $0x38] sm:$0xff]
  %668 = vset.pattern.permute.xlu0 0
  %669 = vperm.xlu0 %668, %v659
  %v670 = vpop.permute.xlu0 %669
  %673 = vset.pattern.permute.xlu0 0
  %674 = vperm.xlu0 %673, %v660
  %v675 = vpop.permute.xlu0 %674
  %678 = vset.pattern.permute.xlu0 0
  %679 = vperm.xlu0 %678, %v661
  %v680 = vpop.permute.xlu0 %679
  %683 = vset.pattern.permute.xlu0 0
  %684 = vperm.xlu0 %683, %v662
  %v685 = vpop.permute.xlu0 %684
  %688 = vset.pattern.permute.xlu0 0
  %689 = vperm.xlu0 %688, %v663
  %v690 = vpop.permute.xlu0 %689
  %693 = vset.pattern.permute.xlu0 0
  %694 = vperm.xlu0 %693, %v664
  %v695 = vpop.permute.xlu0 %694
  %698 = vset.pattern.permute.xlu0 0
  %699 = vperm.xlu0 %698, %v665
  %v700 = vpop.permute.xlu0 %699
  %703 = vset.pattern.permute.xlu0 0
  %704 = vperm.xlu0 %703, %v666
  %v705 = vpop.permute.xlu0 %704
  %v707 = vmul.f32 %v650, %v670
  %v708 = vmul.f32 %v651, %v675
  %v709 = vmul.f32 %v652, %v680
  %v710 = vmul.f32 %v653, %v685
  %v711 = vmul.f32 %v654, %v690
  %v712 = vmul.f32 %v655, %v695
  %v713 = vmul.f32 %v656, %v700
  %v714 = vmul.f32 %v657, %v705
  %715 = vst.msk [vmem:[#allocation2 + $0x90] sm:$0xff] %vm43, %v707
  %716 = vst.msk [vmem:[#allocation2 + $0x98] sm:$0xff] %vm43, %v708
  %717 = vst.msk [vmem:[#allocation2 + $0xa0] sm:$0xff] %vm43, %v709
  %718 = vst.msk [vmem:[#allocation2 + $0xa8] sm:$0xff] %vm43, %v710
  %719 = vst.msk [vmem:[#allocation2 + $0xb0] sm:$0xff] %vm43, %v711
  %720 = vst.msk [vmem:[#allocation2 + $0xb8] sm:$0xff] %vm43, %v712
  %721 = vst.msk [vmem:[#allocation2 + $0xc0] sm:$0xff] %vm43, %v713
  %722 = vst.msk [vmem:[#allocation2 + $0xc8] sm:$0xff] %vm43, %v714
  %s723 = scalar_lea.vmem %s0, 192
  %v724 = vld [vmem:[%s723] sm:$0xff]
  %v725 = vld [vmem:[%s723 + $0x8] sm:$0xff]
  %v726 = vld [vmem:[%s723 + $0x10] sm:$0xff]
  %v727 = vld [vmem:[%s723 + $0x18] sm:$0xff]
  %v728 = vld [vmem:[%s723 + $0x20] sm:$0xff]
  %v729 = vld [vmem:[%s723 + $0x28] sm:$0xff]
  %v730 = vld [vmem:[%s723 + $0x30] sm:$0xff]
  %v731 = vld [vmem:[%s723 + $0x38] sm:$0xff]
  %v733 = vsel %vm99, %v724, 0
  %v736 = vsel %vm99, %v725, 0
  %v739 = vsel %vm99, %v726, 0
  %v742 = vsel %vm99, %v727, 0
  %v745 = vsel %vm99, %v728, 0
  %v748 = vsel %vm99, %v729, 0
  %v751 = vsel %vm99, %v730, 0
  %v754 = vsel %vm99, %v731, 0
  %756 = vmatprep.subr.mxu0 0.0
  %757 = vmatpush1.msra.mxu0 %v80
  %758 = vmatprep.subr.mxu0 0.0
  %759 = vmatpush1.msra.mxu0 %v81
  %760 = vmatprep.subr.mxu0 0.0
  %761 = vmatpush1.msra.mxu0 %v82
  %762 = vmatprep.subr.mxu0 0.0
  %763 = vmatpush1.msra.mxu0 %v83
  %764 = vmatprep.subr.mxu0 0.0
  %765 = vmatpush1.msra.mxu0 0.0
  %766 = vmatprep.subr.mxu0 0.0
  %767 = vmatpush1.msra.mxu0 0.0
  %768 = vmatprep.subr.mxu0 0.0
  %769 = vmatpush1.msra.mxu0 0.0
  %770 = vmatprep.subr.mxu0 0.0
  %771 = vmatpush1.msra.mxu0 0.0
  %772 = vmatprep.subr.mxu0 0.0
  %773 = vmatpush1.msra.mxu0 0.0
  %774 = vmatprep.subr.mxu0 0.0
  %775 = vmatpush1.msra.mxu0 0.0
  %776 = vmatprep.subr.mxu0 0.0
  %777 = vmatpush1.msra.mxu0 0.0
  %778 = vmatprep.subr.mxu0 0.0
  %779 = vmatpush1.msra.mxu0 0.0
  %780 = vmatprep.subr.mxu0 0.0
  %781 = vmatpush1.msra.mxu0 0.0
  %782 = vmatprep.subr.mxu0 0.0
  %783 = vmatpush1.msra.mxu0 0.0
  %784 = vmatprep.subr.mxu0 0.0
  %785 = vmatpush1.msra.mxu0 0.0
  %786 = vmatprep.subr.mxu0 0.0
  %787 = vmatpush1.msra.mxu0 0.0
  %788 = vmatprep.subr.mxu0 0.0
  %789 = vmatpush1.msra.mxu0 0.0
  %790 = vmatprep.subr.mxu0 0.0
  %791 = vmatpush1.msra.mxu0 0.0
  %792 = vmatprep.subr.mxu0 0.0
  %793 = vmatpush1.msra.mxu0 0.0
  %794 = vmatprep.subr.mxu0 0.0
  %795 = vmatpush1.msra.mxu0 0.0
  %796 = vmatprep.subr.mxu0 0.0
  %797 = vmatpush1.msra.mxu0 0.0
  %798 = vmatprep.subr.mxu0 0.0
  %799 = vmatpush1.msra.mxu0 0.0
  %800 = vmatprep.subr.mxu0 0.0
  %801 = vmatpush1.msra.mxu0 0.0
  %802 = vmatprep.subr.mxu0 0.0
  %803 = vmatpush1.msra.mxu0 0.0
  %804 = vmatprep.subr.mxu0 0.0
  %805 = vmatpush1.msra.mxu0 0.0
  %806 = vmatprep.subr.mxu0 0.0
  %807 = vmatpush1.msra.mxu0 0.0
  %808 = vmatprep.subr.mxu0 0.0
  %809 = vmatpush1.msra.mxu0 0.0
  %810 = vmatprep.subr.mxu0 0.0
  %811 = vmatpush1.msra.mxu0 0.0
  %812 = vmatprep.subr.mxu0 0.0
  %813 = vmatpush1.msra.mxu0 0.0
  %814 = vmatprep.subr.mxu0 0.0
  %815 = vmatpush1.msra.mxu0 0.0
  %816 = vmatprep.subr.mxu0 0.0
  %817 = vmatpush1.msra.mxu0 0.0
  %818 = vmatprep.subr.mxu0 0.0
  %819 = vmatpush1.msra.mxu0 0.0
  %820 = vmatprep.mubr.f32.mxu0 0.0
  %821 = vmatmul.mubr.f32.gmra.mrb[0].mxu0 %v733
  %v822 = vpop.f32.mrb[0].mxu0
  %v823 = vadd.f32 %v97, %v822
  %v824 = vpop.f32.mrb[0].mxu0
  %825 = vmatprep.mubr.f32.mxu0 0.0
  %826 = vmatmul.mubr.f32.gmra.mrb[0].mxu0 %v736
  %v827 = vpop.f32.mrb[0].mxu0
  %v828 = vadd.f32 %v97, %v827
  %v829 = vpop.f32.mrb[0].mxu0
  %830 = vmatprep.mubr.f32.mxu0 0.0
  %831 = vmatmul.mubr.f32.gmra.mrb[0].mxu0 %v739
  %v832 = vpop.f32.mrb[0].mxu0
  %v833 = vadd.f32 %v97, %v832
  %v834 = vpop.f32.mrb[0].mxu0
  %835 = vmatprep.mubr.f32.mxu0 0.0
  %836 = vmatmul.mubr.f32.gmra.mrb[0].mxu0 %v742
  %v837 = vpop.f32.mrb[0].mxu0
  %v838 = vadd.f32 %v97, %v837
  %v839 = vpop.f32.mrb[0].mxu0
  %840 = vmatprep.mubr.f32.mxu0 0.0
  %841 = vmatmul.mubr.f32.gmra.mrb[0].mxu0 %v745
  %v842 = vpop.f32.mrb[0].mxu0
  %v843 = vadd.f32 %v97, %v842
  %v844 = vpop.f32.mrb[0].mxu0
  %845 = vmatprep.mubr.f32.mxu0 0.0
  %846 = vmatmul.mubr.f32.gmra.mrb[0].mxu0 %v748
  %v847 = vpop.f32.mrb[0].mxu0
  %v848 = vadd.f32 %v97, %v847
  %v849 = vpop.f32.mrb[0].mxu0
  %850 = vmatprep.mubr.f32.mxu0 0.0
  %851 = vmatmul.mubr.f32.gmra.mrb[0].mxu0 %v751
  %v852 = vpop.f32.mrb[0].mxu0
  %v853 = vadd.f32 %v97, %v852
  %v854 = vpop.f32.mrb[0].mxu0
  %855 = vmatprep.mubr.f32.mxu0 0.0
  %856 = vmatmul.mubr.f32.gmra.mrb[0].mxu0 %v754
  %v857 = vpop.f32.mrb[0].mxu0
  %v858 = vadd.f32 %v97, %v857
  %v859 = vpop.f32.mrb[0].mxu0
  %860 = vdwg.mxu0
  %v861 = vtanh.pop %v823
  %v862 = vtanh.pop %v828
  %v863 = vtanh.pop %v833
  %v864 = vtanh.pop %v838
  %v865 = vtanh.pop %v843
  %v866 = vtanh.pop %v848
  %v867 = vtanh.pop %v853
  %v868 = vtanh.pop %v858
  %s869 = scalar_lea.vmem %s1, 192
  %v870 = vld [vmem:[%s869] sm:$0xff]
  %v871 = vld [vmem:[%s869 + $0x8] sm:$0xff]
  %v872 = vld [vmem:[%s869 + $0x10] sm:$0xff]
  %v873 = vld [vmem:[%s869 + $0x18] sm:$0xff]
  %v874 = vld [vmem:[%s869 + $0x20] sm:$0xff]
  %v875 = vld [vmem:[%s869 + $0x28] sm:$0xff]
  %v876 = vld [vmem:[%s869 + $0x30] sm:$0xff]
  %v877 = vld [vmem:[%s869 + $0x38] sm:$0xff]
  %879 = vset.pattern.permute.xlu0 0
  %880 = vperm.xlu0 %879, %v870
  %v881 = vpop.permute.xlu0 %880
  %884 = vset.pattern.permute.xlu0 0
  %885 = vperm.xlu0 %884, %v871
  %v886 = vpop.permute.xlu0 %885
  %889 = vset.pattern.permute.xlu0 0
  %890 = vperm.xlu0 %889, %v872
  %v891 = vpop.permute.xlu0 %890
  %894 = vset.pattern.permute.xlu0 0
  %895 = vperm.xlu0 %894, %v873
  %v896 = vpop.permute.xlu0 %895
  %899 = vset.pattern.permute.xlu0 0
  %900 = vperm.xlu0 %899, %v874
  %v901 = vpop.permute.xlu0 %900
  %904 = vset.pattern.permute.xlu0 0
  %905 = vperm.xlu0 %904, %v875
  %v906 = vpop.permute.xlu0 %905
  %909 = vset.pattern.permute.xlu0 0
  %910 = vperm.xlu0 %909, %v876
  %v911 = vpop.permute.xlu0 %910
  %914 = vset.pattern.permute.xlu0 0
  %915 = vperm.xlu0 %914, %v877
  %v916 = vpop.permute.xlu0 %915
  %v918 = vmul.f32 %v861, %v881
  %v919 = vmul.f32 %v862, %v886
  %v920 = vmul.f32 %v863, %v891
  %v921 = vmul.f32 %v864, %v896
  %v922 = vmul.f32 %v865, %v901
  %v923 = vmul.f32 %v866, %v906
  %v924 = vmul.f32 %v867, %v911
  %v925 = vmul.f32 %v868, %v916
  %926 = vst.msk [vmem:[#allocation2 + $0xd8] sm:$0xff] %vm43, %v918
  %927 = vst.msk [vmem:[#allocation2 + $0xe0] sm:$0xff] %vm43, %v919
  %928 = vst.msk [vmem:[#allocation2 + $0xe8] sm:$0xff] %vm43, %v920
  %929 = vst.msk [vmem:[#allocation2 + $0xf0] sm:$0xff] %vm43, %v921
  %930 = vst.msk [vmem:[#allocation2 + $0xf8] sm:$0xff] %vm43, %v922
  %931 = vst.msk [vmem:[#allocation2 + $0x100] sm:$0xff] %vm43, %v923
  %932 = vst.msk [vmem:[#allocation2 + $0x108] sm:$0xff] %vm43, %v924
  %933 = vst.msk [vmem:[#allocation2 + $0x110] sm:$0xff] %vm43, %v925
  %v934 = vld [vmem:[#allocation2] sm:$0xff]
  %v935 = vld [vmem:[#allocation2 + $0x8] sm:$0xff]
  %v936 = vld [vmem:[#allocation2 + $0x10] sm:$0xff]
  %v937 = vld [vmem:[#allocation2 + $0x18] sm:$0xff]
  %v938 = vld [vmem:[#allocation2 + $0x20] sm:$0xff]
  %v939 = vld [vmem:[#allocation2 + $0x28] sm:$0xff]
  %v940 = vld [vmem:[#allocation2 + $0x30] sm:$0xff]
  %v941 = vld [vmem:[#allocation2 + $0x38] sm:$0xff]
  %v942 = vld [vmem:[%s4] sm:$0xff]
  %v943 = vld [vmem:[%s4 + $0x8] sm:$0xff]
  %v944 = vld [vmem:[%s4 + $0x10] sm:$0xff]
  %v945 = vld [vmem:[%s4 + $0x18] sm:$0xff]
  %v946 = vld [vmem:[%s4 + $0x20] sm:$0xff]
  %v947 = vld [vmem:[%s4 + $0x28] sm:$0xff]
  %v948 = vld [vmem:[%s4 + $0x30] sm:$0xff]
  %v949 = vld [vmem:[%s4 + $0x38] sm:$0xff]
  %v950 = vld [vmem:[#allocation2 + $0x48] sm:$0xff]
  %v951 = vld [vmem:[#allocation2 + $0x50] sm:$0xff]
  %v952 = vld [vmem:[#allocation2 + $0x58] sm:$0xff]
  %v953 = vld [vmem:[#allocation2 + $0x60] sm:$0xff]
  %v954 = vld [vmem:[#allocation2 + $0x68] sm:$0xff]
  %v955 = vld [vmem:[#allocation2 + $0x70] sm:$0xff]
  %v956 = vld [vmem:[#allocation2 + $0x78] sm:$0xff]
  %v957 = vld [vmem:[#allocation2 + $0x80] sm:$0xff]
  %s958 = scalar_lea.vmem %s4, 64
  %v959 = vld [vmem:[%s958] sm:$0xff]
  %v960 = vld [vmem:[%s958 + $0x8] sm:$0xff]
  %v961 = vld [vmem:[%s958 + $0x10] sm:$0xff]
  %v962 = vld [vmem:[%s958 + $0x18] sm:$0xff]
  %v963 = vld [vmem:[%s958 + $0x20] sm:$0xff]
  %v964 = vld [vmem:[%s958 + $0x28] sm:$0xff]
  %v965 = vld [vmem:[%s958 + $0x30] sm:$0xff]
  %v966 = vld [vmem:[%s958 + $0x38] sm:$0xff]
  %v968 = vsel %vm43, %v950, 0
  %v971 = vsel %vm43, %v951, 0
  %v974 = vsel %vm43, %v952, 0
  %v977 = vsel %vm43, %v953, 0
  %v980 = vsel %vm43, %v954, 0
  %v983 = vsel %vm43, %v955, 0
  %v986 = vsel %vm43, %v956, 0
  %v989 = vsel %vm43, %v957, 0
  %991 = vmatprep.subr.mxu0 0.0
  %992 = vmatpush1.msra.mxu0 %v959
  %993 = vmatprep.subr.mxu0 0.0
  %994 = vmatpush1.msra.mxu0 %v960
  %995 = vmatprep.subr.mxu0 0.0
  %996 = vmatpush1.msra.mxu0 %v961
  %997 = vmatprep.subr.mxu0 0.0
  %998 = vmatpush1.msra.mxu0 %v962
  %999 = vmatprep.subr.mxu0 0.0
  %1000 = vmatpush1.msra.mxu0 %v963
  %1001 = vmatprep.subr.mxu0 0.0
  %1002 = vmatpush1.msra.mxu0 %v964
  %1003 = vmatprep.subr.mxu0 0.0
  %1004 = vmatpush1.msra.mxu0 %v965
  %1005 = vmatprep.subr.mxu0 0.0
  %1006 = vmatpush1.msra.mxu0 %v966
  %1007 = vmatprep.subr.mxu0 0.0
  %1008 = vmatpush1.msra.mxu0 0.0
  %1009 = vmatprep.subr.mxu0 0.0
  %1010 = vmatpush1.msra.mxu0 0.0
  %1011 = vmatprep.subr.mxu0 0.0
  %1012 = vmatpush1.msra.mxu0 0.0
  %1013 = vmatprep.subr.mxu0 0.0
  %1014 = vmatpush1.msra.mxu0 0.0
  %1015 = vmatprep.subr.mxu0 0.0
  %1016 = vmatpush1.msra.mxu0 0.0
  %1017 = vmatprep.subr.mxu0 0.0
  %1018 = vmatpush1.msra.mxu0 0.0
  %1019 = vmatprep.subr.mxu0 0.0
  %1020 = vmatpush1.msra.mxu0 0.0
  %1021 = vmatprep.subr.mxu0 0.0
  %1022 = vmatpush1.msra.mxu0 0.0
  %1023 = vmatprep.subr.mxu0 0.0
  %1024 = vmatpush1.msra.mxu0 0.0
  %1025 = vmatprep.subr.mxu0 0.0
  %1026 = vmatpush1.msra.mxu0 0.0
  %1027 = vmatprep.subr.mxu0 0.0
  %1028 = vmatpush1.msra.mxu0 0.0
  %1029 = vmatprep.subr.mxu0 0.0
  %1030 = vmatpush1.msra.mxu0 0.0
  %1031 = vmatprep.subr.mxu0 0.0
  %1032 = vmatpush1.msra.mxu0 0.0
  %1033 = vmatprep.subr.mxu0 0.0
  %1034 = vmatpush1.msra.mxu0 0.0
  %1035 = vmatprep.subr.mxu0 0.0
  %1036 = vmatpush1.msra.mxu0 0.0
  %1037 = vmatprep.subr.mxu0 0.0
  %1038 = vmatpush1.msra.mxu0 0.0
  %1039 = vmatprep.subr.mxu0 0.0
  %1040 = vmatpush1.msra.mxu0 0.0
  %1041 = vmatprep.subr.mxu0 0.0
  %1042 = vmatpush1.msra.mxu0 0.0
  %1043 = vmatprep.subr.mxu0 0.0
  %1044 = vmatpush1.msra.mxu0 0.0
  %1045 = vmatprep.subr.mxu0 0.0
  %1046 = vmatpush1.msra.mxu0 0.0
  %1047 = vmatprep.subr.mxu0 0.0
  %1048 = vmatpush1.msra.mxu0 0.0
  %1049 = vmatprep.subr.mxu0 0.0
  %1050 = vmatpush1.msra.mxu0 0.0
  %1051 = vmatprep.subr.mxu0 0.0
  %1052 = vmatpush1.msra.mxu0 0.0
  %1053 = vmatprep.subr.mxu0 0.0
  %1054 = vmatpush1.msra.mxu0 0.0
  %1055 = vmatprep.mubr.f32.mxu0 0.0
  %1056 = vmatmul.mubr.f32.gmra.mrb[0].mxu0 %v968
  %v1057 = vpop.f32.mrb[0].mxu0
  %v1058 = vadd.f32 0.0, %v1057
  %v1059 = vpop.f32.mrb[0].mxu0
  %1060 = vmatprep.mubr.f32.mxu0 0.0
  %1061 = vmatmul.mubr.f32.gmra.mrb[0].mxu0 %v971
  %v1062 = vpop.f32.mrb[0].mxu0
  %v1063 = vadd.f32 0.0, %v1062
  %v1064 = vpop.f32.mrb[0].mxu0
  %1065 = vmatprep.mubr.f32.mxu0 0.0
  %1066 = vmatmul.mubr.f32.gmra.mrb[0].mxu0 %v974
  %v1067 = vpop.f32.mrb[0].mxu0
  %v1068 = vadd.f32 0.0, %v1067
  %v1069 = vpop.f32.mrb[0].mxu0
  %1070 = vmatprep.mubr.f32.mxu0 0.0
  %1071 = vmatmul.mubr.f32.gmra.mrb[0].mxu0 %v977
  %v1072 = vpop.f32.mrb[0].mxu0
  %v1073 = vadd.f32 0.0, %v1072
  %v1074 = vpop.f32.mrb[0].mxu0
  %1075 = vmatprep.mubr.f32.mxu0 0.0
  %1076 = vmatmul.mubr.f32.gmra.mrb[0].mxu0 %v980
  %v1077 = vpop.f32.mrb[0].mxu0
  %v1078 = vadd.f32 0.0, %v1077
  %v1079 = vpop.f32.mrb[0].mxu0
  %1080 = vmatprep.mubr.f32.mxu0 0.0
  %1081 = vmatmul.mubr.f32.gmra.mrb[0].mxu0 %v983
  %v1082 = vpop.f32.mrb[0].mxu0
  %v1083 = vadd.f32 0.0, %v1082
  %v1084 = vpop.f32.mrb[0].mxu0
  %1085 = vmatprep.mubr.f32.mxu0 0.0
  %1086 = vmatmul.mubr.f32.gmra.mrb[0].mxu0 %v986
  %v1087 = vpop.f32.mrb[0].mxu0
  %v1088 = vadd.f32 0.0, %v1087
  %v1089 = vpop.f32.mrb[0].mxu0
  %1090 = vmatprep.mubr.f32.mxu0 0.0
  %1091 = vmatmul.mubr.f32.gmra.mrb[0].mxu0 %v989
  %v1092 = vpop.f32.mrb[0].mxu0
  %v1093 = vadd.f32 0.0, %v1092
  %v1094 = vpop.f32.mrb[0].mxu0
  %1095 = vdwg.mxu0
  %v1097 = vsel %vm43, %v934, 0
  %v1100 = vsel %vm43, %v935, 0
  %v1103 = vsel %vm43, %v936, 0
  %v1106 = vsel %vm43, %v937, 0
  %v1109 = vsel %vm43, %v938, 0
  %v1112 = vsel %vm43, %v939, 0
  %v1115 = vsel %vm43, %v940, 0
  %v1118 = vsel %vm43, %v941, 0
  %1120 = vmatprep.subr.mxu0 0.0
  %1121 = vmatpush1.msra.mxu0 %v942
  %1122 = vmatprep.subr.mxu0 0.0
  %1123 = vmatpush1.msra.mxu0 %v943
  %1124 = vmatprep.subr.mxu0 0.0
  %1125 = vmatpush1.msra.mxu0 %v944
  %1126 = vmatprep.subr.mxu0 0.0
  %1127 = vmatpush1.msra.mxu0 %v945
  %1128 = vmatprep.subr.mxu0 0.0
  %1129 = vmatpush1.msra.mxu0 %v946
  %1130 = vmatprep.subr.mxu0 0.0
  %1131 = vmatpush1.msra.mxu0 %v947
  %1132 = vmatprep.subr.mxu0 0.0
  %1133 = vmatpush1.msra.mxu0 %v948
  %1134 = vmatprep.subr.mxu0 0.0
  %1135 = vmatpush1.msra.mxu0 %v949
  %1136 = vmatprep.subr.mxu0 0.0
  %1137 = vmatpush1.msra.mxu0 0.0
  %1138 = vmatprep.subr.mxu0 0.0
  %1139 = vmatpush1.msra.mxu0 0.0
  %1140 = vmatprep.subr.mxu0 0.0
  %1141 = vmatpush1.msra.mxu0 0.0
  %1142 = vmatprep.subr.mxu0 0.0
  %1143 = vmatpush1.msra.mxu0 0.0
  %1144 = vmatprep.subr.mxu0 0.0
  %1145 = vmatpush1.msra.mxu0 0.0
  %1146 = vmatprep.subr.mxu0 0.0
  %1147 = vmatpush1.msra.mxu0 0.0
  %1148 = vmatprep.subr.mxu0 0.0
  %1149 = vmatpush1.msra.mxu0 0.0
  %1150 = vmatprep.subr.mxu0 0.0
  %1151 = vmatpush1.msra.mxu0 0.0
  %1152 = vmatprep.subr.mxu0 0.0
  %1153 = vmatpush1.msra.mxu0 0.0
  %1154 = vmatprep.subr.mxu0 0.0
  %1155 = vmatpush1.msra.mxu0 0.0
  %1156 = vmatprep.subr.mxu0 0.0
  %1157 = vmatpush1.msra.mxu0 0.0
  %1158 = vmatprep.subr.mxu0 0.0
  %1159 = vmatpush1.msra.mxu0 0.0
  %1160 = vmatprep.subr.mxu0 0.0
  %1161 = vmatpush1.msra.mxu0 0.0
  %1162 = vmatprep.subr.mxu0 0.0
  %1163 = vmatpush1.msra.mxu0 0.0
  %1164 = vmatprep.subr.mxu0 0.0
  %1165 = vmatpush1.msra.mxu0 0.0
  %1166 = vmatprep.subr.mxu0 0.0
  %1167 = vmatpush1.msra.mxu0 0.0
  %1168 = vmatprep.subr.mxu0 0.0
  %1169 = vmatpush1.msra.mxu0 0.0
  %1170 = vmatprep.subr.mxu0 0.0
  %1171 = vmatpush1.msra.mxu0 0.0
  %1172 = vmatprep.subr.mxu0 0.0
  %1173 = vmatpush1.msra.mxu0 0.0
  %1174 = vmatprep.subr.mxu0 0.0
  %1175 = vmatpush1.msra.mxu0 0.0
  %1176 = vmatprep.subr.mxu0 0.0
  %1177 = vmatpush1.msra.mxu0 0.0
  %1178 = vmatprep.subr.mxu0 0.0
  %1179 = vmatpush1.msra.mxu0 0.0
  %1180 = vmatprep.subr.mxu0 0.0
  %1181 = vmatpush1.msra.mxu0 0.0
  %1182 = vmatprep.subr.mxu0 0.0
  %1183 = vmatpush1.msra.mxu0 0.0
  %1184 = vmatprep.mubr.f32.mxu0 0.0
  %1185 = vmatmul.mubr.f32.gmra.mrb[0].mxu0 %v1097
  %v1186 = vpop.f32.mrb[0].mxu0
  %v1187 = vadd.f32 %v1058, %v1186
  %v1188 = vpop.f32.mrb[0].mxu0
  %1189 = vmatprep.mubr.f32.mxu0 0.0
  %1190 = vmatmul.mubr.f32.gmra.mrb[0].mxu0 %v1100
  %v1191 = vpop.f32.mrb[0].mxu0
  %v1192 = vadd.f32 %v1063, %v1191
  %v1193 = vpop.f32.mrb[0].mxu0
  %1194 = vmatprep.mubr.f32.mxu0 0.0
  %1195 = vmatmul.mubr.f32.gmra.mrb[0].mxu0 %v1103
  %v1196 = vpop.f32.mrb[0].mxu0
  %v1197 = vadd.f32 %v1068, %v1196
  %v1198 = vpop.f32.mrb[0].mxu0
  %1199 = vmatprep.mubr.f32.mxu0 0.0
  %1200 = vmatmul.mubr.f32.gmra.mrb[0].mxu0 %v1106
  %v1201 = vpop.f32.mrb[0].mxu0
  %v1202 = vadd.f32 %v1073, %v1201
  %v1203 = vpop.f32.mrb[0].mxu0
  %1204 = vmatprep.mubr.f32.mxu0 0.0
  %1205 = vmatmul.mubr.f32.gmra.mrb[0].mxu0 %v1109
  %v1206 = vpop.f32.mrb[0].mxu0
  %v1207 = vadd.f32 %v1078, %v1206
  %v1208 = vpop.f32.mrb[0].mxu0
  %1209 = vmatprep.mubr.f32.mxu0 0.0
  %1210 = vmatmul.mubr.f32.gmra.mrb[0].mxu0 %v1112
  %v1211 = vpop.f32.mrb[0].mxu0
  %v1212 = vadd.f32 %v1083, %v1211
  %v1213 = vpop.f32.mrb[0].mxu0
  %1214 = vmatprep.mubr.f32.mxu0 0.0
  %1215 = vmatmul.mubr.f32.gmra.mrb[0].mxu0 %v1115
  %v1216 = vpop.f32.mrb[0].mxu0
  %v1217 = vadd.f32 %v1088, %v1216
  %v1218 = vpop.f32.mrb[0].mxu0
  %1219 = vmatprep.mubr.f32.mxu0 0.0
  %1220 = vmatmul.mubr.f32.gmra.mrb[0].mxu0 %v1118
  %v1221 = vpop.f32.mrb[0].mxu0
  %v1222 = vadd.f32 %v1093, %v1221
  %v1223 = vpop.f32.mrb[0].mxu0
  %1224 = vdwg.mxu0
  %v1225 = vld [vmem:[#allocation2 + $0x1] sm:$0xff]
  %v1226 = vld [vmem:[#allocation2 + $0x9] sm:$0xff]
  %v1227 = vld [vmem:[#allocation2 + $0x11] sm:$0xff]
  %v1228 = vld [vmem:[#allocation2 + $0x19] sm:$0xff]
  %v1229 = vld [vmem:[#allocation2 + $0x21] sm:$0xff]
  %v1230 = vld [vmem:[#allocation2 + $0x29] sm:$0xff]
  %v1231 = vld [vmem:[#allocation2 + $0x31] sm:$0xff]
  %v1232 = vld [vmem:[#allocation2 + $0x39] sm:$0xff]
  %s1233 = scalar_lea.vmem %s4, 128
  %v1234 = vld [vmem:[%s1233] sm:$0xff]
  %v1235 = vld [vmem:[%s1233 + $0x8] sm:$0xff]
  %v1236 = vld [vmem:[%s1233 + $0x10] sm:$0xff]
  %v1237 = vld [vmem:[%s1233 + $0x18] sm:$0xff]
  %v1238 = vld [vmem:[%s1233 + $0x20] sm:$0xff]
  %v1239 = vld [vmem:[%s1233 + $0x28] sm:$0xff]
  %v1240 = vld [vmem:[%s1233 + $0x30] sm:$0xff]
  %v1241 = vld [vmem:[%s1233 + $0x38] sm:$0xff]
  %v1243 = vsel %vm43, %v1225, 0
  %v1246 = vsel %vm43, %v1226, 0
  %v1249 = vsel %vm43, %v1227, 0
  %v1252 = vsel %vm43, %v1228, 0
  %v1255 = vsel %vm43, %v1229, 0
  %v1258 = vsel %vm43, %v1230, 0
  %v1261 = vsel %vm43, %v1231, 0
  %v1264 = vsel %vm43, %v1232, 0
  %1266 = vmatprep.subr.mxu0 0.0
  %1267 = vmatpush1.msra.mxu0 %v1234
  %1268 = vmatprep.subr.mxu0 0.0
  %1269 = vmatpush1.msra.mxu0 %v1235
  %1270 = vmatprep.subr.mxu0 0.0
  %1271 = vmatpush1.msra.mxu0 %v1236
  %1272 = vmatprep.subr.mxu0 0.0
  %1273 = vmatpush1.msra.mxu0 %v1237
  %1274 = vmatprep.subr.mxu0 0.0
  %1275 = vmatpush1.msra.mxu0 %v1238
  %1276 = vmatprep.subr.mxu0 0.0
  %1277 = vmatpush1.msra.mxu0 %v1239
  %1278 = vmatprep.subr.mxu0 0.0
  %1279 = vmatpush1.msra.mxu0 %v1240
  %1280 = vmatprep.subr.mxu0 0.0
  %1281 = vmatpush1.msra.mxu0 %v1241
  %1282 = vmatprep.subr.mxu0 0.0
  %1283 = vmatpush1.msra.mxu0 0.0
  %1284 = vmatprep.subr.mxu0 0.0
  %1285 = vmatpush1.msra.mxu0 0.0
  %1286 = vmatprep.subr.mxu0 0.0
  %1287 = vmatpush1.msra.mxu0 0.0
  %1288 = vmatprep.subr.mxu0 0.0
  %1289 = vmatpush1.msra.mxu0 0.0
  %1290 = vmatprep.subr.mxu0 0.0
  %1291 = vmatpush1.msra.mxu0 0.0
  %1292 = vmatprep.subr.mxu0 0.0
  %1293 = vmatpush1.msra.mxu0 0.0
  %1294 = vmatprep.subr.mxu0 0.0
  %1295 = vmatpush1.msra.mxu0 0.0
  %1296 = vmatprep.subr.mxu0 0.0
  %1297 = vmatpush1.msra.mxu0 0.0
  %1298 = vmatprep.subr.mxu0 0.0
  %1299 = vmatpush1.msra.mxu0 0.0
  %1300 = vmatprep.subr.mxu0 0.0
  %1301 = vmatpush1.msra.mxu0 0.0
  %1302 = vmatprep.subr.mxu0 0.0
  %1303 = vmatpush1.msra.mxu0 0.0
  %1304 = vmatprep.subr.mxu0 0.0
  %1305 = vmatpush1.msra.mxu0 0.0
  %1306 = vmatprep.subr.mxu0 0.0
  %1307 = vmatpush1.msra.mxu0 0.0
  %1308 = vmatprep.subr.mxu0 0.0
  %1309 = vmatpush1.msra.mxu0 0.0
  %1310 = vmatprep.subr.mxu0 0.0
  %1311 = vmatpush1.msra.mxu0 0.0
  %1312 = vmatprep.subr.mxu0 0.0
  %1313 = vmatpush1.msra.mxu0 0.0
  %1314 = vmatprep.subr.mxu0 0.0
  %1315 = vmatpush1.msra.mxu0 0.0
  %1316 = vmatprep.subr.mxu0 0.0
  %1317 = vmatpush1.msra.mxu0 0.0
  %1318 = vmatprep.subr.mxu0 0.0
  %1319 = vmatpush1.msra.mxu0 0.0
  %1320 = vmatprep.subr.mxu0 0.0
  %1321 = vmatpush1.msra.mxu0 0.0
  %1322 = vmatprep.subr.mxu0 0.0
  %1323 = vmatpush1.msra.mxu0 0.0
  %1324 = vmatprep.subr.mxu0 0.0
  %1325 = vmatpush1.msra.mxu0 0.0
  %1326 = vmatprep.subr.mxu0 0.0
  %1327 = vmatpush1.msra.mxu0 0.0
  %1328 = vmatprep.subr.mxu0 0.0
  %1329 = vmatpush1.msra.mxu0 0.0
  %1330 = vmatprep.mubr.f32.mxu0 0.0
  %1331 = vmatmul.mubr.f32.gmra.mrb[0].mxu0 %v1243
  %v1332 = vpop.f32.mrb[0].mxu0
  %v1333 = vadd.f32 0.0, %v1332
  %v1334 = vpop.f32.mrb[0].mxu0
  %1335 = vmatprep.mubr.f32.mxu0 0.0
  %1336 = vmatmul.mubr.f32.gmra.mrb[0].mxu0 %v1246
  %v1337 = vpop.f32.mrb[0].mxu0
  %v1338 = vadd.f32 0.0, %v1337
  %v1339 = vpop.f32.mrb[0].mxu0
  %1340 = vmatprep.mubr.f32.mxu0 0.0
  %1341 = vmatmul.mubr.f32.gmra.mrb[0].mxu0 %v1249
  %v1342 = vpop.f32.mrb[0].mxu0
  %v1343 = vadd.f32 0.0, %v1342
  %v1344 = vpop.f32.mrb[0].mxu0
  %1345 = vmatprep.mubr.f32.mxu0 0.0
  %1346 = vmatmul.mubr.f32.gmra.mrb[0].mxu0 %v1252
  %v1347 = vpop.f32.mrb[0].mxu0
  %v1348 = vadd.f32 0.0, %v1347
  %v1349 = vpop.f32.mrb[0].mxu0
  %1350 = vmatprep.mubr.f32.mxu0 0.0
  %1351 = vmatmul.mubr.f32.gmra.mrb[0].mxu0 %v1255
  %v1352 = vpop.f32.mrb[0].mxu0
  %v1353 = vadd.f32 0.0, %v1352
  %v1354 = vpop.f32.mrb[0].mxu0
  %1355 = vmatprep.mubr.f32.mxu0 0.0
  %1356 = vmatmul.mubr.f32.gmra.mrb[0].mxu0 %v1258
  %v1357 = vpop.f32.mrb[0].mxu0
  %v1358 = vadd.f32 0.0, %v1357
  %v1359 = vpop.f32.mrb[0].mxu0
  %1360 = vmatprep.mubr.f32.mxu0 0.0
  %1361 = vmatmul.mubr.f32.gmra.mrb[0].mxu0 %v1261
  %v1362 = vpop.f32.mrb[0].mxu0
  %v1363 = vadd.f32 0.0, %v1362
  %v1364 = vpop.f32.mrb[0].mxu0
  %1365 = vmatprep.mubr.f32.mxu0 0.0
  %1366 = vmatmul.mubr.f32.gmra.mrb[0].mxu0 %v1264
  %v1367 = vpop.f32.mrb[0].mxu0
  %v1368 = vadd.f32 0.0, %v1367
  %v1369 = vpop.f32.mrb[0].mxu0
  %1370 = vdwg.mxu0
  %v1371 = vadd.f32 %v1187, %v1333
  %v1372 = vadd.f32 %v1192, %v1338
  %v1373 = vadd.f32 %v1197, %v1343
  %v1374 = vadd.f32 %v1202, %v1348
  %v1375 = vadd.f32 %v1207, %v1353
  %v1376 = vadd.f32 %v1212, %v1358
  %v1377 = vadd.f32 %v1217, %v1363
  %v1378 = vadd.f32 %v1222, %v1368
  %v1379 = vld [vmem:[#allocation2 + $0x90] sm:$0xff]
  %v1380 = vld [vmem:[#allocation2 + $0x98] sm:$0xff]
  %v1381 = vld [vmem:[#allocation2 + $0xa0] sm:$0xff]
  %v1382 = vld [vmem:[#allocation2 + $0xa8] sm:$0xff]
  %v1383 = vld [vmem:[#allocation2 + $0xb0] sm:$0xff]
  %v1384 = vld [vmem:[#allocation2 + $0xb8] sm:$0xff]
  %v1385 = vld [vmem:[#allocation2 + $0xc0] sm:$0xff]
  %v1386 = vld [vmem:[#allocation2 + $0xc8] sm:$0xff]
  %s1387 = scalar_lea.vmem %s4, 192
  %v1388 = vld [vmem:[%s1387] sm:$0xff]
  %v1389 = vld [vmem:[%s1387 + $0x8] sm:$0xff]
  %v1390 = vld [vmem:[%s1387 + $0x10] sm:$0xff]
  %v1391 = vld [vmem:[%s1387 + $0x18] sm:$0xff]
  %v1392 = vld [vmem:[%s1387 + $0x20] sm:$0xff]
  %v1393 = vld [vmem:[%s1387 + $0x28] sm:$0xff]
  %v1394 = vld [vmem:[%s1387 + $0x30] sm:$0xff]
  %v1395 = vld [vmem:[%s1387 + $0x38] sm:$0xff]
  %v1397 = vsel %vm43, %v1379, 0
  %v1400 = vsel %vm43, %v1380, 0
  %v1403 = vsel %vm43, %v1381, 0
  %v1406 = vsel %vm43, %v1382, 0
  %v1409 = vsel %vm43, %v1383, 0
  %v1412 = vsel %vm43, %v1384, 0
  %v1415 = vsel %vm43, %v1385, 0
  %v1418 = vsel %vm43, %v1386, 0
  %1420 = vmatprep.subr.mxu0 0.0
  %1421 = vmatpush1.msra.mxu0 %v1388
  %1422 = vmatprep.subr.mxu0 0.0
  %1423 = vmatpush1.msra.mxu0 %v1389
  %1424 = vmatprep.subr.mxu0 0.0
  %1425 = vmatpush1.msra.mxu0 %v1390
  %1426 = vmatprep.subr.mxu0 0.0
  %1427 = vmatpush1.msra.mxu0 %v1391
  %1428 = vmatprep.subr.mxu0 0.0
  %1429 = vmatpush1.msra.mxu0 %v1392
  %1430 = vmatprep.subr.mxu0 0.0
  %1431 = vmatpush1.msra.mxu0 %v1393
  %1432 = vmatprep.subr.mxu0 0.0
  %1433 = vmatpush1.msra.mxu0 %v1394
  %1434 = vmatprep.subr.mxu0 0.0
  %1435 = vmatpush1.msra.mxu0 %v1395
  %1436 = vmatprep.subr.mxu0 0.0
  %1437 = vmatpush1.msra.mxu0 0.0
  %1438 = vmatprep.subr.mxu0 0.0
  %1439 = vmatpush1.msra.mxu0 0.0
  %1440 = vmatprep.subr.mxu0 0.0
  %1441 = vmatpush1.msra.mxu0 0.0
  %1442 = vmatprep.subr.mxu0 0.0
  %1443 = vmatpush1.msra.mxu0 0.0
  %1444 = vmatprep.subr.mxu0 0.0
  %1445 = vmatpush1.msra.mxu0 0.0
  %1446 = vmatprep.subr.mxu0 0.0
  %1447 = vmatpush1.msra.mxu0 0.0
  %1448 = vmatprep.subr.mxu0 0.0
  %1449 = vmatpush1.msra.mxu0 0.0
  %1450 = vmatprep.subr.mxu0 0.0
  %1451 = vmatpush1.msra.mxu0 0.0
  %1452 = vmatprep.subr.mxu0 0.0
  %1453 = vmatpush1.msra.mxu0 0.0
  %1454 = vmatprep.subr.mxu0 0.0
  %1455 = vmatpush1.msra.mxu0 0.0
  %1456 = vmatprep.subr.mxu0 0.0
  %1457 = vmatpush1.msra.mxu0 0.0
  %1458 = vmatprep.subr.mxu0 0.0
  %1459 = vmatpush1.msra.mxu0 0.0
  %1460 = vmatprep.subr.mxu0 0.0
  %1461 = vmatpush1.msra.mxu0 0.0
  %1462 = vmatprep.subr.mxu0 0.0
  %1463 = vmatpush1.msra.mxu0 0.0
  %1464 = vmatprep.subr.mxu0 0.0
  %1465 = vmatpush1.msra.mxu0 0.0
  %1466 = vmatprep.subr.mxu0 0.0
  %1467 = vmatpush1.msra.mxu0 0.0
  %1468 = vmatprep.subr.mxu0 0.0
  %1469 = vmatpush1.msra.mxu0 0.0
  %1470 = vmatprep.subr.mxu0 0.0
  %1471 = vmatpush1.msra.mxu0 0.0
  %1472 = vmatprep.subr.mxu0 0.0
  %1473 = vmatpush1.msra.mxu0 0.0
  %1474 = vmatprep.subr.mxu0 0.0
  %1475 = vmatpush1.msra.mxu0 0.0
  %1476 = vmatprep.subr.mxu0 0.0
  %1477 = vmatpush1.msra.mxu0 0.0
  %1478 = vmatprep.subr.mxu0 0.0
  %1479 = vmatpush1.msra.mxu0 0.0
  %1480 = vmatprep.subr.mxu0 0.0
  %1481 = vmatpush1.msra.mxu0 0.0
  %1482 = vmatprep.subr.mxu0 0.0
  %1483 = vmatpush1.msra.mxu0 0.0
  %1484 = vmatprep.mubr.f32.mxu0 0.0
  %1485 = vmatmul.mubr.f32.gmra.mrb[0].mxu0 %v1397
  %v1486 = vpop.f32.mrb[0].mxu0
  %v1487 = vadd.f32 0.0, %v1486
  %v1488 = vpop.f32.mrb[0].mxu0
  %1489 = vmatprep.mubr.f32.mxu0 0.0
  %1490 = vmatmul.mubr.f32.gmra.mrb[0].mxu0 %v1400
  %v1491 = vpop.f32.mrb[0].mxu0
  %v1492 = vadd.f32 0.0, %v1491
  %v1493 = vpop.f32.mrb[0].mxu0
  %1494 = vmatprep.mubr.f32.mxu0 0.0
  %1495 = vmatmul.mubr.f32.gmra.mrb[0].mxu0 %v1403
  %v1496 = vpop.f32.mrb[0].mxu0
  %v1497 = vadd.f32 0.0, %v1496
  %v1498 = vpop.f32.mrb[0].mxu0
  %1499 = vmatprep.mubr.f32.mxu0 0.0
  %1500 = vmatmul.mubr.f32.gmra.mrb[0].mxu0 %v1406
  %v1501 = vpop.f32.mrb[0].mxu0
  %v1502 = vadd.f32 0.0, %v1501
  %v1503 = vpop.f32.mrb[0].mxu0
  %1504 = vmatprep.mubr.f32.mxu0 0.0
  %1505 = vmatmul.mubr.f32.gmra.mrb[0].mxu0 %v1409
  %v1506 = vpop.f32.mrb[0].mxu0
  %v1507 = vadd.f32 0.0, %v1506
  %v1508 = vpop.f32.mrb[0].mxu0
  %1509 = vmatprep.mubr.f32.mxu0 0.0
  %1510 = vmatmul.mubr.f32.gmra.mrb[0].mxu0 %v1412
  %v1511 = vpop.f32.mrb[0].mxu0
  %v1512 = vadd.f32 0.0, %v1511
  %v1513 = vpop.f32.mrb[0].mxu0
  %1514 = vmatprep.mubr.f32.mxu0 0.0
  %1515 = vmatmul.mubr.f32.gmra.mrb[0].mxu0 %v1415
  %v1516 = vpop.f32.mrb[0].mxu0
  %v1517 = vadd.f32 0.0, %v1516
  %v1518 = vpop.f32.mrb[0].mxu0
  %1519 = vmatprep.mubr.f32.mxu0 0.0
  %1520 = vmatmul.mubr.f32.gmra.mrb[0].mxu0 %v1418
  %v1521 = vpop.f32.mrb[0].mxu0
  %v1522 = vadd.f32 0.0, %v1521
  %v1523 = vpop.f32.mrb[0].mxu0
  %1524 = vdwg.mxu0
  %v1525 = vadd.f32 %v1371, %v1487
  %v1526 = vadd.f32 %v1372, %v1492
  %v1527 = vadd.f32 %v1373, %v1497
  %v1528 = vadd.f32 %v1374, %v1502
  %v1529 = vadd.f32 %v1375, %v1507
  %v1530 = vadd.f32 %v1376, %v1512
  %v1531 = vadd.f32 %v1377, %v1517
  %v1532 = vadd.f32 %v1378, %v1522
  %v1533 = vld [vmem:[#allocation2 + $0xd8] sm:$0xff]
  %v1534 = vld [vmem:[#allocation2 + $0xe0] sm:$0xff]
  %v1535 = vld [vmem:[#allocation2 + $0xe8] sm:$0xff]
  %v1536 = vld [vmem:[#allocation2 + $0xf0] sm:$0xff]
  %v1537 = vld [vmem:[#allocation2 + $0xf8] sm:$0xff]
  %v1538 = vld [vmem:[#allocation2 + $0x100] sm:$0xff]
  %v1539 = vld [vmem:[#allocation2 + $0x108] sm:$0xff]
  %v1540 = vld [vmem:[#allocation2 + $0x110] sm:$0xff]
  %s1541 = scalar_lea.vmem %s4, 256
  %v1542 = vld [vmem:[%s1541] sm:$0xff]
  %v1543 = vld [vmem:[%s1541 + $0x8] sm:$0xff]
  %v1544 = vld [vmem:[%s1541 + $0x10] sm:$0xff]
  %v1545 = vld [vmem:[%s1541 + $0x18] sm:$0xff]
  %v1546 = vld [vmem:[%s1541 + $0x20] sm:$0xff]
  %v1547 = vld [vmem:[%s1541 + $0x28] sm:$0xff]
  %v1548 = vld [vmem:[%s1541 + $0x30] sm:$0xff]
  %v1549 = vld [vmem:[%s1541 + $0x38] sm:$0xff]
  %v1551 = vsel %vm43, %v1533, 0
  %v1554 = vsel %vm43, %v1534, 0
  %v1557 = vsel %vm43, %v1535, 0
  %v1560 = vsel %vm43, %v1536, 0
  %v1563 = vsel %vm43, %v1537, 0
  %v1566 = vsel %vm43, %v1538, 0
  %v1569 = vsel %vm43, %v1539, 0
  %v1572 = vsel %vm43, %v1540, 0
  %1574 = vmatprep.subr.mxu0 0.0
  %1575 = vmatpush1.msra.mxu0 %v1542
  %1576 = vmatprep.subr.mxu0 0.0
  %1577 = vmatpush1.msra.mxu0 %v1543
  %1578 = vmatprep.subr.mxu0 0.0
  %1579 = vmatpush1.msra.mxu0 %v1544
  %1580 = vmatprep.subr.mxu0 0.0
  %1581 = vmatpush1.msra.mxu0 %v1545
  %1582 = vmatprep.subr.mxu0 0.0
  %1583 = vmatpush1.msra.mxu0 %v1546
  %1584 = vmatprep.subr.mxu0 0.0
  %1585 = vmatpush1.msra.mxu0 %v1547
  %1586 = vmatprep.subr.mxu0 0.0
  %1587 = vmatpush1.msra.mxu0 %v1548
  %1588 = vmatprep.subr.mxu0 0.0
  %1589 = vmatpush1.msra.mxu0 %v1549
  %1590 = vmatprep.subr.mxu0 0.0
  %1591 = vmatpush1.msra.mxu0 0.0
  %1592 = vmatprep.subr.mxu0 0.0
  %1593 = vmatpush1.msra.mxu0 0.0
  %1594 = vmatprep.subr.mxu0 0.0
  %1595 = vmatpush1.msra.mxu0 0.0
  %1596 = vmatprep.subr.mxu0 0.0
  %1597 = vmatpush1.msra.mxu0 0.0
  %1598 = vmatprep.subr.mxu0 0.0
  %1599 = vmatpush1.msra.mxu0 0.0
  %1600 = vmatprep.subr.mxu0 0.0
  %1601 = vmatpush1.msra.mxu0 0.0
  %1602 = vmatprep.subr.mxu0 0.0
  %1603 = vmatpush1.msra.mxu0 0.0
  %1604 = vmatprep.subr.mxu0 0.0
  %1605 = vmatpush1.msra.mxu0 0.0
  %1606 = vmatprep.subr.mxu0 0.0
  %1607 = vmatpush1.msra.mxu0 0.0
  %1608 = vmatprep.subr.mxu0 0.0
  %1609 = vmatpush1.msra.mxu0 0.0
  %1610 = vmatprep.subr.mxu0 0.0
  %1611 = vmatpush1.msra.mxu0 0.0
  %1612 = vmatprep.subr.mxu0 0.0
  %1613 = vmatpush1.msra.mxu0 0.0
  %1614 = vmatprep.subr.mxu0 0.0
  %1615 = vmatpush1.msra.mxu0 0.0
  %1616 = vmatprep.subr.mxu0 0.0
  %1617 = vmatpush1.msra.mxu0 0.0
  %1618 = vmatprep.subr.mxu0 0.0
  %1619 = vmatpush1.msra.mxu0 0.0
  %1620 = vmatprep.subr.mxu0 0.0
  %1621 = vmatpush1.msra.mxu0 0.0
  %1622 = vmatprep.subr.mxu0 0.0
  %1623 = vmatpush1.msra.mxu0 0.0
  %1624 = vmatprep.subr.mxu0 0.0
  %1625 = vmatpush1.msra.mxu0 0.0
  %1626 = vmatprep.subr.mxu0 0.0
  %1627 = vmatpush1.msra.mxu0 0.0
  %1628 = vmatprep.subr.mxu0 0.0
  %1629 = vmatpush1.msra.mxu0 0.0
  %1630 = vmatprep.subr.mxu0 0.0
  %1631 = vmatpush1.msra.mxu0 0.0
  %1632 = vmatprep.subr.mxu0 0.0
  %1633 = vmatpush1.msra.mxu0 0.0
  %1634 = vmatprep.subr.mxu0 0.0
  %1635 = vmatpush1.msra.mxu0 0.0
  %1636 = vmatprep.subr.mxu0 0.0
  %1637 = vmatpush1.msra.mxu0 0.0
  %1638 = vmatprep.mubr.f32.mxu0 0.0
  %1639 = vmatmul.mubr.f32.gmra.mrb[0].mxu0 %v1551
  %v1640 = vpop.f32.mrb[0].mxu0
  %v1641 = vadd.f32 0.0, %v1640
  %v1642 = vpop.f32.mrb[0].mxu0
  %1643 = vmatprep.mubr.f32.mxu0 0.0
  %1644 = vmatmul.mubr.f32.gmra.mrb[0].mxu0 %v1554
  %v1645 = vpop.f32.mrb[0].mxu0
  %v1646 = vadd.f32 0.0, %v1645
  %v1647 = vpop.f32.mrb[0].mxu0
  %1648 = vmatprep.mubr.f32.mxu0 0.0
  %1649 = vmatmul.mubr.f32.gmra.mrb[0].mxu0 %v1557
  %v1650 = vpop.f32.mrb[0].mxu0
  %v1651 = vadd.f32 0.0, %v1650
  %v1652 = vpop.f32.mrb[0].mxu0
  %1653 = vmatprep.mubr.f32.mxu0 0.0
  %1654 = vmatmul.mubr.f32.gmra.mrb[0].mxu0 %v1560
  %v1655 = vpop.f32.mrb[0].mxu0
  %v1656 = vadd.f32 0.0, %v1655
  %v1657 = vpop.f32.mrb[0].mxu0
  %1658 = vmatprep.mubr.f32.mxu0 0.0
  %1659 = vmatmul.mubr.f32.gmra.mrb[0].mxu0 %v1563
  %v1660 = vpop.f32.mrb[0].mxu0
  %v1661 = vadd.f32 0.0, %v1660
  %v1662 = vpop.f32.mrb[0].mxu0
  %1663 = vmatprep.mubr.f32.mxu0 0.0
  %1664 = vmatmul.mubr.f32.gmra.mrb[0].mxu0 %v1566
  %v1665 = vpop.f32.mrb[0].mxu0
  %v1666 = vadd.f32 0.0, %v1665
  %v1667 = vpop.f32.mrb[0].mxu0
  %1668 = vmatprep.mubr.f32.mxu0 0.0
  %1669 = vmatmul.mubr.f32.gmra.mrb[0].mxu0 %v1569
  %v1670 = vpop.f32.mrb[0].mxu0
  %v1671 = vadd.f32 0.0, %v1670
  %v1672 = vpop.f32.mrb[0].mxu0
  %1673 = vmatprep.mubr.f32.mxu0 0.0
  %1674 = vmatmul.mubr.f32.gmra.mrb[0].mxu0 %v1572
  %v1675 = vpop.f32.mrb[0].mxu0
  %v1676 = vadd.f32 0.0, %v1675
  %v1677 = vpop.f32.mrb[0].mxu0
  %1678 = vdwg.mxu0
  %v1679 = vadd.f32 %v1525, %v1641
  %v1680 = vadd.f32 %v1526, %v1646
  %v1681 = vadd.f32 %v1527, %v1651
  %v1682 = vadd.f32 %v1528, %v1656
  %v1683 = vadd.f32 %v1529, %v1661
  %v1684 = vadd.f32 %v1530, %v1666
  %v1685 = vadd.f32 %v1531, %v1671
  %v1686 = vadd.f32 %v1532, %v1676
  %v1687 = vld [vmem:[#allocation2 + $0x91] sm:$0xff]
  %v1688 = vld [vmem:[#allocation2 + $0x99] sm:$0xff]
  %v1689 = vld [vmem:[#allocation2 + $0xa1] sm:$0xff]
  %v1690 = vld [vmem:[#allocation2 + $0xa9] sm:$0xff]
  %v1691 = vld [vmem:[#allocation2 + $0xb1] sm:$0xff]
  %v1692 = vld [vmem:[#allocation2 + $0xb9] sm:$0xff]
  %v1693 = vld [vmem:[#allocation2 + $0xc1] sm:$0xff]
  %v1694 = vld [vmem:[#allocation2 + $0xc9] sm:$0xff]
  %s1695 = scalar_lea.vmem %s4, 320
  %v1696 = vld [vmem:[%s1695] sm:$0xff]
  %v1697 = vld [vmem:[%s1695 + $0x8] sm:$0xff]
  %v1698 = vld [vmem:[%s1695 + $0x10] sm:$0xff]
  %v1699 = vld [vmem:[%s1695 + $0x18] sm:$0xff]
  %v1700 = vld [vmem:[%s1695 + $0x20] sm:$0xff]
  %v1701 = vld [vmem:[%s1695 + $0x28] sm:$0xff]
  %v1702 = vld [vmem:[%s1695 + $0x30] sm:$0xff]
  %v1703 = vld [vmem:[%s1695 + $0x38] sm:$0xff]
  %v1705 = vsel %vm43, %v1687, 0
  %v1708 = vsel %vm43, %v1688, 0
  %v1711 = vsel %vm43, %v1689, 0
  %v1714 = vsel %vm43, %v1690, 0
  %v1717 = vsel %vm43, %v1691, 0
  %v1720 = vsel %vm43, %v1692, 0
  %v1723 = vsel %vm43, %v1693, 0
  %v1726 = vsel %vm43, %v1694, 0
  %1728 = vmatprep.subr.mxu0 0.0
  %1729 = vmatpush1.msra.mxu0 %v1696
  %1730 = vmatprep.subr.mxu0 0.0
  %1731 = vmatpush1.msra.mxu0 %v1697
  %1732 = vmatprep.subr.mxu0 0.0
  %1733 = vmatpush1.msra.mxu0 %v1698
  %1734 = vmatprep.subr.mxu0 0.0
  %1735 = vmatpush1.msra.mxu0 %v1699
  %1736 = vmatprep.subr.mxu0 0.0
  %1737 = vmatpush1.msra.mxu0 %v1700
  %1738 = vmatprep.subr.mxu0 0.0
  %1739 = vmatpush1.msra.mxu0 %v1701
  %1740 = vmatprep.subr.mxu0 0.0
  %1741 = vmatpush1.msra.mxu0 %v1702
  %1742 = vmatprep.subr.mxu0 0.0
  %1743 = vmatpush1.msra.mxu0 %v1703
  %1744 = vmatprep.subr.mxu0 0.0
  %1745 = vmatpush1.msra.mxu0 0.0
  %1746 = vmatprep.subr.mxu0 0.0
  %1747 = vmatpush1.msra.mxu0 0.0
  %1748 = vmatprep.subr.mxu0 0.0
  %1749 = vmatpush1.msra.mxu0 0.0
  %1750 = vmatprep.subr.mxu0 0.0
  %1751 = vmatpush1.msra.mxu0 0.0
  %1752 = vmatprep.subr.mxu0 0.0
  %1753 = vmatpush1.msra.mxu0 0.0
  %1754 = vmatprep.subr.mxu0 0.0
  %1755 = vmatpush1.msra.mxu0 0.0
  %1756 = vmatprep.subr.mxu0 0.0
  %1757 = vmatpush1.msra.mxu0 0.0
  %1758 = vmatprep.subr.mxu0 0.0
  %1759 = vmatpush1.msra.mxu0 0.0
  %1760 = vmatprep.subr.mxu0 0.0
  %1761 = vmatpush1.msra.mxu0 0.0
  %1762 = vmatprep.subr.mxu0 0.0
  %1763 = vmatpush1.msra.mxu0 0.0
  %1764 = vmatprep.subr.mxu0 0.0
  %1765 = vmatpush1.msra.mxu0 0.0
  %1766 = vmatprep.subr.mxu0 0.0
  %1767 = vmatpush1.msra.mxu0 0.0
  %1768 = vmatprep.subr.mxu0 0.0
  %1769 = vmatpush1.msra.mxu0 0.0
  %1770 = vmatprep.subr.mxu0 0.0
  %1771 = vmatpush1.msra.mxu0 0.0
  %1772 = vmatprep.subr.mxu0 0.0
  %1773 = vmatpush1.msra.mxu0 0.0
  %1774 = vmatprep.subr.mxu0 0.0
  %1775 = vmatpush1.msra.mxu0 0.0
  %1776 = vmatprep.subr.mxu0 0.0
  %1777 = vmatpush1.msra.mxu0 0.0
  %1778 = vmatprep.subr.mxu0 0.0
  %1779 = vmatpush1.msra.mxu0 0.0
  %1780 = vmatprep.subr.mxu0 0.0
  %1781 = vmatpush1.msra.mxu0 0.0
  %1782 = vmatprep.subr.mxu0 0.0
  %1783 = vmatpush1.msra.mxu0 0.0
  %1784 = vmatprep.subr.mxu0 0.0
  %1785 = vmatpush1.msra.mxu0 0.0
  %1786 = vmatprep.subr.mxu0 0.0
  %1787 = vmatpush1.msra.mxu0 0.0
  %1788 = vmatprep.subr.mxu0 0.0
  %1789 = vmatpush1.msra.mxu0 0.0
  %1790 = vmatprep.subr.mxu0 0.0
  %1791 = vmatpush1.msra.mxu0 0.0
  %1792 = vmatprep.mubr.f32.mxu0 0.0
  %1793 = vmatmul.mubr.f32.gmra.mrb[0].mxu0 %v1705
  %v1794 = vpop.f32.mrb[0].mxu0
  %v1795 = vadd.f32 0.0, %v1794
  %v1796 = vpop.f32.mrb[0].mxu0
  %1797 = vmatprep.mubr.f32.mxu0 0.0
  %1798 = vmatmul.mubr.f32.gmra.mrb[0].mxu0 %v1708
  %v1799 = vpop.f32.mrb[0].mxu0
  %v1800 = vadd.f32 0.0, %v1799
  %v1801 = vpop.f32.mrb[0].mxu0
  %1802 = vmatprep.mubr.f32.mxu0 0.0
  %1803 = vmatmul.mubr.f32.gmra.mrb[0].mxu0 %v1711
  %v1804 = vpop.f32.mrb[0].mxu0
  %v1805 = vadd.f32 0.0, %v1804
  %v1806 = vpop.f32.mrb[0].mxu0
  %1807 = vmatprep.mubr.f32.mxu0 0.0
  %1808 = vmatmul.mubr.f32.gmra.mrb[0].mxu0 %v1714
  %v1809 = vpop.f32.mrb[0].mxu0
  %v1810 = vadd.f32 0.0, %v1809
  %v1811 = vpop.f32.mrb[0].mxu0
  %1812 = vmatprep.mubr.f32.mxu0 0.0
  %1813 = vmatmul.mubr.f32.gmra.mrb[0].mxu0 %v1717
  %v1814 = vpop.f32.mrb[0].mxu0
  %v1815 = vadd.f32 0.0, %v1814
  %v1816 = vpop.f32.mrb[0].mxu0
  %1817 = vmatprep.mubr.f32.mxu0 0.0
  %1818 = vmatmul.mubr.f32.gmra.mrb[0].mxu0 %v1720
  %v1819 = vpop.f32.mrb[0].mxu0
  %v1820 = vadd.f32 0.0, %v1819
  %v1821 = vpop.f32.mrb[0].mxu0
  %1822 = vmatprep.mubr.f32.mxu0 0.0
  %1823 = vmatmul.mubr.f32.gmra.mrb[0].mxu0 %v1723
  %v1824 = vpop.f32.mrb[0].mxu0
  %v1825 = vadd.f32 0.0, %v1824
  %v1826 = vpop.f32.mrb[0].mxu0
  %1827 = vmatprep.mubr.f32.mxu0 0.0
  %1828 = vmatmul.mubr.f32.gmra.mrb[0].mxu0 %v1726
  %v1829 = vpop.f32.mrb[0].mxu0
  %v1830 = vadd.f32 0.0, %v1829
  %v1831 = vpop.f32.mrb[0].mxu0
  %1832 = vdwg.mxu0
  %v1833 = vadd.f32 %v1679, %v1795
  %v1834 = vadd.f32 %v1680, %v1800
  %v1835 = vadd.f32 %v1681, %v1805
  %v1836 = vadd.f32 %v1682, %v1810
  %v1837 = vadd.f32 %v1683, %v1815
  %v1838 = vadd.f32 %v1684, %v1820
  %v1839 = vadd.f32 %v1685, %v1825
  %v1840 = vadd.f32 %v1686, %v1830
  %v1841 = vld [vmem:[#allocation2 + $0x5] sm:$0xff]
  %v1842 = vld [vmem:[#allocation2 + $0xd] sm:$0xff]
  %v1843 = vld [vmem:[#allocation2 + $0x15] sm:$0xff]
  %v1844 = vld [vmem:[#allocation2 + $0x1d] sm:$0xff]
  %v1845 = vld [vmem:[#allocation2 + $0x25] sm:$0xff]
  %v1846 = vld [vmem:[#allocation2 + $0x2d] sm:$0xff]
  %v1847 = vld [vmem:[#allocation2 + $0x35] sm:$0xff]
  %v1848 = vld [vmem:[#allocation2 + $0x3d] sm:$0xff]
  %s1849 = scalar_lea.vmem %s4, 384
  %v1850 = vld [vmem:[%s1849] sm:$0xff]
  %v1851 = vld [vmem:[%s1849 + $0x8] sm:$0xff]
  %v1852 = vld [vmem:[%s1849 + $0x10] sm:$0xff]
  %v1853 = vld [vmem:[%s1849 + $0x18] sm:$0xff]
  %v1854 = vld [vmem:[%s1849 + $0x20] sm:$0xff]
  %v1855 = vld [vmem:[%s1849 + $0x28] sm:$0xff]
  %v1856 = vld [vmem:[%s1849 + $0x30] sm:$0xff]
  %v1857 = vld [vmem:[%s1849 + $0x38] sm:$0xff]
  %v1859 = vsel %vm43, %v1841, 0
  %v1862 = vsel %vm43, %v1842, 0
  %v1865 = vsel %vm43, %v1843, 0
  %v1868 = vsel %vm43, %v1844, 0
  %v1871 = vsel %vm43, %v1845, 0
  %v1874 = vsel %vm43, %v1846, 0
  %v1877 = vsel %vm43, %v1847, 0
  %v1880 = vsel %vm43, %v1848, 0
  %1882 = vmatprep.subr.mxu0 0.0
  %1883 = vmatpush1.msra.mxu0 %v1850
  %1884 = vmatprep.subr.mxu0 0.0
  %1885 = vmatpush1.msra.mxu0 %v1851
  %1886 = vmatprep.subr.mxu0 0.0
  %1887 = vmatpush1.msra.mxu0 %v1852
  %1888 = vmatprep.subr.mxu0 0.0
  %1889 = vmatpush1.msra.mxu0 %v1853
  %1890 = vmatprep.subr.mxu0 0.0
  %1891 = vmatpush1.msra.mxu0 %v1854
  %1892 = vmatprep.subr.mxu0 0.0
  %1893 = vmatpush1.msra.mxu0 %v1855
  %1894 = vmatprep.subr.mxu0 0.0
  %1895 = vmatpush1.msra.mxu0 %v1856
  %1896 = vmatprep.subr.mxu0 0.0
  %1897 = vmatpush1.msra.mxu0 %v1857
  %1898 = vmatprep.subr.mxu0 0.0
  %1899 = vmatpush1.msra.mxu0 0.0
  %1900 = vmatprep.subr.mxu0 0.0
  %1901 = vmatpush1.msra.mxu0 0.0
  %1902 = vmatprep.subr.mxu0 0.0
  %1903 = vmatpush1.msra.mxu0 0.0
  %1904 = vmatprep.subr.mxu0 0.0
  %1905 = vmatpush1.msra.mxu0 0.0
  %1906 = vmatprep.subr.mxu0 0.0
  %1907 = vmatpush1.msra.mxu0 0.0
  %1908 = vmatprep.subr.mxu0 0.0
  %1909 = vmatpush1.msra.mxu0 0.0
  %1910 = vmatprep.subr.mxu0 0.0
  %1911 = vmatpush1.msra.mxu0 0.0
  %1912 = vmatprep.subr.mxu0 0.0
  %1913 = vmatpush1.msra.mxu0 0.0
  %1914 = vmatprep.subr.mxu0 0.0
  %1915 = vmatpush1.msra.mxu0 0.0
  %1916 = vmatprep.subr.mxu0 0.0
  %1917 = vmatpush1.msra.mxu0 0.0
  %1918 = vmatprep.subr.mxu0 0.0
  %1919 = vmatpush1.msra.mxu0 0.0
  %1920 = vmatprep.subr.mxu0 0.0
  %1921 = vmatpush1.msra.mxu0 0.0
  %1922 = vmatprep.subr.mxu0 0.0
  %1923 = vmatpush1.msra.mxu0 0.0
  %1924 = vmatprep.subr.mxu0 0.0
  %1925 = vmatpush1.msra.mxu0 0.0
  %1926 = vmatprep.subr.mxu0 0.0
  %1927 = vmatpush1.msra.mxu0 0.0
  %1928 = vmatprep.subr.mxu0 0.0
  %1929 = vmatpush1.msra.mxu0 0.0
  %1930 = vmatprep.subr.mxu0 0.0
  %1931 = vmatpush1.msra.mxu0 0.0
  %1932 = vmatprep.subr.mxu0 0.0
  %1933 = vmatpush1.msra.mxu0 0.0
  %1934 = vmatprep.subr.mxu0 0.0
  %1935 = vmatpush1.msra.mxu0 0.0
  %1936 = vmatprep.subr.mxu0 0.0
  %1937 = vmatpush1.msra.mxu0 0.0
  %1938 = vmatprep.subr.mxu0 0.0
  %1939 = vmatpush1.msra.mxu0 0.0
  %1940 = vmatprep.subr.mxu0 0.0
  %1941 = vmatpush1.msra.mxu0 0.0
  %1942 = vmatprep.subr.mxu0 0.0
  %1943 = vmatpush1.msra.mxu0 0.0
  %1944 = vmatprep.subr.mxu0 0.0
  %1945 = vmatpush1.msra.mxu0 0.0
  %1946 = vmatprep.mubr.f32.mxu0 0.0
  %1947 = vmatmul.mubr.f32.gmra.mrb[0].mxu0 %v1859
  %v1948 = vpop.f32.mrb[0].mxu0
  %v1949 = vadd.f32 0.0, %v1948
  %v1950 = vpop.f32.mrb[0].mxu0
  %1951 = vmatprep.mubr.f32.mxu0 0.0
  %1952 = vmatmul.mubr.f32.gmra.mrb[0].mxu0 %v1862
  %v1953 = vpop.f32.mrb[0].mxu0
  %v1954 = vadd.f32 0.0, %v1953
  %v1955 = vpop.f32.mrb[0].mxu0
  %1956 = vmatprep.mubr.f32.mxu0 0.0
  %1957 = vmatmul.mubr.f32.gmra.mrb[0].mxu0 %v1865
  %v1958 = vpop.f32.mrb[0].mxu0
  %v1959 = vadd.f32 0.0, %v1958
  %v1960 = vpop.f32.mrb[0].mxu0
  %1961 = vmatprep.mubr.f32.mxu0 0.0
  %1962 = vmatmul.mubr.f32.gmra.mrb[0].mxu0 %v1868
  %v1963 = vpop.f32.mrb[0].mxu0
  %v1964 = vadd.f32 0.0, %v1963
  %v1965 = vpop.f32.mrb[0].mxu0
  %1966 = vmatprep.mubr.f32.mxu0 0.0
  %1967 = vmatmul.mubr.f32.gmra.mrb[0].mxu0 %v1871
  %v1968 = vpop.f32.mrb[0].mxu0
  %v1969 = vadd.f32 0.0, %v1968
  %v1970 = vpop.f32.mrb[0].mxu0
  %1971 = vmatprep.mubr.f32.mxu0 0.0
  %1972 = vmatmul.mubr.f32.gmra.mrb[0].mxu0 %v1874
  %v1973 = vpop.f32.mrb[0].mxu0
  %v1974 = vadd.f32 0.0, %v1973
  %v1975 = vpop.f32.mrb[0].mxu0
  %1976 = vmatprep.mubr.f32.mxu0 0.0
  %1977 = vmatmul.mubr.f32.gmra.mrb[0].mxu0 %v1877
  %v1978 = vpop.f32.mrb[0].mxu0
  %v1979 = vadd.f32 0.0, %v1978
  %v1980 = vpop.f32.mrb[0].mxu0
  %1981 = vmatprep.mubr.f32.mxu0 0.0
  %1982 = vmatmul.mubr.f32.gmra.mrb[0].mxu0 %v1880
  %v1983 = vpop.f32.mrb[0].mxu0
  %v1984 = vadd.f32 0.0, %v1983
  %v1985 = vpop.f32.mrb[0].mxu0
  %1986 = vdwg.mxu0
  %v1987 = vadd.f32 %v1833, %v1949
  %v1988 = vadd.f32 %v1834, %v1954
  %v1989 = vadd.f32 %v1835, %v1959
  %v1990 = vadd.f32 %v1836, %v1964
  %v1991 = vadd.f32 %v1837, %v1969
  %v1992 = vadd.f32 %v1838, %v1974
  %v1993 = vadd.f32 %v1839, %v1979
  %v1994 = vadd.f32 %v1840, %v1984
  %v1995 = vld [vmem:[#allocation2 + $0x4d] sm:$0xff]
  %v1996 = vld [vmem:[#allocation2 + $0x55] sm:$0xff]
  %v1997 = vld [vmem:[#allocation2 + $0x5d] sm:$0xff]
  %v1998 = vld [vmem:[#allocation2 + $0x65] sm:$0xff]
  %v1999 = vld [vmem:[#allocation2 + $0x6d] sm:$0xff]
  %v2000 = vld [vmem:[#allocation2 + $0x75] sm:$0xff]
  %v2001 = vld [vmem:[#allocation2 + $0x7d] sm:$0xff]
  %v2002 = vld [vmem:[#allocation2 + $0x85] sm:$0xff]
  %s2003 = scalar_lea.vmem %s4, 448
  %v2004 = vld [vmem:[%s2003] sm:$0xff]
  %v2005 = vld [vmem:[%s2003 + $0x8] sm:$0xff]
  %v2006 = vld [vmem:[%s2003 + $0x10] sm:$0xff]
  %v2007 = vld [vmem:[%s2003 + $0x18] sm:$0xff]
  %v2008 = vld [vmem:[%s2003 + $0x20] sm:$0xff]
  %v2009 = vld [vmem:[%s2003 + $0x28] sm:$0xff]
  %v2010 = vld [vmem:[%s2003 + $0x30] sm:$0xff]
  %v2011 = vld [vmem:[%s2003 + $0x38] sm:$0xff]
  %v2013 = vsel %vm43, %v1995, 0
  %v2016 = vsel %vm43, %v1996, 0
  %v2019 = vsel %vm43, %v1997, 0
  %v2022 = vsel %vm43, %v1998, 0
  %v2025 = vsel %vm43, %v1999, 0
  %v2028 = vsel %vm43, %v2000, 0
  %v2031 = vsel %vm43, %v2001, 0
  %v2034 = vsel %vm43, %v2002, 0
  %2036 = vmatprep.subr.mxu0 0.0
  %2037 = vmatpush1.msra.mxu0 %v2004
  %2038 = vmatprep.subr.mxu0 0.0
  %2039 = vmatpush1.msra.mxu0 %v2005
  %2040 = vmatprep.subr.mxu0 0.0
  %2041 = vmatpush1.msra.mxu0 %v2006
  %2042 = vmatprep.subr.mxu0 0.0
  %2043 = vmatpush1.msra.mxu0 %v2007
  %2044 = vmatprep.subr.mxu0 0.0
  %2045 = vmatpush1.msra.mxu0 %v2008
  %2046 = vmatprep.subr.mxu0 0.0
  %2047 = vmatpush1.msra.mxu0 %v2009
  %2048 = vmatprep.subr.mxu0 0.0
  %2049 = vmatpush1.msra.mxu0 %v2010
  %2050 = vmatprep.subr.mxu0 0.0
  %2051 = vmatpush1.msra.mxu0 %v2011
  %2052 = vmatprep.subr.mxu0 0.0
  %2053 = vmatpush1.msra.mxu0 0.0
  %2054 = vmatprep.subr.mxu0 0.0
  %2055 = vmatpush1.msra.mxu0 0.0
  %2056 = vmatprep.subr.mxu0 0.0
  %2057 = vmatpush1.msra.mxu0 0.0
  %2058 = vmatprep.subr.mxu0 0.0
  %2059 = vmatpush1.msra.mxu0 0.0
  %2060 = vmatprep.subr.mxu0 0.0
  %2061 = vmatpush1.msra.mxu0 0.0
  %2062 = vmatprep.subr.mxu0 0.0
  %2063 = vmatpush1.msra.mxu0 0.0
  %2064 = vmatprep.subr.mxu0 0.0
  %2065 = vmatpush1.msra.mxu0 0.0
  %2066 = vmatprep.subr.mxu0 0.0
  %2067 = vmatpush1.msra.mxu0 0.0
  %2068 = vmatprep.subr.mxu0 0.0
  %2069 = vmatpush1.msra.mxu0 0.0
  %2070 = vmatprep.subr.mxu0 0.0
  %2071 = vmatpush1.msra.mxu0 0.0
  %2072 = vmatprep.subr.mxu0 0.0
  %2073 = vmatpush1.msra.mxu0 0.0
  %2074 = vmatprep.subr.mxu0 0.0
  %2075 = vmatpush1.msra.mxu0 0.0
  %2076 = vmatprep.subr.mxu0 0.0
  %2077 = vmatpush1.msra.mxu0 0.0
  %2078 = vmatprep.subr.mxu0 0.0
  %2079 = vmatpush1.msra.mxu0 0.0
  %2080 = vmatprep.subr.mxu0 0.0
  %2081 = vmatpush1.msra.mxu0 0.0
  %2082 = vmatprep.subr.mxu0 0.0
  %2083 = vmatpush1.msra.mxu0 0.0
  %2084 = vmatprep.subr.mxu0 0.0
  %2085 = vmatpush1.msra.mxu0 0.0
  %2086 = vmatprep.subr.mxu0 0.0
  %2087 = vmatpush1.msra.mxu0 0.0
  %2088 = vmatprep.subr.mxu0 0.0
  %2089 = vmatpush1.msra.mxu0 0.0
  %2090 = vmatprep.subr.mxu0 0.0
  %2091 = vmatpush1.msra.mxu0 0.0
  %2092 = vmatprep.subr.mxu0 0.0
  %2093 = vmatpush1.msra.mxu0 0.0
  %2094 = vmatprep.subr.mxu0 0.0
  %2095 = vmatpush1.msra.mxu0 0.0
  %2096 = vmatprep.subr.mxu0 0.0
  %2097 = vmatpush1.msra.mxu0 0.0
  %2098 = vmatprep.subr.mxu0 0.0
  %2099 = vmatpush1.msra.mxu0 0.0
  %2100 = vmatprep.mubr.f32.mxu0 0.0
  %2101 = vmatmul.mubr.f32.gmra.mrb[0].mxu0 %v2013
  %v2102 = vpop.f32.mrb[0].mxu0
  %v2103 = vadd.f32 0.0, %v2102
  %v2104 = vpop.f32.mrb[0].mxu0
  %2105 = vmatprep.mubr.f32.mxu0 0.0
  %2106 = vmatmul.mubr.f32.gmra.mrb[0].mxu0 %v2016
  %v2107 = vpop.f32.mrb[0].mxu0
  %v2108 = vadd.f32 0.0, %v2107
  %v2109 = vpop.f32.mrb[0].mxu0
  %2110 = vmatprep.mubr.f32.mxu0 0.0
  %2111 = vmatmul.mubr.f32.gmra.mrb[0].mxu0 %v2019
  %v2112 = vpop.f32.mrb[0].mxu0
  %v2113 = vadd.f32 0.0, %v2112
  %v2114 = vpop.f32.mrb[0].mxu0
  %2115 = vmatprep.mubr.f32.mxu0 0.0
  %2116 = vmatmul.mubr.f32.gmra.mrb[0].mxu0 %v2022
  %v2117 = vpop.f32.mrb[0].mxu0
  %v2118 = vadd.f32 0.0, %v2117
  %v2119 = vpop.f32.mrb[0].mxu0
  %2120 = vmatprep.mubr.f32.mxu0 0.0
  %2121 = vmatmul.mubr.f32.gmra.mrb[0].mxu0 %v2025
  %v2122 = vpop.f32.mrb[0].mxu0
  %v2123 = vadd.f32 0.0, %v2122
  %v2124 = vpop.f32.mrb[0].mxu0
  %2125 = vmatprep.mubr.f32.mxu0 0.0
  %2126 = vmatmul.mubr.f32.gmra.mrb[0].mxu0 %v2028
  %v2127 = vpop.f32.mrb[0].mxu0
  %v2128 = vadd.f32 0.0, %v2127
  %v2129 = vpop.f32.mrb[0].mxu0
  %2130 = vmatprep.mubr.f32.mxu0 0.0
  %2131 = vmatmul.mubr.f32.gmra.mrb[0].mxu0 %v2031
  %v2132 = vpop.f32.mrb[0].mxu0
  %v2133 = vadd.f32 0.0, %v2132
  %v2134 = vpop.f32.mrb[0].mxu0
  %2135 = vmatprep.mubr.f32.mxu0 0.0
  %2136 = vmatmul.mubr.f32.gmra.mrb[0].mxu0 %v2034
  %v2137 = vpop.f32.mrb[0].mxu0
  %v2138 = vadd.f32 0.0, %v2137
  %v2139 = vpop.f32.mrb[0].mxu0
  %2140 = vdwg.mxu0
  %v2141 = vadd.f32 %v1987, %v2103
  %v2142 = vadd.f32 %v1988, %v2108
  %v2143 = vadd.f32 %v1989, %v2113
  %v2144 = vadd.f32 %v1990, %v2118
  %v2145 = vadd.f32 %v1991, %v2123
  %v2146 = vadd.f32 %v1992, %v2128
  %v2147 = vadd.f32 %v1993, %v2133
  %v2148 = vadd.f32 %v1994, %v2138
  %v2149 = vld [vmem:[#allocation2 + $0x6] sm:$0xff]
  %v2150 = vld [vmem:[#allocation2 + $0xe] sm:$0xff]
  %v2151 = vld [vmem:[#allocation2 + $0x16] sm:$0xff]
  %v2152 = vld [vmem:[#allocation2 + $0x1e] sm:$0xff]
  %v2153 = vld [vmem:[#allocation2 + $0x26] sm:$0xff]
  %v2154 = vld [vmem:[#allocation2 + $0x2e] sm:$0xff]
  %v2155 = vld [vmem:[#allocation2 + $0x36] sm:$0xff]
  %v2156 = vld [vmem:[#allocation2 + $0x3e] sm:$0xff]
  %s2157 = scalar_lea.vmem %s4, 512
  %v2158 = vld [vmem:[%s2157] sm:$0xff]
  %v2159 = vld [vmem:[%s2157 + $0x8] sm:$0xff]
  %v2160 = vld [vmem:[%s2157 + $0x10] sm:$0xff]
  %v2161 = vld [vmem:[%s2157 + $0x18] sm:$0xff]
  %v2162 = vld [vmem:[%s2157 + $0x20] sm:$0xff]
  %v2163 = vld [vmem:[%s2157 + $0x28] sm:$0xff]
  %v2164 = vld [vmem:[%s2157 + $0x30] sm:$0xff]
  %v2165 = vld [vmem:[%s2157 + $0x38] sm:$0xff]
  %v2167 = vsel %vm43, %v2149, 0
  %v2170 = vsel %vm43, %v2150, 0
  %v2173 = vsel %vm43, %v2151, 0
  %v2176 = vsel %vm43, %v2152, 0
  %v2179 = vsel %vm43, %v2153, 0
  %v2182 = vsel %vm43, %v2154, 0
  %v2185 = vsel %vm43, %v2155, 0
  %v2188 = vsel %vm43, %v2156, 0
  %2190 = vmatprep.subr.mxu0 0.0
  %2191 = vmatpush1.msra.mxu0 %v2158
  %2192 = vmatprep.subr.mxu0 0.0
  %2193 = vmatpush1.msra.mxu0 %v2159
  %2194 = vmatprep.subr.mxu0 0.0
  %2195 = vmatpush1.msra.mxu0 %v2160
  %2196 = vmatprep.subr.mxu0 0.0
  %2197 = vmatpush1.msra.mxu0 %v2161
  %2198 = vmatprep.subr.mxu0 0.0
  %2199 = vmatpush1.msra.mxu0 %v2162
  %2200 = vmatprep.subr.mxu0 0.0
  %2201 = vmatpush1.msra.mxu0 %v2163
  %2202 = vmatprep.subr.mxu0 0.0
  %2203 = vmatpush1.msra.mxu0 %v2164
  %2204 = vmatprep.subr.mxu0 0.0
  %2205 = vmatpush1.msra.mxu0 %v2165
  %2206 = vmatprep.subr.mxu0 0.0
  %2207 = vmatpush1.msra.mxu0 0.0
  %2208 = vmatprep.subr.mxu0 0.0
  %2209 = vmatpush1.msra.mxu0 0.0
  %2210 = vmatprep.subr.mxu0 0.0
  %2211 = vmatpush1.msra.mxu0 0.0
  %2212 = vmatprep.subr.mxu0 0.0
  %2213 = vmatpush1.msra.mxu0 0.0
  %2214 = vmatprep.subr.mxu0 0.0
  %2215 = vmatpush1.msra.mxu0 0.0
  %2216 = vmatprep.subr.mxu0 0.0
  %2217 = vmatpush1.msra.mxu0 0.0
  %2218 = vmatprep.subr.mxu0 0.0
  %2219 = vmatpush1.msra.mxu0 0.0
  %2220 = vmatprep.subr.mxu0 0.0
  %2221 = vmatpush1.msra.mxu0 0.0
  %2222 = vmatprep.subr.mxu0 0.0
  %2223 = vmatpush1.msra.mxu0 0.0
  %2224 = vmatprep.subr.mxu0 0.0
  %2225 = vmatpush1.msra.mxu0 0.0
  %2226 = vmatprep.subr.mxu0 0.0
  %2227 = vmatpush1.msra.mxu0 0.0
  %2228 = vmatprep.subr.mxu0 0.0
  %2229 = vmatpush1.msra.mxu0 0.0
  %2230 = vmatprep.subr.mxu0 0.0
  %2231 = vmatpush1.msra.mxu0 0.0
  %2232 = vmatprep.subr.mxu0 0.0
  %2233 = vmatpush1.msra.mxu0 0.0
  %2234 = vmatprep.subr.mxu0 0.0
  %2235 = vmatpush1.msra.mxu0 0.0
  %2236 = vmatprep.subr.mxu0 0.0
  %2237 = vmatpush1.msra.mxu0 0.0
  %2238 = vmatprep.subr.mxu0 0.0
  %2239 = vmatpush1.msra.mxu0 0.0
  %2240 = vmatprep.subr.mxu0 0.0
  %2241 = vmatpush1.msra.mxu0 0.0
  %2242 = vmatprep.subr.mxu0 0.0
  %2243 = vmatpush1.msra.mxu0 0.0
  %2244 = vmatprep.subr.mxu0 0.0
  %2245 = vmatpush1.msra.mxu0 0.0
  %2246 = vmatprep.subr.mxu0 0.0
  %2247 = vmatpush1.msra.mxu0 0.0
  %2248 = vmatprep.subr.mxu0 0.0
  %2249 = vmatpush1.msra.mxu0 0.0
  %2250 = vmatprep.subr.mxu0 0.0
  %2251 = vmatpush1.msra.mxu0 0.0
  %2252 = vmatprep.subr.mxu0 0.0
  %2253 = vmatpush1.msra.mxu0 0.0
  %2254 = vmatprep.mubr.f32.mxu0 0.0
  %2255 = vmatmul.mubr.f32.gmra.mrb[0].mxu0 %v2167
  %v2256 = vpop.f32.mrb[0].mxu0
  %v2257 = vadd.f32 0.0, %v2256
  %v2258 = vpop.f32.mrb[0].mxu0
  %2259 = vmatprep.mubr.f32.mxu0 0.0
  %2260 = vmatmul.mubr.f32.gmra.mrb[0].mxu0 %v2170
  %v2261 = vpop.f32.mrb[0].mxu0
  %v2262 = vadd.f32 0.0, %v2261
  %v2263 = vpop.f32.mrb[0].mxu0
  %2264 = vmatprep.mubr.f32.mxu0 0.0
  %2265 = vmatmul.mubr.f32.gmra.mrb[0].mxu0 %v2173
  %v2266 = vpop.f32.mrb[0].mxu0
  %v2267 = vadd.f32 0.0, %v2266
  %v2268 = vpop.f32.mrb[0].mxu0
  %2269 = vmatprep.mubr.f32.mxu0 0.0
  %2270 = vmatmul.mubr.f32.gmra.mrb[0].mxu0 %v2176
  %v2271 = vpop.f32.mrb[0].mxu0
  %v2272 = vadd.f32 0.0, %v2271
  %v2273 = vpop.f32.mrb[0].mxu0
  %2274 = vmatprep.mubr.f32.mxu0 0.0
  %2275 = vmatmul.mubr.f32.gmra.mrb[0].mxu0 %v2179
  %v2276 = vpop.f32.mrb[0].mxu0
  %v2277 = vadd.f32 0.0, %v2276
  %v2278 = vpop.f32.mrb[0].mxu0
  %2279 = vmatprep.mubr.f32.mxu0 0.0
  %2280 = vmatmul.mubr.f32.gmra.mrb[0].mxu0 %v2182
  %v2281 = vpop.f32.mrb[0].mxu0
  %v2282 = vadd.f32 0.0, %v2281
  %v2283 = vpop.f32.mrb[0].mxu0
  %2284 = vmatprep.mubr.f32.mxu0 0.0
  %2285 = vmatmul.mubr.f32.gmra.mrb[0].mxu0 %v2185
  %v2286 = vpop.f32.mrb[0].mxu0
  %v2287 = vadd.f32 0.0, %v2286
  %v2288 = vpop.f32.mrb[0].mxu0
  %2289 = vmatprep.mubr.f32.mxu0 0.0
  %2290 = vmatmul.mubr.f32.gmra.mrb[0].mxu0 %v2188
  %v2291 = vpop.f32.mrb[0].mxu0
  %v2292 = vadd.f32 0.0, %v2291
  %v2293 = vpop.f32.mrb[0].mxu0
  %2294 = vdwg.mxu0
  %v2295 = vadd.f32 %v2141, %v2257
  %v2296 = vadd.f32 %v2142, %v2262
  %v2297 = vadd.f32 %v2143, %v2267
  %v2298 = vadd.f32 %v2144, %v2272
  %v2299 = vadd.f32 %v2145, %v2277
  %v2300 = vadd.f32 %v2146, %v2282
  %v2301 = vadd.f32 %v2147, %v2287
  %v2302 = vadd.f32 %v2148, %v2292
  %v2303 = vld [vmem:[%s5] sm:$0x1]
  %v2305 = vlaneseq
  %v2306 = vshrl.u32 %v2305, 7
  %v2307 = vsub.s32 0, %v2306
  %v2308 = vrot.slane %v2303, %v2307
  %v2310 = vadd.f32 %v2295, %v2308
  %v2311 = vadd.f32 %v2296, %v2308
  %v2312 = vadd.f32 %v2297, %v2308
  %v2313 = vadd.f32 %v2298, %v2308
  %v2314 = vadd.f32 %v2299, %v2308
  %v2315 = vadd.f32 %v2300, %v2308
  %v2316 = vadd.f32 %v2301, %v2308
  %v2317 = vadd.f32 %v2302, %v2308
  %v2318 = vtanh.pop %v2310
  %v2319 = vtanh.pop %v2311
  %v2320 = vtanh.pop %v2312
  %v2321 = vtanh.pop %v2313
  %v2322 = vtanh.pop %v2314
  %v2323 = vtanh.pop %v2315
  %v2324 = vtanh.pop %v2316
  %v2325 = vtanh.pop %v2317
  %v2326 = vlaneseq
  %v2327 = vshrl.u32 %v2326, 7
  %v2328 = vlaneseq
  %v2329 = vand.u32 %v2328, 127
  %v2330 = vmul.u32 %v2327, 32
  %vm2331 = vcmp.eq.s32.totalorder %v2329, %v2330
  %v2332 = vsel %vm2331, 1, 0
  %v2333 = vcvt.s32.f32 %v2332
  %v2335 = vsel %vm43, %v2333, 0
  %2337 = vmatprep.subr.mxu0 0.0
  %2338 = vmatpush1.msra.mxu0 %v2318
  %2339 = vmatprep.subr.mxu0 0.0
  %2340 = vmatpush1.msra.mxu0 %v2319
  %2341 = vmatprep.subr.mxu0 0.0
  %2342 = vmatpush1.msra.mxu0 %v2320
  %2343 = vmatprep.subr.mxu0 0.0
  %2344 = vmatpush1.msra.mxu0 %v2321
  %2345 = vmatprep.subr.mxu0 0.0
  %2346 = vmatpush1.msra.mxu0 %v2322
  %2347 = vmatprep.subr.mxu0 0.0
  %2348 = vmatpush1.msra.mxu0 %v2323
  %2349 = vmatprep.subr.mxu0 0.0
  %2350 = vmatpush1.msra.mxu0 %v2324
  %2351 = vmatprep.subr.mxu0 0.0
  %2352 = vmatpush1.msra.mxu0 %v2325
  %2353 = vmatprep.subr.mxu0 0.0
  %2354 = vmatpush1.msra.mxu0 0.0
  %2355 = vmatprep.subr.mxu0 0.0
  %2356 = vmatpush1.msra.mxu0 0.0
  %2357 = vmatprep.subr.mxu0 0.0
  %2358 = vmatpush1.msra.mxu0 0.0
  %2359 = vmatprep.subr.mxu0 0.0
  %2360 = vmatpush1.msra.mxu0 0.0
  %2361 = vmatprep.subr.mxu0 0.0
  %2362 = vmatpush1.msra.mxu0 0.0
  %2363 = vmatprep.subr.mxu0 0.0
  %2364 = vmatpush1.msra.mxu0 0.0
  %2365 = vmatprep.subr.mxu0 0.0
  %2366 = vmatpush1.msra.mxu0 0.0
  %2367 = vmatprep.subr.mxu0 0.0
  %2368 = vmatpush1.msra.mxu0 0.0
  %2369 = vmatprep.subr.mxu0 0.0
  %2370 = vmatpush1.msra.mxu0 0.0
  %2371 = vmatprep.subr.mxu0 0.0
  %2372 = vmatpush1.msra.mxu0 0.0
  %2373 = vmatprep.subr.mxu0 0.0
  %2374 = vmatpush1.msra.mxu0 0.0
  %2375 = vmatprep.subr.mxu0 0.0
  %2376 = vmatpush1.msra.mxu0 0.0
  %2377 = vmatprep.subr.mxu0 0.0
  %2378 = vmatpush1.msra.mxu0 0.0
  %2379 = vmatprep.subr.mxu0 0.0
  %2380 = vmatpush1.msra.mxu0 0.0
  %2381 = vmatprep.subr.mxu0 0.0
  %2382 = vmatpush1.msra.mxu0 0.0
  %2383 = vmatprep.subr.mxu0 0.0
  %2384 = vmatpush1.msra.mxu0 0.0
  %2385 = vmatprep.subr.mxu0 0.0
  %2386 = vmatpush1.msra.mxu0 0.0
  %2387 = vmatprep.subr.mxu0 0.0
  %2388 = vmatpush1.msra.mxu0 0.0
  %2389 = vmatprep.subr.mxu0 0.0
  %2390 = vmatpush1.msra.mxu0 0.0
  %2391 = vmatprep.subr.mxu0 0.0
  %2392 = vmatpush1.msra.mxu0 0.0
  %2393 = vmatprep.subr.mxu0 0.0
  %2394 = vmatpush1.msra.mxu0 0.0
  %2395 = vmatprep.subr.mxu0 0.0
  %2396 = vmatpush1.msra.mxu0 0.0
  %2397 = vmatprep.subr.mxu0 0.0
  %2398 = vmatpush1.msra.mxu0 0.0
  %2399 = vmatprep.subr.mxu0 0.0
  %2400 = vmatpush1.msra.mxu0 0.0
  %2401 = vmatprep.mubr.f32.mxu0 0.0
  %2402 = vmatmul.mubr.f32.gmra.mrb[0].mxu0 %v2335
  %v2403 = vpop.f32.mrb[0].mxu0
  %v2404 = vadd.f32 0.0, %v2403
  %v2405 = vpop.f32.mrb[0].mxu0
  %2406 = vdwg.mxu0
  %v2407 = vld [vmem:[%s6] sm:$0xff]
  %v2408 = vld [vmem:[%s6 + $0x8] sm:$0xff]
  %v2409 = vld [vmem:[%s6 + $0x10] sm:$0xff]
  %v2410 = vld [vmem:[%s6 + $0x18] sm:$0xff]
  %v2411 = vld [vmem:[%s6 + $0x20] sm:$0xff]
  %v2412 = vld [vmem:[%s6 + $0x28] sm:$0xff]
  %v2413 = vld [vmem:[%s6 + $0x30] sm:$0xff]
  %v2414 = vld [vmem:[%s6 + $0x38] sm:$0xff]
  %v2415 = vld [vmem:[%s6 + $0x40] sm:$0xff]
  %v2416 = vld [vmem:[%s6 + $0x48] sm:$0xff]
  %v2417 = vld [vmem:[%s6 + $0x50] sm:$0xff]
  %v2418 = vld [vmem:[%s6 + $0x58] sm:$0xff]
  %v2419 = vld [vmem:[%s6 + $0x60] sm:$0xff]
  %v2420 = vld [vmem:[%s6 + $0x68] sm:$0xff]
  %v2421 = vld [vmem:[%s6 + $0x70] sm:$0xff]
  %v2422 = vld [vmem:[%s6 + $0x78] sm:$0xff]
  %v2423 = vld [vmem:[%s6 + $0x80] sm:$0xff]
  %v2424 = vld [vmem:[%s6 + $0x88] sm:$0xff]
  %v2425 = vld [vmem:[%s6 + $0x90] sm:$0xff]
  %v2426 = vld [vmem:[%s6 + $0x98] sm:$0xff]
  %v2427 = vld [vmem:[%s6 + $0xa0] sm:$0xff]
  %v2428 = vld [vmem:[%s6 + $0xa8] sm:$0xff]
  %v2429 = vld [vmem:[%s6 + $0xb0] sm:$0xff]
  %v2430 = vld [vmem:[%s6 + $0xb8] sm:$0xff]
  %v2431 = vadd.s32 %v2330, 1
  %vm2432 = vcmp.eq.s32.totalorder %v2329, %v2431
  %v2433 = vsel %vm2432, 1, 0
  %v2434 = vcvt.s32.f32 %v2433
  %v2436 = vsel %vm43, %v2434, 0
  %2438 = vmatprep.subr.mxu0 0.0
  %2439 = vmatpush1.msra.mxu0 %v2318
  %2440 = vmatprep.subr.mxu0 0.0
  %2441 = vmatpush1.msra.mxu0 %v2319
  %2442 = vmatprep.subr.mxu0 0.0
  %2443 = vmatpush1.msra.mxu0 %v2320
  %2444 = vmatprep.subr.mxu0 0.0
  %2445 = vmatpush1.msra.mxu0 %v2321
  %2446 = vmatprep.subr.mxu0 0.0
  %2447 = vmatpush1.msra.mxu0 %v2322
  %2448 = vmatprep.subr.mxu0 0.0
  %2449 = vmatpush1.msra.mxu0 %v2323
  %2450 = vmatprep.subr.mxu0 0.0
  %2451 = vmatpush1.msra.mxu0 %v2324
  %2452 = vmatprep.subr.mxu0 0.0
  %2453 = vmatpush1.msra.mxu0 %v2325
  %2454 = vmatprep.subr.mxu0 0.0
  %2455 = vmatpush1.msra.mxu0 0.0
  %2456 = vmatprep.subr.mxu0 0.0
  %2457 = vmatpush1.msra.mxu0 0.0
  %2458 = vmatprep.subr.mxu0 0.0
  %2459 = vmatpush1.msra.mxu0 0.0
  %2460 = vmatprep.subr.mxu0 0.0
  %2461 = vmatpush1.msra.mxu0 0.0
  %2462 = vmatprep.subr.mxu0 0.0
  %2463 = vmatpush1.msra.mxu0 0.0
  %2464 = vmatprep.subr.mxu0 0.0
  %2465 = vmatpush1.msra.mxu0 0.0
  %2466 = vmatprep.subr.mxu0 0.0
  %2467 = vmatpush1.msra.mxu0 0.0
  %2468 = vmatprep.subr.mxu0 0.0
  %2469 = vmatpush1.msra.mxu0 0.0
  %2470 = vmatprep.subr.mxu0 0.0
  %2471 = vmatpush1.msra.mxu0 0.0
  %2472 = vmatprep.subr.mxu0 0.0
  %2473 = vmatpush1.msra.mxu0 0.0
  %2474 = vmatprep.subr.mxu0 0.0
  %2475 = vmatpush1.msra.mxu0 0.0
  %2476 = vmatprep.subr.mxu0 0.0
  %2477 = vmatpush1.msra.mxu0 0.0
  %2478 = vmatprep.subr.mxu0 0.0
  %2479 = vmatpush1.msra.mxu0 0.0
  %2480 = vmatprep.subr.mxu0 0.0
  %2481 = vmatpush1.msra.mxu0 0.0
  %2482 = vmatprep.subr.mxu0 0.0
  %2483 = vmatpush1.msra.mxu0 0.0
  %2484 = vmatprep.subr.mxu0 0.0
  %2485 = vmatpush1.msra.mxu0 0.0
  %2486 = vmatprep.subr.mxu0 0.0
  %2487 = vmatpush1.msra.mxu0 0.0
  %2488 = vmatprep.subr.mxu0 0.0
  %2489 = vmatpush1.msra.mxu0 0.0
  %2490 = vmatprep.subr.mxu0 0.0
  %2491 = vmatpush1.msra.mxu0 0.0
  %2492 = vmatprep.subr.mxu0 0.0
  %2493 = vmatpush1.msra.mxu0 0.0
  %2494 = vmatprep.subr.mxu0 0.0
  %2495 = vmatpush1.msra.mxu0 0.0
  %2496 = vmatprep.subr.mxu0 0.0
  %2497 = vmatpush1.msra.mxu0 0.0
  %2498 = vmatprep.subr.mxu0 0.0
  %2499 = vmatpush1.msra.mxu0 0.0
  %2500 = vmatprep.subr.mxu0 0.0
  %2501 = vmatpush1.msra.mxu0 0.0
  %2502 = vmatprep.mubr.f32.mxu0 0.0
  %2503 = vmatmul.mubr.f32.gmra.mrb[0].mxu0 %v2436
  %v2504 = vpop.f32.mrb[0].mxu0
  %v2505 = vadd.f32 0.0, %v2504
  %v2506 = vpop.f32.mrb[0].mxu0
  %2507 = vdwg.mxu0
  %v2508 = vld [vmem:[%s6 + $0xc0] sm:$0xff]
  %v2509 = vld [vmem:[%s6 + $0xc8] sm:$0xff]
  %v2510 = vld [vmem:[%s6 + $0xd0] sm:$0xff]
  %v2511 = vld [vmem:[%s6 + $0xd8] sm:$0xff]
  %v2512 = vld [vmem:[%s6 + $0xe0] sm:$0xff]
  %v2513 = vld [vmem:[%s6 + $0xe8] sm:$0xff]
  %v2514 = vld [vmem:[%s6 + $0xf0] sm:$0xff]
  %v2515 = vld [vmem:[%s6 + $0xf8] sm:$0xff]
  %v2516 = vld [vmem:[%s6 + $0x100] sm:$0xff]
  %v2517 = vld [vmem:[%s6 + $0x108] sm:$0xff]
  %v2518 = vld [vmem:[%s6 + $0x110] sm:$0xff]
  %v2519 = vld [vmem:[%s6 + $0x118] sm:$0xff]
  %v2520 = vld [vmem:[%s6 + $0x120] sm:$0xff]
  %v2521 = vld [vmem:[%s6 + $0x128] sm:$0xff]
  %v2522 = vld [vmem:[%s6 + $0x130] sm:$0xff]
  %v2523 = vld [vmem:[%s6 + $0x138] sm:$0xff]
  %v2524 = vld [vmem:[%s6 + $0x140] sm:$0xff]
  %v2525 = vld [vmem:[%s6 + $0x148] sm:$0xff]
  %v2526 = vld [vmem:[%s6 + $0x150] sm:$0xff]
  %v2527 = vld [vmem:[%s6 + $0x158] sm:$0xff]
  %v2528 = vld [vmem:[%s6 + $0x160] sm:$0xff]
  %v2529 = vld [vmem:[%s6 + $0x168] sm:$0xff]
  %v2530 = vld [vmem:[%s6 + $0x170] sm:$0xff]
  %v2531 = vld [vmem:[%s6 + $0x178] sm:$0xff]
  %v2533 = vsel %vm99, %v2505, 0
  %2535 = vmatprep.subr.mxu0 %v2509
  %2536 = vmatpush1.msra.mxu0 %v2508
  %2537 = vmatprep.subr.mxu0 %v2515
  %2538 = vmatpush1.msra.mxu0 %v2514
  %2539 = vmatprep.subr.mxu0 %v2521
  %2540 = vmatpush1.msra.mxu0 %v2520
  %2541 = vmatprep.subr.mxu0 %v2527
  %2542 = vmatpush1.msra.mxu0 %v2526
  %2543 = vmatprep.subr.mxu0 0.0
  %2544 = vmatpush1.msra.mxu0 0.0
  %2545 = vmatprep.subr.mxu0 0.0
  %2546 = vmatpush1.msra.mxu0 0.0
  %2547 = vmatprep.subr.mxu0 0.0
  %2548 = vmatpush1.msra.mxu0 0.0
  %2549 = vmatprep.subr.mxu0 0.0
  %2550 = vmatpush1.msra.mxu0 0.0
  %2551 = vmatprep.subr.mxu0 0.0
  %2552 = vmatpush1.msra.mxu0 0.0
  %2553 = vmatprep.subr.mxu0 0.0
  %2554 = vmatpush1.msra.mxu0 0.0
  %2555 = vmatprep.subr.mxu0 0.0
  %2556 = vmatpush1.msra.mxu0 0.0
  %2557 = vmatprep.subr.mxu0 0.0
  %2558 = vmatpush1.msra.mxu0 0.0
  %2559 = vmatprep.subr.mxu0 0.0
  %2560 = vmatpush1.msra.mxu0 0.0
  %2561 = vmatprep.subr.mxu0 0.0
  %2562 = vmatpush1.msra.mxu0 0.0
  %2563 = vmatprep.subr.mxu0 0.0
  %2564 = vmatpush1.msra.mxu0 0.0
  %2565 = vmatprep.subr.mxu0 0.0
  %2566 = vmatpush1.msra.mxu0 0.0
  %2567 = vmatprep.subr.mxu0 0.0
  %2568 = vmatpush1.msra.mxu0 0.0
  %2569 = vmatprep.subr.mxu0 0.0
  %2570 = vmatpush1.msra.mxu0 0.0
  %2571 = vmatprep.subr.mxu0 0.0
  %2572 = vmatpush1.msra.mxu0 0.0
  %2573 = vmatprep.subr.mxu0 0.0
  %2574 = vmatpush1.msra.mxu0 0.0
  %2575 = vmatprep.subr.mxu0 0.0
  %2576 = vmatpush1.msra.mxu0 0.0
  %2577 = vmatprep.subr.mxu0 0.0
  %2578 = vmatpush1.msra.mxu0 0.0
  %2579 = vmatprep.subr.mxu0 0.0
  %2580 = vmatpush1.msra.mxu0 0.0
  %2581 = vmatprep.subr.mxu0 0.0
  %2582 = vmatpush1.msra.mxu0 0.0
  %2583 = vmatprep.subr.mxu0 0.0
  %2584 = vmatpush1.msra.mxu0 0.0
  %2585 = vmatprep.subr.mxu0 0.0
  %2586 = vmatpush1.msra.mxu0 0.0
  %2587 = vmatprep.subr.mxu0 0.0
  %2588 = vmatpush1.msra.mxu0 0.0
  %2589 = vmatprep.subr.mxu0 0.0
  %2590 = vmatpush1.msra.mxu0 0.0
  %2591 = vmatprep.subr.mxu0 0.0
  %2592 = vmatpush1.msra.mxu0 0.0
  %2593 = vmatprep.subr.mxu0 0.0
  %2594 = vmatpush1.msra.mxu0 0.0
  %2595 = vmatprep.subr.mxu0 0.0
  %2596 = vmatpush1.msra.mxu0 0.0
  %2597 = vmatprep.subr.mxu0 0.0
  %2598 = vmatpush1.msra.mxu0 0.0
  %2599 = vmatprep.mubr.f32.mxu0 0.0
  %2600 = vmatmul.mubr.f32.gmra.mrb[0].mxu0 %v2533
  %v2601 = vpop.f32.mrb[0].mxu0
  %v2602 = vadd.f32 0.0, %v2601
  %v2603 = vpop.f32.mrb[0].mxu0
  %v2604 = vadd.f32 0.0, %v2603
  %2605 = vdwg.mxu0
  %2606 = vmatprep.subr.mxu0 %v2511
  %2607 = vmatpush1.msra.mxu0 %v2510
  %2608 = vmatprep.subr.mxu0 %v2517
  %2609 = vmatpush1.msra.mxu0 %v2516
  %2610 = vmatprep.subr.mxu0 %v2523
  %2611 = vmatpush1.msra.mxu0 %v2522
  %2612 = vmatprep.subr.mxu0 %v2529
  %2613 = vmatpush1.msra.mxu0 %v2528
  %2614 = vmatprep.subr.mxu0 0.0
  %2615 = vmatpush1.msra.mxu0 0.0
  %2616 = vmatprep.subr.mxu0 0.0
  %2617 = vmatpush1.msra.mxu0 0.0
  %2618 = vmatprep.subr.mxu0 0.0
  %2619 = vmatpush1.msra.mxu0 0.0
  %2620 = vmatprep.subr.mxu0 0.0
  %2621 = vmatpush1.msra.mxu0 0.0
  %2622 = vmatprep.subr.mxu0 0.0
  %2623 = vmatpush1.msra.mxu0 0.0
  %2624 = vmatprep.subr.mxu0 0.0
  %2625 = vmatpush1.msra.mxu0 0.0
  %2626 = vmatprep.subr.mxu0 0.0
  %2627 = vmatpush1.msra.mxu0 0.0
  %2628 = vmatprep.subr.mxu0 0.0
  %2629 = vmatpush1.msra.mxu0 0.0
  %2630 = vmatprep.subr.mxu0 0.0
  %2631 = vmatpush1.msra.mxu0 0.0
  %2632 = vmatprep.subr.mxu0 0.0
  %2633 = vmatpush1.msra.mxu0 0.0
  %2634 = vmatprep.subr.mxu0 0.0
  %2635 = vmatpush1.msra.mxu0 0.0
  %2636 = vmatprep.subr.mxu0 0.0
  %2637 = vmatpush1.msra.mxu0 0.0
  %2638 = vmatprep.subr.mxu0 0.0
  %2639 = vmatpush1.msra.mxu0 0.0
  %2640 = vmatprep.subr.mxu0 0.0
  %2641 = vmatpush1.msra.mxu0 0.0
  %2642 = vmatprep.subr.mxu0 0.0
  %2643 = vmatpush1.msra.mxu0 0.0
  %2644 = vmatprep.subr.mxu0 0.0
  %2645 = vmatpush1.msra.mxu0 0.0
  %2646 = vmatprep.subr.mxu0 0.0
  %2647 = vmatpush1.msra.mxu0 0.0
  %2648 = vmatprep.subr.mxu0 0.0
  %2649 = vmatpush1.msra.mxu0 0.0
  %2650 = vmatprep.subr.mxu0 0.0
  %2651 = vmatpush1.msra.mxu0 0.0
  %2652 = vmatprep.subr.mxu0 0.0
  %2653 = vmatpush1.msra.mxu0 0.0
  %2654 = vmatprep.subr.mxu0 0.0
  %2655 = vmatpush1.msra.mxu0 0.0
  %2656 = vmatprep.subr.mxu0 0.0
  %2657 = vmatpush1.msra.mxu0 0.0
  %2658 = vmatprep.subr.mxu0 0.0
  %2659 = vmatpush1.msra.mxu0 0.0
  %2660 = vmatprep.subr.mxu0 0.0
  %2661 = vmatpush1.msra.mxu0 0.0
  %2662 = vmatprep.subr.mxu0 0.0
  %2663 = vmatpush1.msra.mxu0 0.0
  %2664 = vmatprep.subr.mxu0 0.0
  %2665 = vmatpush1.msra.mxu0 0.0
  %2666 = vmatprep.subr.mxu0 0.0
  %2667 = vmatpush1.msra.mxu0 0.0
  %2668 = vmatprep.subr.mxu0 0.0
  %2669 = vmatpush1.msra.mxu0 0.0
  %2670 = vmatprep.mubr.f32.mxu0 0.0
  %2671 = vmatmul.mubr.f32.gmra.mrb[0].mxu0 %v2533
  %v2672 = vpop.f32.mrb[0].mxu0
  %v2673 = vadd.f32 0.0, %v2672
  %v2674 = vpop.f32.mrb[0].mxu0
  %v2675 = vadd.f32 0.0, %v2674
  %2676 = vdwg.mxu0
  %2677 = vmatprep.subr.mxu0 %v2513
  %2678 = vmatpush1.msra.mxu0 %v2512
  %2679 = vmatprep.subr.mxu0 %v2519
  %2680 = vmatpush1.msra.mxu0 %v2518
  %2681 = vmatprep.subr.mxu0 %v2525
  %2682 = vmatpush1.msra.mxu0 %v2524
  %2683 = vmatprep.subr.mxu0 %v2531
  %2684 = vmatpush1.msra.mxu0 %v2530
  %2685 = vmatprep.subr.mxu0 0.0
  %2686 = vmatpush1.msra.mxu0 0.0
  %2687 = vmatprep.subr.mxu0 0.0
  %2688 = vmatpush1.msra.mxu0 0.0
  %2689 = vmatprep.subr.mxu0 0.0
  %2690 = vmatpush1.msra.mxu0 0.0
  %2691 = vmatprep.subr.mxu0 0.0
  %2692 = vmatpush1.msra.mxu0 0.0
  %2693 = vmatprep.subr.mxu0 0.0
  %2694 = vmatpush1.msra.mxu0 0.0
  %2695 = vmatprep.subr.mxu0 0.0
  %2696 = vmatpush1.msra.mxu0 0.0
  %2697 = vmatprep.subr.mxu0 0.0
  %2698 = vmatpush1.msra.mxu0 0.0
  %2699 = vmatprep.subr.mxu0 0.0
  %2700 = vmatpush1.msra.mxu0 0.0
  %2701 = vmatprep.subr.mxu0 0.0
  %2702 = vmatpush1.msra.mxu0 0.0
  %2703 = vmatprep.subr.mxu0 0.0
  %2704 = vmatpush1.msra.mxu0 0.0
  %2705 = vmatprep.subr.mxu0 0.0
  %2706 = vmatpush1.msra.mxu0 0.0
  %2707 = vmatprep.subr.mxu0 0.0
  %2708 = vmatpush1.msra.mxu0 0.0
  %2709 = vmatprep.subr.mxu0 0.0
  %2710 = vmatpush1.msra.mxu0 0.0
  %2711 = vmatprep.subr.mxu0 0.0
  %2712 = vmatpush1.msra.mxu0 0.0
  %2713 = vmatprep.subr.mxu0 0.0
  %2714 = vmatpush1.msra.mxu0 0.0
  %2715 = vmatprep.subr.mxu0 0.0
  %2716 = vmatpush1.msra.mxu0 0.0
  %2717 = vmatprep.subr.mxu0 0.0
  %2718 = vmatpush1.msra.mxu0 0.0
  %2719 = vmatprep.subr.mxu0 0.0
  %2720 = vmatpush1.msra.mxu0 0.0
  %2721 = vmatprep.subr.mxu0 0.0
  %2722 = vmatpush1.msra.mxu0 0.0
  %2723 = vmatprep.subr.mxu0 0.0
  %2724 = vmatpush1.msra.mxu0 0.0
  %2725 = vmatprep.subr.mxu0 0.0
  %2726 = vmatpush1.msra.mxu0 0.0
  %2727 = vmatprep.subr.mxu0 0.0
  %2728 = vmatpush1.msra.mxu0 0.0
  %2729 = vmatprep.subr.mxu0 0.0
  %2730 = vmatpush1.msra.mxu0 0.0
  %2731 = vmatprep.subr.mxu0 0.0
  %2732 = vmatpush1.msra.mxu0 0.0
  %2733 = vmatprep.subr.mxu0 0.0
  %2734 = vmatpush1.msra.mxu0 0.0
  %2735 = vmatprep.subr.mxu0 0.0
  %2736 = vmatpush1.msra.mxu0 0.0
  %2737 = vmatprep.subr.mxu0 0.0
  %2738 = vmatpush1.msra.mxu0 0.0
  %2739 = vmatprep.subr.mxu0 0.0
  %2740 = vmatpush1.msra.mxu0 0.0
  %2741 = vmatprep.mubr.f32.mxu0 0.0
  %2742 = vmatmul.mubr.f32.gmra.mrb[0].mxu0 %v2533
  %v2743 = vpop.f32.mrb[0].mxu0
  %v2744 = vadd.f32 0.0, %v2743
  %v2745 = vpop.f32.mrb[0].mxu0
  %v2746 = vadd.f32 0.0, %v2745
  %2747 = vdwg.mxu0
  %v2749 = vsel %vm99, %v2404, 0
  %2751 = vmatprep.subr.mxu0 %v2408
  %2752 = vmatpush1.msra.mxu0 %v2407
  %2753 = vmatprep.subr.mxu0 %v2414
  %2754 = vmatpush1.msra.mxu0 %v2413
  %2755 = vmatprep.subr.mxu0 %v2420
  %2756 = vmatpush1.msra.mxu0 %v2419
  %2757 = vmatprep.subr.mxu0 %v2426
  %2758 = vmatpush1.msra.mxu0 %v2425
  %2759 = vmatprep.subr.mxu0 0.0
  %2760 = vmatpush1.msra.mxu0 0.0
  %2761 = vmatprep.subr.mxu0 0.0
  %2762 = vmatpush1.msra.mxu0 0.0
  %2763 = vmatprep.subr.mxu0 0.0
  %2764 = vmatpush1.msra.mxu0 0.0
  %2765 = vmatprep.subr.mxu0 0.0
  %2766 = vmatpush1.msra.mxu0 0.0
  %2767 = vmatprep.subr.mxu0 0.0
  %2768 = vmatpush1.msra.mxu0 0.0
  %2769 = vmatprep.subr.mxu0 0.0
  %2770 = vmatpush1.msra.mxu0 0.0
  %2771 = vmatprep.subr.mxu0 0.0
  %2772 = vmatpush1.msra.mxu0 0.0
  %2773 = vmatprep.subr.mxu0 0.0
  %2774 = vmatpush1.msra.mxu0 0.0
  %2775 = vmatprep.subr.mxu0 0.0
  %2776 = vmatpush1.msra.mxu0 0.0
  %2777 = vmatprep.subr.mxu0 0.0
  %2778 = vmatpush1.msra.mxu0 0.0
  %2779 = vmatprep.subr.mxu0 0.0
  %2780 = vmatpush1.msra.mxu0 0.0
  %2781 = vmatprep.subr.mxu0 0.0
  %2782 = vmatpush1.msra.mxu0 0.0
  %2783 = vmatprep.subr.mxu0 0.0
  %2784 = vmatpush1.msra.mxu0 0.0
  %2785 = vmatprep.subr.mxu0 0.0
  %2786 = vmatpush1.msra.mxu0 0.0
  %2787 = vmatprep.subr.mxu0 0.0
  %2788 = vmatpush1.msra.mxu0 0.0
  %2789 = vmatprep.subr.mxu0 0.0
  %2790 = vmatpush1.msra.mxu0 0.0
  %2791 = vmatprep.subr.mxu0 0.0
  %2792 = vmatpush1.msra.mxu0 0.0
  %2793 = vmatprep.subr.mxu0 0.0
  %2794 = vmatpush1.msra.mxu0 0.0
  %2795 = vmatprep.subr.mxu0 0.0
  %2796 = vmatpush1.msra.mxu0 0.0
  %2797 = vmatprep.subr.mxu0 0.0
  %2798 = vmatpush1.msra.mxu0 0.0
  %2799 = vmatprep.subr.mxu0 0.0
  %2800 = vmatpush1.msra.mxu0 0.0
  %2801 = vmatprep.subr.mxu0 0.0
  %2802 = vmatpush1.msra.mxu0 0.0
  %2803 = vmatprep.subr.mxu0 0.0
  %2804 = vmatpush1.msra.mxu0 0.0
  %2805 = vmatprep.subr.mxu0 0.0
  %2806 = vmatpush1.msra.mxu0 0.0
  %2807 = vmatprep.subr.mxu0 0.0
  %2808 = vmatpush1.msra.mxu0 0.0
  %2809 = vmatprep.subr.mxu0 0.0
  %2810 = vmatpush1.msra.mxu0 0.0
  %2811 = vmatprep.subr.mxu0 0.0
  %2812 = vmatpush1.msra.mxu0 0.0
  %2813 = vmatprep.subr.mxu0 0.0
  %2814 = vmatpush1.msra.mxu0 0.0
  %2815 = vmatprep.mubr.f32.mxu0 0.0
  %2816 = vmatmul.mubr.f32.gmra.mrb[0].mxu0 %v2749
  %v2817 = vpop.f32.mrb[0].mxu0
  %v2818 = vadd.f32 %v2602, %v2817
  %v2819 = vpop.f32.mrb[0].mxu0
  %v2820 = vadd.f32 %v2604, %v2819
  %2821 = vdwg.mxu0
  %2822 = vmatprep.subr.mxu0 %v2410
  %2823 = vmatpush1.msra.mxu0 %v2409
  %2824 = vmatprep.subr.mxu0 %v2416
  %2825 = vmatpush1.msra.mxu0 %v2415
  %2826 = vmatprep.subr.mxu0 %v2422
  %2827 = vmatpush1.msra.mxu0 %v2421
  %2828 = vmatprep.subr.mxu0 %v2428
  %2829 = vmatpush1.msra.mxu0 %v2427
  %2830 = vmatprep.subr.mxu0 0.0
  %2831 = vmatpush1.msra.mxu0 0.0
  %2832 = vmatprep.subr.mxu0 0.0
  %2833 = vmatpush1.msra.mxu0 0.0
  %2834 = vmatprep.subr.mxu0 0.0
  %2835 = vmatpush1.msra.mxu0 0.0
  %2836 = vmatprep.subr.mxu0 0.0
  %2837 = vmatpush1.msra.mxu0 0.0
  %2838 = vmatprep.subr.mxu0 0.0
  %2839 = vmatpush1.msra.mxu0 0.0
  %2840 = vmatprep.subr.mxu0 0.0
  %2841 = vmatpush1.msra.mxu0 0.0
  %2842 = vmatprep.subr.mxu0 0.0
  %2843 = vmatpush1.msra.mxu0 0.0
  %2844 = vmatprep.subr.mxu0 0.0
  %2845 = vmatpush1.msra.mxu0 0.0
  %2846 = vmatprep.subr.mxu0 0.0
  %2847 = vmatpush1.msra.mxu0 0.0
  %2848 = vmatprep.subr.mxu0 0.0
  %2849 = vmatpush1.msra.mxu0 0.0
  %2850 = vmatprep.subr.mxu0 0.0
  %2851 = vmatpush1.msra.mxu0 0.0
  %2852 = vmatprep.subr.mxu0 0.0
  %2853 = vmatpush1.msra.mxu0 0.0
  %2854 = vmatprep.subr.mxu0 0.0
  %2855 = vmatpush1.msra.mxu0 0.0
  %2856 = vmatprep.subr.mxu0 0.0
  %2857 = vmatpush1.msra.mxu0 0.0
  %2858 = vmatprep.subr.mxu0 0.0
  %2859 = vmatpush1.msra.mxu0 0.0
  %2860 = vmatprep.subr.mxu0 0.0
  %2861 = vmatpush1.msra.mxu0 0.0
  %2862 = vmatprep.subr.mxu0 0.0
  %2863 = vmatpush1.msra.mxu0 0.0
  %2864 = vmatprep.subr.mxu0 0.0
  %2865 = vmatpush1.msra.mxu0 0.0
  %2866 = vmatprep.subr.mxu0 0.0
  %2867 = vmatpush1.msra.mxu0 0.0
  %2868 = vmatprep.subr.mxu0 0.0
  %2869 = vmatpush1.msra.mxu0 0.0
  %2870 = vmatprep.subr.mxu0 0.0
  %2871 = vmatpush1.msra.mxu0 0.0
  %2872 = vmatprep.subr.mxu0 0.0
  %2873 = vmatpush1.msra.mxu0 0.0
  %2874 = vmatprep.subr.mxu0 0.0
  %2875 = vmatpush1.msra.mxu0 0.0
  %2876 = vmatprep.subr.mxu0 0.0
  %2877 = vmatpush1.msra.mxu0 0.0
  %2878 = vmatprep.subr.mxu0 0.0
  %2879 = vmatpush1.msra.mxu0 0.0
  %2880 = vmatprep.subr.mxu0 0.0
  %2881 = vmatpush1.msra.mxu0 0.0
  %2882 = vmatprep.subr.mxu0 0.0
  %2883 = vmatpush1.msra.mxu0 0.0
  %2884 = vmatprep.subr.mxu0 0.0
  %2885 = vmatpush1.msra.mxu0 0.0
  %2886 = vmatprep.mubr.f32.mxu0 0.0
  %2887 = vmatmul.mubr.f32.gmra.mrb[0].mxu0 %v2749
  %v2888 = vpop.f32.mrb[0].mxu0
  %v2889 = vadd.f32 %v2673, %v2888
  %v2890 = vpop.f32.mrb[0].mxu0
  %v2891 = vadd.f32 %v2675, %v2890
  %2892 = vdwg.mxu0
  %2893 = vmatprep.subr.mxu0 %v2412
  %2894 = vmatpush1.msra.mxu0 %v2411
  %2895 = vmatprep.subr.mxu0 %v2418
  %2896 = vmatpush1.msra.mxu0 %v2417
  %2897 = vmatprep.subr.mxu0 %v2424
  %2898 = vmatpush1.msra.mxu0 %v2423
  %2899 = vmatprep.subr.mxu0 %v2430
  %2900 = vmatpush1.msra.mxu0 %v2429
  %2901 = vmatprep.subr.mxu0 0.0
  %2902 = vmatpush1.msra.mxu0 0.0
  %2903 = vmatprep.subr.mxu0 0.0
  %2904 = vmatpush1.msra.mxu0 0.0
  %2905 = vmatprep.subr.mxu0 0.0
  %2906 = vmatpush1.msra.mxu0 0.0
  %2907 = vmatprep.subr.mxu0 0.0
  %2908 = vmatpush1.msra.mxu0 0.0
  %2909 = vmatprep.subr.mxu0 0.0
  %2910 = vmatpush1.msra.mxu0 0.0
  %2911 = vmatprep.subr.mxu0 0.0
  %2912 = vmatpush1.msra.mxu0 0.0
  %2913 = vmatprep.subr.mxu0 0.0
  %2914 = vmatpush1.msra.mxu0 0.0
  %2915 = vmatprep.subr.mxu0 0.0
  %2916 = vmatpush1.msra.mxu0 0.0
  %2917 = vmatprep.subr.mxu0 0.0
  %2918 = vmatpush1.msra.mxu0 0.0
  %2919 = vmatprep.subr.mxu0 0.0
  %2920 = vmatpush1.msra.mxu0 0.0
  %2921 = vmatprep.subr.mxu0 0.0
  %2922 = vmatpush1.msra.mxu0 0.0
  %2923 = vmatprep.subr.mxu0 0.0
  %2924 = vmatpush1.msra.mxu0 0.0
  %2925 = vmatprep.subr.mxu0 0.0
  %2926 = vmatpush1.msra.mxu0 0.0
  %2927 = vmatprep.subr.mxu0 0.0
  %2928 = vmatpush1.msra.mxu0 0.0
  %2929 = vmatprep.subr.mxu0 0.0
  %2930 = vmatpush1.msra.mxu0 0.0
  %2931 = vmatprep.subr.mxu0 0.0
  %2932 = vmatpush1.msra.mxu0 0.0
  %2933 = vmatprep.subr.mxu0 0.0
  %2934 = vmatpush1.msra.mxu0 0.0
  %2935 = vmatprep.subr.mxu0 0.0
  %2936 = vmatpush1.msra.mxu0 0.0
  %2937 = vmatprep.subr.mxu0 0.0
  %2938 = vmatpush1.msra.mxu0 0.0
  %2939 = vmatprep.subr.mxu0 0.0
  %2940 = vmatpush1.msra.mxu0 0.0
  %2941 = vmatprep.subr.mxu0 0.0
  %2942 = vmatpush1.msra.mxu0 0.0
  %2943 = vmatprep.subr.mxu0 0.0
  %2944 = vmatpush1.msra.mxu0 0.0
  %2945 = vmatprep.subr.mxu0 0.0
  %2946 = vmatpush1.msra.mxu0 0.0
  %2947 = vmatprep.subr.mxu0 0.0
  %2948 = vmatpush1.msra.mxu0 0.0
  %2949 = vmatprep.subr.mxu0 0.0
  %2950 = vmatpush1.msra.mxu0 0.0
  %2951 = vmatprep.subr.mxu0 0.0
  %2952 = vmatpush1.msra.mxu0 0.0
  %2953 = vmatprep.subr.mxu0 0.0
  %2954 = vmatpush1.msra.mxu0 0.0
  %2955 = vmatprep.subr.mxu0 0.0
  %2956 = vmatpush1.msra.mxu0 0.0
  %2957 = vmatprep.mubr.f32.mxu0 0.0
  %2958 = vmatmul.mubr.f32.gmra.mrb[0].mxu0 %v2749
  %v2959 = vpop.f32.mrb[0].mxu0
  %v2960 = vadd.f32 %v2744, %v2959
  %v2961 = vpop.f32.mrb[0].mxu0
  %v2962 = vadd.f32 %v2746, %v2961
  %2963 = vdwg.mxu0
  %v2964 = vadd.s32 %v2330, 2
  %vm2965 = vcmp.eq.s32.totalorder %v2329, %v2964
  %v2966 = vsel %vm2965, 1, 0
  %v2967 = vcvt.s32.f32 %v2966
  %v2969 = vsel %vm43, %v2967, 0
  %2971 = vmatprep.subr.mxu0 0.0
  %2972 = vmatpush1.msra.mxu0 %v2318
  %2973 = vmatprep.subr.mxu0 0.0
  %2974 = vmatpush1.msra.mxu0 %v2319
  %2975 = vmatprep.subr.mxu0 0.0
  %2976 = vmatpush1.msra.mxu0 %v2320
  %2977 = vmatprep.subr.mxu0 0.0
  %2978 = vmatpush1.msra.mxu0 %v2321
  %2979 = vmatprep.subr.mxu0 0.0
  %2980 = vmatpush1.msra.mxu0 %v2322
  %2981 = vmatprep.subr.mxu0 0.0
  %2982 = vmatpush1.msra.mxu0 %v2323
  %2983 = vmatprep.subr.mxu0 0.0
  %2984 = vmatpush1.msra.mxu0 %v2324
  %2985 = vmatprep.subr.mxu0 0.0
  %2986 = vmatpush1.msra.mxu0 %v2325
  %2987 = vmatprep.subr.mxu0 0.0
  %2988 = vmatpush1.msra.mxu0 0.0
  %2989 = vmatprep.subr.mxu0 0.0
  %2990 = vmatpush1.msra.mxu0 0.0
  %2991 = vmatprep.subr.mxu0 0.0
  %2992 = vmatpush1.msra.mxu0 0.0
  %2993 = vmatprep.subr.mxu0 0.0
  %2994 = vmatpush1.msra.mxu0 0.0
  %2995 = vmatprep.subr.mxu0 0.0
  %2996 = vmatpush1.msra.mxu0 0.0
  %2997 = vmatprep.subr.mxu0 0.0
  %2998 = vmatpush1.msra.mxu0 0.0
  %2999 = vmatprep.subr.mxu0 0.0
  %3000 = vmatpush1.msra.mxu0 0.0
  %3001 = vmatprep.subr.mxu0 0.0
  %3002 = vmatpush1.msra.mxu0 0.0
  %3003 = vmatprep.subr.mxu0 0.0
  %3004 = vmatpush1.msra.mxu0 0.0
  %3005 = vmatprep.subr.mxu0 0.0
  %3006 = vmatpush1.msra.mxu0 0.0
  %3007 = vmatprep.subr.mxu0 0.0
  %3008 = vmatpush1.msra.mxu0 0.0
  %3009 = vmatprep.subr.mxu0 0.0
  %3010 = vmatpush1.msra.mxu0 0.0
  %3011 = vmatprep.subr.mxu0 0.0
  %3012 = vmatpush1.msra.mxu0 0.0
  %3013 = vmatprep.subr.mxu0 0.0
  %3014 = vmatpush1.msra.mxu0 0.0
  %3015 = vmatprep.subr.mxu0 0.0
  %3016 = vmatpush1.msra.mxu0 0.0
  %3017 = vmatprep.subr.mxu0 0.0
  %3018 = vmatpush1.msra.mxu0 0.0
  %3019 = vmatprep.subr.mxu0 0.0
  %3020 = vmatpush1.msra.mxu0 0.0
  %3021 = vmatprep.subr.mxu0 0.0
  %3022 = vmatpush1.msra.mxu0 0.0
  %3023 = vmatprep.subr.mxu0 0.0
  %3024 = vmatpush1.msra.mxu0 0.0
  %3025 = vmatprep.subr.mxu0 0.0
  %3026 = vmatpush1.msra.mxu0 0.0
  %3027 = vmatprep.subr.mxu0 0.0
  %3028 = vmatpush1.msra.mxu0 0.0
  %3029 = vmatprep.subr.mxu0 0.0
  %3030 = vmatpush1.msra.mxu0 0.0
  %3031 = vmatprep.subr.mxu0 0.0
  %3032 = vmatpush1.msra.mxu0 0.0
  %3033 = vmatprep.subr.mxu0 0.0
  %3034 = vmatpush1.msra.mxu0 0.0
  %3035 = vmatprep.mubr.f32.mxu0 0.0
  %3036 = vmatmul.mubr.f32.gmra.mrb[0].mxu0 %v2969
  %v3037 = vpop.f32.mrb[0].mxu0
  %v3038 = vadd.f32 0.0, %v3037
  %v3039 = vpop.f32.mrb[0].mxu0
  %3040 = vdwg.mxu0
  %v3041 = vld [vmem:[%s6 + $0x180] sm:$0xff]
  %v3042 = vld [vmem:[%s6 + $0x188] sm:$0xff]
  %v3043 = vld [vmem:[%s6 + $0x190] sm:$0xff]
  %v3044 = vld [vmem:[%s6 + $0x198] sm:$0xff]
  %v3045 = vld [vmem:[%s6 + $0x1a0] sm:$0xff]
  %v3046 = vld [vmem:[%s6 + $0x1a8] sm:$0xff]
  %v3047 = vld [vmem:[%s6 + $0x1b0] sm:$0xff]
  %v3048 = vld [vmem:[%s6 + $0x1b8] sm:$0xff]
  %v3049 = vld [vmem:[%s6 + $0x1c0] sm:$0xff]
  %v3050 = vld [vmem:[%s6 + $0x1c8] sm:$0xff]
  %v3051 = vld [vmem:[%s6 + $0x1d0] sm:$0xff]
  %v3052 = vld [vmem:[%s6 + $0x1d8] sm:$0xff]
  %v3053 = vld [vmem:[%s6 + $0x1e0] sm:$0xff]
  %v3054 = vld [vmem:[%s6 + $0x1e8] sm:$0xff]
  %v3055 = vld [vmem:[%s6 + $0x1f0] sm:$0xff]
  %v3056 = vld [vmem:[%s6 + $0x1f8] sm:$0xff]
  %v3057 = vld [vmem:[%s6 + $0x200] sm:$0xff]
  %v3058 = vld [vmem:[%s6 + $0x208] sm:$0xff]
  %v3059 = vld [vmem:[%s6 + $0x210] sm:$0xff]
  %v3060 = vld [vmem:[%s6 + $0x218] sm:$0xff]
  %v3061 = vld [vmem:[%s6 + $0x220] sm:$0xff]
  %v3062 = vld [vmem:[%s6 + $0x228] sm:$0xff]
  %v3063 = vld [vmem:[%s6 + $0x230] sm:$0xff]
  %v3064 = vld [vmem:[%s6 + $0x238] sm:$0xff]
  %v3066 = vsel %vm99, %v3038, 0
  %3068 = vmatprep.subr.mxu0 %v3042
  %3069 = vmatpush1.msra.mxu0 %v3041
  %3070 = vmatprep.subr.mxu0 %v3048
  %3071 = vmatpush1.msra.mxu0 %v3047
  %3072 = vmatprep.subr.mxu0 %v3054
  %3073 = vmatpush1.msra.mxu0 %v3053
  %3074 = vmatprep.subr.mxu0 %v3060
  %3075 = vmatpush1.msra.mxu0 %v3059
  %3076 = vmatprep.subr.mxu0 0.0
  %3077 = vmatpush1.msra.mxu0 0.0
  %3078 = vmatprep.subr.mxu0 0.0
  %3079 = vmatpush1.msra.mxu0 0.0
  %3080 = vmatprep.subr.mxu0 0.0
  %3081 = vmatpush1.msra.mxu0 0.0
  %3082 = vmatprep.subr.mxu0 0.0
  %3083 = vmatpush1.msra.mxu0 0.0
  %3084 = vmatprep.subr.mxu0 0.0
  %3085 = vmatpush1.msra.mxu0 0.0
  %3086 = vmatprep.subr.mxu0 0.0
  %3087 = vmatpush1.msra.mxu0 0.0
  %3088 = vmatprep.subr.mxu0 0.0
  %3089 = vmatpush1.msra.mxu0 0.0
  %3090 = vmatprep.subr.mxu0 0.0
  %3091 = vmatpush1.msra.mxu0 0.0
  %3092 = vmatprep.subr.mxu0 0.0
  %3093 = vmatpush1.msra.mxu0 0.0
  %3094 = vmatprep.subr.mxu0 0.0
  %3095 = vmatpush1.msra.mxu0 0.0
  %3096 = vmatprep.subr.mxu0 0.0
  %3097 = vmatpush1.msra.mxu0 0.0
  %3098 = vmatprep.subr.mxu0 0.0
  %3099 = vmatpush1.msra.mxu0 0.0
  %3100 = vmatprep.subr.mxu0 0.0
  %3101 = vmatpush1.msra.mxu0 0.0
  %3102 = vmatprep.subr.mxu0 0.0
  %3103 = vmatpush1.msra.mxu0 0.0
  %3104 = vmatprep.subr.mxu0 0.0
  %3105 = vmatpush1.msra.mxu0 0.0
  %3106 = vmatprep.subr.mxu0 0.0
  %3107 = vmatpush1.msra.mxu0 0.0
  %3108 = vmatprep.subr.mxu0 0.0
  %3109 = vmatpush1.msra.mxu0 0.0
  %3110 = vmatprep.subr.mxu0 0.0
  %3111 = vmatpush1.msra.mxu0 0.0
  %3112 = vmatprep.subr.mxu0 0.0
  %3113 = vmatpush1.msra.mxu0 0.0
  %3114 = vmatprep.subr.mxu0 0.0
  %3115 = vmatpush1.msra.mxu0 0.0
  %3116 = vmatprep.subr.mxu0 0.0
  %3117 = vmatpush1.msra.mxu0 0.0
  %3118 = vmatprep.subr.mxu0 0.0
  %3119 = vmatpush1.msra.mxu0 0.0
  %3120 = vmatprep.subr.mxu0 0.0
  %3121 = vmatpush1.msra.mxu0 0.0
  %3122 = vmatprep.subr.mxu0 0.0
  %3123 = vmatpush1.msra.mxu0 0.0
  %3124 = vmatprep.subr.mxu0 0.0
  %3125 = vmatpush1.msra.mxu0 0.0
  %3126 = vmatprep.subr.mxu0 0.0
  %3127 = vmatpush1.msra.mxu0 0.0
  %3128 = vmatprep.subr.mxu0 0.0
  %3129 = vmatpush1.msra.mxu0 0.0
  %3130 = vmatprep.subr.mxu0 0.0
  %3131 = vmatpush1.msra.mxu0 0.0
  %3132 = vmatprep.mubr.f32.mxu0 0.0
  %3133 = vmatmul.mubr.f32.gmra.mrb[0].mxu0 %v3066
  %v3134 = vpop.f32.mrb[0].mxu0
  %v3135 = vadd.f32 0.0, %v3134
  %v3136 = vpop.f32.mrb[0].mxu0
  %v3137 = vadd.f32 0.0, %v3136
  %3138 = vdwg.mxu0
  %3139 = vmatprep.subr.mxu0 %v3044
  %3140 = vmatpush1.msra.mxu0 %v3043
  %3141 = vmatprep.subr.mxu0 %v3050
  %3142 = vmatpush1.msra.mxu0 %v3049
  %3143 = vmatprep.subr.mxu0 %v3056
  %3144 = vmatpush1.msra.mxu0 %v3055
  %3145 = vmatprep.subr.mxu0 %v3062
  %3146 = vmatpush1.msra.mxu0 %v3061
  %3147 = vmatprep.subr.mxu0 0.0
  %3148 = vmatpush1.msra.mxu0 0.0
  %3149 = vmatprep.subr.mxu0 0.0
  %3150 = vmatpush1.msra.mxu0 0.0
  %3151 = vmatprep.subr.mxu0 0.0
  %3152 = vmatpush1.msra.mxu0 0.0
  %3153 = vmatprep.subr.mxu0 0.0
  %3154 = vmatpush1.msra.mxu0 0.0
  %3155 = vmatprep.subr.mxu0 0.0
  %3156 = vmatpush1.msra.mxu0 0.0
  %3157 = vmatprep.subr.mxu0 0.0
  %3158 = vmatpush1.msra.mxu0 0.0
  %3159 = vmatprep.subr.mxu0 0.0
  %3160 = vmatpush1.msra.mxu0 0.0
  %3161 = vmatprep.subr.mxu0 0.0
  %3162 = vmatpush1.msra.mxu0 0.0
  %3163 = vmatprep.subr.mxu0 0.0
  %3164 = vmatpush1.msra.mxu0 0.0
  %3165 = vmatprep.subr.mxu0 0.0
  %3166 = vmatpush1.msra.mxu0 0.0
  %3167 = vmatprep.subr.mxu0 0.0
  %3168 = vmatpush1.msra.mxu0 0.0
  %3169 = vmatprep.subr.mxu0 0.0
  %3170 = vmatpush1.msra.mxu0 0.0
  %3171 = vmatprep.subr.mxu0 0.0
  %3172 = vmatpush1.msra.mxu0 0.0
  %3173 = vmatprep.subr.mxu0 0.0
  %3174 = vmatpush1.msra.mxu0 0.0
  %3175 = vmatprep.subr.mxu0 0.0
  %3176 = vmatpush1.msra.mxu0 0.0
  %3177 = vmatprep.subr.mxu0 0.0
  %3178 = vmatpush1.msra.mxu0 0.0
  %3179 = vmatprep.subr.mxu0 0.0
  %3180 = vmatpush1.msra.mxu0 0.0
  %3181 = vmatprep.subr.mxu0 0.0
  %3182 = vmatpush1.msra.mxu0 0.0
  %3183 = vmatprep.subr.mxu0 0.0
  %3184 = vmatpush1.msra.mxu0 0.0
  %3185 = vmatprep.subr.mxu0 0.0
  %3186 = vmatpush1.msra.mxu0 0.0
  %3187 = vmatprep.subr.mxu0 0.0
  %3188 = vmatpush1.msra.mxu0 0.0
  %3189 = vmatprep.subr.mxu0 0.0
  %3190 = vmatpush1.msra.mxu0 0.0
  %3191 = vmatprep.subr.mxu0 0.0
  %3192 = vmatpush1.msra.mxu0 0.0
  %3193 = vmatprep.subr.mxu0 0.0
  %3194 = vmatpush1.msra.mxu0 0.0
  %3195 = vmatprep.subr.mxu0 0.0
  %3196 = vmatpush1.msra.mxu0 0.0
  %3197 = vmatprep.subr.mxu0 0.0
  %3198 = vmatpush1.msra.mxu0 0.0
  %3199 = vmatprep.subr.mxu0 0.0
  %3200 = vmatpush1.msra.mxu0 0.0
  %3201 = vmatprep.subr.mxu0 0.0
  %3202 = vmatpush1.msra.mxu0 0.0
  %3203 = vmatprep.mubr.f32.mxu0 0.0
  %3204 = vmatmul.mubr.f32.gmra.mrb[0].mxu0 %v3066
  %v3205 = vpop.f32.mrb[0].mxu0
  %v3206 = vadd.f32 0.0, %v3205
  %v3207 = vpop.f32.mrb[0].mxu0
  %v3208 = vadd.f32 0.0, %v3207
  %3209 = vdwg.mxu0
  %3210 = vmatprep.subr.mxu0 %v3046
  %3211 = vmatpush1.msra.mxu0 %v3045
  %3212 = vmatprep.subr.mxu0 %v3052
  %3213 = vmatpush1.msra.mxu0 %v3051
  %3214 = vmatprep.subr.mxu0 %v3058
  %3215 = vmatpush1.msra.mxu0 %v3057
  %3216 = vmatprep.subr.mxu0 %v3064
  %3217 = vmatpush1.msra.mxu0 %v3063
  %3218 = vmatprep.subr.mxu0 0.0
  %3219 = vmatpush1.msra.mxu0 0.0
  %3220 = vmatprep.subr.mxu0 0.0
  %3221 = vmatpush1.msra.mxu0 0.0
  %3222 = vmatprep.subr.mxu0 0.0
  %3223 = vmatpush1.msra.mxu0 0.0
  %3224 = vmatprep.subr.mxu0 0.0
  %3225 = vmatpush1.msra.mxu0 0.0
  %3226 = vmatprep.subr.mxu0 0.0
  %3227 = vmatpush1.msra.mxu0 0.0
  %3228 = vmatprep.subr.mxu0 0.0
  %3229 = vmatpush1.msra.mxu0 0.0
  %3230 = vmatprep.subr.mxu0 0.0
  %3231 = vmatpush1.msra.mxu0 0.0
  %3232 = vmatprep.subr.mxu0 0.0
  %3233 = vmatpush1.msra.mxu0 0.0
  %3234 = vmatprep.subr.mxu0 0.0
  %3235 = vmatpush1.msra.mxu0 0.0
  %3236 = vmatprep.subr.mxu0 0.0
  %3237 = vmatpush1.msra.mxu0 0.0
  %3238 = vmatprep.subr.mxu0 0.0
  %3239 = vmatpush1.msra.mxu0 0.0
  %3240 = vmatprep.subr.mxu0 0.0
  %3241 = vmatpush1.msra.mxu0 0.0
  %3242 = vmatprep.subr.mxu0 0.0
  %3243 = vmatpush1.msra.mxu0 0.0
  %3244 = vmatprep.subr.mxu0 0.0
  %3245 = vmatpush1.msra.mxu0 0.0
  %3246 = vmatprep.subr.mxu0 0.0
  %3247 = vmatpush1.msra.mxu0 0.0
  %3248 = vmatprep.subr.mxu0 0.0
  %3249 = vmatpush1.msra.mxu0 0.0
  %3250 = vmatprep.subr.mxu0 0.0
  %3251 = vmatpush1.msra.mxu0 0.0
  %3252 = vmatprep.subr.mxu0 0.0
  %3253 = vmatpush1.msra.mxu0 0.0
  %3254 = vmatprep.subr.mxu0 0.0
  %3255 = vmatpush1.msra.mxu0 0.0
  %3256 = vmatprep.subr.mxu0 0.0
  %3257 = vmatpush1.msra.mxu0 0.0
  %3258 = vmatprep.subr.mxu0 0.0
  %3259 = vmatpush1.msra.mxu0 0.0
  %3260 = vmatprep.subr.mxu0 0.0
  %3261 = vmatpush1.msra.mxu0 0.0
  %3262 = vmatprep.subr.mxu0 0.0
  %3263 = vmatpush1.msra.mxu0 0.0
  %3264 = vmatprep.subr.mxu0 0.0
  %3265 = vmatpush1.msra.mxu0 0.0
  %3266 = vmatprep.subr.mxu0 0.0
  %3267 = vmatpush1.msra.mxu0 0.0
  %3268 = vmatprep.subr.mxu0 0.0
  %3269 = vmatpush1.msra.mxu0 0.0
  %3270 = vmatprep.subr.mxu0 0.0
  %3271 = vmatpush1.msra.mxu0 0.0
  %3272 = vmatprep.subr.mxu0 0.0
  %3273 = vmatpush1.msra.mxu0 0.0
  %3274 = vmatprep.mubr.f32.mxu0 0.0
  %3275 = vmatmul.mubr.f32.gmra.mrb[0].mxu0 %v3066
  %v3276 = vpop.f32.mrb[0].mxu0
  %v3277 = vadd.f32 0.0, %v3276
  %v3278 = vpop.f32.mrb[0].mxu0
  %v3279 = vadd.f32 0.0, %v3278
  %3280 = vdwg.mxu0
  %v3281 = vadd.f32 %v2818, %v3135
  %v3282 = vadd.f32 %v2820, %v3137
  %v3283 = vadd.f32 %v2889, %v3206
  %v3284 = vadd.f32 %v2891, %v3208
  %v3285 = vadd.f32 %v2960, %v3277
  %v3286 = vadd.f32 %v2962, %v3279
  %v3287 = vadd.s32 %v2330, 3
  %vm3288 = vcmp.eq.s32.totalorder %v2329, %v3287
  %v3289 = vsel %vm3288, 1, 0
  %v3290 = vcvt.s32.f32 %v3289
  %v3292 = vsel %vm43, %v3290, 0
  %3294 = vmatprep.subr.mxu0 0.0
  %3295 = vmatpush1.msra.mxu0 %v2318
  %3296 = vmatprep.subr.mxu0 0.0
  %3297 = vmatpush1.msra.mxu0 %v2319
  %3298 = vmatprep.subr.mxu0 0.0
  %3299 = vmatpush1.msra.mxu0 %v2320
  %3300 = vmatprep.subr.mxu0 0.0
  %3301 = vmatpush1.msra.mxu0 %v2321
  %3302 = vmatprep.subr.mxu0 0.0
  %3303 = vmatpush1.msra.mxu0 %v2322
  %3304 = vmatprep.subr.mxu0 0.0
  %3305 = vmatpush1.msra.mxu0 %v2323
  %3306 = vmatprep.subr.mxu0 0.0
  %3307 = vmatpush1.msra.mxu0 %v2324
  %3308 = vmatprep.subr.mxu0 0.0
  %3309 = vmatpush1.msra.mxu0 %v2325
  %3310 = vmatprep.subr.mxu0 0.0
  %3311 = vmatpush1.msra.mxu0 0.0
  %3312 = vmatprep.subr.mxu0 0.0
  %3313 = vmatpush1.msra.mxu0 0.0
  %3314 = vmatprep.subr.mxu0 0.0
  %3315 = vmatpush1.msra.mxu0 0.0
  %3316 = vmatprep.subr.mxu0 0.0
  %3317 = vmatpush1.msra.mxu0 0.0
  %3318 = vmatprep.subr.mxu0 0.0
  %3319 = vmatpush1.msra.mxu0 0.0
  %3320 = vmatprep.subr.mxu0 0.0
  %3321 = vmatpush1.msra.mxu0 0.0
  %3322 = vmatprep.subr.mxu0 0.0
  %3323 = vmatpush1.msra.mxu0 0.0
  %3324 = vmatprep.subr.mxu0 0.0
  %3325 = vmatpush1.msra.mxu0 0.0
  %3326 = vmatprep.subr.mxu0 0.0
  %3327 = vmatpush1.msra.mxu0 0.0
  %3328 = vmatprep.subr.mxu0 0.0
  %3329 = vmatpush1.msra.mxu0 0.0
  %3330 = vmatprep.subr.mxu0 0.0
  %3331 = vmatpush1.msra.mxu0 0.0
  %3332 = vmatprep.subr.mxu0 0.0
  %3333 = vmatpush1.msra.mxu0 0.0
  %3334 = vmatprep.subr.mxu0 0.0
  %3335 = vmatpush1.msra.mxu0 0.0
  %3336 = vmatprep.subr.mxu0 0.0
  %3337 = vmatpush1.msra.mxu0 0.0
  %3338 = vmatprep.subr.mxu0 0.0
  %3339 = vmatpush1.msra.mxu0 0.0
  %3340 = vmatprep.subr.mxu0 0.0
  %3341 = vmatpush1.msra.mxu0 0.0
  %3342 = vmatprep.subr.mxu0 0.0
  %3343 = vmatpush1.msra.mxu0 0.0
  %3344 = vmatprep.subr.mxu0 0.0
  %3345 = vmatpush1.msra.mxu0 0.0
  %3346 = vmatprep.subr.mxu0 0.0
  %3347 = vmatpush1.msra.mxu0 0.0
  %3348 = vmatprep.subr.mxu0 0.0
  %3349 = vmatpush1.msra.mxu0 0.0
  %3350 = vmatprep.subr.mxu0 0.0
  %3351 = vmatpush1.msra.mxu0 0.0
  %3352 = vmatprep.subr.mxu0 0.0
  %3353 = vmatpush1.msra.mxu0 0.0
  %3354 = vmatprep.subr.mxu0 0.0
  %3355 = vmatpush1.msra.mxu0 0.0
  %3356 = vmatprep.subr.mxu0 0.0
  %3357 = vmatpush1.msra.mxu0 0.0
  %3358 = vmatprep.mubr.f32.mxu0 0.0
  %3359 = vmatmul.mubr.f32.gmra.mrb[0].mxu0 %v3292
  %v3360 = vpop.f32.mrb[0].mxu0
  %v3361 = vadd.f32 0.0, %v3360
  %v3362 = vpop.f32.mrb[0].mxu0
  %3363 = vdwg.mxu0
  %v3364 = vld [vmem:[%s6 + $0x240] sm:$0xff]
  %v3365 = vld [vmem:[%s6 + $0x248] sm:$0xff]
  %v3366 = vld [vmem:[%s6 + $0x250] sm:$0xff]
  %v3367 = vld [vmem:[%s6 + $0x258] sm:$0xff]
  %v3368 = vld [vmem:[%s6 + $0x260] sm:$0xff]
  %v3369 = vld [vmem:[%s6 + $0x268] sm:$0xff]
  %v3370 = vld [vmem:[%s6 + $0x270] sm:$0xff]
  %v3371 = vld [vmem:[%s6 + $0x278] sm:$0xff]
  %v3372 = vld [vmem:[%s6 + $0x280] sm:$0xff]
  %v3373 = vld [vmem:[%s6 + $0x288] sm:$0xff]
  %v3374 = vld [vmem:[%s6 + $0x290] sm:$0xff]
  %v3375 = vld [vmem:[%s6 + $0x298] sm:$0xff]
  %v3376 = vld [vmem:[%s6 + $0x2a0] sm:$0xff]
  %v3377 = vld [vmem:[%s6 + $0x2a8] sm:$0xff]
  %v3378 = vld [vmem:[%s6 + $0x2b0] sm:$0xff]
  %v3379 = vld [vmem:[%s6 + $0x2b8] sm:$0xff]
  %v3380 = vld [vmem:[%s6 + $0x2c0] sm:$0xff]
  %v3381 = vld [vmem:[%s6 + $0x2c8] sm:$0xff]
  %v3382 = vld [vmem:[%s6 + $0x2d0] sm:$0xff]
  %v3383 = vld [vmem:[%s6 + $0x2d8] sm:$0xff]
  %v3384 = vld [vmem:[%s6 + $0x2e0] sm:$0xff]
  %v3385 = vld [vmem:[%s6 + $0x2e8] sm:$0xff]
  %v3386 = vld [vmem:[%s6 + $0x2f0] sm:$0xff]
  %v3387 = vld [vmem:[%s6 + $0x2f8] sm:$0xff]
  %v3389 = vsel %vm99, %v3361, 0
  %3391 = vmatprep.subr.mxu0 %v3365
  %3392 = vmatpush1.msra.mxu0 %v3364
  %3393 = vmatprep.subr.mxu0 %v3371
  %3394 = vmatpush1.msra.mxu0 %v3370
  %3395 = vmatprep.subr.mxu0 %v3377
  %3396 = vmatpush1.msra.mxu0 %v3376
  %3397 = vmatprep.subr.mxu0 %v3383
  %3398 = vmatpush1.msra.mxu0 %v3382
  %3399 = vmatprep.subr.mxu0 0.0
  %3400 = vmatpush1.msra.mxu0 0.0
  %3401 = vmatprep.subr.mxu0 0.0
  %3402 = vmatpush1.msra.mxu0 0.0
  %3403 = vmatprep.subr.mxu0 0.0
  %3404 = vmatpush1.msra.mxu0 0.0
  %3405 = vmatprep.subr.mxu0 0.0
  %3406 = vmatpush1.msra.mxu0 0.0
  %3407 = vmatprep.subr.mxu0 0.0
  %3408 = vmatpush1.msra.mxu0 0.0
  %3409 = vmatprep.subr.mxu0 0.0
  %3410 = vmatpush1.msra.mxu0 0.0
  %3411 = vmatprep.subr.mxu0 0.0
  %3412 = vmatpush1.msra.mxu0 0.0
  %3413 = vmatprep.subr.mxu0 0.0
  %3414 = vmatpush1.msra.mxu0 0.0
  %3415 = vmatprep.subr.mxu0 0.0
  %3416 = vmatpush1.msra.mxu0 0.0
  %3417 = vmatprep.subr.mxu0 0.0
  %3418 = vmatpush1.msra.mxu0 0.0
  %3419 = vmatprep.subr.mxu0 0.0
  %3420 = vmatpush1.msra.mxu0 0.0
  %3421 = vmatprep.subr.mxu0 0.0
  %3422 = vmatpush1.msra.mxu0 0.0
  %3423 = vmatprep.subr.mxu0 0.0
  %3424 = vmatpush1.msra.mxu0 0.0
  %3425 = vmatprep.subr.mxu0 0.0
  %3426 = vmatpush1.msra.mxu0 0.0
  %3427 = vmatprep.subr.mxu0 0.0
  %3428 = vmatpush1.msra.mxu0 0.0
  %3429 = vmatprep.subr.mxu0 0.0
  %3430 = vmatpush1.msra.mxu0 0.0
  %3431 = vmatprep.subr.mxu0 0.0
  %3432 = vmatpush1.msra.mxu0 0.0
  %3433 = vmatprep.subr.mxu0 0.0
  %3434 = vmatpush1.msra.mxu0 0.0
  %3435 = vmatprep.subr.mxu0 0.0
  %3436 = vmatpush1.msra.mxu0 0.0
  %3437 = vmatprep.subr.mxu0 0.0
  %3438 = vmatpush1.msra.mxu0 0.0
  %3439 = vmatprep.subr.mxu0 0.0
  %3440 = vmatpush1.msra.mxu0 0.0
  %3441 = vmatprep.subr.mxu0 0.0
  %3442 = vmatpush1.msra.mxu0 0.0
  %3443 = vmatprep.subr.mxu0 0.0
  %3444 = vmatpush1.msra.mxu0 0.0
  %3445 = vmatprep.subr.mxu0 0.0
  %3446 = vmatpush1.msra.mxu0 0.0
  %3447 = vmatprep.subr.mxu0 0.0
  %3448 = vmatpush1.msra.mxu0 0.0
  %3449 = vmatprep.subr.mxu0 0.0
  %3450 = vmatpush1.msra.mxu0 0.0
  %3451 = vmatprep.subr.mxu0 0.0
  %3452 = vmatpush1.msra.mxu0 0.0
  %3453 = vmatprep.subr.mxu0 0.0
  %3454 = vmatpush1.msra.mxu0 0.0
  %3455 = vmatprep.mubr.f32.mxu0 0.0
  %3456 = vmatmul.mubr.f32.gmra.mrb[0].mxu0 %v3389
  %v3457 = vpop.f32.mrb[0].mxu0
  %v3458 = vadd.f32 0.0, %v3457
  %v3459 = vpop.f32.mrb[0].mxu0
  %v3460 = vadd.f32 0.0, %v3459
  %3461 = vdwg.mxu0
  %3462 = vmatprep.subr.mxu0 %v3367
  %3463 = vmatpush1.msra.mxu0 %v3366
  %3464 = vmatprep.subr.mxu0 %v3373
  %3465 = vmatpush1.msra.mxu0 %v3372
  %3466 = vmatprep.subr.mxu0 %v3379
  %3467 = vmatpush1.msra.mxu0 %v3378
  %3468 = vmatprep.subr.mxu0 %v3385
  %3469 = vmatpush1.msra.mxu0 %v3384
  %3470 = vmatprep.subr.mxu0 0.0
  %3471 = vmatpush1.msra.mxu0 0.0
  %3472 = vmatprep.subr.mxu0 0.0
  %3473 = vmatpush1.msra.mxu0 0.0
  %3474 = vmatprep.subr.mxu0 0.0
  %3475 = vmatpush1.msra.mxu0 0.0
  %3476 = vmatprep.subr.mxu0 0.0
  %3477 = vmatpush1.msra.mxu0 0.0
  %3478 = vmatprep.subr.mxu0 0.0
  %3479 = vmatpush1.msra.mxu0 0.0
  %3480 = vmatprep.subr.mxu0 0.0
  %3481 = vmatpush1.msra.mxu0 0.0
  %3482 = vmatprep.subr.mxu0 0.0
  %3483 = vmatpush1.msra.mxu0 0.0
  %3484 = vmatprep.subr.mxu0 0.0
  %3485 = vmatpush1.msra.mxu0 0.0
  %3486 = vmatprep.subr.mxu0 0.0
  %3487 = vmatpush1.msra.mxu0 0.0
  %3488 = vmatprep.subr.mxu0 0.0
  %3489 = vmatpush1.msra.mxu0 0.0
  %3490 = vmatprep.subr.mxu0 0.0
  %3491 = vmatpush1.msra.mxu0 0.0
  %3492 = vmatprep.subr.mxu0 0.0
  %3493 = vmatpush1.msra.mxu0 0.0
  %3494 = vmatprep.subr.mxu0 0.0
  %3495 = vmatpush1.msra.mxu0 0.0
  %3496 = vmatprep.subr.mxu0 0.0
  %3497 = vmatpush1.msra.mxu0 0.0
  %3498 = vmatprep.subr.mxu0 0.0
  %3499 = vmatpush1.msra.mxu0 0.0
  %3500 = vmatprep.subr.mxu0 0.0
  %3501 = vmatpush1.msra.mxu0 0.0
  %3502 = vmatprep.subr.mxu0 0.0
  %3503 = vmatpush1.msra.mxu0 0.0
  %3504 = vmatprep.subr.mxu0 0.0
  %3505 = vmatpush1.msra.mxu0 0.0
  %3506 = vmatprep.subr.mxu0 0.0
  %3507 = vmatpush1.msra.mxu0 0.0
  %3508 = vmatprep.subr.mxu0 0.0
  %3509 = vmatpush1.msra.mxu0 0.0
  %3510 = vmatprep.subr.mxu0 0.0
  %3511 = vmatpush1.msra.mxu0 0.0
  %3512 = vmatprep.subr.mxu0 0.0
  %3513 = vmatpush1.msra.mxu0 0.0
  %3514 = vmatprep.subr.mxu0 0.0
  %3515 = vmatpush1.msra.mxu0 0.0
  %3516 = vmatprep.subr.mxu0 0.0
  %3517 = vmatpush1.msra.mxu0 0.0
  %3518 = vmatprep.subr.mxu0 0.0
  %3519 = vmatpush1.msra.mxu0 0.0
  %3520 = vmatprep.subr.mxu0 0.0
  %3521 = vmatpush1.msra.mxu0 0.0
  %3522 = vmatprep.subr.mxu0 0.0
  %3523 = vmatpush1.msra.mxu0 0.0
  %3524 = vmatprep.subr.mxu0 0.0
  %3525 = vmatpush1.msra.mxu0 0.0
  %3526 = vmatprep.mubr.f32.mxu0 0.0
  %3527 = vmatmul.mubr.f32.gmra.mrb[0].mxu0 %v3389
  %v3528 = vpop.f32.mrb[0].mxu0
  %v3529 = vadd.f32 0.0, %v3528
  %v3530 = vpop.f32.mrb[0].mxu0
  %v3531 = vadd.f32 0.0, %v3530
  %3532 = vdwg.mxu0
  %3533 = vmatprep.subr.mxu0 %v3369
  %3534 = vmatpush1.msra.mxu0 %v3368
  %3535 = vmatprep.subr.mxu0 %v3375
  %3536 = vmatpush1.msra.mxu0 %v3374
  %3537 = vmatprep.subr.mxu0 %v3381
  %3538 = vmatpush1.msra.mxu0 %v3380
  %3539 = vmatprep.subr.mxu0 %v3387
  %3540 = vmatpush1.msra.mxu0 %v3386
  %3541 = vmatprep.subr.mxu0 0.0
  %3542 = vmatpush1.msra.mxu0 0.0
  %3543 = vmatprep.subr.mxu0 0.0
  %3544 = vmatpush1.msra.mxu0 0.0
  %3545 = vmatprep.subr.mxu0 0.0
  %3546 = vmatpush1.msra.mxu0 0.0
  %3547 = vmatprep.subr.mxu0 0.0
  %3548 = vmatpush1.msra.mxu0 0.0
  %3549 = vmatprep.subr.mxu0 0.0
  %3550 = vmatpush1.msra.mxu0 0.0
  %3551 = vmatprep.subr.mxu0 0.0
  %3552 = vmatpush1.msra.mxu0 0.0
  %3553 = vmatprep.subr.mxu0 0.0
  %3554 = vmatpush1.msra.mxu0 0.0
  %3555 = vmatprep.subr.mxu0 0.0
  %3556 = vmatpush1.msra.mxu0 0.0
  %3557 = vmatprep.subr.mxu0 0.0
  %3558 = vmatpush1.msra.mxu0 0.0
  %3559 = vmatprep.subr.mxu0 0.0
  %3560 = vmatpush1.msra.mxu0 0.0
  %3561 = vmatprep.subr.mxu0 0.0
  %3562 = vmatpush1.msra.mxu0 0.0
  %3563 = vmatprep.subr.mxu0 0.0
  %3564 = vmatpush1.msra.mxu0 0.0
  %3565 = vmatprep.subr.mxu0 0.0
  %3566 = vmatpush1.msra.mxu0 0.0
  %3567 = vmatprep.subr.mxu0 0.0
  %3568 = vmatpush1.msra.mxu0 0.0
  %3569 = vmatprep.subr.mxu0 0.0
  %3570 = vmatpush1.msra.mxu0 0.0
  %3571 = vmatprep.subr.mxu0 0.0
  %3572 = vmatpush1.msra.mxu0 0.0
  %3573 = vmatprep.subr.mxu0 0.0
  %3574 = vmatpush1.msra.mxu0 0.0
  %3575 = vmatprep.subr.mxu0 0.0
  %3576 = vmatpush1.msra.mxu0 0.0
  %3577 = vmatprep.subr.mxu0 0.0
  %3578 = vmatpush1.msra.mxu0 0.0
  %3579 = vmatprep.subr.mxu0 0.0
  %3580 = vmatpush1.msra.mxu0 0.0
  %3581 = vmatprep.subr.mxu0 0.0
  %3582 = vmatpush1.msra.mxu0 0.0
  %3583 = vmatprep.subr.mxu0 0.0
  %3584 = vmatpush1.msra.mxu0 0.0
  %3585 = vmatprep.subr.mxu0 0.0
  %3586 = vmatpush1.msra.mxu0 0.0
  %3587 = vmatprep.subr.mxu0 0.0
  %3588 = vmatpush1.msra.mxu0 0.0
  %3589 = vmatprep.subr.mxu0 0.0
  %3590 = vmatpush1.msra.mxu0 0.0
  %3591 = vmatprep.subr.mxu0 0.0
  %3592 = vmatpush1.msra.mxu0 0.0
  %3593 = vmatprep.subr.mxu0 0.0
  %3594 = vmatpush1.msra.mxu0 0.0
  %3595 = vmatprep.subr.mxu0 0.0
  %3596 = vmatpush1.msra.mxu0 0.0
  %3597 = vmatprep.mubr.f32.mxu0 0.0
  %3598 = vmatmul.mubr.f32.gmra.mrb[0].mxu0 %v3389
  %v3599 = vpop.f32.mrb[0].mxu0
  %v3600 = vadd.f32 0.0, %v3599
  %v3601 = vpop.f32.mrb[0].mxu0
  %v3602 = vadd.f32 0.0, %v3601
  %3603 = vdwg.mxu0
  %v3604 = vadd.f32 %v3281, %v3458
  %v3605 = vadd.f32 %v3282, %v3460
  %v3606 = vadd.f32 %v3283, %v3529
  %v3607 = vadd.f32 %v3284, %v3531
  %v3608 = vadd.f32 %v3285, %v3600
  %v3609 = vadd.f32 %v3286, %v3602
  %v3610 = vadd.s32 %v2330, 5
  %vm3611 = vcmp.eq.s32.totalorder %v2329, %v3610
  %v3612 = vsel %vm3611, 1, 0
  %v3613 = vcvt.s32.f32 %v3612
  %v3615 = vsel %vm43, %v3613, 0
  %3617 = vmatprep.subr.mxu0 0.0
  %3618 = vmatpush1.msra.mxu0 %v2318
  %3619 = vmatprep.subr.mxu0 0.0
  %3620 = vmatpush1.msra.mxu0 %v2319
  %3621 = vmatprep.subr.mxu0 0.0
  %3622 = vmatpush1.msra.mxu0 %v2320
  %3623 = vmatprep.subr.mxu0 0.0
  %3624 = vmatpush1.msra.mxu0 %v2321
  %3625 = vmatprep.subr.mxu0 0.0
  %3626 = vmatpush1.msra.mxu0 %v2322
  %3627 = vmatprep.subr.mxu0 0.0
  %3628 = vmatpush1.msra.mxu0 %v2323
  %3629 = vmatprep.subr.mxu0 0.0
  %3630 = vmatpush1.msra.mxu0 %v2324
  %3631 = vmatprep.subr.mxu0 0.0
  %3632 = vmatpush1.msra.mxu0 %v2325
  %3633 = vmatprep.subr.mxu0 0.0
  %3634 = vmatpush1.msra.mxu0 0.0
  %3635 = vmatprep.subr.mxu0 0.0
  %3636 = vmatpush1.msra.mxu0 0.0
  %3637 = vmatprep.subr.mxu0 0.0
  %3638 = vmatpush1.msra.mxu0 0.0
  %3639 = vmatprep.subr.mxu0 0.0
  %3640 = vmatpush1.msra.mxu0 0.0
  %3641 = vmatprep.subr.mxu0 0.0
  %3642 = vmatpush1.msra.mxu0 0.0
  %3643 = vmatprep.subr.mxu0 0.0
  %3644 = vmatpush1.msra.mxu0 0.0
  %3645 = vmatprep.subr.mxu0 0.0
  %3646 = vmatpush1.msra.mxu0 0.0
  %3647 = vmatprep.subr.mxu0 0.0
  %3648 = vmatpush1.msra.mxu0 0.0
  %3649 = vmatprep.subr.mxu0 0.0
  %3650 = vmatpush1.msra.mxu0 0.0
  %3651 = vmatprep.subr.mxu0 0.0
  %3652 = vmatpush1.msra.mxu0 0.0
  %3653 = vmatprep.subr.mxu0 0.0
  %3654 = vmatpush1.msra.mxu0 0.0
  %3655 = vmatprep.subr.mxu0 0.0
  %3656 = vmatpush1.msra.mxu0 0.0
  %3657 = vmatprep.subr.mxu0 0.0
  %3658 = vmatpush1.msra.mxu0 0.0
  %3659 = vmatprep.subr.mxu0 0.0
  %3660 = vmatpush1.msra.mxu0 0.0
  %3661 = vmatprep.subr.mxu0 0.0
  %3662 = vmatpush1.msra.mxu0 0.0
  %3663 = vmatprep.subr.mxu0 0.0
  %3664 = vmatpush1.msra.mxu0 0.0
  %3665 = vmatprep.subr.mxu0 0.0
  %3666 = vmatpush1.msra.mxu0 0.0
  %3667 = vmatprep.subr.mxu0 0.0
  %3668 = vmatpush1.msra.mxu0 0.0
  %3669 = vmatprep.subr.mxu0 0.0
  %3670 = vmatpush1.msra.mxu0 0.0
  %3671 = vmatprep.subr.mxu0 0.0
  %3672 = vmatpush1.msra.mxu0 0.0
  %3673 = vmatprep.subr.mxu0 0.0
  %3674 = vmatpush1.msra.mxu0 0.0
  %3675 = vmatprep.subr.mxu0 0.0
  %3676 = vmatpush1.msra.mxu0 0.0
  %3677 = vmatprep.subr.mxu0 0.0
  %3678 = vmatpush1.msra.mxu0 0.0
  %3679 = vmatprep.subr.mxu0 0.0
  %3680 = vmatpush1.msra.mxu0 0.0
  %3681 = vmatprep.mubr.f32.mxu0 0.0
  %3682 = vmatmul.mubr.f32.gmra.mrb[0].mxu0 %v3615
  %v3683 = vpop.f32.mrb[0].mxu0
  %v3684 = vadd.f32 0.0, %v3683
  %v3685 = vpop.f32.mrb[0].mxu0
  %3686 = vdwg.mxu0
  %v3687 = vld [vmem:[%s6 + $0x300] sm:$0xff]
  %v3688 = vld [vmem:[%s6 + $0x308] sm:$0xff]
  %v3689 = vld [vmem:[%s6 + $0x310] sm:$0xff]
  %v3690 = vld [vmem:[%s6 + $0x318] sm:$0xff]
  %v3691 = vld [vmem:[%s6 + $0x320] sm:$0xff]
  %v3692 = vld [vmem:[%s6 + $0x328] sm:$0xff]
  %v3693 = vld [vmem:[%s6 + $0x330] sm:$0xff]
  %v3694 = vld [vmem:[%s6 + $0x338] sm:$0xff]
  %v3695 = vld [vmem:[%s6 + $0x340] sm:$0xff]
  %v3696 = vld [vmem:[%s6 + $0x348] sm:$0xff]
  %v3697 = vld [vmem:[%s6 + $0x350] sm:$0xff]
  %v3698 = vld [vmem:[%s6 + $0x358] sm:$0xff]
  %v3699 = vld [vmem:[%s6 + $0x360] sm:$0xff]
  %v3700 = vld [vmem:[%s6 + $0x368] sm:$0xff]
  %v3701 = vld [vmem:[%s6 + $0x370] sm:$0xff]
  %v3702 = vld [vmem:[%s6 + $0x378] sm:$0xff]
  %v3703 = vld [vmem:[%s6 + $0x380] sm:$0xff]
  %v3704 = vld [vmem:[%s6 + $0x388] sm:$0xff]
  %v3705 = vld [vmem:[%s6 + $0x390] sm:$0xff]
  %v3706 = vld [vmem:[%s6 + $0x398] sm:$0xff]
  %v3707 = vld [vmem:[%s6 + $0x3a0] sm:$0xff]
  %v3708 = vld [vmem:[%s6 + $0x3a8] sm:$0xff]
  %v3709 = vld [vmem:[%s6 + $0x3b0] sm:$0xff]
  %v3710 = vld [vmem:[%s6 + $0x3b8] sm:$0xff]
  %v3712 = vsel %vm99, %v3684, 0
  %3714 = vmatprep.subr.mxu0 %v3688
  %3715 = vmatpush1.msra.mxu0 %v3687
  %3716 = vmatprep.subr.mxu0 %v3694
  %3717 = vmatpush1.msra.mxu0 %v3693
  %3718 = vmatprep.subr.mxu0 %v3700
  %3719 = vmatpush1.msra.mxu0 %v3699
  %3720 = vmatprep.subr.mxu0 %v3706
  %3721 = vmatpush1.msra.mxu0 %v3705
  %3722 = vmatprep.subr.mxu0 0.0
  %3723 = vmatpush1.msra.mxu0 0.0
  %3724 = vmatprep.subr.mxu0 0.0
  %3725 = vmatpush1.msra.mxu0 0.0
  %3726 = vmatprep.subr.mxu0 0.0
  %3727 = vmatpush1.msra.mxu0 0.0
  %3728 = vmatprep.subr.mxu0 0.0
  %3729 = vmatpush1.msra.mxu0 0.0
  %3730 = vmatprep.subr.mxu0 0.0
  %3731 = vmatpush1.msra.mxu0 0.0
  %3732 = vmatprep.subr.mxu0 0.0
  %3733 = vmatpush1.msra.mxu0 0.0
  %3734 = vmatprep.subr.mxu0 0.0
  %3735 = vmatpush1.msra.mxu0 0.0
  %3736 = vmatprep.subr.mxu0 0.0
  %3737 = vmatpush1.msra.mxu0 0.0
  %3738 = vmatprep.subr.mxu0 0.0
  %3739 = vmatpush1.msra.mxu0 0.0
  %3740 = vmatprep.subr.mxu0 0.0
  %3741 = vmatpush1.msra.mxu0 0.0
  %3742 = vmatprep.subr.mxu0 0.0
  %3743 = vmatpush1.msra.mxu0 0.0
  %3744 = vmatprep.subr.mxu0 0.0
  %3745 = vmatpush1.msra.mxu0 0.0
  %3746 = vmatprep.subr.mxu0 0.0
  %3747 = vmatpush1.msra.mxu0 0.0
  %3748 = vmatprep.subr.mxu0 0.0
  %3749 = vmatpush1.msra.mxu0 0.0
  %3750 = vmatprep.subr.mxu0 0.0
  %3751 = vmatpush1.msra.mxu0 0.0
  %3752 = vmatprep.subr.mxu0 0.0
  %3753 = vmatpush1.msra.mxu0 0.0
  %3754 = vmatprep.subr.mxu0 0.0
  %3755 = vmatpush1.msra.mxu0 0.0
  %3756 = vmatprep.subr.mxu0 0.0
  %3757 = vmatpush1.msra.mxu0 0.0
  %3758 = vmatprep.subr.mxu0 0.0
  %3759 = vmatpush1.msra.mxu0 0.0
  %3760 = vmatprep.subr.mxu0 0.0
  %3761 = vmatpush1.msra.mxu0 0.0
  %3762 = vmatprep.subr.mxu0 0.0
  %3763 = vmatpush1.msra.mxu0 0.0
  %3764 = vmatprep.subr.mxu0 0.0
  %3765 = vmatpush1.msra.mxu0 0.0
  %3766 = vmatprep.subr.mxu0 0.0
  %3767 = vmatpush1.msra.mxu0 0.0
  %3768 = vmatprep.subr.mxu0 0.0
  %3769 = vmatpush1.msra.mxu0 0.0
  %3770 = vmatprep.subr.mxu0 0.0
  %3771 = vmatpush1.msra.mxu0 0.0
  %3772 = vmatprep.subr.mxu0 0.0
  %3773 = vmatpush1.msra.mxu0 0.0
  %3774 = vmatprep.subr.mxu0 0.0
  %3775 = vmatpush1.msra.mxu0 0.0
  %3776 = vmatprep.subr.mxu0 0.0
  %3777 = vmatpush1.msra.mxu0 0.0
  %3778 = vmatprep.mubr.f32.mxu0 0.0
  %3779 = vmatmul.mubr.f32.gmra.mrb[0].mxu0 %v3712
  %v3780 = vpop.f32.mrb[0].mxu0
  %v3781 = vadd.f32 0.0, %v3780
  %v3782 = vpop.f32.mrb[0].mxu0
  %v3783 = vadd.f32 0.0, %v3782
  %3784 = vdwg.mxu0
  %3785 = vmatprep.subr.mxu0 %v3690
  %3786 = vmatpush1.msra.mxu0 %v3689
  %3787 = vmatprep.subr.mxu0 %v3696
  %3788 = vmatpush1.msra.mxu0 %v3695
  %3789 = vmatprep.subr.mxu0 %v3702
  %3790 = vmatpush1.msra.mxu0 %v3701
  %3791 = vmatprep.subr.mxu0 %v3708
  %3792 = vmatpush1.msra.mxu0 %v3707
  %3793 = vmatprep.subr.mxu0 0.0
  %3794 = vmatpush1.msra.mxu0 0.0
  %3795 = vmatprep.subr.mxu0 0.0
  %3796 = vmatpush1.msra.mxu0 0.0
  %3797 = vmatprep.subr.mxu0 0.0
  %3798 = vmatpush1.msra.mxu0 0.0
  %3799 = vmatprep.subr.mxu0 0.0
  %3800 = vmatpush1.msra.mxu0 0.0
  %3801 = vmatprep.subr.mxu0 0.0
  %3802 = vmatpush1.msra.mxu0 0.0
  %3803 = vmatprep.subr.mxu0 0.0
  %3804 = vmatpush1.msra.mxu0 0.0
  %3805 = vmatprep.subr.mxu0 0.0
  %3806 = vmatpush1.msra.mxu0 0.0
  %3807 = vmatprep.subr.mxu0 0.0
  %3808 = vmatpush1.msra.mxu0 0.0
  %3809 = vmatprep.subr.mxu0 0.0
  %3810 = vmatpush1.msra.mxu0 0.0
  %3811 = vmatprep.subr.mxu0 0.0
  %3812 = vmatpush1.msra.mxu0 0.0
  %3813 = vmatprep.subr.mxu0 0.0
  %3814 = vmatpush1.msra.mxu0 0.0
  %3815 = vmatprep.subr.mxu0 0.0
  %3816 = vmatpush1.msra.mxu0 0.0
  %3817 = vmatprep.subr.mxu0 0.0
  %3818 = vmatpush1.msra.mxu0 0.0
  %3819 = vmatprep.subr.mxu0 0.0
  %3820 = vmatpush1.msra.mxu0 0.0
  %3821 = vmatprep.subr.mxu0 0.0
  %3822 = vmatpush1.msra.mxu0 0.0
  %3823 = vmatprep.subr.mxu0 0.0
  %3824 = vmatpush1.msra.mxu0 0.0
  %3825 = vmatprep.subr.mxu0 0.0
  %3826 = vmatpush1.msra.mxu0 0.0
  %3827 = vmatprep.subr.mxu0 0.0
  %3828 = vmatpush1.msra.mxu0 0.0
  %3829 = vmatprep.subr.mxu0 0.0
  %3830 = vmatpush1.msra.mxu0 0.0
  %3831 = vmatprep.subr.mxu0 0.0
  %3832 = vmatpush1.msra.mxu0 0.0
  %3833 = vmatprep.subr.mxu0 0.0
  %3834 = vmatpush1.msra.mxu0 0.0
  %3835 = vmatprep.subr.mxu0 0.0
  %3836 = vmatpush1.msra.mxu0 0.0
  %3837 = vmatprep.subr.mxu0 0.0
  %3838 = vmatpush1.msra.mxu0 0.0
  %3839 = vmatprep.subr.mxu0 0.0
  %3840 = vmatpush1.msra.mxu0 0.0
  %3841 = vmatprep.subr.mxu0 0.0
  %3842 = vmatpush1.msra.mxu0 0.0
  %3843 = vmatprep.subr.mxu0 0.0
  %3844 = vmatpush1.msra.mxu0 0.0
  %3845 = vmatprep.subr.mxu0 0.0
  %3846 = vmatpush1.msra.mxu0 0.0
  %3847 = vmatprep.subr.mxu0 0.0
  %3848 = vmatpush1.msra.mxu0 0.0
  %3849 = vmatprep.mubr.f32.mxu0 0.0
  %3850 = vmatmul.mubr.f32.gmra.mrb[0].mxu0 %v3712
  %v3851 = vpop.f32.mrb[0].mxu0
  %v3852 = vadd.f32 0.0, %v3851
  %v3853 = vpop.f32.mrb[0].mxu0
  %v3854 = vadd.f32 0.0, %v3853
  %3855 = vdwg.mxu0
  %3856 = vmatprep.subr.mxu0 %v3692
  %3857 = vmatpush1.msra.mxu0 %v3691
  %3858 = vmatprep.subr.mxu0 %v3698
  %3859 = vmatpush1.msra.mxu0 %v3697
  %3860 = vmatprep.subr.mxu0 %v3704
  %3861 = vmatpush1.msra.mxu0 %v3703
  %3862 = vmatprep.subr.mxu0 %v3710
  %3863 = vmatpush1.msra.mxu0 %v3709
  %3864 = vmatprep.subr.mxu0 0.0
  %3865 = vmatpush1.msra.mxu0 0.0
  %3866 = vmatprep.subr.mxu0 0.0
  %3867 = vmatpush1.msra.mxu0 0.0
  %3868 = vmatprep.subr.mxu0 0.0
  %3869 = vmatpush1.msra.mxu0 0.0
  %3870 = vmatprep.subr.mxu0 0.0
  %3871 = vmatpush1.msra.mxu0 0.0
  %3872 = vmatprep.subr.mxu0 0.0
  %3873 = vmatpush1.msra.mxu0 0.0
  %3874 = vmatprep.subr.mxu0 0.0
  %3875 = vmatpush1.msra.mxu0 0.0
  %3876 = vmatprep.subr.mxu0 0.0
  %3877 = vmatpush1.msra.mxu0 0.0
  %3878 = vmatprep.subr.mxu0 0.0
  %3879 = vmatpush1.msra.mxu0 0.0
  %3880 = vmatprep.subr.mxu0 0.0
  %3881 = vmatpush1.msra.mxu0 0.0
  %3882 = vmatprep.subr.mxu0 0.0
  %3883 = vmatpush1.msra.mxu0 0.0
  %3884 = vmatprep.subr.mxu0 0.0
  %3885 = vmatpush1.msra.mxu0 0.0
  %3886 = vmatprep.subr.mxu0 0.0
  %3887 = vmatpush1.msra.mxu0 0.0
  %3888 = vmatprep.subr.mxu0 0.0
  %3889 = vmatpush1.msra.mxu0 0.0
  %3890 = vmatprep.subr.mxu0 0.0
  %3891 = vmatpush1.msra.mxu0 0.0
  %3892 = vmatprep.subr.mxu0 0.0
  %3893 = vmatpush1.msra.mxu0 0.0
  %3894 = vmatprep.subr.mxu0 0.0
  %3895 = vmatpush1.msra.mxu0 0.0
  %3896 = vmatprep.subr.mxu0 0.0
  %3897 = vmatpush1.msra.mxu0 0.0
  %3898 = vmatprep.subr.mxu0 0.0
  %3899 = vmatpush1.msra.mxu0 0.0
  %3900 = vmatprep.subr.mxu0 0.0
  %3901 = vmatpush1.msra.mxu0 0.0
  %3902 = vmatprep.subr.mxu0 0.0
  %3903 = vmatpush1.msra.mxu0 0.0
  %3904 = vmatprep.subr.mxu0 0.0
  %3905 = vmatpush1.msra.mxu0 0.0
  %3906 = vmatprep.subr.mxu0 0.0
  %3907 = vmatpush1.msra.mxu0 0.0
  %3908 = vmatprep.subr.mxu0 0.0
  %3909 = vmatpush1.msra.mxu0 0.0
  %3910 = vmatprep.subr.mxu0 0.0
  %3911 = vmatpush1.msra.mxu0 0.0
  %3912 = vmatprep.subr.mxu0 0.0
  %3913 = vmatpush1.msra.mxu0 0.0
  %3914 = vmatprep.subr.mxu0 0.0
  %3915 = vmatpush1.msra.mxu0 0.0
  %3916 = vmatprep.subr.mxu0 0.0
  %3917 = vmatpush1.msra.mxu0 0.0
  %3918 = vmatprep.subr.mxu0 0.0
  %3919 = vmatpush1.msra.mxu0 0.0
  %3920 = vmatprep.mubr.f32.mxu0 0.0
  %3921 = vmatmul.mubr.f32.gmra.mrb[0].mxu0 %v3712
  %v3922 = vpop.f32.mrb[0].mxu0
  %v3923 = vadd.f32 0.0, %v3922
  %v3924 = vpop.f32.mrb[0].mxu0
  %v3925 = vadd.f32 0.0, %v3924
  %3926 = vdwg.mxu0
  %v3927 = vadd.f32 %v3604, %v3781
  %v3928 = vadd.f32 %v3605, %v3783
  %v3929 = vadd.f32 %v3606, %v3852
  %v3930 = vadd.f32 %v3607, %v3854
  %v3931 = vadd.f32 %v3608, %v3923
  %v3932 = vadd.f32 %v3609, %v3925
  %v3933 = vadd.s32 %v2330, 6
  %vm3934 = vcmp.eq.s32.totalorder %v2329, %v3933
  %v3935 = vsel %vm3934, 1, 0
  %v3936 = vcvt.s32.f32 %v3935
  %v3938 = vsel %vm43, %v3936, 0
  %3940 = vmatprep.subr.mxu0 0.0
  %3941 = vmatpush1.msra.mxu0 %v2318
  %3942 = vmatprep.subr.mxu0 0.0
  %3943 = vmatpush1.msra.mxu0 %v2319
  %3944 = vmatprep.subr.mxu0 0.0
  %3945 = vmatpush1.msra.mxu0 %v2320
  %3946 = vmatprep.subr.mxu0 0.0
  %3947 = vmatpush1.msra.mxu0 %v2321
  %3948 = vmatprep.subr.mxu0 0.0
  %3949 = vmatpush1.msra.mxu0 %v2322
  %3950 = vmatprep.subr.mxu0 0.0
  %3951 = vmatpush1.msra.mxu0 %v2323
  %3952 = vmatprep.subr.mxu0 0.0
  %3953 = vmatpush1.msra.mxu0 %v2324
  %3954 = vmatprep.subr.mxu0 0.0
  %3955 = vmatpush1.msra.mxu0 %v2325
  %3956 = vmatprep.subr.mxu0 0.0
  %3957 = vmatpush1.msra.mxu0 0.0
  %3958 = vmatprep.subr.mxu0 0.0
  %3959 = vmatpush1.msra.mxu0 0.0
  %3960 = vmatprep.subr.mxu0 0.0
  %3961 = vmatpush1.msra.mxu0 0.0
  %3962 = vmatprep.subr.mxu0 0.0
  %3963 = vmatpush1.msra.mxu0 0.0
  %3964 = vmatprep.subr.mxu0 0.0
  %3965 = vmatpush1.msra.mxu0 0.0
  %3966 = vmatprep.subr.mxu0 0.0
  %3967 = vmatpush1.msra.mxu0 0.0
  %3968 = vmatprep.subr.mxu0 0.0
  %3969 = vmatpush1.msra.mxu0 0.0
  %3970 = vmatprep.subr.mxu0 0.0
  %3971 = vmatpush1.msra.mxu0 0.0
  %3972 = vmatprep.subr.mxu0 0.0
  %3973 = vmatpush1.msra.mxu0 0.0
  %3974 = vmatprep.subr.mxu0 0.0
  %3975 = vmatpush1.msra.mxu0 0.0
  %3976 = vmatprep.subr.mxu0 0.0
  %3977 = vmatpush1.msra.mxu0 0.0
  %3978 = vmatprep.subr.mxu0 0.0
  %3979 = vmatpush1.msra.mxu0 0.0
  %3980 = vmatprep.subr.mxu0 0.0
  %3981 = vmatpush1.msra.mxu0 0.0
  %3982 = vmatprep.subr.mxu0 0.0
  %3983 = vmatpush1.msra.mxu0 0.0
  %3984 = vmatprep.subr.mxu0 0.0
  %3985 = vmatpush1.msra.mxu0 0.0
  %3986 = vmatprep.subr.mxu0 0.0
  %3987 = vmatpush1.msra.mxu0 0.0
  %3988 = vmatprep.subr.mxu0 0.0
  %3989 = vmatpush1.msra.mxu0 0.0
  %3990 = vmatprep.subr.mxu0 0.0
  %3991 = vmatpush1.msra.mxu0 0.0
  %3992 = vmatprep.subr.mxu0 0.0
  %3993 = vmatpush1.msra.mxu0 0.0
  %3994 = vmatprep.subr.mxu0 0.0
  %3995 = vmatpush1.msra.mxu0 0.0
  %3996 = vmatprep.subr.mxu0 0.0
  %3997 = vmatpush1.msra.mxu0 0.0
  %3998 = vmatprep.subr.mxu0 0.0
  %3999 = vmatpush1.msra.mxu0 0.0
  %4000 = vmatprep.subr.mxu0 0.0
  %4001 = vmatpush1.msra.mxu0 0.0
  %4002 = vmatprep.subr.mxu0 0.0
  %4003 = vmatpush1.msra.mxu0 0.0
  %4004 = vmatprep.mubr.f32.mxu0 0.0
  %4005 = vmatmul.mubr.f32.gmra.mrb[0].mxu0 %v3938
  %v4006 = vpop.f32.mrb[0].mxu0
  %v4007 = vadd.f32 0.0, %v4006
  %v4008 = vpop.f32.mrb[0].mxu0
  %4009 = vdwg.mxu0
  %v4010 = vld [vmem:[%s6 + $0x3c0] sm:$0xff]
  %v4011 = vld [vmem:[%s6 + $0x3c8] sm:$0xff]
  %v4012 = vld [vmem:[%s6 + $0x3d0] sm:$0xff]
  %v4013 = vld [vmem:[%s6 + $0x3d8] sm:$0xff]
  %v4014 = vld [vmem:[%s6 + $0x3e0] sm:$0xff]
  %v4015 = vld [vmem:[%s6 + $0x3e8] sm:$0xff]
  %v4016 = vld [vmem:[%s6 + $0x3f0] sm:$0xff]
  %v4017 = vld [vmem:[%s6 + $0x3f8] sm:$0xff]
  %v4018 = vld [vmem:[%s6 + $0x400] sm:$0xff]
  %v4019 = vld [vmem:[%s6 + $0x408] sm:$0xff]
  %v4020 = vld [vmem:[%s6 + $0x410] sm:$0xff]
  %v4021 = vld [vmem:[%s6 + $0x418] sm:$0xff]
  %v4022 = vld [vmem:[%s6 + $0x420] sm:$0xff]
  %v4023 = vld [vmem:[%s6 + $0x428] sm:$0xff]
  %v4024 = vld [vmem:[%s6 + $0x430] sm:$0xff]
  %v4025 = vld [vmem:[%s6 + $0x438] sm:$0xff]
  %v4026 = vld [vmem:[%s6 + $0x440] sm:$0xff]
  %v4027 = vld [vmem:[%s6 + $0x448] sm:$0xff]
  %v4028 = vld [vmem:[%s6 + $0x450] sm:$0xff]
  %v4029 = vld [vmem:[%s6 + $0x458] sm:$0xff]
  %v4030 = vld [vmem:[%s6 + $0x460] sm:$0xff]
  %v4031 = vld [vmem:[%s6 + $0x468] sm:$0xff]
  %v4032 = vld [vmem:[%s6 + $0x470] sm:$0xff]
  %v4033 = vld [vmem:[%s6 + $0x478] sm:$0xff]
  %v4035 = vsel %vm99, %v4007, 0
  %4037 = vmatprep.subr.mxu0 %v4011
  %4038 = vmatpush1.msra.mxu0 %v4010
  %4039 = vmatprep.subr.mxu0 %v4017
  %4040 = vmatpush1.msra.mxu0 %v4016
  %4041 = vmatprep.subr.mxu0 %v4023
  %4042 = vmatpush1.msra.mxu0 %v4022
  %4043 = vmatprep.subr.mxu0 %v4029
  %4044 = vmatpush1.msra.mxu0 %v4028
  %4045 = vmatprep.subr.mxu0 0.0
  %4046 = vmatpush1.msra.mxu0 0.0
  %4047 = vmatprep.subr.mxu0 0.0
  %4048 = vmatpush1.msra.mxu0 0.0
  %4049 = vmatprep.subr.mxu0 0.0
  %4050 = vmatpush1.msra.mxu0 0.0
  %4051 = vmatprep.subr.mxu0 0.0
  %4052 = vmatpush1.msra.mxu0 0.0
  %4053 = vmatprep.subr.mxu0 0.0
  %4054 = vmatpush1.msra.mxu0 0.0
  %4055 = vmatprep.subr.mxu0 0.0
  %4056 = vmatpush1.msra.mxu0 0.0
  %4057 = vmatprep.subr.mxu0 0.0
  %4058 = vmatpush1.msra.mxu0 0.0
  %4059 = vmatprep.subr.mxu0 0.0
  %4060 = vmatpush1.msra.mxu0 0.0
  %4061 = vmatprep.subr.mxu0 0.0
  %4062 = vmatpush1.msra.mxu0 0.0
  %4063 = vmatprep.subr.mxu0 0.0
  %4064 = vmatpush1.msra.mxu0 0.0
  %4065 = vmatprep.subr.mxu0 0.0
  %4066 = vmatpush1.msra.mxu0 0.0
  %4067 = vmatprep.subr.mxu0 0.0
  %4068 = vmatpush1.msra.mxu0 0.0
  %4069 = vmatprep.subr.mxu0 0.0
  %4070 = vmatpush1.msra.mxu0 0.0
  %4071 = vmatprep.subr.mxu0 0.0
  %4072 = vmatpush1.msra.mxu0 0.0
  %4073 = vmatprep.subr.mxu0 0.0
  %4074 = vmatpush1.msra.mxu0 0.0
  %4075 = vmatprep.subr.mxu0 0.0
  %4076 = vmatpush1.msra.mxu0 0.0
  %4077 = vmatprep.subr.mxu0 0.0
  %4078 = vmatpush1.msra.mxu0 0.0
  %4079 = vmatprep.subr.mxu0 0.0
  %4080 = vmatpush1.msra.mxu0 0.0
  %4081 = vmatprep.subr.mxu0 0.0
  %4082 = vmatpush1.msra.mxu0 0.0
  %4083 = vmatprep.subr.mxu0 0.0
  %4084 = vmatpush1.msra.mxu0 0.0
  %4085 = vmatprep.subr.mxu0 0.0
  %4086 = vmatpush1.msra.mxu0 0.0
  %4087 = vmatprep.subr.mxu0 0.0
  %4088 = vmatpush1.msra.mxu0 0.0
  %4089 = vmatprep.subr.mxu0 0.0
  %4090 = vmatpush1.msra.mxu0 0.0
  %4091 = vmatprep.subr.mxu0 0.0
  %4092 = vmatpush1.msra.mxu0 0.0
  %4093 = vmatprep.subr.mxu0 0.0
  %4094 = vmatpush1.msra.mxu0 0.0
  %4095 = vmatprep.subr.mxu0 0.0
  %4096 = vmatpush1.msra.mxu0 0.0
  %4097 = vmatprep.subr.mxu0 0.0
  %4098 = vmatpush1.msra.mxu0 0.0
  %4099 = vmatprep.subr.mxu0 0.0
  %4100 = vmatpush1.msra.mxu0 0.0
  %4101 = vmatprep.mubr.f32.mxu0 0.0
  %4102 = vmatmul.mubr.f32.gmra.mrb[0].mxu0 %v4035
  %v4103 = vpop.f32.mrb[0].mxu0
  %v4104 = vadd.f32 0.0, %v4103
  %v4105 = vpop.f32.mrb[0].mxu0
  %v4106 = vadd.f32 0.0, %v4105
  %4107 = vdwg.mxu0
  %4108 = vmatprep.subr.mxu0 %v4013
  %4109 = vmatpush1.msra.mxu0 %v4012
  %4110 = vmatprep.subr.mxu0 %v4019
  %4111 = vmatpush1.msra.mxu0 %v4018
  %4112 = vmatprep.subr.mxu0 %v4025
  %4113 = vmatpush1.msra.mxu0 %v4024
  %4114 = vmatprep.subr.mxu0 %v4031
  %4115 = vmatpush1.msra.mxu0 %v4030
  %4116 = vmatprep.subr.mxu0 0.0
  %4117 = vmatpush1.msra.mxu0 0.0
  %4118 = vmatprep.subr.mxu0 0.0
  %4119 = vmatpush1.msra.mxu0 0.0
  %4120 = vmatprep.subr.mxu0 0.0
  %4121 = vmatpush1.msra.mxu0 0.0
  %4122 = vmatprep.subr.mxu0 0.0
  %4123 = vmatpush1.msra.mxu0 0.0
  %4124 = vmatprep.subr.mxu0 0.0
  %4125 = vmatpush1.msra.mxu0 0.0
  %4126 = vmatprep.subr.mxu0 0.0
  %4127 = vmatpush1.msra.mxu0 0.0
  %4128 = vmatprep.subr.mxu0 0.0
  %4129 = vmatpush1.msra.mxu0 0.0
  %4130 = vmatprep.subr.mxu0 0.0
  %4131 = vmatpush1.msra.mxu0 0.0
  %4132 = vmatprep.subr.mxu0 0.0
  %4133 = vmatpush1.msra.mxu0 0.0
  %4134 = vmatprep.subr.mxu0 0.0
  %4135 = vmatpush1.msra.mxu0 0.0
  %4136 = vmatprep.subr.mxu0 0.0
  %4137 = vmatpush1.msra.mxu0 0.0
  %4138 = vmatprep.subr.mxu0 0.0
  %4139 = vmatpush1.msra.mxu0 0.0
  %4140 = vmatprep.subr.mxu0 0.0
  %4141 = vmatpush1.msra.mxu0 0.0
  %4142 = vmatprep.subr.mxu0 0.0
  %4143 = vmatpush1.msra.mxu0 0.0
  %4144 = vmatprep.subr.mxu0 0.0
  %4145 = vmatpush1.msra.mxu0 0.0
  %4146 = vmatprep.subr.mxu0 0.0
  %4147 = vmatpush1.msra.mxu0 0.0
  %4148 = vmatprep.subr.mxu0 0.0
  %4149 = vmatpush1.msra.mxu0 0.0
  %4150 = vmatprep.subr.mxu0 0.0
  %4151 = vmatpush1.msra.mxu0 0.0
  %4152 = vmatprep.subr.mxu0 0.0
  %4153 = vmatpush1.msra.mxu0 0.0
  %4154 = vmatprep.subr.mxu0 0.0
  %4155 = vmatpush1.msra.mxu0 0.0
  %4156 = vmatprep.subr.mxu0 0.0
  %4157 = vmatpush1.msra.mxu0 0.0
  %4158 = vmatprep.subr.mxu0 0.0
  %4159 = vmatpush1.msra.mxu0 0.0
  %4160 = vmatprep.subr.mxu0 0.0
  %4161 = vmatpush1.msra.mxu0 0.0
  %4162 = vmatprep.subr.mxu0 0.0
  %4163 = vmatpush1.msra.mxu0 0.0
  %4164 = vmatprep.subr.mxu0 0.0
  %4165 = vmatpush1.msra.mxu0 0.0
  %4166 = vmatprep.subr.mxu0 0.0
  %4167 = vmatpush1.msra.mxu0 0.0
  %4168 = vmatprep.subr.mxu0 0.0
  %4169 = vmatpush1.msra.mxu0 0.0
  %4170 = vmatprep.subr.mxu0 0.0
  %4171 = vmatpush1.msra.mxu0 0.0
  %4172 = vmatprep.mubr.f32.mxu0 0.0
  %4173 = vmatmul.mubr.f32.gmra.mrb[0].mxu0 %v4035
  %v4174 = vpop.f32.mrb[0].mxu0
  %v4175 = vadd.f32 0.0, %v4174
  %v4176 = vpop.f32.mrb[0].mxu0
  %v4177 = vadd.f32 0.0, %v4176
  %4178 = vdwg.mxu0
  %4179 = vmatprep.subr.mxu0 %v4015
  %4180 = vmatpush1.msra.mxu0 %v4014
  %4181 = vmatprep.subr.mxu0 %v4021
  %4182 = vmatpush1.msra.mxu0 %v4020
  %4183 = vmatprep.subr.mxu0 %v4027
  %4184 = vmatpush1.msra.mxu0 %v4026
  %4185 = vmatprep.subr.mxu0 %v4033
  %4186 = vmatpush1.msra.mxu0 %v4032
  %4187 = vmatprep.subr.mxu0 0.0
  %4188 = vmatpush1.msra.mxu0 0.0
  %4189 = vmatprep.subr.mxu0 0.0
  %4190 = vmatpush1.msra.mxu0 0.0
  %4191 = vmatprep.subr.mxu0 0.0
  %4192 = vmatpush1.msra.mxu0 0.0
  %4193 = vmatprep.subr.mxu0 0.0
  %4194 = vmatpush1.msra.mxu0 0.0
  %4195 = vmatprep.subr.mxu0 0.0
  %4196 = vmatpush1.msra.mxu0 0.0
  %4197 = vmatprep.subr.mxu0 0.0
  %4198 = vmatpush1.msra.mxu0 0.0
  %4199 = vmatprep.subr.mxu0 0.0
  %4200 = vmatpush1.msra.mxu0 0.0
  %4201 = vmatprep.subr.mxu0 0.0
  %4202 = vmatpush1.msra.mxu0 0.0
  %4203 = vmatprep.subr.mxu0 0.0
  %4204 = vmatpush1.msra.mxu0 0.0
  %4205 = vmatprep.subr.mxu0 0.0
  %4206 = vmatpush1.msra.mxu0 0.0
  %4207 = vmatprep.subr.mxu0 0.0
  %4208 = vmatpush1.msra.mxu0 0.0
  %4209 = vmatprep.subr.mxu0 0.0
  %4210 = vmatpush1.msra.mxu0 0.0
  %4211 = vmatprep.subr.mxu0 0.0
  %4212 = vmatpush1.msra.mxu0 0.0
  %4213 = vmatprep.subr.mxu0 0.0
  %4214 = vmatpush1.msra.mxu0 0.0
  %4215 = vmatprep.subr.mxu0 0.0
  %4216 = vmatpush1.msra.mxu0 0.0
  %4217 = vmatprep.subr.mxu0 0.0
  %4218 = vmatpush1.msra.mxu0 0.0
  %4219 = vmatprep.subr.mxu0 0.0
  %4220 = vmatpush1.msra.mxu0 0.0
  %4221 = vmatprep.subr.mxu0 0.0
  %4222 = vmatpush1.msra.mxu0 0.0
  %4223 = vmatprep.subr.mxu0 0.0
  %4224 = vmatpush1.msra.mxu0 0.0
  %4225 = vmatprep.subr.mxu0 0.0
  %4226 = vmatpush1.msra.mxu0 0.0
  %4227 = vmatprep.subr.mxu0 0.0
  %4228 = vmatpush1.msra.mxu0 0.0
  %4229 = vmatprep.subr.mxu0 0.0
  %4230 = vmatpush1.msra.mxu0 0.0
  %4231 = vmatprep.subr.mxu0 0.0
  %4232 = vmatpush1.msra.mxu0 0.0
  %4233 = vmatprep.subr.mxu0 0.0
  %4234 = vmatpush1.msra.mxu0 0.0
  %4235 = vmatprep.subr.mxu0 0.0
  %4236 = vmatpush1.msra.mxu0 0.0
  %4237 = vmatprep.subr.mxu0 0.0
  %4238 = vmatpush1.msra.mxu0 0.0
  %4239 = vmatprep.subr.mxu0 0.0
  %4240 = vmatpush1.msra.mxu0 0.0
  %4241 = vmatprep.subr.mxu0 0.0
  %4242 = vmatpush1.msra.mxu0 0.0
  %4243 = vmatprep.mubr.f32.mxu0 0.0
  %4244 = vmatmul.mubr.f32.gmra.mrb[0].mxu0 %v4035
  %v4245 = vpop.f32.mrb[0].mxu0
  %v4246 = vadd.f32 0.0, %v4245
  %v4247 = vpop.f32.mrb[0].mxu0
  %v4248 = vadd.f32 0.0, %v4247
  %4249 = vdwg.mxu0
  %v4250 = vadd.f32 %v3927, %v4104
  %v4251 = vadd.f32 %v3928, %v4106
  %v4252 = vadd.f32 %v3929, %v4175
  %v4253 = vadd.f32 %v3930, %v4177
  %v4254 = vadd.f32 %v3931, %v4246
  %v4255 = vadd.f32 %v3932, %v4248
  %v4256 = vadd.s32 %v2330, 7
  %vm4257 = vcmp.eq.s32.totalorder %v2329, %v4256
  %v4258 = vsel %vm4257, 1, 0
  %v4259 = vcvt.s32.f32 %v4258
  %v4261 = vsel %vm43, %v4259, 0
  %4263 = vmatprep.subr.mxu0 0.0
  %4264 = vmatpush1.msra.mxu0 %v2318
  %4265 = vmatprep.subr.mxu0 0.0
  %4266 = vmatpush1.msra.mxu0 %v2319
  %4267 = vmatprep.subr.mxu0 0.0
  %4268 = vmatpush1.msra.mxu0 %v2320
  %4269 = vmatprep.subr.mxu0 0.0
  %4270 = vmatpush1.msra.mxu0 %v2321
  %4271 = vmatprep.subr.mxu0 0.0
  %4272 = vmatpush1.msra.mxu0 %v2322
  %4273 = vmatprep.subr.mxu0 0.0
  %4274 = vmatpush1.msra.mxu0 %v2323
  %4275 = vmatprep.subr.mxu0 0.0
  %4276 = vmatpush1.msra.mxu0 %v2324
  %4277 = vmatprep.subr.mxu0 0.0
  %4278 = vmatpush1.msra.mxu0 %v2325
  %4279 = vmatprep.subr.mxu0 0.0
  %4280 = vmatpush1.msra.mxu0 0.0
  %4281 = vmatprep.subr.mxu0 0.0
  %4282 = vmatpush1.msra.mxu0 0.0
  %4283 = vmatprep.subr.mxu0 0.0
  %4284 = vmatpush1.msra.mxu0 0.0
  %4285 = vmatprep.subr.mxu0 0.0
  %4286 = vmatpush1.msra.mxu0 0.0
  %4287 = vmatprep.subr.mxu0 0.0
  %4288 = vmatpush1.msra.mxu0 0.0
  %4289 = vmatprep.subr.mxu0 0.0
  %4290 = vmatpush1.msra.mxu0 0.0
  %4291 = vmatprep.subr.mxu0 0.0
  %4292 = vmatpush1.msra.mxu0 0.0
  %4293 = vmatprep.subr.mxu0 0.0
  %4294 = vmatpush1.msra.mxu0 0.0
  %4295 = vmatprep.subr.mxu0 0.0
  %4296 = vmatpush1.msra.mxu0 0.0
  %4297 = vmatprep.subr.mxu0 0.0
  %4298 = vmatpush1.msra.mxu0 0.0
  %4299 = vmatprep.subr.mxu0 0.0
  %4300 = vmatpush1.msra.mxu0 0.0
  %4301 = vmatprep.subr.mxu0 0.0
  %4302 = vmatpush1.msra.mxu0 0.0
  %4303 = vmatprep.subr.mxu0 0.0
  %4304 = vmatpush1.msra.mxu0 0.0
  %4305 = vmatprep.subr.mxu0 0.0
  %4306 = vmatpush1.msra.mxu0 0.0
  %4307 = vmatprep.subr.mxu0 0.0
  %4308 = vmatpush1.msra.mxu0 0.0
  %4309 = vmatprep.subr.mxu0 0.0
  %4310 = vmatpush1.msra.mxu0 0.0
  %4311 = vmatprep.subr.mxu0 0.0
  %4312 = vmatpush1.msra.mxu0 0.0
  %4313 = vmatprep.subr.mxu0 0.0
  %4314 = vmatpush1.msra.mxu0 0.0
  %4315 = vmatprep.subr.mxu0 0.0
  %4316 = vmatpush1.msra.mxu0 0.0
  %4317 = vmatprep.subr.mxu0 0.0
  %4318 = vmatpush1.msra.mxu0 0.0
  %4319 = vmatprep.subr.mxu0 0.0
  %4320 = vmatpush1.msra.mxu0 0.0
  %4321 = vmatprep.subr.mxu0 0.0
  %4322 = vmatpush1.msra.mxu0 0.0
  %4323 = vmatprep.subr.mxu0 0.0
  %4324 = vmatpush1.msra.mxu0 0.0
  %4325 = vmatprep.subr.mxu0 0.0
  %4326 = vmatpush1.msra.mxu0 0.0
  %4327 = vmatprep.mubr.f32.mxu0 0.0
  %4328 = vmatmul.mubr.f32.gmra.mrb[0].mxu0 %v4261
  %v4329 = vpop.f32.mrb[0].mxu0
  %v4330 = vadd.f32 0.0, %v4329
  %v4331 = vpop.f32.mrb[0].mxu0
  %4332 = vdwg.mxu0
  %v4333 = vld [vmem:[%s6 + $0x480] sm:$0xff]
  %v4334 = vld [vmem:[%s6 + $0x488] sm:$0xff]
  %v4335 = vld [vmem:[%s6 + $0x490] sm:$0xff]
  %v4336 = vld [vmem:[%s6 + $0x498] sm:$0xff]
  %v4337 = vld [vmem:[%s6 + $0x4a0] sm:$0xff]
  %v4338 = vld [vmem:[%s6 + $0x4a8] sm:$0xff]
  %v4339 = vld [vmem:[%s6 + $0x4b0] sm:$0xff]
  %v4340 = vld [vmem:[%s6 + $0x4b8] sm:$0xff]
  %v4341 = vld [vmem:[%s6 + $0x4c0] sm:$0xff]
  %v4342 = vld [vmem:[%s6 + $0x4c8] sm:$0xff]
  %v4343 = vld [vmem:[%s6 + $0x4d0] sm:$0xff]
  %v4344 = vld [vmem:[%s6 + $0x4d8] sm:$0xff]
  %v4345 = vld [vmem:[%s6 + $0x4e0] sm:$0xff]
  %v4346 = vld [vmem:[%s6 + $0x4e8] sm:$0xff]
  %v4347 = vld [vmem:[%s6 + $0x4f0] sm:$0xff]
  %v4348 = vld [vmem:[%s6 + $0x4f8] sm:$0xff]
  %v4349 = vld [vmem:[%s6 + $0x500] sm:$0xff]
  %v4350 = vld [vmem:[%s6 + $0x508] sm:$0xff]
  %v4351 = vld [vmem:[%s6 + $0x510] sm:$0xff]
  %v4352 = vld [vmem:[%s6 + $0x518] sm:$0xff]
  %v4353 = vld [vmem:[%s6 + $0x520] sm:$0xff]
  %v4354 = vld [vmem:[%s6 + $0x528] sm:$0xff]
  %v4355 = vld [vmem:[%s6 + $0x530] sm:$0xff]
  %v4356 = vld [vmem:[%s6 + $0x538] sm:$0xff]
  %v4358 = vsel %vm99, %v4330, 0
  %4360 = vmatprep.subr.mxu0 %v4334
  %4361 = vmatpush1.msra.mxu0 %v4333
  %4362 = vmatprep.subr.mxu0 %v4340
  %4363 = vmatpush1.msra.mxu0 %v4339
  %4364 = vmatprep.subr.mxu0 %v4346
  %4365 = vmatpush1.msra.mxu0 %v4345
  %4366 = vmatprep.subr.mxu0 %v4352
  %4367 = vmatpush1.msra.mxu0 %v4351
  %4368 = vmatprep.subr.mxu0 0.0
  %4369 = vmatpush1.msra.mxu0 0.0
  %4370 = vmatprep.subr.mxu0 0.0
  %4371 = vmatpush1.msra.mxu0 0.0
  %4372 = vmatprep.subr.mxu0 0.0
  %4373 = vmatpush1.msra.mxu0 0.0
  %4374 = vmatprep.subr.mxu0 0.0
  %4375 = vmatpush1.msra.mxu0 0.0
  %4376 = vmatprep.subr.mxu0 0.0
  %4377 = vmatpush1.msra.mxu0 0.0
  %4378 = vmatprep.subr.mxu0 0.0
  %4379 = vmatpush1.msra.mxu0 0.0
  %4380 = vmatprep.subr.mxu0 0.0
  %4381 = vmatpush1.msra.mxu0 0.0
  %4382 = vmatprep.subr.mxu0 0.0
  %4383 = vmatpush1.msra.mxu0 0.0
  %4384 = vmatprep.subr.mxu0 0.0
  %4385 = vmatpush1.msra.mxu0 0.0
  %4386 = vmatprep.subr.mxu0 0.0
  %4387 = vmatpush1.msra.mxu0 0.0
  %4388 = vmatprep.subr.mxu0 0.0
  %4389 = vmatpush1.msra.mxu0 0.0
  %4390 = vmatprep.subr.mxu0 0.0
  %4391 = vmatpush1.msra.mxu0 0.0
  %4392 = vmatprep.subr.mxu0 0.0
  %4393 = vmatpush1.msra.mxu0 0.0
  %4394 = vmatprep.subr.mxu0 0.0
  %4395 = vmatpush1.msra.mxu0 0.0
  %4396 = vmatprep.subr.mxu0 0.0
  %4397 = vmatpush1.msra.mxu0 0.0
  %4398 = vmatprep.subr.mxu0 0.0
  %4399 = vmatpush1.msra.mxu0 0.0
  %4400 = vmatprep.subr.mxu0 0.0
  %4401 = vmatpush1.msra.mxu0 0.0
  %4402 = vmatprep.subr.mxu0 0.0
  %4403 = vmatpush1.msra.mxu0 0.0
  %4404 = vmatprep.subr.mxu0 0.0
  %4405 = vmatpush1.msra.mxu0 0.0
  %4406 = vmatprep.subr.mxu0 0.0
  %4407 = vmatpush1.msra.mxu0 0.0
  %4408 = vmatprep.subr.mxu0 0.0
  %4409 = vmatpush1.msra.mxu0 0.0
  %4410 = vmatprep.subr.mxu0 0.0
  %4411 = vmatpush1.msra.mxu0 0.0
  %4412 = vmatprep.subr.mxu0 0.0
  %4413 = vmatpush1.msra.mxu0 0.0
  %4414 = vmatprep.subr.mxu0 0.0
  %4415 = vmatpush1.msra.mxu0 0.0
  %4416 = vmatprep.subr.mxu0 0.0
  %4417 = vmatpush1.msra.mxu0 0.0
  %4418 = vmatprep.subr.mxu0 0.0
  %4419 = vmatpush1.msra.mxu0 0.0
  %4420 = vmatprep.subr.mxu0 0.0
  %4421 = vmatpush1.msra.mxu0 0.0
  %4422 = vmatprep.subr.mxu0 0.0
  %4423 = vmatpush1.msra.mxu0 0.0
  %4424 = vmatprep.mubr.f32.mxu0 0.0
  %4425 = vmatmul.mubr.f32.gmra.mrb[0].mxu0 %v4358
  %v4426 = vpop.f32.mrb[0].mxu0
  %v4427 = vadd.f32 0.0, %v4426
  %v4428 = vpop.f32.mrb[0].mxu0
  %v4429 = vadd.f32 0.0, %v4428
  %4430 = vdwg.mxu0
  %4431 = vmatprep.subr.mxu0 %v4336
  %4432 = vmatpush1.msra.mxu0 %v4335
  %4433 = vmatprep.subr.mxu0 %v4342
  %4434 = vmatpush1.msra.mxu0 %v4341
  %4435 = vmatprep.subr.mxu0 %v4348
  %4436 = vmatpush1.msra.mxu0 %v4347
  %4437 = vmatprep.subr.mxu0 %v4354
  %4438 = vmatpush1.msra.mxu0 %v4353
  %4439 = vmatprep.subr.mxu0 0.0
  %4440 = vmatpush1.msra.mxu0 0.0
  %4441 = vmatprep.subr.mxu0 0.0
  %4442 = vmatpush1.msra.mxu0 0.0
  %4443 = vmatprep.subr.mxu0 0.0
  %4444 = vmatpush1.msra.mxu0 0.0
  %4445 = vmatprep.subr.mxu0 0.0
  %4446 = vmatpush1.msra.mxu0 0.0
  %4447 = vmatprep.subr.mxu0 0.0
  %4448 = vmatpush1.msra.mxu0 0.0
  %4449 = vmatprep.subr.mxu0 0.0
  %4450 = vmatpush1.msra.mxu0 0.0
  %4451 = vmatprep.subr.mxu0 0.0
  %4452 = vmatpush1.msra.mxu0 0.0
  %4453 = vmatprep.subr.mxu0 0.0
  %4454 = vmatpush1.msra.mxu0 0.0
  %4455 = vmatprep.subr.mxu0 0.0
  %4456 = vmatpush1.msra.mxu0 0.0
  %4457 = vmatprep.subr.mxu0 0.0
  %4458 = vmatpush1.msra.mxu0 0.0
  %4459 = vmatprep.subr.mxu0 0.0
  %4460 = vmatpush1.msra.mxu0 0.0
  %4461 = vmatprep.subr.mxu0 0.0
  %4462 = vmatpush1.msra.mxu0 0.0
  %4463 = vmatprep.subr.mxu0 0.0
  %4464 = vmatpush1.msra.mxu0 0.0
  %4465 = vmatprep.subr.mxu0 0.0
  %4466 = vmatpush1.msra.mxu0 0.0
  %4467 = vmatprep.subr.mxu0 0.0
  %4468 = vmatpush1.msra.mxu0 0.0
  %4469 = vmatprep.subr.mxu0 0.0
  %4470 = vmatpush1.msra.mxu0 0.0
  %4471 = vmatprep.subr.mxu0 0.0
  %4472 = vmatpush1.msra.mxu0 0.0
  %4473 = vmatprep.subr.mxu0 0.0
  %4474 = vmatpush1.msra.mxu0 0.0
  %4475 = vmatprep.subr.mxu0 0.0
  %4476 = vmatpush1.msra.mxu0 0.0
  %4477 = vmatprep.subr.mxu0 0.0
  %4478 = vmatpush1.msra.mxu0 0.0
  %4479 = vmatprep.subr.mxu0 0.0
  %4480 = vmatpush1.msra.mxu0 0.0
  %4481 = vmatprep.subr.mxu0 0.0
  %4482 = vmatpush1.msra.mxu0 0.0
  %4483 = vmatprep.subr.mxu0 0.0
  %4484 = vmatpush1.msra.mxu0 0.0
  %4485 = vmatprep.subr.mxu0 0.0
  %4486 = vmatpush1.msra.mxu0 0.0
  %4487 = vmatprep.subr.mxu0 0.0
  %4488 = vmatpush1.msra.mxu0 0.0
  %4489 = vmatprep.subr.mxu0 0.0
  %4490 = vmatpush1.msra.mxu0 0.0
  %4491 = vmatprep.subr.mxu0 0.0
  %4492 = vmatpush1.msra.mxu0 0.0
  %4493 = vmatprep.subr.mxu0 0.0
  %4494 = vmatpush1.msra.mxu0 0.0
  %4495 = vmatprep.mubr.f32.mxu0 0.0
  %4496 = vmatmul.mubr.f32.gmra.mrb[0].mxu0 %v4358
  %v4497 = vpop.f32.mrb[0].mxu0
  %v4498 = vadd.f32 0.0, %v4497
  %v4499 = vpop.f32.mrb[0].mxu0
  %v4500 = vadd.f32 0.0, %v4499
  %4501 = vdwg.mxu0
  %4502 = vmatprep.subr.mxu0 %v4338
  %4503 = vmatpush1.msra.mxu0 %v4337
  %4504 = vmatprep.subr.mxu0 %v4344
  %4505 = vmatpush1.msra.mxu0 %v4343
  %4506 = vmatprep.subr.mxu0 %v4350
  %4507 = vmatpush1.msra.mxu0 %v4349
  %4508 = vmatprep.subr.mxu0 %v4356
  %4509 = vmatpush1.msra.mxu0 %v4355
  %4510 = vmatprep.subr.mxu0 0.0
  %4511 = vmatpush1.msra.mxu0 0.0
  %4512 = vmatprep.subr.mxu0 0.0
  %4513 = vmatpush1.msra.mxu0 0.0
  %4514 = vmatprep.subr.mxu0 0.0
  %4515 = vmatpush1.msra.mxu0 0.0
  %4516 = vmatprep.subr.mxu0 0.0
  %4517 = vmatpush1.msra.mxu0 0.0
  %4518 = vmatprep.subr.mxu0 0.0
  %4519 = vmatpush1.msra.mxu0 0.0
  %4520 = vmatprep.subr.mxu0 0.0
  %4521 = vmatpush1.msra.mxu0 0.0
  %4522 = vmatprep.subr.mxu0 0.0
  %4523 = vmatpush1.msra.mxu0 0.0
  %4524 = vmatprep.subr.mxu0 0.0
  %4525 = vmatpush1.msra.mxu0 0.0
  %4526 = vmatprep.subr.mxu0 0.0
  %4527 = vmatpush1.msra.mxu0 0.0
  %4528 = vmatprep.subr.mxu0 0.0
  %4529 = vmatpush1.msra.mxu0 0.0
  %4530 = vmatprep.subr.mxu0 0.0
  %4531 = vmatpush1.msra.mxu0 0.0
  %4532 = vmatprep.subr.mxu0 0.0
  %4533 = vmatpush1.msra.mxu0 0.0
  %4534 = vmatprep.subr.mxu0 0.0
  %4535 = vmatpush1.msra.mxu0 0.0
  %4536 = vmatprep.subr.mxu0 0.0
  %4537 = vmatpush1.msra.mxu0 0.0
  %4538 = vmatprep.subr.mxu0 0.0
  %4539 = vmatpush1.msra.mxu0 0.0
  %4540 = vmatprep.subr.mxu0 0.0
  %4541 = vmatpush1.msra.mxu0 0.0
  %4542 = vmatprep.subr.mxu0 0.0
  %4543 = vmatpush1.msra.mxu0 0.0
  %4544 = vmatprep.subr.mxu0 0.0
  %4545 = vmatpush1.msra.mxu0 0.0
  %4546 = vmatprep.subr.mxu0 0.0
  %4547 = vmatpush1.msra.mxu0 0.0
  %4548 = vmatprep.subr.mxu0 0.0
  %4549 = vmatpush1.msra.mxu0 0.0
  %4550 = vmatprep.subr.mxu0 0.0
  %4551 = vmatpush1.msra.mxu0 0.0
  %4552 = vmatprep.subr.mxu0 0.0
  %4553 = vmatpush1.msra.mxu0 0.0
  %4554 = vmatprep.subr.mxu0 0.0
  %4555 = vmatpush1.msra.mxu0 0.0
  %4556 = vmatprep.subr.mxu0 0.0
  %4557 = vmatpush1.msra.mxu0 0.0
  %4558 = vmatprep.subr.mxu0 0.0
  %4559 = vmatpush1.msra.mxu0 0.0
  %4560 = vmatprep.subr.mxu0 0.0
  %4561 = vmatpush1.msra.mxu0 0.0
  %4562 = vmatprep.subr.mxu0 0.0
  %4563 = vmatpush1.msra.mxu0 0.0
  %4564 = vmatprep.subr.mxu0 0.0
  %4565 = vmatpush1.msra.mxu0 0.0
  %4566 = vmatprep.mubr.f32.mxu0 0.0
  %4567 = vmatmul.mubr.f32.gmra.mrb[0].mxu0 %v4358
  %v4568 = vpop.f32.mrb[0].mxu0
  %v4569 = vadd.f32 0.0, %v4568
  %v4570 = vpop.f32.mrb[0].mxu0
  %v4571 = vadd.f32 0.0, %v4570
  %4572 = vdwg.mxu0
  %v4573 = vadd.f32 %v4250, %v4427
  %v4574 = vadd.f32 %v4251, %v4429
  %v4575 = vadd.f32 %v4252, %v4498
  %v4576 = vadd.f32 %v4253, %v4500
  %v4577 = vadd.f32 %v4254, %v4569
  %v4578 = vadd.f32 %v4255, %v4571
  %v4579 = vadd.s32 %v2330, 8
  %vm4580 = vcmp.eq.s32.totalorder %v2329, %v4579
  %v4581 = vsel %vm4580, 1, 0
  %v4582 = vcvt.s32.f32 %v4581
  %v4584 = vsel %vm43, %v4582, 0
  %4586 = vmatprep.subr.mxu0 0.0
  %4587 = vmatpush1.msra.mxu0 %v2318
  %4588 = vmatprep.subr.mxu0 0.0
  %4589 = vmatpush1.msra.mxu0 %v2319
  %4590 = vmatprep.subr.mxu0 0.0
  %4591 = vmatpush1.msra.mxu0 %v2320
  %4592 = vmatprep.subr.mxu0 0.0
  %4593 = vmatpush1.msra.mxu0 %v2321
  %4594 = vmatprep.subr.mxu0 0.0
  %4595 = vmatpush1.msra.mxu0 %v2322
  %4596 = vmatprep.subr.mxu0 0.0
  %4597 = vmatpush1.msra.mxu0 %v2323
  %4598 = vmatprep.subr.mxu0 0.0
  %4599 = vmatpush1.msra.mxu0 %v2324
  %4600 = vmatprep.subr.mxu0 0.0
  %4601 = vmatpush1.msra.mxu0 %v2325
  %4602 = vmatprep.subr.mxu0 0.0
  %4603 = vmatpush1.msra.mxu0 0.0
  %4604 = vmatprep.subr.mxu0 0.0
  %4605 = vmatpush1.msra.mxu0 0.0
  %4606 = vmatprep.subr.mxu0 0.0
  %4607 = vmatpush1.msra.mxu0 0.0
  %4608 = vmatprep.subr.mxu0 0.0
  %4609 = vmatpush1.msra.mxu0 0.0
  %4610 = vmatprep.subr.mxu0 0.0
  %4611 = vmatpush1.msra.mxu0 0.0
  %4612 = vmatprep.subr.mxu0 0.0
  %4613 = vmatpush1.msra.mxu0 0.0
  %4614 = vmatprep.subr.mxu0 0.0
  %4615 = vmatpush1.msra.mxu0 0.0
  %4616 = vmatprep.subr.mxu0 0.0
  %4617 = vmatpush1.msra.mxu0 0.0
  %4618 = vmatprep.subr.mxu0 0.0
  %4619 = vmatpush1.msra.mxu0 0.0
  %4620 = vmatprep.subr.mxu0 0.0
  %4621 = vmatpush1.msra.mxu0 0.0
  %4622 = vmatprep.subr.mxu0 0.0
  %4623 = vmatpush1.msra.mxu0 0.0
  %4624 = vmatprep.subr.mxu0 0.0
  %4625 = vmatpush1.msra.mxu0 0.0
  %4626 = vmatprep.subr.mxu0 0.0
  %4627 = vmatpush1.msra.mxu0 0.0
  %4628 = vmatprep.subr.mxu0 0.0
  %4629 = vmatpush1.msra.mxu0 0.0
  %4630 = vmatprep.subr.mxu0 0.0
  %4631 = vmatpush1.msra.mxu0 0.0
  %4632 = vmatprep.subr.mxu0 0.0
  %4633 = vmatpush1.msra.mxu0 0.0
  %4634 = vmatprep.subr.mxu0 0.0
  %4635 = vmatpush1.msra.mxu0 0.0
  %4636 = vmatprep.subr.mxu0 0.0
  %4637 = vmatpush1.msra.mxu0 0.0
  %4638 = vmatprep.subr.mxu0 0.0
  %4639 = vmatpush1.msra.mxu0 0.0
  %4640 = vmatprep.subr.mxu0 0.0
  %4641 = vmatpush1.msra.mxu0 0.0
  %4642 = vmatprep.subr.mxu0 0.0
  %4643 = vmatpush1.msra.mxu0 0.0
  %4644 = vmatprep.subr.mxu0 0.0
  %4645 = vmatpush1.msra.mxu0 0.0
  %4646 = vmatprep.subr.mxu0 0.0
  %4647 = vmatpush1.msra.mxu0 0.0
  %4648 = vmatprep.subr.mxu0 0.0
  %4649 = vmatpush1.msra.mxu0 0.0
  %4650 = vmatprep.mubr.f32.mxu0 0.0
  %4651 = vmatmul.mubr.f32.gmra.mrb[0].mxu0 %v4584
  %v4652 = vpop.f32.mrb[0].mxu0
  %v4653 = vadd.f32 0.0, %v4652
  %v4654 = vpop.f32.mrb[0].mxu0
  %4655 = vdwg.mxu0
  %v4656 = vld [vmem:[%s6 + $0x540] sm:$0xff]
  %v4657 = vld [vmem:[%s6 + $0x548] sm:$0xff]
  %v4658 = vld [vmem:[%s6 + $0x550] sm:$0xff]
  %v4659 = vld [vmem:[%s6 + $0x558] sm:$0xff]
  %v4660 = vld [vmem:[%s6 + $0x560] sm:$0xff]
  %v4661 = vld [vmem:[%s6 + $0x568] sm:$0xff]
  %v4662 = vld [vmem:[%s6 + $0x570] sm:$0xff]
  %v4663 = vld [vmem:[%s6 + $0x578] sm:$0xff]
  %v4664 = vld [vmem:[%s6 + $0x580] sm:$0xff]
  %v4665 = vld [vmem:[%s6 + $0x588] sm:$0xff]
  %v4666 = vld [vmem:[%s6 + $0x590] sm:$0xff]
  %v4667 = vld [vmem:[%s6 + $0x598] sm:$0xff]
  %v4668 = vld [vmem:[%s6 + $0x5a0] sm:$0xff]
  %v4669 = vld [vmem:[%s6 + $0x5a8] sm:$0xff]
  %v4670 = vld [vmem:[%s6 + $0x5b0] sm:$0xff]
  %v4671 = vld [vmem:[%s6 + $0x5b8] sm:$0xff]
  %v4672 = vld [vmem:[%s6 + $0x5c0] sm:$0xff]
  %v4673 = vld [vmem:[%s6 + $0x5c8] sm:$0xff]
  %v4674 = vld [vmem:[%s6 + $0x5d0] sm:$0xff]
  %v4675 = vld [vmem:[%s6 + $0x5d8] sm:$0xff]
  %v4676 = vld [vmem:[%s6 + $0x5e0] sm:$0xff]
  %v4677 = vld [vmem:[%s6 + $0x5e8] sm:$0xff]
  %v4678 = vld [vmem:[%s6 + $0x5f0] sm:$0xff]
  %v4679 = vld [vmem:[%s6 + $0x5f8] sm:$0xff]
  %v4681 = vsel %vm99, %v4653, 0
  %4683 = vmatprep.subr.mxu0 %v4657
  %4684 = vmatpush1.msra.mxu0 %v4656
  %4685 = vmatprep.subr.mxu0 %v4663
  %4686 = vmatpush1.msra.mxu0 %v4662
  %4687 = vmatprep.subr.mxu0 %v4669
  %4688 = vmatpush1.msra.mxu0 %v4668
  %4689 = vmatprep.subr.mxu0 %v4675
  %4690 = vmatpush1.msra.mxu0 %v4674
  %4691 = vmatprep.subr.mxu0 0.0
  %4692 = vmatpush1.msra.mxu0 0.0
  %4693 = vmatprep.subr.mxu0 0.0
  %4694 = vmatpush1.msra.mxu0 0.0
  %4695 = vmatprep.subr.mxu0 0.0
  %4696 = vmatpush1.msra.mxu0 0.0
  %4697 = vmatprep.subr.mxu0 0.0
  %4698 = vmatpush1.msra.mxu0 0.0
  %4699 = vmatprep.subr.mxu0 0.0
  %4700 = vmatpush1.msra.mxu0 0.0
  %4701 = vmatprep.subr.mxu0 0.0
  %4702 = vmatpush1.msra.mxu0 0.0
  %4703 = vmatprep.subr.mxu0 0.0
  %4704 = vmatpush1.msra.mxu0 0.0
  %4705 = vmatprep.subr.mxu0 0.0
  %4706 = vmatpush1.msra.mxu0 0.0
  %4707 = vmatprep.subr.mxu0 0.0
  %4708 = vmatpush1.msra.mxu0 0.0
  %4709 = vmatprep.subr.mxu0 0.0
  %4710 = vmatpush1.msra.mxu0 0.0
  %4711 = vmatprep.subr.mxu0 0.0
  %4712 = vmatpush1.msra.mxu0 0.0
  %4713 = vmatprep.subr.mxu0 0.0
  %4714 = vmatpush1.msra.mxu0 0.0
  %4715 = vmatprep.subr.mxu0 0.0
  %4716 = vmatpush1.msra.mxu0 0.0
  %4717 = vmatprep.subr.mxu0 0.0
  %4718 = vmatpush1.msra.mxu0 0.0
  %4719 = vmatprep.subr.mxu0 0.0
  %4720 = vmatpush1.msra.mxu0 0.0
  %4721 = vmatprep.subr.mxu0 0.0
  %4722 = vmatpush1.msra.mxu0 0.0
  %4723 = vmatprep.subr.mxu0 0.0
  %4724 = vmatpush1.msra.mxu0 0.0
  %4725 = vmatprep.subr.mxu0 0.0
  %4726 = vmatpush1.msra.mxu0 0.0
  %4727 = vmatprep.subr.mxu0 0.0
  %4728 = vmatpush1.msra.mxu0 0.0
  %4729 = vmatprep.subr.mxu0 0.0
  %4730 = vmatpush1.msra.mxu0 0.0
  %4731 = vmatprep.subr.mxu0 0.0
  %4732 = vmatpush1.msra.mxu0 0.0
  %4733 = vmatprep.subr.mxu0 0.0
  %4734 = vmatpush1.msra.mxu0 0.0
  %4735 = vmatprep.subr.mxu0 0.0
  %4736 = vmatpush1.msra.mxu0 0.0
  %4737 = vmatprep.subr.mxu0 0.0
  %4738 = vmatpush1.msra.mxu0 0.0
  %4739 = vmatprep.subr.mxu0 0.0
  %4740 = vmatpush1.msra.mxu0 0.0
  %4741 = vmatprep.subr.mxu0 0.0
  %4742 = vmatpush1.msra.mxu0 0.0
  %4743 = vmatprep.subr.mxu0 0.0
  %4744 = vmatpush1.msra.mxu0 0.0
  %4745 = vmatprep.subr.mxu0 0.0
  %4746 = vmatpush1.msra.mxu0 0.0
  %4747 = vmatprep.mubr.f32.mxu0 0.0
  %4748 = vmatmul.mubr.f32.gmra.mrb[0].mxu0 %v4681
  %v4749 = vpop.f32.mrb[0].mxu0
  %v4750 = vadd.f32 0.0, %v4749
  %v4751 = vpop.f32.mrb[0].mxu0
  %v4752 = vadd.f32 0.0, %v4751
  %4753 = vdwg.mxu0
  %4754 = vmatprep.subr.mxu0 %v4659
  %4755 = vmatpush1.msra.mxu0 %v4658
  %4756 = vmatprep.subr.mxu0 %v4665
  %4757 = vmatpush1.msra.mxu0 %v4664
  %4758 = vmatprep.subr.mxu0 %v4671
  %4759 = vmatpush1.msra.mxu0 %v4670
  %4760 = vmatprep.subr.mxu0 %v4677
  %4761 = vmatpush1.msra.mxu0 %v4676
  %4762 = vmatprep.subr.mxu0 0.0
  %4763 = vmatpush1.msra.mxu0 0.0
  %4764 = vmatprep.subr.mxu0 0.0
  %4765 = vmatpush1.msra.mxu0 0.0
  %4766 = vmatprep.subr.mxu0 0.0
  %4767 = vmatpush1.msra.mxu0 0.0
  %4768 = vmatprep.subr.mxu0 0.0
  %4769 = vmatpush1.msra.mxu0 0.0
  %4770 = vmatprep.subr.mxu0 0.0
  %4771 = vmatpush1.msra.mxu0 0.0
  %4772 = vmatprep.subr.mxu0 0.0
  %4773 = vmatpush1.msra.mxu0 0.0
  %4774 = vmatprep.subr.mxu0 0.0
  %4775 = vmatpush1.msra.mxu0 0.0
  %4776 = vmatprep.subr.mxu0 0.0
  %4777 = vmatpush1.msra.mxu0 0.0
  %4778 = vmatprep.subr.mxu0 0.0
  %4779 = vmatpush1.msra.mxu0 0.0
  %4780 = vmatprep.subr.mxu0 0.0
  %4781 = vmatpush1.msra.mxu0 0.0
  %4782 = vmatprep.subr.mxu0 0.0
  %4783 = vmatpush1.msra.mxu0 0.0
  %4784 = vmatprep.subr.mxu0 0.0
  %4785 = vmatpush1.msra.mxu0 0.0
  %4786 = vmatprep.subr.mxu0 0.0
  %4787 = vmatpush1.msra.mxu0 0.0
  %4788 = vmatprep.subr.mxu0 0.0
  %4789 = vmatpush1.msra.mxu0 0.0
  %4790 = vmatprep.subr.mxu0 0.0
  %4791 = vmatpush1.msra.mxu0 0.0
  %4792 = vmatprep.subr.mxu0 0.0
  %4793 = vmatpush1.msra.mxu0 0.0
  %4794 = vmatprep.subr.mxu0 0.0
  %4795 = vmatpush1.msra.mxu0 0.0
  %4796 = vmatprep.subr.mxu0 0.0
  %4797 = vmatpush1.msra.mxu0 0.0
  %4798 = vmatprep.subr.mxu0 0.0
  %4799 = vmatpush1.msra.mxu0 0.0
  %4800 = vmatprep.subr.mxu0 0.0
  %4801 = vmatpush1.msra.mxu0 0.0
  %4802 = vmatprep.subr.mxu0 0.0
  %4803 = vmatpush1.msra.mxu0 0.0
  %4804 = vmatprep.subr.mxu0 0.0
  %4805 = vmatpush1.msra.mxu0 0.0
  %4806 = vmatprep.subr.mxu0 0.0
  %4807 = vmatpush1.msra.mxu0 0.0
  %4808 = vmatprep.subr.mxu0 0.0
  %4809 = vmatpush1.msra.mxu0 0.0
  %4810 = vmatprep.subr.mxu0 0.0
  %4811 = vmatpush1.msra.mxu0 0.0
  %4812 = vmatprep.subr.mxu0 0.0
  %4813 = vmatpush1.msra.mxu0 0.0
  %4814 = vmatprep.subr.mxu0 0.0
  %4815 = vmatpush1.msra.mxu0 0.0
  %4816 = vmatprep.subr.mxu0 0.0
  %4817 = vmatpush1.msra.mxu0 0.0
  %4818 = vmatprep.mubr.f32.mxu0 0.0
  %4819 = vmatmul.mubr.f32.gmra.mrb[0].mxu0 %v4681
  %v4820 = vpop.f32.mrb[0].mxu0
  %v4821 = vadd.f32 0.0, %v4820
  %v4822 = vpop.f32.mrb[0].mxu0
  %v4823 = vadd.f32 0.0, %v4822
  %4824 = vdwg.mxu0
  %4825 = vmatprep.subr.mxu0 %v4661
  %4826 = vmatpush1.msra.mxu0 %v4660
  %4827 = vmatprep.subr.mxu0 %v4667
  %4828 = vmatpush1.msra.mxu0 %v4666
  %4829 = vmatprep.subr.mxu0 %v4673
  %4830 = vmatpush1.msra.mxu0 %v4672
  %4831 = vmatprep.subr.mxu0 %v4679
  %4832 = vmatpush1.msra.mxu0 %v4678
  %4833 = vmatprep.subr.mxu0 0.0
  %4834 = vmatpush1.msra.mxu0 0.0
  %4835 = vmatprep.subr.mxu0 0.0
  %4836 = vmatpush1.msra.mxu0 0.0
  %4837 = vmatprep.subr.mxu0 0.0
  %4838 = vmatpush1.msra.mxu0 0.0
  %4839 = vmatprep.subr.mxu0 0.0
  %4840 = vmatpush1.msra.mxu0 0.0
  %4841 = vmatprep.subr.mxu0 0.0
  %4842 = vmatpush1.msra.mxu0 0.0
  %4843 = vmatprep.subr.mxu0 0.0
  %4844 = vmatpush1.msra.mxu0 0.0
  %4845 = vmatprep.subr.mxu0 0.0
  %4846 = vmatpush1.msra.mxu0 0.0
  %4847 = vmatprep.subr.mxu0 0.0
  %4848 = vmatpush1.msra.mxu0 0.0
  %4849 = vmatprep.subr.mxu0 0.0
  %4850 = vmatpush1.msra.mxu0 0.0
  %4851 = vmatprep.subr.mxu0 0.0
  %4852 = vmatpush1.msra.mxu0 0.0
  %4853 = vmatprep.subr.mxu0 0.0
  %4854 = vmatpush1.msra.mxu0 0.0
  %4855 = vmatprep.subr.mxu0 0.0
  %4856 = vmatpush1.msra.mxu0 0.0
  %4857 = vmatprep.subr.mxu0 0.0
  %4858 = vmatpush1.msra.mxu0 0.0
  %4859 = vmatprep.subr.mxu0 0.0
  %4860 = vmatpush1.msra.mxu0 0.0
  %4861 = vmatprep.subr.mxu0 0.0
  %4862 = vmatpush1.msra.mxu0 0.0
  %4863 = vmatprep.subr.mxu0 0.0
  %4864 = vmatpush1.msra.mxu0 0.0
  %4865 = vmatprep.subr.mxu0 0.0
  %4866 = vmatpush1.msra.mxu0 0.0
  %4867 = vmatprep.subr.mxu0 0.0
  %4868 = vmatpush1.msra.mxu0 0.0
  %4869 = vmatprep.subr.mxu0 0.0
  %4870 = vmatpush1.msra.mxu0 0.0
  %4871 = vmatprep.subr.mxu0 0.0
  %4872 = vmatpush1.msra.mxu0 0.0
  %4873 = vmatprep.subr.mxu0 0.0
  %4874 = vmatpush1.msra.mxu0 0.0
  %4875 = vmatprep.subr.mxu0 0.0
  %4876 = vmatpush1.msra.mxu0 0.0
  %4877 = vmatprep.subr.mxu0 0.0
  %4878 = vmatpush1.msra.mxu0 0.0
  %4879 = vmatprep.subr.mxu0 0.0
  %4880 = vmatpush1.msra.mxu0 0.0
  %4881 = vmatprep.subr.mxu0 0.0
  %4882 = vmatpush1.msra.mxu0 0.0
  %4883 = vmatprep.subr.mxu0 0.0
  %4884 = vmatpush1.msra.mxu0 0.0
  %4885 = vmatprep.subr.mxu0 0.0
  %4886 = vmatpush1.msra.mxu0 0.0
  %4887 = vmatprep.subr.mxu0 0.0
  %4888 = vmatpush1.msra.mxu0 0.0
  %4889 = vmatprep.mubr.f32.mxu0 0.0
  %4890 = vmatmul.mubr.f32.gmra.mrb[0].mxu0 %v4681
  %v4891 = vpop.f32.mrb[0].mxu0
  %v4892 = vadd.f32 0.0, %v4891
  %v4893 = vpop.f32.mrb[0].mxu0
  %v4894 = vadd.f32 0.0, %v4893
  %4895 = vdwg.mxu0
  %v4896 = vadd.f32 %v4573, %v4750
  %v4897 = vadd.f32 %v4574, %v4752
  %v4898 = vadd.f32 %v4575, %v4821
  %v4899 = vadd.f32 %v4576, %v4823
  %v4900 = vadd.f32 %v4577, %v4892
  %v4901 = vadd.f32 %v4578, %v4894
  %v4902 = vadd.s32 %v2330, 10
  %vm4903 = vcmp.eq.s32.totalorder %v2329, %v4902
  %v4904 = vsel %vm4903, 1, 0
  %v4905 = vcvt.s32.f32 %v4904
  %v4907 = vsel %vm43, %v4905, 0
  %4909 = vmatprep.subr.mxu0 0.0
  %4910 = vmatpush1.msra.mxu0 %v2318
  %4911 = vmatprep.subr.mxu0 0.0
  %4912 = vmatpush1.msra.mxu0 %v2319
  %4913 = vmatprep.subr.mxu0 0.0
  %4914 = vmatpush1.msra.mxu0 %v2320
  %4915 = vmatprep.subr.mxu0 0.0
  %4916 = vmatpush1.msra.mxu0 %v2321
  %4917 = vmatprep.subr.mxu0 0.0
  %4918 = vmatpush1.msra.mxu0 %v2322
  %4919 = vmatprep.subr.mxu0 0.0
  %4920 = vmatpush1.msra.mxu0 %v2323
  %4921 = vmatprep.subr.mxu0 0.0
  %4922 = vmatpush1.msra.mxu0 %v2324
  %4923 = vmatprep.subr.mxu0 0.0
  %4924 = vmatpush1.msra.mxu0 %v2325
  %4925 = vmatprep.subr.mxu0 0.0
  %4926 = vmatpush1.msra.mxu0 0.0
  %4927 = vmatprep.subr.mxu0 0.0
  %4928 = vmatpush1.msra.mxu0 0.0
  %4929 = vmatprep.subr.mxu0 0.0
  %4930 = vmatpush1.msra.mxu0 0.0
  %4931 = vmatprep.subr.mxu0 0.0
  %4932 = vmatpush1.msra.mxu0 0.0
  %4933 = vmatprep.subr.mxu0 0.0
  %4934 = vmatpush1.msra.mxu0 0.0
  %4935 = vmatprep.subr.mxu0 0.0
  %4936 = vmatpush1.msra.mxu0 0.0
  %4937 = vmatprep.subr.mxu0 0.0
  %4938 = vmatpush1.msra.mxu0 0.0
  %4939 = vmatprep.subr.mxu0 0.0
  %4940 = vmatpush1.msra.mxu0 0.0
  %4941 = vmatprep.subr.mxu0 0.0
  %4942 = vmatpush1.msra.mxu0 0.0
  %4943 = vmatprep.subr.mxu0 0.0
  %4944 = vmatpush1.msra.mxu0 0.0
  %4945 = vmatprep.subr.mxu0 0.0
  %4946 = vmatpush1.msra.mxu0 0.0
  %4947 = vmatprep.subr.mxu0 0.0
  %4948 = vmatpush1.msra.mxu0 0.0
  %4949 = vmatprep.subr.mxu0 0.0
  %4950 = vmatpush1.msra.mxu0 0.0
  %4951 = vmatprep.subr.mxu0 0.0
  %4952 = vmatpush1.msra.mxu0 0.0
  %4953 = vmatprep.subr.mxu0 0.0
  %4954 = vmatpush1.msra.mxu0 0.0
  %4955 = vmatprep.subr.mxu0 0.0
  %4956 = vmatpush1.msra.mxu0 0.0
  %4957 = vmatprep.subr.mxu0 0.0
  %4958 = vmatpush1.msra.mxu0 0.0
  %4959 = vmatprep.subr.mxu0 0.0
  %4960 = vmatpush1.msra.mxu0 0.0
  %4961 = vmatprep.subr.mxu0 0.0
  %4962 = vmatpush1.msra.mxu0 0.0
  %4963 = vmatprep.subr.mxu0 0.0
  %4964 = vmatpush1.msra.mxu0 0.0
  %4965 = vmatprep.subr.mxu0 0.0
  %4966 = vmatpush1.msra.mxu0 0.0
  %4967 = vmatprep.subr.mxu0 0.0
  %4968 = vmatpush1.msra.mxu0 0.0
  %4969 = vmatprep.subr.mxu0 0.0
  %4970 = vmatpush1.msra.mxu0 0.0
  %4971 = vmatprep.subr.mxu0 0.0
  %4972 = vmatpush1.msra.mxu0 0.0
  %4973 = vmatprep.mubr.f32.mxu0 0.0
  %4974 = vmatmul.mubr.f32.gmra.mrb[0].mxu0 %v4907
  %v4975 = vpop.f32.mrb[0].mxu0
  %v4976 = vadd.f32 0.0, %v4975
  %v4977 = vpop.f32.mrb[0].mxu0
  %4978 = vdwg.mxu0
  %v4979 = vld [vmem:[%s6 + $0x600] sm:$0xff]
  %v4980 = vld [vmem:[%s6 + $0x608] sm:$0xff]
  %v4981 = vld [vmem:[%s6 + $0x610] sm:$0xff]
  %v4982 = vld [vmem:[%s6 + $0x618] sm:$0xff]
  %v4983 = vld [vmem:[%s6 + $0x620] sm:$0xff]
  %v4984 = vld [vmem:[%s6 + $0x628] sm:$0xff]
  %v4985 = vld [vmem:[%s6 + $0x630] sm:$0xff]
  %v4986 = vld [vmem:[%s6 + $0x638] sm:$0xff]
  %v4987 = vld [vmem:[%s6 + $0x640] sm:$0xff]
  %v4988 = vld [vmem:[%s6 + $0x648] sm:$0xff]
  %v4989 = vld [vmem:[%s6 + $0x650] sm:$0xff]
  %v4990 = vld [vmem:[%s6 + $0x658] sm:$0xff]
  %v4991 = vld [vmem:[%s6 + $0x660] sm:$0xff]
  %v4992 = vld [vmem:[%s6 + $0x668] sm:$0xff]
  %v4993 = vld [vmem:[%s6 + $0x670] sm:$0xff]
  %v4994 = vld [vmem:[%s6 + $0x678] sm:$0xff]
  %v4995 = vld [vmem:[%s6 + $0x680] sm:$0xff]
  %v4996 = vld [vmem:[%s6 + $0x688] sm:$0xff]
  %v4997 = vld [vmem:[%s6 + $0x690] sm:$0xff]
  %v4998 = vld [vmem:[%s6 + $0x698] sm:$0xff]
  %v4999 = vld [vmem:[%s6 + $0x6a0] sm:$0xff]
  %v5000 = vld [vmem:[%s6 + $0x6a8] sm:$0xff]
  %v5001 = vld [vmem:[%s6 + $0x6b0] sm:$0xff]
  %v5002 = vld [vmem:[%s6 + $0x6b8] sm:$0xff]
  %v5004 = vsel %vm99, %v4976, 0
  %5006 = vmatprep.subr.mxu0 %v4980
  %5007 = vmatpush1.msra.mxu0 %v4979
  %5008 = vmatprep.subr.mxu0 %v4986
  %5009 = vmatpush1.msra.mxu0 %v4985
  %5010 = vmatprep.subr.mxu0 %v4992
  %5011 = vmatpush1.msra.mxu0 %v4991
  %5012 = vmatprep.subr.mxu0 %v4998
  %5013 = vmatpush1.msra.mxu0 %v4997
  %5014 = vmatprep.subr.mxu0 0.0
  %5015 = vmatpush1.msra.mxu0 0.0
  %5016 = vmatprep.subr.mxu0 0.0
  %5017 = vmatpush1.msra.mxu0 0.0
  %5018 = vmatprep.subr.mxu0 0.0
  %5019 = vmatpush1.msra.mxu0 0.0
  %5020 = vmatprep.subr.mxu0 0.0
  %5021 = vmatpush1.msra.mxu0 0.0
  %5022 = vmatprep.subr.mxu0 0.0
  %5023 = vmatpush1.msra.mxu0 0.0
  %5024 = vmatprep.subr.mxu0 0.0
  %5025 = vmatpush1.msra.mxu0 0.0
  %5026 = vmatprep.subr.mxu0 0.0
  %5027 = vmatpush1.msra.mxu0 0.0
  %5028 = vmatprep.subr.mxu0 0.0
  %5029 = vmatpush1.msra.mxu0 0.0
  %5030 = vmatprep.subr.mxu0 0.0
  %5031 = vmatpush1.msra.mxu0 0.0
  %5032 = vmatprep.subr.mxu0 0.0
  %5033 = vmatpush1.msra.mxu0 0.0
  %5034 = vmatprep.subr.mxu0 0.0
  %5035 = vmatpush1.msra.mxu0 0.0
  %5036 = vmatprep.subr.mxu0 0.0
  %5037 = vmatpush1.msra.mxu0 0.0
  %5038 = vmatprep.subr.mxu0 0.0
  %5039 = vmatpush1.msra.mxu0 0.0
  %5040 = vmatprep.subr.mxu0 0.0
  %5041 = vmatpush1.msra.mxu0 0.0
  %5042 = vmatprep.subr.mxu0 0.0
  %5043 = vmatpush1.msra.mxu0 0.0
  %5044 = vmatprep.subr.mxu0 0.0
  %5045 = vmatpush1.msra.mxu0 0.0
  %5046 = vmatprep.subr.mxu0 0.0
  %5047 = vmatpush1.msra.mxu0 0.0
  %5048 = vmatprep.subr.mxu0 0.0
  %5049 = vmatpush1.msra.mxu0 0.0
  %5050 = vmatprep.subr.mxu0 0.0
  %5051 = vmatpush1.msra.mxu0 0.0
  %5052 = vmatprep.subr.mxu0 0.0
  %5053 = vmatpush1.msra.mxu0 0.0
  %5054 = vmatprep.subr.mxu0 0.0
  %5055 = vmatpush1.msra.mxu0 0.0
  %5056 = vmatprep.subr.mxu0 0.0
  %5057 = vmatpush1.msra.mxu0 0.0
  %5058 = vmatprep.subr.mxu0 0.0
  %5059 = vmatpush1.msra.mxu0 0.0
  %5060 = vmatprep.subr.mxu0 0.0
  %5061 = vmatpush1.msra.mxu0 0.0
  %5062 = vmatprep.subr.mxu0 0.0
  %5063 = vmatpush1.msra.mxu0 0.0
  %5064 = vmatprep.subr.mxu0 0.0
  %5065 = vmatpush1.msra.mxu0 0.0
  %5066 = vmatprep.subr.mxu0 0.0
  %5067 = vmatpush1.msra.mxu0 0.0
  %5068 = vmatprep.subr.mxu0 0.0
  %5069 = vmatpush1.msra.mxu0 0.0
  %5070 = vmatprep.mubr.f32.mxu0 0.0
  %5071 = vmatmul.mubr.f32.gmra.mrb[0].mxu0 %v5004
  %v5072 = vpop.f32.mrb[0].mxu0
  %v5073 = vadd.f32 0.0, %v5072
  %v5074 = vpop.f32.mrb[0].mxu0
  %v5075 = vadd.f32 0.0, %v5074
  %5076 = vdwg.mxu0
  %5077 = vmatprep.subr.mxu0 %v4982
  %5078 = vmatpush1.msra.mxu0 %v4981
  %5079 = vmatprep.subr.mxu0 %v4988
  %5080 = vmatpush1.msra.mxu0 %v4987
  %5081 = vmatprep.subr.mxu0 %v4994
  %5082 = vmatpush1.msra.mxu0 %v4993
  %5083 = vmatprep.subr.mxu0 %v5000
  %5084 = vmatpush1.msra.mxu0 %v4999
  %5085 = vmatprep.subr.mxu0 0.0
  %5086 = vmatpush1.msra.mxu0 0.0
  %5087 = vmatprep.subr.mxu0 0.0
  %5088 = vmatpush1.msra.mxu0 0.0
  %5089 = vmatprep.subr.mxu0 0.0
  %5090 = vmatpush1.msra.mxu0 0.0
  %5091 = vmatprep.subr.mxu0 0.0
  %5092 = vmatpush1.msra.mxu0 0.0
  %5093 = vmatprep.subr.mxu0 0.0
  %5094 = vmatpush1.msra.mxu0 0.0
  %5095 = vmatprep.subr.mxu0 0.0
  %5096 = vmatpush1.msra.mxu0 0.0
  %5097 = vmatprep.subr.mxu0 0.0
  %5098 = vmatpush1.msra.mxu0 0.0
  %5099 = vmatprep.subr.mxu0 0.0
  %5100 = vmatpush1.msra.mxu0 0.0
  %5101 = vmatprep.subr.mxu0 0.0
  %5102 = vmatpush1.msra.mxu0 0.0
  %5103 = vmatprep.subr.mxu0 0.0
  %5104 = vmatpush1.msra.mxu0 0.0
  %5105 = vmatprep.subr.mxu0 0.0
  %5106 = vmatpush1.msra.mxu0 0.0
  %5107 = vmatprep.subr.mxu0 0.0
  %5108 = vmatpush1.msra.mxu0 0.0
  %5109 = vmatprep.subr.mxu0 0.0
  %5110 = vmatpush1.msra.mxu0 0.0
  %5111 = vmatprep.subr.mxu0 0.0
  %5112 = vmatpush1.msra.mxu0 0.0
  %5113 = vmatprep.subr.mxu0 0.0
  %5114 = vmatpush1.msra.mxu0 0.0
  %5115 = vmatprep.subr.mxu0 0.0
  %5116 = vmatpush1.msra.mxu0 0.0
  %5117 = vmatprep.subr.mxu0 0.0
  %5118 = vmatpush1.msra.mxu0 0.0
  %5119 = vmatprep.subr.mxu0 0.0
  %5120 = vmatpush1.msra.mxu0 0.0
  %5121 = vmatprep.subr.mxu0 0.0
  %5122 = vmatpush1.msra.mxu0 0.0
  %5123 = vmatprep.subr.mxu0 0.0
  %5124 = vmatpush1.msra.mxu0 0.0
  %5125 = vmatprep.subr.mxu0 0.0
  %5126 = vmatpush1.msra.mxu0 0.0
  %5127 = vmatprep.subr.mxu0 0.0
  %5128 = vmatpush1.msra.mxu0 0.0
  %5129 = vmatprep.subr.mxu0 0.0
  %5130 = vmatpush1.msra.mxu0 0.0
  %5131 = vmatprep.subr.mxu0 0.0
  %5132 = vmatpush1.msra.mxu0 0.0
  %5133 = vmatprep.subr.mxu0 0.0
  %5134 = vmatpush1.msra.mxu0 0.0
  %5135 = vmatprep.subr.mxu0 0.0
  %5136 = vmatpush1.msra.mxu0 0.0
  %5137 = vmatprep.subr.mxu0 0.0
  %5138 = vmatpush1.msra.mxu0 0.0
  %5139 = vmatprep.subr.mxu0 0.0
  %5140 = vmatpush1.msra.mxu0 0.0
  %5141 = vmatprep.mubr.f32.mxu0 0.0
  %5142 = vmatmul.mubr.f32.gmra.mrb[0].mxu0 %v5004
  %v5143 = vpop.f32.mrb[0].mxu0
  %v5144 = vadd.f32 0.0, %v5143
  %v5145 = vpop.f32.mrb[0].mxu0
  %v5146 = vadd.f32 0.0, %v5145
  %5147 = vdwg.mxu0
  %5148 = vmatprep.subr.mxu0 %v4984
  %5149 = vmatpush1.msra.mxu0 %v4983
  %5150 = vmatprep.subr.mxu0 %v4990
  %5151 = vmatpush1.msra.mxu0 %v4989
  %5152 = vmatprep.subr.mxu0 %v4996
  %5153 = vmatpush1.msra.mxu0 %v4995
  %5154 = vmatprep.subr.mxu0 %v5002
  %5155 = vmatpush1.msra.mxu0 %v5001
  %5156 = vmatprep.subr.mxu0 0.0
  %5157 = vmatpush1.msra.mxu0 0.0
  %5158 = vmatprep.subr.mxu0 0.0
  %5159 = vmatpush1.msra.mxu0 0.0
  %5160 = vmatprep.subr.mxu0 0.0
  %5161 = vmatpush1.msra.mxu0 0.0
  %5162 = vmatprep.subr.mxu0 0.0
  %5163 = vmatpush1.msra.mxu0 0.0
  %5164 = vmatprep.subr.mxu0 0.0
  %5165 = vmatpush1.msra.mxu0 0.0
  %5166 = vmatprep.subr.mxu0 0.0
  %5167 = vmatpush1.msra.mxu0 0.0
  %5168 = vmatprep.subr.mxu0 0.0
  %5169 = vmatpush1.msra.mxu0 0.0
  %5170 = vmatprep.subr.mxu0 0.0
  %5171 = vmatpush1.msra.mxu0 0.0
  %5172 = vmatprep.subr.mxu0 0.0
  %5173 = vmatpush1.msra.mxu0 0.0
  %5174 = vmatprep.subr.mxu0 0.0
  %5175 = vmatpush1.msra.mxu0 0.0
  %5176 = vmatprep.subr.mxu0 0.0
  %5177 = vmatpush1.msra.mxu0 0.0
  %5178 = vmatprep.subr.mxu0 0.0
  %5179 = vmatpush1.msra.mxu0 0.0
  %5180 = vmatprep.subr.mxu0 0.0
  %5181 = vmatpush1.msra.mxu0 0.0
  %5182 = vmatprep.subr.mxu0 0.0
  %5183 = vmatpush1.msra.mxu0 0.0
  %5184 = vmatprep.subr.mxu0 0.0
  %5185 = vmatpush1.msra.mxu0 0.0
  %5186 = vmatprep.subr.mxu0 0.0
  %5187 = vmatpush1.msra.mxu0 0.0
  %5188 = vmatprep.subr.mxu0 0.0
  %5189 = vmatpush1.msra.mxu0 0.0
  %5190 = vmatprep.subr.mxu0 0.0
  %5191 = vmatpush1.msra.mxu0 0.0
  %5192 = vmatprep.subr.mxu0 0.0
  %5193 = vmatpush1.msra.mxu0 0.0
  %5194 = vmatprep.subr.mxu0 0.0
  %5195 = vmatpush1.msra.mxu0 0.0
  %5196 = vmatprep.subr.mxu0 0.0
  %5197 = vmatpush1.msra.mxu0 0.0
  %5198 = vmatprep.subr.mxu0 0.0
  %5199 = vmatpush1.msra.mxu0 0.0
  %5200 = vmatprep.subr.mxu0 0.0
  %5201 = vmatpush1.msra.mxu0 0.0
  %5202 = vmatprep.subr.mxu0 0.0
  %5203 = vmatpush1.msra.mxu0 0.0
  %5204 = vmatprep.subr.mxu0 0.0
  %5205 = vmatpush1.msra.mxu0 0.0
  %5206 = vmatprep.subr.mxu0 0.0
  %5207 = vmatpush1.msra.mxu0 0.0
  %5208 = vmatprep.subr.mxu0 0.0
  %5209 = vmatpush1.msra.mxu0 0.0
  %5210 = vmatprep.subr.mxu0 0.0
  %5211 = vmatpush1.msra.mxu0 0.0
  %5212 = vmatprep.mubr.f32.mxu0 0.0
  %5213 = vmatmul.mubr.f32.gmra.mrb[0].mxu0 %v5004
  %v5214 = vpop.f32.mrb[0].mxu0
  %v5215 = vadd.f32 0.0, %v5214
  %v5216 = vpop.f32.mrb[0].mxu0
  %v5217 = vadd.f32 0.0, %v5216
  %5218 = vdwg.mxu0
  %v5219 = vadd.f32 %v4896, %v5073
  %v5220 = vadd.f32 %v4897, %v5075
  %v5221 = vadd.f32 %v4898, %v5144
  %v5222 = vadd.f32 %v4899, %v5146
  %v5223 = vadd.f32 %v4900, %v5215
  %v5224 = vadd.f32 %v4901, %v5217
  %v5225 = vadd.s32 %v2330, 11
  %vm5226 = vcmp.eq.s32.totalorder %v2329, %v5225
  %v5227 = vsel %vm5226, 1, 0
  %v5228 = vcvt.s32.f32 %v5227
  %v5230 = vsel %vm43, %v5228, 0
  %5232 = vmatprep.subr.mxu0 0.0
  %5233 = vmatpush1.msra.mxu0 %v2318
  %5234 = vmatprep.subr.mxu0 0.0
  %5235 = vmatpush1.msra.mxu0 %v2319
  %5236 = vmatprep.subr.mxu0 0.0
  %5237 = vmatpush1.msra.mxu0 %v2320
  %5238 = vmatprep.subr.mxu0 0.0
  %5239 = vmatpush1.msra.mxu0 %v2321
  %5240 = vmatprep.subr.mxu0 0.0
  %5241 = vmatpush1.msra.mxu0 %v2322
  %5242 = vmatprep.subr.mxu0 0.0
  %5243 = vmatpush1.msra.mxu0 %v2323
  %5244 = vmatprep.subr.mxu0 0.0
  %5245 = vmatpush1.msra.mxu0 %v2324
  %5246 = vmatprep.subr.mxu0 0.0
  %5247 = vmatpush1.msra.mxu0 %v2325
  %5248 = vmatprep.subr.mxu0 0.0
  %5249 = vmatpush1.msra.mxu0 0.0
  %5250 = vmatprep.subr.mxu0 0.0
  %5251 = vmatpush1.msra.mxu0 0.0
  %5252 = vmatprep.subr.mxu0 0.0
  %5253 = vmatpush1.msra.mxu0 0.0
  %5254 = vmatprep.subr.mxu0 0.0
  %5255 = vmatpush1.msra.mxu0 0.0
  %5256 = vmatprep.subr.mxu0 0.0
  %5257 = vmatpush1.msra.mxu0 0.0
  %5258 = vmatprep.subr.mxu0 0.0
  %5259 = vmatpush1.msra.mxu0 0.0
  %5260 = vmatprep.subr.mxu0 0.0
  %5261 = vmatpush1.msra.mxu0 0.0
  %5262 = vmatprep.subr.mxu0 0.0
  %5263 = vmatpush1.msra.mxu0 0.0
  %5264 = vmatprep.subr.mxu0 0.0
  %5265 = vmatpush1.msra.mxu0 0.0
  %5266 = vmatprep.subr.mxu0 0.0
  %5267 = vmatpush1.msra.mxu0 0.0
  %5268 = vmatprep.subr.mxu0 0.0
  %5269 = vmatpush1.msra.mxu0 0.0
  %5270 = vmatprep.subr.mxu0 0.0
  %5271 = vmatpush1.msra.mxu0 0.0
  %5272 = vmatprep.subr.mxu0 0.0
  %5273 = vmatpush1.msra.mxu0 0.0
  %5274 = vmatprep.subr.mxu0 0.0
  %5275 = vmatpush1.msra.mxu0 0.0
  %5276 = vmatprep.subr.mxu0 0.0
  %5277 = vmatpush1.msra.mxu0 0.0
  %5278 = vmatprep.subr.mxu0 0.0
  %5279 = vmatpush1.msra.mxu0 0.0
  %5280 = vmatprep.subr.mxu0 0.0
  %5281 = vmatpush1.msra.mxu0 0.0
  %5282 = vmatprep.subr.mxu0 0.0
  %5283 = vmatpush1.msra.mxu0 0.0
  %5284 = vmatprep.subr.mxu0 0.0
  %5285 = vmatpush1.msra.mxu0 0.0
  %5286 = vmatprep.subr.mxu0 0.0
  %5287 = vmatpush1.msra.mxu0 0.0
  %5288 = vmatprep.subr.mxu0 0.0
  %5289 = vmatpush1.msra.mxu0 0.0
  %5290 = vmatprep.subr.mxu0 0.0
  %5291 = vmatpush1.msra.mxu0 0.0
  %5292 = vmatprep.subr.mxu0 0.0
  %5293 = vmatpush1.msra.mxu0 0.0
  %5294 = vmatprep.subr.mxu0 0.0
  %5295 = vmatpush1.msra.mxu0 0.0
  %5296 = vmatprep.mubr.f32.mxu0 0.0
  %5297 = vmatmul.mubr.f32.gmra.mrb[0].mxu0 %v5230
  %v5298 = vpop.f32.mrb[0].mxu0
  %v5299 = vadd.f32 0.0, %v5298
  %v5300 = vpop.f32.mrb[0].mxu0
  %5301 = vdwg.mxu0
  %v5302 = vld [vmem:[%s6 + $0x6c0] sm:$0xff]
  %v5303 = vld [vmem:[%s6 + $0x6c8] sm:$0xff]
  %v5304 = vld [vmem:[%s6 + $0x6d0] sm:$0xff]
  %v5305 = vld [vmem:[%s6 + $0x6d8] sm:$0xff]
  %v5306 = vld [vmem:[%s6 + $0x6e0] sm:$0xff]
  %v5307 = vld [vmem:[%s6 + $0x6e8] sm:$0xff]
  %v5308 = vld [vmem:[%s6 + $0x6f0] sm:$0xff]
  %v5309 = vld [vmem:[%s6 + $0x6f8] sm:$0xff]
  %v5310 = vld [vmem:[%s6 + $0x700] sm:$0xff]
  %v5311 = vld [vmem:[%s6 + $0x708] sm:$0xff]
  %v5312 = vld [vmem:[%s6 + $0x710] sm:$0xff]
  %v5313 = vld [vmem:[%s6 + $0x718] sm:$0xff]
  %v5314 = vld [vmem:[%s6 + $0x720] sm:$0xff]
  %v5315 = vld [vmem:[%s6 + $0x728] sm:$0xff]
  %v5316 = vld [vmem:[%s6 + $0x730] sm:$0xff]
  %v5317 = vld [vmem:[%s6 + $0x738] sm:$0xff]
  %v5318 = vld [vmem:[%s6 + $0x740] sm:$0xff]
  %v5319 = vld [vmem:[%s6 + $0x748] sm:$0xff]
  %v5320 = vld [vmem:[%s6 + $0x750] sm:$0xff]
  %v5321 = vld [vmem:[%s6 + $0x758] sm:$0xff]
  %v5322 = vld [vmem:[%s6 + $0x760] sm:$0xff]
  %v5323 = vld [vmem:[%s6 + $0x768] sm:$0xff]
  %v5324 = vld [vmem:[%s6 + $0x770] sm:$0xff]
  %v5325 = vld [vmem:[%s6 + $0x778] sm:$0xff]
  %v5327 = vsel %vm99, %v5299, 0
  %5329 = vmatprep.subr.mxu0 %v5303
  %5330 = vmatpush1.msra.mxu0 %v5302
  %5331 = vmatprep.subr.mxu0 %v5309
  %5332 = vmatpush1.msra.mxu0 %v5308
  %5333 = vmatprep.subr.mxu0 %v5315
  %5334 = vmatpush1.msra.mxu0 %v5314
  %5335 = vmatprep.subr.mxu0 %v5321
  %5336 = vmatpush1.msra.mxu0 %v5320
  %5337 = vmatprep.subr.mxu0 0.0
  %5338 = vmatpush1.msra.mxu0 0.0
  %5339 = vmatprep.subr.mxu0 0.0
  %5340 = vmatpush1.msra.mxu0 0.0
  %5341 = vmatprep.subr.mxu0 0.0
  %5342 = vmatpush1.msra.mxu0 0.0
  %5343 = vmatprep.subr.mxu0 0.0
  %5344 = vmatpush1.msra.mxu0 0.0
  %5345 = vmatprep.subr.mxu0 0.0
  %5346 = vmatpush1.msra.mxu0 0.0
  %5347 = vmatprep.subr.mxu0 0.0
  %5348 = vmatpush1.msra.mxu0 0.0
  %5349 = vmatprep.subr.mxu0 0.0
  %5350 = vmatpush1.msra.mxu0 0.0
  %5351 = vmatprep.subr.mxu0 0.0
  %5352 = vmatpush1.msra.mxu0 0.0
  %5353 = vmatprep.subr.mxu0 0.0
  %5354 = vmatpush1.msra.mxu0 0.0
  %5355 = vmatprep.subr.mxu0 0.0
  %5356 = vmatpush1.msra.mxu0 0.0
  %5357 = vmatprep.subr.mxu0 0.0
  %5358 = vmatpush1.msra.mxu0 0.0
  %5359 = vmatprep.subr.mxu0 0.0
  %5360 = vmatpush1.msra.mxu0 0.0
  %5361 = vmatprep.subr.mxu0 0.0
  %5362 = vmatpush1.msra.mxu0 0.0
  %5363 = vmatprep.subr.mxu0 0.0
  %5364 = vmatpush1.msra.mxu0 0.0
  %5365 = vmatprep.subr.mxu0 0.0
  %5366 = vmatpush1.msra.mxu0 0.0
  %5367 = vmatprep.subr.mxu0 0.0
  %5368 = vmatpush1.msra.mxu0 0.0
  %5369 = vmatprep.subr.mxu0 0.0
  %5370 = vmatpush1.msra.mxu0 0.0
  %5371 = vmatprep.subr.mxu0 0.0
  %5372 = vmatpush1.msra.mxu0 0.0
  %5373 = vmatprep.subr.mxu0 0.0
  %5374 = vmatpush1.msra.mxu0 0.0
  %5375 = vmatprep.subr.mxu0 0.0
  %5376 = vmatpush1.msra.mxu0 0.0
  %5377 = vmatprep.subr.mxu0 0.0
  %5378 = vmatpush1.msra.mxu0 0.0
  %5379 = vmatprep.subr.mxu0 0.0
  %5380 = vmatpush1.msra.mxu0 0.0
  %5381 = vmatprep.subr.mxu0 0.0
  %5382 = vmatpush1.msra.mxu0 0.0
  %5383 = vmatprep.subr.mxu0 0.0
  %5384 = vmatpush1.msra.mxu0 0.0
  %5385 = vmatprep.subr.mxu0 0.0
  %5386 = vmatpush1.msra.mxu0 0.0
  %5387 = vmatprep.subr.mxu0 0.0
  %5388 = vmatpush1.msra.mxu0 0.0
  %5389 = vmatprep.subr.mxu0 0.0
  %5390 = vmatpush1.msra.mxu0 0.0
  %5391 = vmatprep.subr.mxu0 0.0
  %5392 = vmatpush1.msra.mxu0 0.0
  %5393 = vmatprep.mubr.f32.mxu0 0.0
  %5394 = vmatmul.mubr.f32.gmra.mrb[0].mxu0 %v5327
  %v5395 = vpop.f32.mrb[0].mxu0
  %v5396 = vadd.f32 0.0, %v5395
  %v5397 = vpop.f32.mrb[0].mxu0
  %v5398 = vadd.f32 0.0, %v5397
  %5399 = vdwg.mxu0
  %5400 = vmatprep.subr.mxu0 %v5305
  %5401 = vmatpush1.msra.mxu0 %v5304
  %5402 = vmatprep.subr.mxu0 %v5311
  %5403 = vmatpush1.msra.mxu0 %v5310
  %5404 = vmatprep.subr.mxu0 %v5317
  %5405 = vmatpush1.msra.mxu0 %v5316
  %5406 = vmatprep.subr.mxu0 %v5323
  %5407 = vmatpush1.msra.mxu0 %v5322
  %5408 = vmatprep.subr.mxu0 0.0
  %5409 = vmatpush1.msra.mxu0 0.0
  %5410 = vmatprep.subr.mxu0 0.0
  %5411 = vmatpush1.msra.mxu0 0.0
  %5412 = vmatprep.subr.mxu0 0.0
  %5413 = vmatpush1.msra.mxu0 0.0
  %5414 = vmatprep.subr.mxu0 0.0
  %5415 = vmatpush1.msra.mxu0 0.0
  %5416 = vmatprep.subr.mxu0 0.0
  %5417 = vmatpush1.msra.mxu0 0.0
  %5418 = vmatprep.subr.mxu0 0.0
  %5419 = vmatpush1.msra.mxu0 0.0
  %5420 = vmatprep.subr.mxu0 0.0
  %5421 = vmatpush1.msra.mxu0 0.0
  %5422 = vmatprep.subr.mxu0 0.0
  %5423 = vmatpush1.msra.mxu0 0.0
  %5424 = vmatprep.subr.mxu0 0.0
  %5425 = vmatpush1.msra.mxu0 0.0
  %5426 = vmatprep.subr.mxu0 0.0
  %5427 = vmatpush1.msra.mxu0 0.0
  %5428 = vmatprep.subr.mxu0 0.0
  %5429 = vmatpush1.msra.mxu0 0.0
  %5430 = vmatprep.subr.mxu0 0.0
  %5431 = vmatpush1.msra.mxu0 0.0
  %5432 = vmatprep.subr.mxu0 0.0
  %5433 = vmatpush1.msra.mxu0 0.0
  %5434 = vmatprep.subr.mxu0 0.0
  %5435 = vmatpush1.msra.mxu0 0.0
  %5436 = vmatprep.subr.mxu0 0.0
  %5437 = vmatpush1.msra.mxu0 0.0
  %5438 = vmatprep.subr.mxu0 0.0
  %5439 = vmatpush1.msra.mxu0 0.0
  %5440 = vmatprep.subr.mxu0 0.0
  %5441 = vmatpush1.msra.mxu0 0.0
  %5442 = vmatprep.subr.mxu0 0.0
  %5443 = vmatpush1.msra.mxu0 0.0
  %5444 = vmatprep.subr.mxu0 0.0
  %5445 = vmatpush1.msra.mxu0 0.0
  %5446 = vmatprep.subr.mxu0 0.0
  %5447 = vmatpush1.msra.mxu0 0.0
  %5448 = vmatprep.subr.mxu0 0.0
  %5449 = vmatpush1.msra.mxu0 0.0
  %5450 = vmatprep.subr.mxu0 0.0
  %5451 = vmatpush1.msra.mxu0 0.0
  %5452 = vmatprep.subr.mxu0 0.0
  %5453 = vmatpush1.msra.mxu0 0.0
  %5454 = vmatprep.subr.mxu0 0.0
  %5455 = vmatpush1.msra.mxu0 0.0
  %5456 = vmatprep.subr.mxu0 0.0
  %5457 = vmatpush1.msra.mxu0 0.0
  %5458 = vmatprep.subr.mxu0 0.0
  %5459 = vmatpush1.msra.mxu0 0.0
  %5460 = vmatprep.subr.mxu0 0.0
  %5461 = vmatpush1.msra.mxu0 0.0
  %5462 = vmatprep.subr.mxu0 0.0
  %5463 = vmatpush1.msra.mxu0 0.0
  %5464 = vmatprep.mubr.f32.mxu0 0.0
  %5465 = vmatmul.mubr.f32.gmra.mrb[0].mxu0 %v5327
  %v5466 = vpop.f32.mrb[0].mxu0
  %v5467 = vadd.f32 0.0, %v5466
  %v5468 = vpop.f32.mrb[0].mxu0
  %v5469 = vadd.f32 0.0, %v5468
  %5470 = vdwg.mxu0
  %5471 = vmatprep.subr.mxu0 %v5307
  %5472 = vmatpush1.msra.mxu0 %v5306
  %5473 = vmatprep.subr.mxu0 %v5313
  %5474 = vmatpush1.msra.mxu0 %v5312
  %5475 = vmatprep.subr.mxu0 %v5319
  %5476 = vmatpush1.msra.mxu0 %v5318
  %5477 = vmatprep.subr.mxu0 %v5325
  %5478 = vmatpush1.msra.mxu0 %v5324
  %5479 = vmatprep.subr.mxu0 0.0
  %5480 = vmatpush1.msra.mxu0 0.0
  %5481 = vmatprep.subr.mxu0 0.0
  %5482 = vmatpush1.msra.mxu0 0.0
  %5483 = vmatprep.subr.mxu0 0.0
  %5484 = vmatpush1.msra.mxu0 0.0
  %5485 = vmatprep.subr.mxu0 0.0
  %5486 = vmatpush1.msra.mxu0 0.0
  %5487 = vmatprep.subr.mxu0 0.0
  %5488 = vmatpush1.msra.mxu0 0.0
  %5489 = vmatprep.subr.mxu0 0.0
  %5490 = vmatpush1.msra.mxu0 0.0
  %5491 = vmatprep.subr.mxu0 0.0
  %5492 = vmatpush1.msra.mxu0 0.0
  %5493 = vmatprep.subr.mxu0 0.0
  %5494 = vmatpush1.msra.mxu0 0.0
  %5495 = vmatprep.subr.mxu0 0.0
  %5496 = vmatpush1.msra.mxu0 0.0
  %5497 = vmatprep.subr.mxu0 0.0
  %5498 = vmatpush1.msra.mxu0 0.0
  %5499 = vmatprep.subr.mxu0 0.0
  %5500 = vmatpush1.msra.mxu0 0.0
  %5501 = vmatprep.subr.mxu0 0.0
  %5502 = vmatpush1.msra.mxu0 0.0
  %5503 = vmatprep.subr.mxu0 0.0
  %5504 = vmatpush1.msra.mxu0 0.0
  %5505 = vmatprep.subr.mxu0 0.0
  %5506 = vmatpush1.msra.mxu0 0.0
  %5507 = vmatprep.subr.mxu0 0.0
  %5508 = vmatpush1.msra.mxu0 0.0
  %5509 = vmatprep.subr.mxu0 0.0
  %5510 = vmatpush1.msra.mxu0 0.0
  %5511 = vmatprep.subr.mxu0 0.0
  %5512 = vmatpush1.msra.mxu0 0.0
  %5513 = vmatprep.subr.mxu0 0.0
  %5514 = vmatpush1.msra.mxu0 0.0
  %5515 = vmatprep.subr.mxu0 0.0
  %5516 = vmatpush1.msra.mxu0 0.0
  %5517 = vmatprep.subr.mxu0 0.0
  %5518 = vmatpush1.msra.mxu0 0.0
  %5519 = vmatprep.subr.mxu0 0.0
  %5520 = vmatpush1.msra.mxu0 0.0
  %5521 = vmatprep.subr.mxu0 0.0
  %5522 = vmatpush1.msra.mxu0 0.0
  %5523 = vmatprep.subr.mxu0 0.0
  %5524 = vmatpush1.msra.mxu0 0.0
  %5525 = vmatprep.subr.mxu0 0.0
  %5526 = vmatpush1.msra.mxu0 0.0
  %5527 = vmatprep.subr.mxu0 0.0
  %5528 = vmatpush1.msra.mxu0 0.0
  %5529 = vmatprep.subr.mxu0 0.0
  %5530 = vmatpush1.msra.mxu0 0.0
  %5531 = vmatprep.subr.mxu0 0.0
  %5532 = vmatpush1.msra.mxu0 0.0
  %5533 = vmatprep.subr.mxu0 0.0
  %5534 = vmatpush1.msra.mxu0 0.0
  %5535 = vmatprep.mubr.f32.mxu0 0.0
  %5536 = vmatmul.mubr.f32.gmra.mrb[0].mxu0 %v5327
  %v5537 = vpop.f32.mrb[0].mxu0
  %v5538 = vadd.f32 0.0, %v5537
  %v5539 = vpop.f32.mrb[0].mxu0
  %v5540 = vadd.f32 0.0, %v5539
  %5541 = vdwg.mxu0
  %v5542 = vadd.f32 %v5219, %v5396
  %v5543 = vadd.f32 %v5220, %v5398
  %v5544 = vadd.f32 %v5221, %v5467
  %v5545 = vadd.f32 %v5222, %v5469
  %v5546 = vadd.f32 %v5223, %v5538
  %v5547 = vadd.f32 %v5224, %v5540
  %v5548 = vadd.s32 %v2330, 12
  %vm5549 = vcmp.eq.s32.totalorder %v2329, %v5548
  %v5550 = vsel %vm5549, 1, 0
  %v5551 = vcvt.s32.f32 %v5550
  %v5553 = vsel %vm43, %v5551, 0
  %5555 = vmatprep.subr.mxu0 0.0
  %5556 = vmatpush1.msra.mxu0 %v2318
  %5557 = vmatprep.subr.mxu0 0.0
  %5558 = vmatpush1.msra.mxu0 %v2319
  %5559 = vmatprep.subr.mxu0 0.0
  %5560 = vmatpush1.msra.mxu0 %v2320
  %5561 = vmatprep.subr.mxu0 0.0
  %5562 = vmatpush1.msra.mxu0 %v2321
  %5563 = vmatprep.subr.mxu0 0.0
  %5564 = vmatpush1.msra.mxu0 %v2322
  %5565 = vmatprep.subr.mxu0 0.0
  %5566 = vmatpush1.msra.mxu0 %v2323
  %5567 = vmatprep.subr.mxu0 0.0
  %5568 = vmatpush1.msra.mxu0 %v2324
  %5569 = vmatprep.subr.mxu0 0.0
  %5570 = vmatpush1.msra.mxu0 %v2325
  %5571 = vmatprep.subr.mxu0 0.0
  %5572 = vmatpush1.msra.mxu0 0.0
  %5573 = vmatprep.subr.mxu0 0.0
  %5574 = vmatpush1.msra.mxu0 0.0
  %5575 = vmatprep.subr.mxu0 0.0
  %5576 = vmatpush1.msra.mxu0 0.0
  %5577 = vmatprep.subr.mxu0 0.0
  %5578 = vmatpush1.msra.mxu0 0.0
  %5579 = vmatprep.subr.mxu0 0.0
  %5580 = vmatpush1.msra.mxu0 0.0
  %5581 = vmatprep.subr.mxu0 0.0
  %5582 = vmatpush1.msra.mxu0 0.0
  %5583 = vmatprep.subr.mxu0 0.0
  %5584 = vmatpush1.msra.mxu0 0.0
  %5585 = vmatprep.subr.mxu0 0.0
  %5586 = vmatpush1.msra.mxu0 0.0
  %5587 = vmatprep.subr.mxu0 0.0
  %5588 = vmatpush1.msra.mxu0 0.0
  %5589 = vmatprep.subr.mxu0 0.0
  %5590 = vmatpush1.msra.mxu0 0.0
  %5591 = vmatprep.subr.mxu0 0.0
  %5592 = vmatpush1.msra.mxu0 0.0
  %5593 = vmatprep.subr.mxu0 0.0
  %5594 = vmatpush1.msra.mxu0 0.0
  %5595 = vmatprep.subr.mxu0 0.0
  %5596 = vmatpush1.msra.mxu0 0.0
  %5597 = vmatprep.subr.mxu0 0.0
  %5598 = vmatpush1.msra.mxu0 0.0
  %5599 = vmatprep.subr.mxu0 0.0
  %5600 = vmatpush1.msra.mxu0 0.0
  %5601 = vmatprep.subr.mxu0 0.0
  %5602 = vmatpush1.msra.mxu0 0.0
  %5603 = vmatprep.subr.mxu0 0.0
  %5604 = vmatpush1.msra.mxu0 0.0
  %5605 = vmatprep.subr.mxu0 0.0
  %5606 = vmatpush1.msra.mxu0 0.0
  %5607 = vmatprep.subr.mxu0 0.0
  %5608 = vmatpush1.msra.mxu0 0.0
  %5609 = vmatprep.subr.mxu0 0.0
  %5610 = vmatpush1.msra.mxu0 0.0
  %5611 = vmatprep.subr.mxu0 0.0
  %5612 = vmatpush1.msra.mxu0 0.0
  %5613 = vmatprep.subr.mxu0 0.0
  %5614 = vmatpush1.msra.mxu0 0.0
  %5615 = vmatprep.subr.mxu0 0.0
  %5616 = vmatpush1.msra.mxu0 0.0
  %5617 = vmatprep.subr.mxu0 0.0
  %5618 = vmatpush1.msra.mxu0 0.0
  %5619 = vmatprep.mubr.f32.mxu0 0.0
  %5620 = vmatmul.mubr.f32.gmra.mrb[0].mxu0 %v5553
  %v5621 = vpop.f32.mrb[0].mxu0
  %v5622 = vadd.f32 0.0, %v5621
  %v5623 = vpop.f32.mrb[0].mxu0
  %5624 = vdwg.mxu0
  %v5625 = vld [vmem:[%s6 + $0x780] sm:$0xff]
  %v5626 = vld [vmem:[%s6 + $0x788] sm:$0xff]
  %v5627 = vld [vmem:[%s6 + $0x790] sm:$0xff]
  %v5628 = vld [vmem:[%s6 + $0x798] sm:$0xff]
  %v5629 = vld [vmem:[%s6 + $0x7a0] sm:$0xff]
  %v5630 = vld [vmem:[%s6 + $0x7a8] sm:$0xff]
  %v5631 = vld [vmem:[%s6 + $0x7b0] sm:$0xff]
  %v5632 = vld [vmem:[%s6 + $0x7b8] sm:$0xff]
  %v5633 = vld [vmem:[%s6 + $0x7c0] sm:$0xff]
  %v5634 = vld [vmem:[%s6 + $0x7c8] sm:$0xff]
  %v5635 = vld [vmem:[%s6 + $0x7d0] sm:$0xff]
  %v5636 = vld [vmem:[%s6 + $0x7d8] sm:$0xff]
  %v5637 = vld [vmem:[%s6 + $0x7e0] sm:$0xff]
  %v5638 = vld [vmem:[%s6 + $0x7e8] sm:$0xff]
  %v5639 = vld [vmem:[%s6 + $0x7f0] sm:$0xff]
  %v5640 = vld [vmem:[%s6 + $0x7f8] sm:$0xff]
  %v5641 = vld [vmem:[%s6 + $0x800] sm:$0xff]
  %v5642 = vld [vmem:[%s6 + $0x808] sm:$0xff]
  %v5643 = vld [vmem:[%s6 + $0x810] sm:$0xff]
  %v5644 = vld [vmem:[%s6 + $0x818] sm:$0xff]
  %v5645 = vld [vmem:[%s6 + $0x820] sm:$0xff]
  %v5646 = vld [vmem:[%s6 + $0x828] sm:$0xff]
  %v5647 = vld [vmem:[%s6 + $0x830] sm:$0xff]
  %v5648 = vld [vmem:[%s6 + $0x838] sm:$0xff]
  %v5650 = vsel %vm99, %v5622, 0
  %5652 = vmatprep.subr.mxu0 %v5626
  %5653 = vmatpush1.msra.mxu0 %v5625
  %5654 = vmatprep.subr.mxu0 %v5632
  %5655 = vmatpush1.msra.mxu0 %v5631
  %5656 = vmatprep.subr.mxu0 %v5638
  %5657 = vmatpush1.msra.mxu0 %v5637
  %5658 = vmatprep.subr.mxu0 %v5644
  %5659 = vmatpush1.msra.mxu0 %v5643
  %5660 = vmatprep.subr.mxu0 0.0
  %5661 = vmatpush1.msra.mxu0 0.0
  %5662 = vmatprep.subr.mxu0 0.0
  %5663 = vmatpush1.msra.mxu0 0.0
  %5664 = vmatprep.subr.mxu0 0.0
  %5665 = vmatpush1.msra.mxu0 0.0
  %5666 = vmatprep.subr.mxu0 0.0
  %5667 = vmatpush1.msra.mxu0 0.0
  %5668 = vmatprep.subr.mxu0 0.0
  %5669 = vmatpush1.msra.mxu0 0.0
  %5670 = vmatprep.subr.mxu0 0.0
  %5671 = vmatpush1.msra.mxu0 0.0
  %5672 = vmatprep.subr.mxu0 0.0
  %5673 = vmatpush1.msra.mxu0 0.0
  %5674 = vmatprep.subr.mxu0 0.0
  %5675 = vmatpush1.msra.mxu0 0.0
  %5676 = vmatprep.subr.mxu0 0.0
  %5677 = vmatpush1.msra.mxu0 0.0
  %5678 = vmatprep.subr.mxu0 0.0
  %5679 = vmatpush1.msra.mxu0 0.0
  %5680 = vmatprep.subr.mxu0 0.0
  %5681 = vmatpush1.msra.mxu0 0.0
  %5682 = vmatprep.subr.mxu0 0.0
  %5683 = vmatpush1.msra.mxu0 0.0
  %5684 = vmatprep.subr.mxu0 0.0
  %5685 = vmatpush1.msra.mxu0 0.0
  %5686 = vmatprep.subr.mxu0 0.0
  %5687 = vmatpush1.msra.mxu0 0.0
  %5688 = vmatprep.subr.mxu0 0.0
  %5689 = vmatpush1.msra.mxu0 0.0
  %5690 = vmatprep.subr.mxu0 0.0
  %5691 = vmatpush1.msra.mxu0 0.0
  %5692 = vmatprep.subr.mxu0 0.0
  %5693 = vmatpush1.msra.mxu0 0.0
  %5694 = vmatprep.subr.mxu0 0.0
  %5695 = vmatpush1.msra.mxu0 0.0
  %5696 = vmatprep.subr.mxu0 0.0
  %5697 = vmatpush1.msra.mxu0 0.0
  %5698 = vmatprep.subr.mxu0 0.0
  %5699 = vmatpush1.msra.mxu0 0.0
  %5700 = vmatprep.subr.mxu0 0.0
  %5701 = vmatpush1.msra.mxu0 0.0
  %5702 = vmatprep.subr.mxu0 0.0
  %5703 = vmatpush1.msra.mxu0 0.0
  %5704 = vmatprep.subr.mxu0 0.0
  %5705 = vmatpush1.msra.mxu0 0.0
  %5706 = vmatprep.subr.mxu0 0.0
  %5707 = vmatpush1.msra.mxu0 0.0
  %5708 = vmatprep.subr.mxu0 0.0
  %5709 = vmatpush1.msra.mxu0 0.0
  %5710 = vmatprep.subr.mxu0 0.0
  %5711 = vmatpush1.msra.mxu0 0.0
  %5712 = vmatprep.subr.mxu0 0.0
  %5713 = vmatpush1.msra.mxu0 0.0
  %5714 = vmatprep.subr.mxu0 0.0
  %5715 = vmatpush1.msra.mxu0 0.0
  %5716 = vmatprep.mubr.f32.mxu0 0.0
  %5717 = vmatmul.mubr.f32.gmra.mrb[0].mxu0 %v5650
  %v5718 = vpop.f32.mrb[0].mxu0
  %v5719 = vadd.f32 0.0, %v5718
  %v5720 = vpop.f32.mrb[0].mxu0
  %v5721 = vadd.f32 0.0, %v5720
  %5722 = vdwg.mxu0
  %5723 = vmatprep.subr.mxu0 %v5628
  %5724 = vmatpush1.msra.mxu0 %v5627
  %5725 = vmatprep.subr.mxu0 %v5634
  %5726 = vmatpush1.msra.mxu0 %v5633
  %5727 = vmatprep.subr.mxu0 %v5640
  %5728 = vmatpush1.msra.mxu0 %v5639
  %5729 = vmatprep.subr.mxu0 %v5646
  %5730 = vmatpush1.msra.mxu0 %v5645
  %5731 = vmatprep.subr.mxu0 0.0
  %5732 = vmatpush1.msra.mxu0 0.0
  %5733 = vmatprep.subr.mxu0 0.0
  %5734 = vmatpush1.msra.mxu0 0.0
  %5735 = vmatprep.subr.mxu0 0.0
  %5736 = vmatpush1.msra.mxu0 0.0
  %5737 = vmatprep.subr.mxu0 0.0
  %5738 = vmatpush1.msra.mxu0 0.0
  %5739 = vmatprep.subr.mxu0 0.0
  %5740 = vmatpush1.msra.mxu0 0.0
  %5741 = vmatprep.subr.mxu0 0.0
  %5742 = vmatpush1.msra.mxu0 0.0
  %5743 = vmatprep.subr.mxu0 0.0
  %5744 = vmatpush1.msra.mxu0 0.0
  %5745 = vmatprep.subr.mxu0 0.0
  %5746 = vmatpush1.msra.mxu0 0.0
  %5747 = vmatprep.subr.mxu0 0.0
  %5748 = vmatpush1.msra.mxu0 0.0
  %5749 = vmatprep.subr.mxu0 0.0
  %5750 = vmatpush1.msra.mxu0 0.0
  %5751 = vmatprep.subr.mxu0 0.0
  %5752 = vmatpush1.msra.mxu0 0.0
  %5753 = vmatprep.subr.mxu0 0.0
  %5754 = vmatpush1.msra.mxu0 0.0
  %5755 = vmatprep.subr.mxu0 0.0
  %5756 = vmatpush1.msra.mxu0 0.0
  %5757 = vmatprep.subr.mxu0 0.0
  %5758 = vmatpush1.msra.mxu0 0.0
  %5759 = vmatprep.subr.mxu0 0.0
  %5760 = vmatpush1.msra.mxu0 0.0
  %5761 = vmatprep.subr.mxu0 0.0
  %5762 = vmatpush1.msra.mxu0 0.0
  %5763 = vmatprep.subr.mxu0 0.0
  %5764 = vmatpush1.msra.mxu0 0.0
  %5765 = vmatprep.subr.mxu0 0.0
  %5766 = vmatpush1.msra.mxu0 0.0
  %5767 = vmatprep.subr.mxu0 0.0
  %5768 = vmatpush1.msra.mxu0 0.0
  %5769 = vmatprep.subr.mxu0 0.0
  %5770 = vmatpush1.msra.mxu0 0.0
  %5771 = vmatprep.subr.mxu0 0.0
  %5772 = vmatpush1.msra.mxu0 0.0
  %5773 = vmatprep.subr.mxu0 0.0
  %5774 = vmatpush1.msra.mxu0 0.0
  %5775 = vmatprep.subr.mxu0 0.0
  %5776 = vmatpush1.msra.mxu0 0.0
  %5777 = vmatprep.subr.mxu0 0.0
  %5778 = vmatpush1.msra.mxu0 0.0
  %5779 = vmatprep.subr.mxu0 0.0
  %5780 = vmatpush1.msra.mxu0 0.0
  %5781 = vmatprep.subr.mxu0 0.0
  %5782 = vmatpush1.msra.mxu0 0.0
  %5783 = vmatprep.subr.mxu0 0.0
  %5784 = vmatpush1.msra.mxu0 0.0
  %5785 = vmatprep.subr.mxu0 0.0
  %5786 = vmatpush1.msra.mxu0 0.0
  %5787 = vmatprep.mubr.f32.mxu0 0.0
  %5788 = vmatmul.mubr.f32.gmra.mrb[0].mxu0 %v5650
  %v5789 = vpop.f32.mrb[0].mxu0
  %v5790 = vadd.f32 0.0, %v5789
  %v5791 = vpop.f32.mrb[0].mxu0
  %v5792 = vadd.f32 0.0, %v5791
  %5793 = vdwg.mxu0
  %5794 = vmatprep.subr.mxu0 %v5630
  %5795 = vmatpush1.msra.mxu0 %v5629
  %5796 = vmatprep.subr.mxu0 %v5636
  %5797 = vmatpush1.msra.mxu0 %v5635
  %5798 = vmatprep.subr.mxu0 %v5642
  %5799 = vmatpush1.msra.mxu0 %v5641
  %5800 = vmatprep.subr.mxu0 %v5648
  %5801 = vmatpush1.msra.mxu0 %v5647
  %5802 = vmatprep.subr.mxu0 0.0
  %5803 = vmatpush1.msra.mxu0 0.0
  %5804 = vmatprep.subr.mxu0 0.0
  %5805 = vmatpush1.msra.mxu0 0.0
  %5806 = vmatprep.subr.mxu0 0.0
  %5807 = vmatpush1.msra.mxu0 0.0
  %5808 = vmatprep.subr.mxu0 0.0
  %5809 = vmatpush1.msra.mxu0 0.0
  %5810 = vmatprep.subr.mxu0 0.0
  %5811 = vmatpush1.msra.mxu0 0.0
  %5812 = vmatprep.subr.mxu0 0.0
  %5813 = vmatpush1.msra.mxu0 0.0
  %5814 = vmatprep.subr.mxu0 0.0
  %5815 = vmatpush1.msra.mxu0 0.0
  %5816 = vmatprep.subr.mxu0 0.0
  %5817 = vmatpush1.msra.mxu0 0.0
  %5818 = vmatprep.subr.mxu0 0.0
  %5819 = vmatpush1.msra.mxu0 0.0
  %5820 = vmatprep.subr.mxu0 0.0
  %5821 = vmatpush1.msra.mxu0 0.0
  %5822 = vmatprep.subr.mxu0 0.0
  %5823 = vmatpush1.msra.mxu0 0.0
  %5824 = vmatprep.subr.mxu0 0.0
  %5825 = vmatpush1.msra.mxu0 0.0
  %5826 = vmatprep.subr.mxu0 0.0
  %5827 = vmatpush1.msra.mxu0 0.0
  %5828 = vmatprep.subr.mxu0 0.0
  %5829 = vmatpush1.msra.mxu0 0.0
  %5830 = vmatprep.subr.mxu0 0.0
  %5831 = vmatpush1.msra.mxu0 0.0
  %5832 = vmatprep.subr.mxu0 0.0
  %5833 = vmatpush1.msra.mxu0 0.0
  %5834 = vmatprep.subr.mxu0 0.0
  %5835 = vmatpush1.msra.mxu0 0.0
  %5836 = vmatprep.subr.mxu0 0.0
  %5837 = vmatpush1.msra.mxu0 0.0
  %5838 = vmatprep.subr.mxu0 0.0
  %5839 = vmatpush1.msra.mxu0 0.0
  %5840 = vmatprep.subr.mxu0 0.0
  %5841 = vmatpush1.msra.mxu0 0.0
  %5842 = vmatprep.subr.mxu0 0.0
  %5843 = vmatpush1.msra.mxu0 0.0
  %5844 = vmatprep.subr.mxu0 0.0
  %5845 = vmatpush1.msra.mxu0 0.0
  %5846 = vmatprep.subr.mxu0 0.0
  %5847 = vmatpush1.msra.mxu0 0.0
  %5848 = vmatprep.subr.mxu0 0.0
  %5849 = vmatpush1.msra.mxu0 0.0
  %5850 = vmatprep.subr.mxu0 0.0
  %5851 = vmatpush1.msra.mxu0 0.0
  %5852 = vmatprep.subr.mxu0 0.0
  %5853 = vmatpush1.msra.mxu0 0.0
  %5854 = vmatprep.subr.mxu0 0.0
  %5855 = vmatpush1.msra.mxu0 0.0
  %5856 = vmatprep.subr.mxu0 0.0
  %5857 = vmatpush1.msra.mxu0 0.0
  %5858 = vmatprep.mubr.f32.mxu0 0.0
  %5859 = vmatmul.mubr.f32.gmra.mrb[0].mxu0 %v5650
  %v5860 = vpop.f32.mrb[0].mxu0
  %v5861 = vadd.f32 0.0, %v5860
  %v5862 = vpop.f32.mrb[0].mxu0
  %v5863 = vadd.f32 0.0, %v5862
  %5864 = vdwg.mxu0
  %v5865 = vadd.f32 %v5542, %v5719
  %v5866 = vadd.f32 %v5543, %v5721
  %v5867 = vadd.f32 %v5544, %v5790
  %v5868 = vadd.f32 %v5545, %v5792
  %v5869 = vadd.f32 %v5546, %v5861
  %v5870 = vadd.f32 %v5547, %v5863
  %v5871 = vadd.s32 %v2330, 13
  %vm5872 = vcmp.eq.s32.totalorder %v2329, %v5871
  %v5873 = vsel %vm5872, 1, 0
  %v5874 = vcvt.s32.f32 %v5873
  %v5876 = vsel %vm43, %v5874, 0
  %5878 = vmatprep.subr.mxu0 0.0
  %5879 = vmatpush1.msra.mxu0 %v2318
  %5880 = vmatprep.subr.mxu0 0.0
  %5881 = vmatpush1.msra.mxu0 %v2319
  %5882 = vmatprep.subr.mxu0 0.0
  %5883 = vmatpush1.msra.mxu0 %v2320
  %5884 = vmatprep.subr.mxu0 0.0
  %5885 = vmatpush1.msra.mxu0 %v2321
  %5886 = vmatprep.subr.mxu0 0.0
  %5887 = vmatpush1.msra.mxu0 %v2322
  %5888 = vmatprep.subr.mxu0 0.0
  %5889 = vmatpush1.msra.mxu0 %v2323
  %5890 = vmatprep.subr.mxu0 0.0
  %5891 = vmatpush1.msra.mxu0 %v2324
  %5892 = vmatprep.subr.mxu0 0.0
  %5893 = vmatpush1.msra.mxu0 %v2325
  %5894 = vmatprep.subr.mxu0 0.0
  %5895 = vmatpush1.msra.mxu0 0.0
  %5896 = vmatprep.subr.mxu0 0.0
  %5897 = vmatpush1.msra.mxu0 0.0
  %5898 = vmatprep.subr.mxu0 0.0
  %5899 = vmatpush1.msra.mxu0 0.0
  %5900 = vmatprep.subr.mxu0 0.0
  %5901 = vmatpush1.msra.mxu0 0.0
  %5902 = vmatprep.subr.mxu0 0.0
  %5903 = vmatpush1.msra.mxu0 0.0
  %5904 = vmatprep.subr.mxu0 0.0
  %5905 = vmatpush1.msra.mxu0 0.0
  %5906 = vmatprep.subr.mxu0 0.0
  %5907 = vmatpush1.msra.mxu0 0.0
  %5908 = vmatprep.subr.mxu0 0.0
  %5909 = vmatpush1.msra.mxu0 0.0
  %5910 = vmatprep.subr.mxu0 0.0
  %5911 = vmatpush1.msra.mxu0 0.0
  %5912 = vmatprep.subr.mxu0 0.0
  %5913 = vmatpush1.msra.mxu0 0.0
  %5914 = vmatprep.subr.mxu0 0.0
  %5915 = vmatpush1.msra.mxu0 0.0
  %5916 = vmatprep.subr.mxu0 0.0
  %5917 = vmatpush1.msra.mxu0 0.0
  %5918 = vmatprep.subr.mxu0 0.0
  %5919 = vmatpush1.msra.mxu0 0.0
  %5920 = vmatprep.subr.mxu0 0.0
  %5921 = vmatpush1.msra.mxu0 0.0
  %5922 = vmatprep.subr.mxu0 0.0
  %5923 = vmatpush1.msra.mxu0 0.0
  %5924 = vmatprep.subr.mxu0 0.0
  %5925 = vmatpush1.msra.mxu0 0.0
  %5926 = vmatprep.subr.mxu0 0.0
  %5927 = vmatpush1.msra.mxu0 0.0
  %5928 = vmatprep.subr.mxu0 0.0
  %5929 = vmatpush1.msra.mxu0 0.0
  %5930 = vmatprep.subr.mxu0 0.0
  %5931 = vmatpush1.msra.mxu0 0.0
  %5932 = vmatprep.subr.mxu0 0.0
  %5933 = vmatpush1.msra.mxu0 0.0
  %5934 = vmatprep.subr.mxu0 0.0
  %5935 = vmatpush1.msra.mxu0 0.0
  %5936 = vmatprep.subr.mxu0 0.0
  %5937 = vmatpush1.msra.mxu0 0.0
  %5938 = vmatprep.subr.mxu0 0.0
  %5939 = vmatpush1.msra.mxu0 0.0
  %5940 = vmatprep.subr.mxu0 0.0
  %5941 = vmatpush1.msra.mxu0 0.0
  %5942 = vmatprep.mubr.f32.mxu0 0.0
  %5943 = vmatmul.mubr.f32.gmra.mrb[0].mxu0 %v5876
  %v5944 = vpop.f32.mrb[0].mxu0
  %v5945 = vadd.f32 0.0, %v5944
  %v5946 = vpop.f32.mrb[0].mxu0
  %5947 = vdwg.mxu0
  %v5948 = vld [vmem:[%s6 + $0x840] sm:$0xff]
  %v5949 = vld [vmem:[%s6 + $0x848] sm:$0xff]
  %v5950 = vld [vmem:[%s6 + $0x850] sm:$0xff]
  %v5951 = vld [vmem:[%s6 + $0x858] sm:$0xff]
  %v5952 = vld [vmem:[%s6 + $0x860] sm:$0xff]
  %v5953 = vld [vmem:[%s6 + $0x868] sm:$0xff]
  %v5954 = vld [vmem:[%s6 + $0x870] sm:$0xff]
  %v5955 = vld [vmem:[%s6 + $0x878] sm:$0xff]
  %v5956 = vld [vmem:[%s6 + $0x880] sm:$0xff]
  %v5957 = vld [vmem:[%s6 + $0x888] sm:$0xff]
  %v5958 = vld [vmem:[%s6 + $0x890] sm:$0xff]
  %v5959 = vld [vmem:[%s6 + $0x898] sm:$0xff]
  %v5960 = vld [vmem:[%s6 + $0x8a0] sm:$0xff]
  %v5961 = vld [vmem:[%s6 + $0x8a8] sm:$0xff]
  %v5962 = vld [vmem:[%s6 + $0x8b0] sm:$0xff]
  %v5963 = vld [vmem:[%s6 + $0x8b8] sm:$0xff]
  %v5964 = vld [vmem:[%s6 + $0x8c0] sm:$0xff]
  %v5965 = vld [vmem:[%s6 + $0x8c8] sm:$0xff]
  %v5966 = vld [vmem:[%s6 + $0x8d0] sm:$0xff]
  %v5967 = vld [vmem:[%s6 + $0x8d8] sm:$0xff]
  %v5968 = vld [vmem:[%s6 + $0x8e0] sm:$0xff]
  %v5969 = vld [vmem:[%s6 + $0x8e8] sm:$0xff]
  %v5970 = vld [vmem:[%s6 + $0x8f0] sm:$0xff]
  %v5971 = vld [vmem:[%s6 + $0x8f8] sm:$0xff]
  %v5973 = vsel %vm99, %v5945, 0
  %5975 = vmatprep.subr.mxu0 %v5949
  %5976 = vmatpush1.msra.mxu0 %v5948
  %5977 = vmatprep.subr.mxu0 %v5955
  %5978 = vmatpush1.msra.mxu0 %v5954
  %5979 = vmatprep.subr.mxu0 %v5961
  %5980 = vmatpush1.msra.mxu0 %v5960
  %5981 = vmatprep.subr.mxu0 %v5967
  %5982 = vmatpush1.msra.mxu0 %v5966
  %5983 = vmatprep.subr.mxu0 0.0
  %5984 = vmatpush1.msra.mxu0 0.0
  %5985 = vmatprep.subr.mxu0 0.0
  %5986 = vmatpush1.msra.mxu0 0.0
  %5987 = vmatprep.subr.mxu0 0.0
  %5988 = vmatpush1.msra.mxu0 0.0
  %5989 = vmatprep.subr.mxu0 0.0
  %5990 = vmatpush1.msra.mxu0 0.0
  %5991 = vmatprep.subr.mxu0 0.0
  %5992 = vmatpush1.msra.mxu0 0.0
  %5993 = vmatprep.subr.mxu0 0.0
  %5994 = vmatpush1.msra.mxu0 0.0
  %5995 = vmatprep.subr.mxu0 0.0
  %5996 = vmatpush1.msra.mxu0 0.0
  %5997 = vmatprep.subr.mxu0 0.0
  %5998 = vmatpush1.msra.mxu0 0.0
  %5999 = vmatprep.subr.mxu0 0.0
  %6000 = vmatpush1.msra.mxu0 0.0
  %6001 = vmatprep.subr.mxu0 0.0
  %6002 = vmatpush1.msra.mxu0 0.0
  %6003 = vmatprep.subr.mxu0 0.0
  %6004 = vmatpush1.msra.mxu0 0.0
  %6005 = vmatprep.subr.mxu0 0.0
  %6006 = vmatpush1.msra.mxu0 0.0
  %6007 = vmatprep.subr.mxu0 0.0
  %6008 = vmatpush1.msra.mxu0 0.0
  %6009 = vmatprep.subr.mxu0 0.0
  %6010 = vmatpush1.msra.mxu0 0.0
  %6011 = vmatprep.subr.mxu0 0.0
  %6012 = vmatpush1.msra.mxu0 0.0
  %6013 = vmatprep.subr.mxu0 0.0
  %6014 = vmatpush1.msra.mxu0 0.0
  %6015 = vmatprep.subr.mxu0 0.0
  %6016 = vmatpush1.msra.mxu0 0.0
  %6017 = vmatprep.subr.mxu0 0.0
  %6018 = vmatpush1.msra.mxu0 0.0
  %6019 = vmatprep.subr.mxu0 0.0
  %6020 = vmatpush1.msra.mxu0 0.0
  %6021 = vmatprep.subr.mxu0 0.0
  %6022 = vmatpush1.msra.mxu0 0.0
  %6023 = vmatprep.subr.mxu0 0.0
  %6024 = vmatpush1.msra.mxu0 0.0
  %6025 = vmatprep.subr.mxu0 0.0
  %6026 = vmatpush1.msra.mxu0 0.0
  %6027 = vmatprep.subr.mxu0 0.0
  %6028 = vmatpush1.msra.mxu0 0.0
  %6029 = vmatprep.subr.mxu0 0.0
  %6030 = vmatpush1.msra.mxu0 0.0
  %6031 = vmatprep.subr.mxu0 0.0
  %6032 = vmatpush1.msra.mxu0 0.0
  %6033 = vmatprep.subr.mxu0 0.0
  %6034 = vmatpush1.msra.mxu0 0.0
  %6035 = vmatprep.subr.mxu0 0.0
  %6036 = vmatpush1.msra.mxu0 0.0
  %6037 = vmatprep.subr.mxu0 0.0
  %6038 = vmatpush1.msra.mxu0 0.0
  %6039 = vmatprep.mubr.f32.mxu0 0.0
  %6040 = vmatmul.mubr.f32.gmra.mrb[0].mxu0 %v5973
  %v6041 = vpop.f32.mrb[0].mxu0
  %v6042 = vadd.f32 0.0, %v6041
  %v6043 = vpop.f32.mrb[0].mxu0
  %v6044 = vadd.f32 0.0, %v6043
  %6045 = vdwg.mxu0
  %6046 = vmatprep.subr.mxu0 %v5951
  %6047 = vmatpush1.msra.mxu0 %v5950
  %6048 = vmatprep.subr.mxu0 %v5957
  %6049 = vmatpush1.msra.mxu0 %v5956
  %6050 = vmatprep.subr.mxu0 %v5963
  %6051 = vmatpush1.msra.mxu0 %v5962
  %6052 = vmatprep.subr.mxu0 %v5969
  %6053 = vmatpush1.msra.mxu0 %v5968
  %6054 = vmatprep.subr.mxu0 0.0
  %6055 = vmatpush1.msra.mxu0 0.0
  %6056 = vmatprep.subr.mxu0 0.0
  %6057 = vmatpush1.msra.mxu0 0.0
  %6058 = vmatprep.subr.mxu0 0.0
  %6059 = vmatpush1.msra.mxu0 0.0
  %6060 = vmatprep.subr.mxu0 0.0
  %6061 = vmatpush1.msra.mxu0 0.0
  %6062 = vmatprep.subr.mxu0 0.0
  %6063 = vmatpush1.msra.mxu0 0.0
  %6064 = vmatprep.subr.mxu0 0.0
  %6065 = vmatpush1.msra.mxu0 0.0
  %6066 = vmatprep.subr.mxu0 0.0
  %6067 = vmatpush1.msra.mxu0 0.0
  %6068 = vmatprep.subr.mxu0 0.0
  %6069 = vmatpush1.msra.mxu0 0.0
  %6070 = vmatprep.subr.mxu0 0.0
  %6071 = vmatpush1.msra.mxu0 0.0
  %6072 = vmatprep.subr.mxu0 0.0
  %6073 = vmatpush1.msra.mxu0 0.0
  %6074 = vmatprep.subr.mxu0 0.0
  %6075 = vmatpush1.msra.mxu0 0.0
  %6076 = vmatprep.subr.mxu0 0.0
  %6077 = vmatpush1.msra.mxu0 0.0
  %6078 = vmatprep.subr.mxu0 0.0
  %6079 = vmatpush1.msra.mxu0 0.0
  %6080 = vmatprep.subr.mxu0 0.0
  %6081 = vmatpush1.msra.mxu0 0.0
  %6082 = vmatprep.subr.mxu0 0.0
  %6083 = vmatpush1.msra.mxu0 0.0
  %6084 = vmatprep.subr.mxu0 0.0
  %6085 = vmatpush1.msra.mxu0 0.0
  %6086 = vmatprep.subr.mxu0 0.0
  %6087 = vmatpush1.msra.mxu0 0.0
  %6088 = vmatprep.subr.mxu0 0.0
  %6089 = vmatpush1.msra.mxu0 0.0
  %6090 = vmatprep.subr.mxu0 0.0
  %6091 = vmatpush1.msra.mxu0 0.0
  %6092 = vmatprep.subr.mxu0 0.0
  %6093 = vmatpush1.msra.mxu0 0.0
  %6094 = vmatprep.subr.mxu0 0.0
  %6095 = vmatpush1.msra.mxu0 0.0
  %6096 = vmatprep.subr.mxu0 0.0
  %6097 = vmatpush1.msra.mxu0 0.0
  %6098 = vmatprep.subr.mxu0 0.0
  %6099 = vmatpush1.msra.mxu0 0.0
  %6100 = vmatprep.subr.mxu0 0.0
  %6101 = vmatpush1.msra.mxu0 0.0
  %6102 = vmatprep.subr.mxu0 0.0
  %6103 = vmatpush1.msra.mxu0 0.0
  %6104 = vmatprep.subr.mxu0 0.0
  %6105 = vmatpush1.msra.mxu0 0.0
  %6106 = vmatprep.subr.mxu0 0.0
  %6107 = vmatpush1.msra.mxu0 0.0
  %6108 = vmatprep.subr.mxu0 0.0
  %6109 = vmatpush1.msra.mxu0 0.0
  %6110 = vmatprep.mubr.f32.mxu0 0.0
  %6111 = vmatmul.mubr.f32.gmra.mrb[0].mxu0 %v5973
  %v6112 = vpop.f32.mrb[0].mxu0
  %v6113 = vadd.f32 0.0, %v6112
  %v6114 = vpop.f32.mrb[0].mxu0
  %v6115 = vadd.f32 0.0, %v6114
  %6116 = vdwg.mxu0
  %6117 = vmatprep.subr.mxu0 %v5953
  %6118 = vmatpush1.msra.mxu0 %v5952
  %6119 = vmatprep.subr.mxu0 %v5959
  %6120 = vmatpush1.msra.mxu0 %v5958
  %6121 = vmatprep.subr.mxu0 %v5965
  %6122 = vmatpush1.msra.mxu0 %v5964
  %6123 = vmatprep.subr.mxu0 %v5971
  %6124 = vmatpush1.msra.mxu0 %v5970
  %6125 = vmatprep.subr.mxu0 0.0
  %6126 = vmatpush1.msra.mxu0 0.0
  %6127 = vmatprep.subr.mxu0 0.0
  %6128 = vmatpush1.msra.mxu0 0.0
  %6129 = vmatprep.subr.mxu0 0.0
  %6130 = vmatpush1.msra.mxu0 0.0
  %6131 = vmatprep.subr.mxu0 0.0
  %6132 = vmatpush1.msra.mxu0 0.0
  %6133 = vmatprep.subr.mxu0 0.0
  %6134 = vmatpush1.msra.mxu0 0.0
  %6135 = vmatprep.subr.mxu0 0.0
  %6136 = vmatpush1.msra.mxu0 0.0
  %6137 = vmatprep.subr.mxu0 0.0
  %6138 = vmatpush1.msra.mxu0 0.0
  %6139 = vmatprep.subr.mxu0 0.0
  %6140 = vmatpush1.msra.mxu0 0.0
  %6141 = vmatprep.subr.mxu0 0.0
  %6142 = vmatpush1.msra.mxu0 0.0
  %6143 = vmatprep.subr.mxu0 0.0
  %6144 = vmatpush1.msra.mxu0 0.0
  %6145 = vmatprep.subr.mxu0 0.0
  %6146 = vmatpush1.msra.mxu0 0.0
  %6147 = vmatprep.subr.mxu0 0.0
  %6148 = vmatpush1.msra.mxu0 0.0
  %6149 = vmatprep.subr.mxu0 0.0
  %6150 = vmatpush1.msra.mxu0 0.0
  %6151 = vmatprep.subr.mxu0 0.0
  %6152 = vmatpush1.msra.mxu0 0.0
  %6153 = vmatprep.subr.mxu0 0.0
  %6154 = vmatpush1.msra.mxu0 0.0
  %6155 = vmatprep.subr.mxu0 0.0
  %6156 = vmatpush1.msra.mxu0 0.0
  %6157 = vmatprep.subr.mxu0 0.0
  %6158 = vmatpush1.msra.mxu0 0.0
  %6159 = vmatprep.subr.mxu0 0.0
  %6160 = vmatpush1.msra.mxu0 0.0
  %6161 = vmatprep.subr.mxu0 0.0
  %6162 = vmatpush1.msra.mxu0 0.0
  %6163 = vmatprep.subr.mxu0 0.0
  %6164 = vmatpush1.msra.mxu0 0.0
  %6165 = vmatprep.subr.mxu0 0.0
  %6166 = vmatpush1.msra.mxu0 0.0
  %6167 = vmatprep.subr.mxu0 0.0
  %6168 = vmatpush1.msra.mxu0 0.0
  %6169 = vmatprep.subr.mxu0 0.0
  %6170 = vmatpush1.msra.mxu0 0.0
  %6171 = vmatprep.subr.mxu0 0.0
  %6172 = vmatpush1.msra.mxu0 0.0
  %6173 = vmatprep.subr.mxu0 0.0
  %6174 = vmatpush1.msra.mxu0 0.0
  %6175 = vmatprep.subr.mxu0 0.0
  %6176 = vmatpush1.msra.mxu0 0.0
  %6177 = vmatprep.subr.mxu0 0.0
  %6178 = vmatpush1.msra.mxu0 0.0
  %6179 = vmatprep.subr.mxu0 0.0
  %6180 = vmatpush1.msra.mxu0 0.0
  %6181 = vmatprep.mubr.f32.mxu0 0.0
  %6182 = vmatmul.mubr.f32.gmra.mrb[0].mxu0 %v5973
  %v6183 = vpop.f32.mrb[0].mxu0
  %v6184 = vadd.f32 0.0, %v6183
  %v6185 = vpop.f32.mrb[0].mxu0
  %v6186 = vadd.f32 0.0, %v6185
  %6187 = vdwg.mxu0
  %v6188 = vadd.f32 %v5865, %v6042
  %v6189 = vadd.f32 %v5866, %v6044
  %v6190 = vadd.f32 %v5867, %v6113
  %v6191 = vadd.f32 %v5868, %v6115
  %v6192 = vadd.f32 %v5869, %v6184
  %v6193 = vadd.f32 %v5870, %v6186
  %v6194 = vadd.s32 %v2330, 15
  %vm6195 = vcmp.eq.s32.totalorder %v2329, %v6194
  %v6196 = vsel %vm6195, 1, 0
  %v6197 = vcvt.s32.f32 %v6196
  %v6199 = vsel %vm43, %v6197, 0
  %6201 = vmatprep.subr.mxu0 0.0
  %6202 = vmatpush1.msra.mxu0 %v2318
  %6203 = vmatprep.subr.mxu0 0.0
  %6204 = vmatpush1.msra.mxu0 %v2319
  %6205 = vmatprep.subr.mxu0 0.0
  %6206 = vmatpush1.msra.mxu0 %v2320
  %6207 = vmatprep.subr.mxu0 0.0
  %6208 = vmatpush1.msra.mxu0 %v2321
  %6209 = vmatprep.subr.mxu0 0.0
  %6210 = vmatpush1.msra.mxu0 %v2322
  %6211 = vmatprep.subr.mxu0 0.0
  %6212 = vmatpush1.msra.mxu0 %v2323
  %6213 = vmatprep.subr.mxu0 0.0
  %6214 = vmatpush1.msra.mxu0 %v2324
  %6215 = vmatprep.subr.mxu0 0.0
  %6216 = vmatpush1.msra.mxu0 %v2325
  %6217 = vmatprep.subr.mxu0 0.0
  %6218 = vmatpush1.msra.mxu0 0.0
  %6219 = vmatprep.subr.mxu0 0.0
  %6220 = vmatpush1.msra.mxu0 0.0
  %6221 = vmatprep.subr.mxu0 0.0
  %6222 = vmatpush1.msra.mxu0 0.0
  %6223 = vmatprep.subr.mxu0 0.0
  %6224 = vmatpush1.msra.mxu0 0.0
  %6225 = vmatprep.subr.mxu0 0.0
  %6226 = vmatpush1.msra.mxu0 0.0
  %6227 = vmatprep.subr.mxu0 0.0
  %6228 = vmatpush1.msra.mxu0 0.0
  %6229 = vmatprep.subr.mxu0 0.0
  %6230 = vmatpush1.msra.mxu0 0.0
  %6231 = vmatprep.subr.mxu0 0.0
  %6232 = vmatpush1.msra.mxu0 0.0
  %6233 = vmatprep.subr.mxu0 0.0
  %6234 = vmatpush1.msra.mxu0 0.0
  %6235 = vmatprep.subr.mxu0 0.0
  %6236 = vmatpush1.msra.mxu0 0.0
  %6237 = vmatprep.subr.mxu0 0.0
  %6238 = vmatpush1.msra.mxu0 0.0
  %6239 = vmatprep.subr.mxu0 0.0
  %6240 = vmatpush1.msra.mxu0 0.0
  %6241 = vmatprep.subr.mxu0 0.0
  %6242 = vmatpush1.msra.mxu0 0.0
  %6243 = vmatprep.subr.mxu0 0.0
  %6244 = vmatpush1.msra.mxu0 0.0
  %6245 = vmatprep.subr.mxu0 0.0
  %6246 = vmatpush1.msra.mxu0 0.0
  %6247 = vmatprep.subr.mxu0 0.0
  %6248 = vmatpush1.msra.mxu0 0.0
  %6249 = vmatprep.subr.mxu0 0.0
  %6250 = vmatpush1.msra.mxu0 0.0
  %6251 = vmatprep.subr.mxu0 0.0
  %6252 = vmatpush1.msra.mxu0 0.0
  %6253 = vmatprep.subr.mxu0 0.0
  %6254 = vmatpush1.msra.mxu0 0.0
  %6255 = vmatprep.subr.mxu0 0.0
  %6256 = vmatpush1.msra.mxu0 0.0
  %6257 = vmatprep.subr.mxu0 0.0
  %6258 = vmatpush1.msra.mxu0 0.0
  %6259 = vmatprep.subr.mxu0 0.0
  %6260 = vmatpush1.msra.mxu0 0.0
  %6261 = vmatprep.subr.mxu0 0.0
  %6262 = vmatpush1.msra.mxu0 0.0
  %6263 = vmatprep.subr.mxu0 0.0
  %6264 = vmatpush1.msra.mxu0 0.0
  %6265 = vmatprep.mubr.f32.mxu0 0.0
  %6266 = vmatmul.mubr.f32.gmra.mrb[0].mxu0 %v6199
  %v6267 = vpop.f32.mrb[0].mxu0
  %v6268 = vadd.f32 0.0, %v6267
  %v6269 = vpop.f32.mrb[0].mxu0
  %6270 = vdwg.mxu0
  %v6271 = vld [vmem:[%s6 + $0x900] sm:$0xff]
  %v6272 = vld [vmem:[%s6 + $0x908] sm:$0xff]
  %v6273 = vld [vmem:[%s6 + $0x910] sm:$0xff]
  %v6274 = vld [vmem:[%s6 + $0x918] sm:$0xff]
  %v6275 = vld [vmem:[%s6 + $0x920] sm:$0xff]
  %v6276 = vld [vmem:[%s6 + $0x928] sm:$0xff]
  %v6277 = vld [vmem:[%s6 + $0x930] sm:$0xff]
  %v6278 = vld [vmem:[%s6 + $0x938] sm:$0xff]
  %v6279 = vld [vmem:[%s6 + $0x940] sm:$0xff]
  %v6280 = vld [vmem:[%s6 + $0x948] sm:$0xff]
  %v6281 = vld [vmem:[%s6 + $0x950] sm:$0xff]
  %v6282 = vld [vmem:[%s6 + $0x958] sm:$0xff]
  %v6283 = vld [vmem:[%s6 + $0x960] sm:$0xff]
  %v6284 = vld [vmem:[%s6 + $0x968] sm:$0xff]
  %v6285 = vld [vmem:[%s6 + $0x970] sm:$0xff]
  %v6286 = vld [vmem:[%s6 + $0x978] sm:$0xff]
  %v6287 = vld [vmem:[%s6 + $0x980] sm:$0xff]
  %v6288 = vld [vmem:[%s6 + $0x988] sm:$0xff]
  %v6289 = vld [vmem:[%s6 + $0x990] sm:$0xff]
  %v6290 = vld [vmem:[%s6 + $0x998] sm:$0xff]
  %v6291 = vld [vmem:[%s6 + $0x9a0] sm:$0xff]
  %v6292 = vld [vmem:[%s6 + $0x9a8] sm:$0xff]
  %v6293 = vld [vmem:[%s6 + $0x9b0] sm:$0xff]
  %v6294 = vld [vmem:[%s6 + $0x9b8] sm:$0xff]
  %v6296 = vsel %vm99, %v6268, 0
  %6298 = vmatprep.subr.mxu0 %v6272
  %6299 = vmatpush1.msra.mxu0 %v6271
  %6300 = vmatprep.subr.mxu0 %v6278
  %6301 = vmatpush1.msra.mxu0 %v6277
  %6302 = vmatprep.subr.mxu0 %v6284
  %6303 = vmatpush1.msra.mxu0 %v6283
  %6304 = vmatprep.subr.mxu0 %v6290
  %6305 = vmatpush1.msra.mxu0 %v6289
  %6306 = vmatprep.subr.mxu0 0.0
  %6307 = vmatpush1.msra.mxu0 0.0
  %6308 = vmatprep.subr.mxu0 0.0
  %6309 = vmatpush1.msra.mxu0 0.0
  %6310 = vmatprep.subr.mxu0 0.0
  %6311 = vmatpush1.msra.mxu0 0.0
  %6312 = vmatprep.subr.mxu0 0.0
  %6313 = vmatpush1.msra.mxu0 0.0
  %6314 = vmatprep.subr.mxu0 0.0
  %6315 = vmatpush1.msra.mxu0 0.0
  %6316 = vmatprep.subr.mxu0 0.0
  %6317 = vmatpush1.msra.mxu0 0.0
  %6318 = vmatprep.subr.mxu0 0.0
  %6319 = vmatpush1.msra.mxu0 0.0
  %6320 = vmatprep.subr.mxu0 0.0
  %6321 = vmatpush1.msra.mxu0 0.0
  %6322 = vmatprep.subr.mxu0 0.0
  %6323 = vmatpush1.msra.mxu0 0.0
  %6324 = vmatprep.subr.mxu0 0.0
  %6325 = vmatpush1.msra.mxu0 0.0
  %6326 = vmatprep.subr.mxu0 0.0
  %6327 = vmatpush1.msra.mxu0 0.0
  %6328 = vmatprep.subr.mxu0 0.0
  %6329 = vmatpush1.msra.mxu0 0.0
  %6330 = vmatprep.subr.mxu0 0.0
  %6331 = vmatpush1.msra.mxu0 0.0
  %6332 = vmatprep.subr.mxu0 0.0
  %6333 = vmatpush1.msra.mxu0 0.0
  %6334 = vmatprep.subr.mxu0 0.0
  %6335 = vmatpush1.msra.mxu0 0.0
  %6336 = vmatprep.subr.mxu0 0.0
  %6337 = vmatpush1.msra.mxu0 0.0
  %6338 = vmatprep.subr.mxu0 0.0
  %6339 = vmatpush1.msra.mxu0 0.0
  %6340 = vmatprep.subr.mxu0 0.0
  %6341 = vmatpush1.msra.mxu0 0.0
  %6342 = vmatprep.subr.mxu0 0.0
  %6343 = vmatpush1.msra.mxu0 0.0
  %6344 = vmatprep.subr.mxu0 0.0
  %6345 = vmatpush1.msra.mxu0 0.0
  %6346 = vmatprep.subr.mxu0 0.0
  %6347 = vmatpush1.msra.mxu0 0.0
  %6348 = vmatprep.subr.mxu0 0.0
  %6349 = vmatpush1.msra.mxu0 0.0
  %6350 = vmatprep.subr.mxu0 0.0
  %6351 = vmatpush1.msra.mxu0 0.0
  %6352 = vmatprep.subr.mxu0 0.0
  %6353 = vmatpush1.msra.mxu0 0.0
  %6354 = vmatprep.subr.mxu0 0.0
  %6355 = vmatpush1.msra.mxu0 0.0
  %6356 = vmatprep.subr.mxu0 0.0
  %6357 = vmatpush1.msra.mxu0 0.0
  %6358 = vmatprep.subr.mxu0 0.0
  %6359 = vmatpush1.msra.mxu0 0.0
  %6360 = vmatprep.subr.mxu0 0.0
  %6361 = vmatpush1.msra.mxu0 0.0
  %6362 = vmatprep.mubr.f32.mxu0 0.0
  %6363 = vmatmul.mubr.f32.gmra.mrb[0].mxu0 %v6296
  %v6364 = vpop.f32.mrb[0].mxu0
  %v6365 = vadd.f32 0.0, %v6364
  %v6366 = vpop.f32.mrb[0].mxu0
  %v6367 = vadd.f32 0.0, %v6366
  %6368 = vdwg.mxu0
  %6369 = vmatprep.subr.mxu0 %v6274
  %6370 = vmatpush1.msra.mxu0 %v6273
  %6371 = vmatprep.subr.mxu0 %v6280
  %6372 = vmatpush1.msra.mxu0 %v6279
  %6373 = vmatprep.subr.mxu0 %v6286
  %6374 = vmatpush1.msra.mxu0 %v6285
  %6375 = vmatprep.subr.mxu0 %v6292
  %6376 = vmatpush1.msra.mxu0 %v6291
  %6377 = vmatprep.subr.mxu0 0.0
  %6378 = vmatpush1.msra.mxu0 0.0
  %6379 = vmatprep.subr.mxu0 0.0
  %6380 = vmatpush1.msra.mxu0 0.0
  %6381 = vmatprep.subr.mxu0 0.0
  %6382 = vmatpush1.msra.mxu0 0.0
  %6383 = vmatprep.subr.mxu0 0.0
  %6384 = vmatpush1.msra.mxu0 0.0
  %6385 = vmatprep.subr.mxu0 0.0
  %6386 = vmatpush1.msra.mxu0 0.0
  %6387 = vmatprep.subr.mxu0 0.0
  %6388 = vmatpush1.msra.mxu0 0.0
  %6389 = vmatprep.subr.mxu0 0.0
  %6390 = vmatpush1.msra.mxu0 0.0
  %6391 = vmatprep.subr.mxu0 0.0
  %6392 = vmatpush1.msra.mxu0 0.0
  %6393 = vmatprep.subr.mxu0 0.0
  %6394 = vmatpush1.msra.mxu0 0.0
  %6395 = vmatprep.subr.mxu0 0.0
  %6396 = vmatpush1.msra.mxu0 0.0
  %6397 = vmatprep.subr.mxu0 0.0
  %6398 = vmatpush1.msra.mxu0 0.0
  %6399 = vmatprep.subr.mxu0 0.0
  %6400 = vmatpush1.msra.mxu0 0.0
  %6401 = vmatprep.subr.mxu0 0.0
  %6402 = vmatpush1.msra.mxu0 0.0
  %6403 = vmatprep.subr.mxu0 0.0
  %6404 = vmatpush1.msra.mxu0 0.0
  %6405 = vmatprep.subr.mxu0 0.0
  %6406 = vmatpush1.msra.mxu0 0.0
  %6407 = vmatprep.subr.mxu0 0.0
  %6408 = vmatpush1.msra.mxu0 0.0
  %6409 = vmatprep.subr.mxu0 0.0
  %6410 = vmatpush1.msra.mxu0 0.0
  %6411 = vmatprep.subr.mxu0 0.0
  %6412 = vmatpush1.msra.mxu0 0.0
  %6413 = vmatprep.subr.mxu0 0.0
  %6414 = vmatpush1.msra.mxu0 0.0
  %6415 = vmatprep.subr.mxu0 0.0
  %6416 = vmatpush1.msra.mxu0 0.0
  %6417 = vmatprep.subr.mxu0 0.0
  %6418 = vmatpush1.msra.mxu0 0.0
  %6419 = vmatprep.subr.mxu0 0.0
  %6420 = vmatpush1.msra.mxu0 0.0
  %6421 = vmatprep.subr.mxu0 0.0
  %6422 = vmatpush1.msra.mxu0 0.0
  %6423 = vmatprep.subr.mxu0 0.0
  %6424 = vmatpush1.msra.mxu0 0.0
  %6425 = vmatprep.subr.mxu0 0.0
  %6426 = vmatpush1.msra.mxu0 0.0
  %6427 = vmatprep.subr.mxu0 0.0
  %6428 = vmatpush1.msra.mxu0 0.0
  %6429 = vmatprep.subr.mxu0 0.0
  %6430 = vmatpush1.msra.mxu0 0.0
  %6431 = vmatprep.subr.mxu0 0.0
  %6432 = vmatpush1.msra.mxu0 0.0
  %6433 = vmatprep.mubr.f32.mxu0 0.0
  %6434 = vmatmul.mubr.f32.gmra.mrb[0].mxu0 %v6296
  %v6435 = vpop.f32.mrb[0].mxu0
  %v6436 = vadd.f32 0.0, %v6435
  %v6437 = vpop.f32.mrb[0].mxu0
  %v6438 = vadd.f32 0.0, %v6437
  %6439 = vdwg.mxu0
  %6440 = vmatprep.subr.mxu0 %v6276
  %6441 = vmatpush1.msra.mxu0 %v6275
  %6442 = vmatprep.subr.mxu0 %v6282
  %6443 = vmatpush1.msra.mxu0 %v6281
  %6444 = vmatprep.subr.mxu0 %v6288
  %6445 = vmatpush1.msra.mxu0 %v6287
  %6446 = vmatprep.subr.mxu0 %v6294
  %6447 = vmatpush1.msra.mxu0 %v6293
  %6448 = vmatprep.subr.mxu0 0.0
  %6449 = vmatpush1.msra.mxu0 0.0
  %6450 = vmatprep.subr.mxu0 0.0
  %6451 = vmatpush1.msra.mxu0 0.0
  %6452 = vmatprep.subr.mxu0 0.0
  %6453 = vmatpush1.msra.mxu0 0.0
  %6454 = vmatprep.subr.mxu0 0.0
  %6455 = vmatpush1.msra.mxu0 0.0
  %6456 = vmatprep.subr.mxu0 0.0
  %6457 = vmatpush1.msra.mxu0 0.0
  %6458 = vmatprep.subr.mxu0 0.0
  %6459 = vmatpush1.msra.mxu0 0.0
  %6460 = vmatprep.subr.mxu0 0.0
  %6461 = vmatpush1.msra.mxu0 0.0
  %6462 = vmatprep.subr.mxu0 0.0
  %6463 = vmatpush1.msra.mxu0 0.0
  %6464 = vmatprep.subr.mxu0 0.0
  %6465 = vmatpush1.msra.mxu0 0.0
  %6466 = vmatprep.subr.mxu0 0.0
  %6467 = vmatpush1.msra.mxu0 0.0
  %6468 = vmatprep.subr.mxu0 0.0
  %6469 = vmatpush1.msra.mxu0 0.0
  %6470 = vmatprep.subr.mxu0 0.0
  %6471 = vmatpush1.msra.mxu0 0.0
  %6472 = vmatprep.subr.mxu0 0.0
  %6473 = vmatpush1.msra.mxu0 0.0
  %6474 = vmatprep.subr.mxu0 0.0
  %6475 = vmatpush1.msra.mxu0 0.0
  %6476 = vmatprep.subr.mxu0 0.0
  %6477 = vmatpush1.msra.mxu0 0.0
  %6478 = vmatprep.subr.mxu0 0.0
  %6479 = vmatpush1.msra.mxu0 0.0
  %6480 = vmatprep.subr.mxu0 0.0
  %6481 = vmatpush1.msra.mxu0 0.0
  %6482 = vmatprep.subr.mxu0 0.0
  %6483 = vmatpush1.msra.mxu0 0.0
  %6484 = vmatprep.subr.mxu0 0.0
  %6485 = vmatpush1.msra.mxu0 0.0
  %6486 = vmatprep.subr.mxu0 0.0
  %6487 = vmatpush1.msra.mxu0 0.0
  %6488 = vmatprep.subr.mxu0 0.0
  %6489 = vmatpush1.msra.mxu0 0.0
  %6490 = vmatprep.subr.mxu0 0.0
  %6491 = vmatpush1.msra.mxu0 0.0
  %6492 = vmatprep.subr.mxu0 0.0
  %6493 = vmatpush1.msra.mxu0 0.0
  %6494 = vmatprep.subr.mxu0 0.0
  %6495 = vmatpush1.msra.mxu0 0.0
  %6496 = vmatprep.subr.mxu0 0.0
  %6497 = vmatpush1.msra.mxu0 0.0
  %6498 = vmatprep.subr.mxu0 0.0
  %6499 = vmatpush1.msra.mxu0 0.0
  %6500 = vmatprep.subr.mxu0 0.0
  %6501 = vmatpush1.msra.mxu0 0.0
  %6502 = vmatprep.subr.mxu0 0.0
  %6503 = vmatpush1.msra.mxu0 0.0
  %6504 = vmatprep.mubr.f32.mxu0 0.0
  %6505 = vmatmul.mubr.f32.gmra.mrb[0].mxu0 %v6296
  %v6506 = vpop.f32.mrb[0].mxu0
  %v6507 = vadd.f32 0.0, %v6506
  %v6508 = vpop.f32.mrb[0].mxu0
  %v6509 = vadd.f32 0.0, %v6508
  %6510 = vdwg.mxu0
  %v6511 = vadd.f32 %v6188, %v6365
  %v6512 = vadd.f32 %v6189, %v6367
  %v6513 = vadd.f32 %v6190, %v6436
  %v6514 = vadd.f32 %v6191, %v6438
  %v6515 = vadd.f32 %v6192, %v6507
  %v6516 = vadd.f32 %v6193, %v6509
  %v6517 = vadd.s32 %v2330, 16
  %vm6518 = vcmp.eq.s32.totalorder %v2329, %v6517
  %v6519 = vsel %vm6518, 1, 0
  %v6520 = vcvt.s32.f32 %v6519
  %v6522 = vsel %vm43, %v6520, 0
  %6524 = vmatprep.subr.mxu0 0.0
  %6525 = vmatpush1.msra.mxu0 %v2318
  %6526 = vmatprep.subr.mxu0 0.0
  %6527 = vmatpush1.msra.mxu0 %v2319
  %6528 = vmatprep.subr.mxu0 0.0
  %6529 = vmatpush1.msra.mxu0 %v2320
  %6530 = vmatprep.subr.mxu0 0.0
  %6531 = vmatpush1.msra.mxu0 %v2321
  %6532 = vmatprep.subr.mxu0 0.0
  %6533 = vmatpush1.msra.mxu0 %v2322
  %6534 = vmatprep.subr.mxu0 0.0
  %6535 = vmatpush1.msra.mxu0 %v2323
  %6536 = vmatprep.subr.mxu0 0.0
  %6537 = vmatpush1.msra.mxu0 %v2324
  %6538 = vmatprep.subr.mxu0 0.0
  %6539 = vmatpush1.msra.mxu0 %v2325
  %6540 = vmatprep.subr.mxu0 0.0
  %6541 = vmatpush1.msra.mxu0 0.0
  %6542 = vmatprep.subr.mxu0 0.0
  %6543 = vmatpush1.msra.mxu0 0.0
  %6544 = vmatprep.subr.mxu0 0.0
  %6545 = vmatpush1.msra.mxu0 0.0
  %6546 = vmatprep.subr.mxu0 0.0
  %6547 = vmatpush1.msra.mxu0 0.0
  %6548 = vmatprep.subr.mxu0 0.0
  %6549 = vmatpush1.msra.mxu0 0.0
  %6550 = vmatprep.subr.mxu0 0.0
  %6551 = vmatpush1.msra.mxu0 0.0
  %6552 = vmatprep.subr.mxu0 0.0
  %6553 = vmatpush1.msra.mxu0 0.0
  %6554 = vmatprep.subr.mxu0 0.0
  %6555 = vmatpush1.msra.mxu0 0.0
  %6556 = vmatprep.subr.mxu0 0.0
  %6557 = vmatpush1.msra.mxu0 0.0
  %6558 = vmatprep.subr.mxu0 0.0
  %6559 = vmatpush1.msra.mxu0 0.0
  %6560 = vmatprep.subr.mxu0 0.0
  %6561 = vmatpush1.msra.mxu0 0.0
  %6562 = vmatprep.subr.mxu0 0.0
  %6563 = vmatpush1.msra.mxu0 0.0
  %6564 = vmatprep.subr.mxu0 0.0
  %6565 = vmatpush1.msra.mxu0 0.0
  %6566 = vmatprep.subr.mxu0 0.0
  %6567 = vmatpush1.msra.mxu0 0.0
  %6568 = vmatprep.subr.mxu0 0.0
  %6569 = vmatpush1.msra.mxu0 0.0
  %6570 = vmatprep.subr.mxu0 0.0
  %6571 = vmatpush1.msra.mxu0 0.0
  %6572 = vmatprep.subr.mxu0 0.0
  %6573 = vmatpush1.msra.mxu0 0.0
  %6574 = vmatprep.subr.mxu0 0.0
  %6575 = vmatpush1.msra.mxu0 0.0
  %6576 = vmatprep.subr.mxu0 0.0
  %6577 = vmatpush1.msra.mxu0 0.0
  %6578 = vmatprep.subr.mxu0 0.0
  %6579 = vmatpush1.msra.mxu0 0.0
  %6580 = vmatprep.subr.mxu0 0.0
  %6581 = vmatpush1.msra.mxu0 0.0
  %6582 = vmatprep.subr.mxu0 0.0
  %6583 = vmatpush1.msra.mxu0 0.0
  %6584 = vmatprep.subr.mxu0 0.0
  %6585 = vmatpush1.msra.mxu0 0.0
  %6586 = vmatprep.subr.mxu0 0.0
  %6587 = vmatpush1.msra.mxu0 0.0
  %6588 = vmatprep.mubr.f32.mxu0 0.0
  %6589 = vmatmul.mubr.f32.gmra.mrb[0].mxu0 %v6522
  %v6590 = vpop.f32.mrb[0].mxu0
  %v6591 = vadd.f32 0.0, %v6590
  %v6592 = vpop.f32.mrb[0].mxu0
  %6593 = vdwg.mxu0
  %v6594 = vld [vmem:[%s6 + $0x9c0] sm:$0xff]
  %v6595 = vld [vmem:[%s6 + $0x9c8] sm:$0xff]
  %v6596 = vld [vmem:[%s6 + $0x9d0] sm:$0xff]
  %v6597 = vld [vmem:[%s6 + $0x9d8] sm:$0xff]
  %v6598 = vld [vmem:[%s6 + $0x9e0] sm:$0xff]
  %v6599 = vld [vmem:[%s6 + $0x9e8] sm:$0xff]
  %v6600 = vld [vmem:[%s6 + $0x9f0] sm:$0xff]
  %v6601 = vld [vmem:[%s6 + $0x9f8] sm:$0xff]
  %v6602 = vld [vmem:[%s6 + $0xa00] sm:$0xff]
  %v6603 = vld [vmem:[%s6 + $0xa08] sm:$0xff]
  %v6604 = vld [vmem:[%s6 + $0xa10] sm:$0xff]
  %v6605 = vld [vmem:[%s6 + $0xa18] sm:$0xff]
  %v6606 = vld [vmem:[%s6 + $0xa20] sm:$0xff]
  %v6607 = vld [vmem:[%s6 + $0xa28] sm:$0xff]
  %v6608 = vld [vmem:[%s6 + $0xa30] sm:$0xff]
  %v6609 = vld [vmem:[%s6 + $0xa38] sm:$0xff]
  %v6610 = vld [vmem:[%s6 + $0xa40] sm:$0xff]
  %v6611 = vld [vmem:[%s6 + $0xa48] sm:$0xff]
  %v6612 = vld [vmem:[%s6 + $0xa50] sm:$0xff]
  %v6613 = vld [vmem:[%s6 + $0xa58] sm:$0xff]
  %v6614 = vld [vmem:[%s6 + $0xa60] sm:$0xff]
  %v6615 = vld [vmem:[%s6 + $0xa68] sm:$0xff]
  %v6616 = vld [vmem:[%s6 + $0xa70] sm:$0xff]
  %v6617 = vld [vmem:[%s6 + $0xa78] sm:$0xff]
  %v6619 = vsel %vm99, %v6591, 0
  %6621 = vmatprep.subr.mxu0 %v6595
  %6622 = vmatpush1.msra.mxu0 %v6594
  %6623 = vmatprep.subr.mxu0 %v6601
  %6624 = vmatpush1.msra.mxu0 %v6600
  %6625 = vmatprep.subr.mxu0 %v6607
  %6626 = vmatpush1.msra.mxu0 %v6606
  %6627 = vmatprep.subr.mxu0 %v6613
  %6628 = vmatpush1.msra.mxu0 %v6612
  %6629 = vmatprep.subr.mxu0 0.0
  %6630 = vmatpush1.msra.mxu0 0.0
  %6631 = vmatprep.subr.mxu0 0.0
  %6632 = vmatpush1.msra.mxu0 0.0
  %6633 = vmatprep.subr.mxu0 0.0
  %6634 = vmatpush1.msra.mxu0 0.0
  %6635 = vmatprep.subr.mxu0 0.0
  %6636 = vmatpush1.msra.mxu0 0.0
  %6637 = vmatprep.subr.mxu0 0.0
  %6638 = vmatpush1.msra.mxu0 0.0
  %6639 = vmatprep.subr.mxu0 0.0
  %6640 = vmatpush1.msra.mxu0 0.0
  %6641 = vmatprep.subr.mxu0 0.0
  %6642 = vmatpush1.msra.mxu0 0.0
  %6643 = vmatprep.subr.mxu0 0.0
  %6644 = vmatpush1.msra.mxu0 0.0
  %6645 = vmatprep.subr.mxu0 0.0
  %6646 = vmatpush1.msra.mxu0 0.0
  %6647 = vmatprep.subr.mxu0 0.0
  %6648 = vmatpush1.msra.mxu0 0.0
  %6649 = vmatprep.subr.mxu0 0.0
  %6650 = vmatpush1.msra.mxu0 0.0
  %6651 = vmatprep.subr.mxu0 0.0
  %6652 = vmatpush1.msra.mxu0 0.0
  %6653 = vmatprep.subr.mxu0 0.0
  %6654 = vmatpush1.msra.mxu0 0.0
  %6655 = vmatprep.subr.mxu0 0.0
  %6656 = vmatpush1.msra.mxu0 0.0
  %6657 = vmatprep.subr.mxu0 0.0
  %6658 = vmatpush1.msra.mxu0 0.0
  %6659 = vmatprep.subr.mxu0 0.0
  %6660 = vmatpush1.msra.mxu0 0.0
  %6661 = vmatprep.subr.mxu0 0.0
  %6662 = vmatpush1.msra.mxu0 0.0
  %6663 = vmatprep.subr.mxu0 0.0
  %6664 = vmatpush1.msra.mxu0 0.0
  %6665 = vmatprep.subr.mxu0 0.0
  %6666 = vmatpush1.msra.mxu0 0.0
  %6667 = vmatprep.subr.mxu0 0.0
  %6668 = vmatpush1.msra.mxu0 0.0
  %6669 = vmatprep.subr.mxu0 0.0
  %6670 = vmatpush1.msra.mxu0 0.0
  %6671 = vmatprep.subr.mxu0 0.0
  %6672 = vmatpush1.msra.mxu0 0.0
  %6673 = vmatprep.subr.mxu0 0.0
  %6674 = vmatpush1.msra.mxu0 0.0
  %6675 = vmatprep.subr.mxu0 0.0
  %6676 = vmatpush1.msra.mxu0 0.0
  %6677 = vmatprep.subr.mxu0 0.0
  %6678 = vmatpush1.msra.mxu0 0.0
  %6679 = vmatprep.subr.mxu0 0.0
  %6680 = vmatpush1.msra.mxu0 0.0
  %6681 = vmatprep.subr.mxu0 0.0
  %6682 = vmatpush1.msra.mxu0 0.0
  %6683 = vmatprep.subr.mxu0 0.0
  %6684 = vmatpush1.msra.mxu0 0.0
  %6685 = vmatprep.mubr.f32.mxu0 0.0
  %6686 = vmatmul.mubr.f32.gmra.mrb[0].mxu0 %v6619
  %v6687 = vpop.f32.mrb[0].mxu0
  %v6688 = vadd.f32 0.0, %v6687
  %v6689 = vpop.f32.mrb[0].mxu0
  %v6690 = vadd.f32 0.0, %v6689
  %6691 = vdwg.mxu0
  %6692 = vmatprep.subr.mxu0 %v6597
  %6693 = vmatpush1.msra.mxu0 %v6596
  %6694 = vmatprep.subr.mxu0 %v6603
  %6695 = vmatpush1.msra.mxu0 %v6602
  %6696 = vmatprep.subr.mxu0 %v6609
  %6697 = vmatpush1.msra.mxu0 %v6608
  %6698 = vmatprep.subr.mxu0 %v6615
  %6699 = vmatpush1.msra.mxu0 %v6614
  %6700 = vmatprep.subr.mxu0 0.0
  %6701 = vmatpush1.msra.mxu0 0.0
  %6702 = vmatprep.subr.mxu0 0.0
  %6703 = vmatpush1.msra.mxu0 0.0
  %6704 = vmatprep.subr.mxu0 0.0
  %6705 = vmatpush1.msra.mxu0 0.0
  %6706 = vmatprep.subr.mxu0 0.0
  %6707 = vmatpush1.msra.mxu0 0.0
  %6708 = vmatprep.subr.mxu0 0.0
  %6709 = vmatpush1.msra.mxu0 0.0
  %6710 = vmatprep.subr.mxu0 0.0
  %6711 = vmatpush1.msra.mxu0 0.0
  %6712 = vmatprep.subr.mxu0 0.0
  %6713 = vmatpush1.msra.mxu0 0.0
  %6714 = vmatprep.subr.mxu0 0.0
  %6715 = vmatpush1.msra.mxu0 0.0
  %6716 = vmatprep.subr.mxu0 0.0
  %6717 = vmatpush1.msra.mxu0 0.0
  %6718 = vmatprep.subr.mxu0 0.0
  %6719 = vmatpush1.msra.mxu0 0.0
  %6720 = vmatprep.subr.mxu0 0.0
  %6721 = vmatpush1.msra.mxu0 0.0
  %6722 = vmatprep.subr.mxu0 0.0
  %6723 = vmatpush1.msra.mxu0 0.0
  %6724 = vmatprep.subr.mxu0 0.0
  %6725 = vmatpush1.msra.mxu0 0.0
  %6726 = vmatprep.subr.mxu0 0.0
  %6727 = vmatpush1.msra.mxu0 0.0
  %6728 = vmatprep.subr.mxu0 0.0
  %6729 = vmatpush1.msra.mxu0 0.0
  %6730 = vmatprep.subr.mxu0 0.0
  %6731 = vmatpush1.msra.mxu0 0.0
  %6732 = vmatprep.subr.mxu0 0.0
  %6733 = vmatpush1.msra.mxu0 0.0
  %6734 = vmatprep.subr.mxu0 0.0
  %6735 = vmatpush1.msra.mxu0 0.0
  %6736 = vmatprep.subr.mxu0 0.0
  %6737 = vmatpush1.msra.mxu0 0.0
  %6738 = vmatprep.subr.mxu0 0.0
  %6739 = vmatpush1.msra.mxu0 0.0
  %6740 = vmatprep.subr.mxu0 0.0
  %6741 = vmatpush1.msra.mxu0 0.0
  %6742 = vmatprep.subr.mxu0 0.0
  %6743 = vmatpush1.msra.mxu0 0.0
  %6744 = vmatprep.subr.mxu0 0.0
  %6745 = vmatpush1.msra.mxu0 0.0
  %6746 = vmatprep.subr.mxu0 0.0
  %6747 = vmatpush1.msra.mxu0 0.0
  %6748 = vmatprep.subr.mxu0 0.0
  %6749 = vmatpush1.msra.mxu0 0.0
  %6750 = vmatprep.subr.mxu0 0.0
  %6751 = vmatpush1.msra.mxu0 0.0
  %6752 = vmatprep.subr.mxu0 0.0
  %6753 = vmatpush1.msra.mxu0 0.0
  %6754 = vmatprep.subr.mxu0 0.0
  %6755 = vmatpush1.msra.mxu0 0.0
  %6756 = vmatprep.mubr.f32.mxu0 0.0
  %6757 = vmatmul.mubr.f32.gmra.mrb[0].mxu0 %v6619
  %v6758 = vpop.f32.mrb[0].mxu0
  %v6759 = vadd.f32 0.0, %v6758
  %v6760 = vpop.f32.mrb[0].mxu0
  %v6761 = vadd.f32 0.0, %v6760
  %6762 = vdwg.mxu0
  %6763 = vmatprep.subr.mxu0 %v6599
  %6764 = vmatpush1.msra.mxu0 %v6598
  %6765 = vmatprep.subr.mxu0 %v6605
  %6766 = vmatpush1.msra.mxu0 %v6604
  %6767 = vmatprep.subr.mxu0 %v6611
  %6768 = vmatpush1.msra.mxu0 %v6610
  %6769 = vmatprep.subr.mxu0 %v6617
  %6770 = vmatpush1.msra.mxu0 %v6616
  %6771 = vmatprep.subr.mxu0 0.0
  %6772 = vmatpush1.msra.mxu0 0.0
  %6773 = vmatprep.subr.mxu0 0.0
  %6774 = vmatpush1.msra.mxu0 0.0
  %6775 = vmatprep.subr.mxu0 0.0
  %6776 = vmatpush1.msra.mxu0 0.0
  %6777 = vmatprep.subr.mxu0 0.0
  %6778 = vmatpush1.msra.mxu0 0.0
  %6779 = vmatprep.subr.mxu0 0.0
  %6780 = vmatpush1.msra.mxu0 0.0
  %6781 = vmatprep.subr.mxu0 0.0
  %6782 = vmatpush1.msra.mxu0 0.0
  %6783 = vmatprep.subr.mxu0 0.0
  %6784 = vmatpush1.msra.mxu0 0.0
  %6785 = vmatprep.subr.mxu0 0.0
  %6786 = vmatpush1.msra.mxu0 0.0
  %6787 = vmatprep.subr.mxu0 0.0
  %6788 = vmatpush1.msra.mxu0 0.0
  %6789 = vmatprep.subr.mxu0 0.0
  %6790 = vmatpush1.msra.mxu0 0.0
  %6791 = vmatprep.subr.mxu0 0.0
  %6792 = vmatpush1.msra.mxu0 0.0
  %6793 = vmatprep.subr.mxu0 0.0
  %6794 = vmatpush1.msra.mxu0 0.0
  %6795 = vmatprep.subr.mxu0 0.0
  %6796 = vmatpush1.msra.mxu0 0.0
  %6797 = vmatprep.subr.mxu0 0.0
  %6798 = vmatpush1.msra.mxu0 0.0
  %6799 = vmatprep.subr.mxu0 0.0
  %6800 = vmatpush1.msra.mxu0 0.0
  %6801 = vmatprep.subr.mxu0 0.0
  %6802 = vmatpush1.msra.mxu0 0.0
  %6803 = vmatprep.subr.mxu0 0.0
  %6804 = vmatpush1.msra.mxu0 0.0
  %6805 = vmatprep.subr.mxu0 0.0
  %6806 = vmatpush1.msra.mxu0 0.0
  %6807 = vmatprep.subr.mxu0 0.0
  %6808 = vmatpush1.msra.mxu0 0.0
  %6809 = vmatprep.subr.mxu0 0.0
  %6810 = vmatpush1.msra.mxu0 0.0
  %6811 = vmatprep.subr.mxu0 0.0
  %6812 = vmatpush1.msra.mxu0 0.0
  %6813 = vmatprep.subr.mxu0 0.0
  %6814 = vmatpush1.msra.mxu0 0.0
  %6815 = vmatprep.subr.mxu0 0.0
  %6816 = vmatpush1.msra.mxu0 0.0
  %6817 = vmatprep.subr.mxu0 0.0
  %6818 = vmatpush1.msra.mxu0 0.0
  %6819 = vmatprep.subr.mxu0 0.0
  %6820 = vmatpush1.msra.mxu0 0.0
  %6821 = vmatprep.subr.mxu0 0.0
  %6822 = vmatpush1.msra.mxu0 0.0
  %6823 = vmatprep.subr.mxu0 0.0
  %6824 = vmatpush1.msra.mxu0 0.0
  %6825 = vmatprep.subr.mxu0 0.0
  %6826 = vmatpush1.msra.mxu0 0.0
  %6827 = vmatprep.mubr.f32.mxu0 0.0
  %6828 = vmatmul.mubr.f32.gmra.mrb[0].mxu0 %v6619
  %v6829 = vpop.f32.mrb[0].mxu0
  %v6830 = vadd.f32 0.0, %v6829
  %v6831 = vpop.f32.mrb[0].mxu0
  %v6832 = vadd.f32 0.0, %v6831
  %6833 = vdwg.mxu0
  %v6834 = vadd.f32 %v6511, %v6688
  %v6835 = vadd.f32 %v6512, %v6690
  %v6836 = vadd.f32 %v6513, %v6759
  %v6837 = vadd.f32 %v6514, %v6761
  %v6838 = vadd.f32 %v6515, %v6830
  %v6839 = vadd.f32 %v6516, %v6832
  %v6840 = vadd.s32 %v2330, 17
  %vm6841 = vcmp.eq.s32.totalorder %v2329, %v6840
  %v6842 = vsel %vm6841, 1, 0
  %v6843 = vcvt.s32.f32 %v6842
  %v6845 = vsel %vm43, %v6843, 0
  %6847 = vmatprep.subr.mxu0 0.0
  %6848 = vmatpush1.msra.mxu0 %v2318
  %6849 = vmatprep.subr.mxu0 0.0
  %6850 = vmatpush1.msra.mxu0 %v2319
  %6851 = vmatprep.subr.mxu0 0.0
  %6852 = vmatpush1.msra.mxu0 %v2320
  %6853 = vmatprep.subr.mxu0 0.0
  %6854 = vmatpush1.msra.mxu0 %v2321
  %6855 = vmatprep.subr.mxu0 0.0
  %6856 = vmatpush1.msra.mxu0 %v2322
  %6857 = vmatprep.subr.mxu0 0.0
  %6858 = vmatpush1.msra.mxu0 %v2323
  %6859 = vmatprep.subr.mxu0 0.0
  %6860 = vmatpush1.msra.mxu0 %v2324
  %6861 = vmatprep.subr.mxu0 0.0
  %6862 = vmatpush1.msra.mxu0 %v2325
  %6863 = vmatprep.subr.mxu0 0.0
  %6864 = vmatpush1.msra.mxu0 0.0
  %6865 = vmatprep.subr.mxu0 0.0
  %6866 = vmatpush1.msra.mxu0 0.0
  %6867 = vmatprep.subr.mxu0 0.0
  %6868 = vmatpush1.msra.mxu0 0.0
  %6869 = vmatprep.subr.mxu0 0.0
  %6870 = vmatpush1.msra.mxu0 0.0
  %6871 = vmatprep.subr.mxu0 0.0
  %6872 = vmatpush1.msra.mxu0 0.0
  %6873 = vmatprep.subr.mxu0 0.0
  %6874 = vmatpush1.msra.mxu0 0.0
  %6875 = vmatprep.subr.mxu0 0.0
  %6876 = vmatpush1.msra.mxu0 0.0
  %6877 = vmatprep.subr.mxu0 0.0
  %6878 = vmatpush1.msra.mxu0 0.0
  %6879 = vmatprep.subr.mxu0 0.0
  %6880 = vmatpush1.msra.mxu0 0.0
  %6881 = vmatprep.subr.mxu0 0.0
  %6882 = vmatpush1.msra.mxu0 0.0
  %6883 = vmatprep.subr.mxu0 0.0
  %6884 = vmatpush1.msra.mxu0 0.0
  %6885 = vmatprep.subr.mxu0 0.0
  %6886 = vmatpush1.msra.mxu0 0.0
  %6887 = vmatprep.subr.mxu0 0.0
  %6888 = vmatpush1.msra.mxu0 0.0
  %6889 = vmatprep.subr.mxu0 0.0
  %6890 = vmatpush1.msra.mxu0 0.0
  %6891 = vmatprep.subr.mxu0 0.0
  %6892 = vmatpush1.msra.mxu0 0.0
  %6893 = vmatprep.subr.mxu0 0.0
  %6894 = vmatpush1.msra.mxu0 0.0
  %6895 = vmatprep.subr.mxu0 0.0
  %6896 = vmatpush1.msra.mxu0 0.0
  %6897 = vmatprep.subr.mxu0 0.0
  %6898 = vmatpush1.msra.mxu0 0.0
  %6899 = vmatprep.subr.mxu0 0.0
  %6900 = vmatpush1.msra.mxu0 0.0
  %6901 = vmatprep.subr.mxu0 0.0
  %6902 = vmatpush1.msra.mxu0 0.0
  %6903 = vmatprep.subr.mxu0 0.0
  %6904 = vmatpush1.msra.mxu0 0.0
  %6905 = vmatprep.subr.mxu0 0.0
  %6906 = vmatpush1.msra.mxu0 0.0
  %6907 = vmatprep.subr.mxu0 0.0
  %6908 = vmatpush1.msra.mxu0 0.0
  %6909 = vmatprep.subr.mxu0 0.0
  %6910 = vmatpush1.msra.mxu0 0.0
  %6911 = vmatprep.mubr.f32.mxu0 0.0
  %6912 = vmatmul.mubr.f32.gmra.mrb[0].mxu0 %v6845
  %v6913 = vpop.f32.mrb[0].mxu0
  %v6914 = vadd.f32 0.0, %v6913
  %v6915 = vpop.f32.mrb[0].mxu0
  %6916 = vdwg.mxu0
  %v6917 = vld [vmem:[%s6 + $0xa80] sm:$0xff]
  %v6918 = vld [vmem:[%s6 + $0xa88] sm:$0xff]
  %v6919 = vld [vmem:[%s6 + $0xa90] sm:$0xff]
  %v6920 = vld [vmem:[%s6 + $0xa98] sm:$0xff]
  %v6921 = vld [vmem:[%s6 + $0xaa0] sm:$0xff]
  %v6922 = vld [vmem:[%s6 + $0xaa8] sm:$0xff]
  %v6923 = vld [vmem:[%s6 + $0xab0] sm:$0xff]
  %v6924 = vld [vmem:[%s6 + $0xab8] sm:$0xff]
  %v6925 = vld [vmem:[%s6 + $0xac0] sm:$0xff]
  %v6926 = vld [vmem:[%s6 + $0xac8] sm:$0xff]
  %v6927 = vld [vmem:[%s6 + $0xad0] sm:$0xff]
  %v6928 = vld [vmem:[%s6 + $0xad8] sm:$0xff]
  %v6929 = vld [vmem:[%s6 + $0xae0] sm:$0xff]
  %v6930 = vld [vmem:[%s6 + $0xae8] sm:$0xff]
  %v6931 = vld [vmem:[%s6 + $0xaf0] sm:$0xff]
  %v6932 = vld [vmem:[%s6 + $0xaf8] sm:$0xff]
  %v6933 = vld [vmem:[%s6 + $0xb00] sm:$0xff]
  %v6934 = vld [vmem:[%s6 + $0xb08] sm:$0xff]
  %v6935 = vld [vmem:[%s6 + $0xb10] sm:$0xff]
  %v6936 = vld [vmem:[%s6 + $0xb18] sm:$0xff]
  %v6937 = vld [vmem:[%s6 + $0xb20] sm:$0xff]
  %v6938 = vld [vmem:[%s6 + $0xb28] sm:$0xff]
  %v6939 = vld [vmem:[%s6 + $0xb30] sm:$0xff]
  %v6940 = vld [vmem:[%s6 + $0xb38] sm:$0xff]
  %v6942 = vsel %vm99, %v6914, 0
  %6944 = vmatprep.subr.mxu0 %v6918
  %6945 = vmatpush1.msra.mxu0 %v6917
  %6946 = vmatprep.subr.mxu0 %v6924
  %6947 = vmatpush1.msra.mxu0 %v6923
  %6948 = vmatprep.subr.mxu0 %v6930
  %6949 = vmatpush1.msra.mxu0 %v6929
  %6950 = vmatprep.subr.mxu0 %v6936
  %6951 = vmatpush1.msra.mxu0 %v6935
  %6952 = vmatprep.subr.mxu0 0.0
  %6953 = vmatpush1.msra.mxu0 0.0
  %6954 = vmatprep.subr.mxu0 0.0
  %6955 = vmatpush1.msra.mxu0 0.0
  %6956 = vmatprep.subr.mxu0 0.0
  %6957 = vmatpush1.msra.mxu0 0.0
  %6958 = vmatprep.subr.mxu0 0.0
  %6959 = vmatpush1.msra.mxu0 0.0
  %6960 = vmatprep.subr.mxu0 0.0
  %6961 = vmatpush1.msra.mxu0 0.0
  %6962 = vmatprep.subr.mxu0 0.0
  %6963 = vmatpush1.msra.mxu0 0.0
  %6964 = vmatprep.subr.mxu0 0.0
  %6965 = vmatpush1.msra.mxu0 0.0
  %6966 = vmatprep.subr.mxu0 0.0
  %6967 = vmatpush1.msra.mxu0 0.0
  %6968 = vmatprep.subr.mxu0 0.0
  %6969 = vmatpush1.msra.mxu0 0.0
  %6970 = vmatprep.subr.mxu0 0.0
  %6971 = vmatpush1.msra.mxu0 0.0
  %6972 = vmatprep.subr.mxu0 0.0
  %6973 = vmatpush1.msra.mxu0 0.0
  %6974 = vmatprep.subr.mxu0 0.0
  %6975 = vmatpush1.msra.mxu0 0.0
  %6976 = vmatprep.subr.mxu0 0.0
  %6977 = vmatpush1.msra.mxu0 0.0
  %6978 = vmatprep.subr.mxu0 0.0
  %6979 = vmatpush1.msra.mxu0 0.0
  %6980 = vmatprep.subr.mxu0 0.0
  %6981 = vmatpush1.msra.mxu0 0.0
  %6982 = vmatprep.subr.mxu0 0.0
  %6983 = vmatpush1.msra.mxu0 0.0
  %6984 = vmatprep.subr.mxu0 0.0
  %6985 = vmatpush1.msra.mxu0 0.0
  %6986 = vmatprep.subr.mxu0 0.0
  %6987 = vmatpush1.msra.mxu0 0.0
  %6988 = vmatprep.subr.mxu0 0.0
  %6989 = vmatpush1.msra.mxu0 0.0
  %6990 = vmatprep.subr.mxu0 0.0
  %6991 = vmatpush1.msra.mxu0 0.0
  %6992 = vmatprep.subr.mxu0 0.0
  %6993 = vmatpush1.msra.mxu0 0.0
  %6994 = vmatprep.subr.mxu0 0.0
  %6995 = vmatpush1.msra.mxu0 0.0
  %6996 = vmatprep.subr.mxu0 0.0
  %6997 = vmatpush1.msra.mxu0 0.0
  %6998 = vmatprep.subr.mxu0 0.0
  %6999 = vmatpush1.msra.mxu0 0.0
  %7000 = vmatprep.subr.mxu0 0.0
  %7001 = vmatpush1.msra.mxu0 0.0
  %7002 = vmatprep.subr.mxu0 0.0
  %7003 = vmatpush1.msra.mxu0 0.0
  %7004 = vmatprep.subr.mxu0 0.0
  %7005 = vmatpush1.msra.mxu0 0.0
  %7006 = vmatprep.subr.mxu0 0.0
  %7007 = vmatpush1.msra.mxu0 0.0
  %7008 = vmatprep.mubr.f32.mxu0 0.0
  %7009 = vmatmul.mubr.f32.gmra.mrb[0].mxu0 %v6942
  %v7010 = vpop.f32.mrb[0].mxu0
  %v7011 = vadd.f32 0.0, %v7010
  %v7012 = vpop.f32.mrb[0].mxu0
  %v7013 = vadd.f32 0.0, %v7012
  %7014 = vdwg.mxu0
  %7015 = vmatprep.subr.mxu0 %v6920
  %7016 = vmatpush1.msra.mxu0 %v6919
  %7017 = vmatprep.subr.mxu0 %v6926
  %7018 = vmatpush1.msra.mxu0 %v6925
  %7019 = vmatprep.subr.mxu0 %v6932
  %7020 = vmatpush1.msra.mxu0 %v6931
  %7021 = vmatprep.subr.mxu0 %v6938
  %7022 = vmatpush1.msra.mxu0 %v6937
  %7023 = vmatprep.subr.mxu0 0.0
  %7024 = vmatpush1.msra.mxu0 0.0
  %7025 = vmatprep.subr.mxu0 0.0
  %7026 = vmatpush1.msra.mxu0 0.0
  %7027 = vmatprep.subr.mxu0 0.0
  %7028 = vmatpush1.msra.mxu0 0.0
  %7029 = vmatprep.subr.mxu0 0.0
  %7030 = vmatpush1.msra.mxu0 0.0
  %7031 = vmatprep.subr.mxu0 0.0
  %7032 = vmatpush1.msra.mxu0 0.0
  %7033 = vmatprep.subr.mxu0 0.0
  %7034 = vmatpush1.msra.mxu0 0.0
  %7035 = vmatprep.subr.mxu0 0.0
  %7036 = vmatpush1.msra.mxu0 0.0
  %7037 = vmatprep.subr.mxu0 0.0
  %7038 = vmatpush1.msra.mxu0 0.0
  %7039 = vmatprep.subr.mxu0 0.0
  %7040 = vmatpush1.msra.mxu0 0.0
  %7041 = vmatprep.subr.mxu0 0.0
  %7042 = vmatpush1.msra.mxu0 0.0
  %7043 = vmatprep.subr.mxu0 0.0
  %7044 = vmatpush1.msra.mxu0 0.0
  %7045 = vmatprep.subr.mxu0 0.0
  %7046 = vmatpush1.msra.mxu0 0.0
  %7047 = vmatprep.subr.mxu0 0.0
  %7048 = vmatpush1.msra.mxu0 0.0
  %7049 = vmatprep.subr.mxu0 0.0
  %7050 = vmatpush1.msra.mxu0 0.0
  %7051 = vmatprep.subr.mxu0 0.0
  %7052 = vmatpush1.msra.mxu0 0.0
  %7053 = vmatprep.subr.mxu0 0.0
  %7054 = vmatpush1.msra.mxu0 0.0
  %7055 = vmatprep.subr.mxu0 0.0
  %7056 = vmatpush1.msra.mxu0 0.0
  %7057 = vmatprep.subr.mxu0 0.0
  %7058 = vmatpush1.msra.mxu0 0.0
  %7059 = vmatprep.subr.mxu0 0.0
  %7060 = vmatpush1.msra.mxu0 0.0
  %7061 = vmatprep.subr.mxu0 0.0
  %7062 = vmatpush1.msra.mxu0 0.0
  %7063 = vmatprep.subr.mxu0 0.0
  %7064 = vmatpush1.msra.mxu0 0.0
  %7065 = vmatprep.subr.mxu0 0.0
  %7066 = vmatpush1.msra.mxu0 0.0
  %7067 = vmatprep.subr.mxu0 0.0
  %7068 = vmatpush1.msra.mxu0 0.0
  %7069 = vmatprep.subr.mxu0 0.0
  %7070 = vmatpush1.msra.mxu0 0.0
  %7071 = vmatprep.subr.mxu0 0.0
  %7072 = vmatpush1.msra.mxu0 0.0
  %7073 = vmatprep.subr.mxu0 0.0
  %7074 = vmatpush1.msra.mxu0 0.0
  %7075 = vmatprep.subr.mxu0 0.0
  %7076 = vmatpush1.msra.mxu0 0.0
  %7077 = vmatprep.subr.mxu0 0.0
  %7078 = vmatpush1.msra.mxu0 0.0
  %7079 = vmatprep.mubr.f32.mxu0 0.0
  %7080 = vmatmul.mubr.f32.gmra.mrb[0].mxu0 %v6942
  %v7081 = vpop.f32.mrb[0].mxu0
  %v7082 = vadd.f32 0.0, %v7081
  %v7083 = vpop.f32.mrb[0].mxu0
  %v7084 = vadd.f32 0.0, %v7083
  %7085 = vdwg.mxu0
  %7086 = vmatprep.subr.mxu0 %v6922
  %7087 = vmatpush1.msra.mxu0 %v6921
  %7088 = vmatprep.subr.mxu0 %v6928
  %7089 = vmatpush1.msra.mxu0 %v6927
  %7090 = vmatprep.subr.mxu0 %v6934
  %7091 = vmatpush1.msra.mxu0 %v6933
  %7092 = vmatprep.subr.mxu0 %v6940
  %7093 = vmatpush1.msra.mxu0 %v6939
  %7094 = vmatprep.subr.mxu0 0.0
  %7095 = vmatpush1.msra.mxu0 0.0
  %7096 = vmatprep.subr.mxu0 0.0
  %7097 = vmatpush1.msra.mxu0 0.0
  %7098 = vmatprep.subr.mxu0 0.0
  %7099 = vmatpush1.msra.mxu0 0.0
  %7100 = vmatprep.subr.mxu0 0.0
  %7101 = vmatpush1.msra.mxu0 0.0
  %7102 = vmatprep.subr.mxu0 0.0
  %7103 = vmatpush1.msra.mxu0 0.0
  %7104 = vmatprep.subr.mxu0 0.0
  %7105 = vmatpush1.msra.mxu0 0.0
  %7106 = vmatprep.subr.mxu0 0.0
  %7107 = vmatpush1.msra.mxu0 0.0
  %7108 = vmatprep.subr.mxu0 0.0
  %7109 = vmatpush1.msra.mxu0 0.0
  %7110 = vmatprep.subr.mxu0 0.0
  %7111 = vmatpush1.msra.mxu0 0.0
  %7112 = vmatprep.subr.mxu0 0.0
  %7113 = vmatpush1.msra.mxu0 0.0
  %7114 = vmatprep.subr.mxu0 0.0
  %7115 = vmatpush1.msra.mxu0 0.0
  %7116 = vmatprep.subr.mxu0 0.0
  %7117 = vmatpush1.msra.mxu0 0.0
  %7118 = vmatprep.subr.mxu0 0.0
  %7119 = vmatpush1.msra.mxu0 0.0
  %7120 = vmatprep.subr.mxu0 0.0
  %7121 = vmatpush1.msra.mxu0 0.0
  %7122 = vmatprep.subr.mxu0 0.0
  %7123 = vmatpush1.msra.mxu0 0.0
  %7124 = vmatprep.subr.mxu0 0.0
  %7125 = vmatpush1.msra.mxu0 0.0
  %7126 = vmatprep.subr.mxu0 0.0
  %7127 = vmatpush1.msra.mxu0 0.0
  %7128 = vmatprep.subr.mxu0 0.0
  %7129 = vmatpush1.msra.mxu0 0.0
  %7130 = vmatprep.subr.mxu0 0.0
  %7131 = vmatpush1.msra.mxu0 0.0
  %7132 = vmatprep.subr.mxu0 0.0
  %7133 = vmatpush1.msra.mxu0 0.0
  %7134 = vmatprep.subr.mxu0 0.0
  %7135 = vmatpush1.msra.mxu0 0.0
  %7136 = vmatprep.subr.mxu0 0.0
  %7137 = vmatpush1.msra.mxu0 0.0
  %7138 = vmatprep.subr.mxu0 0.0
  %7139 = vmatpush1.msra.mxu0 0.0
  %7140 = vmatprep.subr.mxu0 0.0
  %7141 = vmatpush1.msra.mxu0 0.0
  %7142 = vmatprep.subr.mxu0 0.0
  %7143 = vmatpush1.msra.mxu0 0.0
  %7144 = vmatprep.subr.mxu0 0.0
  %7145 = vmatpush1.msra.mxu0 0.0
  %7146 = vmatprep.subr.mxu0 0.0
  %7147 = vmatpush1.msra.mxu0 0.0
  %7148 = vmatprep.subr.mxu0 0.0
  %7149 = vmatpush1.msra.mxu0 0.0
  %7150 = vmatprep.mubr.f32.mxu0 0.0
  %7151 = vmatmul.mubr.f32.gmra.mrb[0].mxu0 %v6942
  %v7152 = vpop.f32.mrb[0].mxu0
  %v7153 = vadd.f32 0.0, %v7152
  %v7154 = vpop.f32.mrb[0].mxu0
  %v7155 = vadd.f32 0.0, %v7154
  %7156 = vdwg.mxu0
  %v7157 = vadd.f32 %v6834, %v7011
  %v7158 = vadd.f32 %v6835, %v7013
  %v7159 = vadd.f32 %v6836, %v7082
  %v7160 = vadd.f32 %v6837, %v7084
  %v7161 = vadd.f32 %v6838, %v7153
  %v7162 = vadd.f32 %v6839, %v7155
  %v7163 = vadd.s32 %v2330, 18
  %vm7164 = vcmp.eq.s32.totalorder %v2329, %v7163
  %v7165 = vsel %vm7164, 1, 0
  %v7166 = vcvt.s32.f32 %v7165
  %v7168 = vsel %vm43, %v7166, 0
  %7170 = vmatprep.subr.mxu0 0.0
  %7171 = vmatpush1.msra.mxu0 %v2318
  %7172 = vmatprep.subr.mxu0 0.0
  %7173 = vmatpush1.msra.mxu0 %v2319
  %7174 = vmatprep.subr.mxu0 0.0
  %7175 = vmatpush1.msra.mxu0 %v2320
  %7176 = vmatprep.subr.mxu0 0.0
  %7177 = vmatpush1.msra.mxu0 %v2321
  %7178 = vmatprep.subr.mxu0 0.0
  %7179 = vmatpush1.msra.mxu0 %v2322
  %7180 = vmatprep.subr.mxu0 0.0
  %7181 = vmatpush1.msra.mxu0 %v2323
  %7182 = vmatprep.subr.mxu0 0.0
  %7183 = vmatpush1.msra.mxu0 %v2324
  %7184 = vmatprep.subr.mxu0 0.0
  %7185 = vmatpush1.msra.mxu0 %v2325
  %7186 = vmatprep.subr.mxu0 0.0
  %7187 = vmatpush1.msra.mxu0 0.0
  %7188 = vmatprep.subr.mxu0 0.0
  %7189 = vmatpush1.msra.mxu0 0.0
  %7190 = vmatprep.subr.mxu0 0.0
  %7191 = vmatpush1.msra.mxu0 0.0
  %7192 = vmatprep.subr.mxu0 0.0
  %7193 = vmatpush1.msra.mxu0 0.0
  %7194 = vmatprep.subr.mxu0 0.0
  %7195 = vmatpush1.msra.mxu0 0.0
  %7196 = vmatprep.subr.mxu0 0.0
  %7197 = vmatpush1.msra.mxu0 0.0
  %7198 = vmatprep.subr.mxu0 0.0
  %7199 = vmatpush1.msra.mxu0 0.0
  %7200 = vmatprep.subr.mxu0 0.0
  %7201 = vmatpush1.msra.mxu0 0.0
  %7202 = vmatprep.subr.mxu0 0.0
  %7203 = vmatpush1.msra.mxu0 0.0
  %7204 = vmatprep.subr.mxu0 0.0
  %7205 = vmatpush1.msra.mxu0 0.0
  %7206 = vmatprep.subr.mxu0 0.0
  %7207 = vmatpush1.msra.mxu0 0.0
  %7208 = vmatprep.subr.mxu0 0.0
  %7209 = vmatpush1.msra.mxu0 0.0
  %7210 = vmatprep.subr.mxu0 0.0
  %7211 = vmatpush1.msra.mxu0 0.0
  %7212 = vmatprep.subr.mxu0 0.0
  %7213 = vmatpush1.msra.mxu0 0.0
  %7214 = vmatprep.subr.mxu0 0.0
  %7215 = vmatpush1.msra.mxu0 0.0
  %7216 = vmatprep.subr.mxu0 0.0
  %7217 = vmatpush1.msra.mxu0 0.0
  %7218 = vmatprep.subr.mxu0 0.0
  %7219 = vmatpush1.msra.mxu0 0.0
  %7220 = vmatprep.subr.mxu0 0.0
  %7221 = vmatpush1.msra.mxu0 0.0
  %7222 = vmatprep.subr.mxu0 0.0
  %7223 = vmatpush1.msra.mxu0 0.0
  %7224 = vmatprep.subr.mxu0 0.0
  %7225 = vmatpush1.msra.mxu0 0.0
  %7226 = vmatprep.subr.mxu0 0.0
  %7227 = vmatpush1.msra.mxu0 0.0
  %7228 = vmatprep.subr.mxu0 0.0
  %7229 = vmatpush1.msra.mxu0 0.0
  %7230 = vmatprep.subr.mxu0 0.0
  %7231 = vmatpush1.msra.mxu0 0.0
  %7232 = vmatprep.subr.mxu0 0.0
  %7233 = vmatpush1.msra.mxu0 0.0
  %7234 = vmatprep.mubr.f32.mxu0 0.0
  %7235 = vmatmul.mubr.f32.gmra.mrb[0].mxu0 %v7168
  %v7236 = vpop.f32.mrb[0].mxu0
  %v7237 = vadd.f32 0.0, %v7236
  %v7238 = vpop.f32.mrb[0].mxu0
  %7239 = vdwg.mxu0
  %v7240 = vld [vmem:[%s6 + $0xb40] sm:$0xff]
  %v7241 = vld [vmem:[%s6 + $0xb48] sm:$0xff]
  %v7242 = vld [vmem:[%s6 + $0xb50] sm:$0xff]
  %v7243 = vld [vmem:[%s6 + $0xb58] sm:$0xff]
  %v7244 = vld [vmem:[%s6 + $0xb60] sm:$0xff]
  %v7245 = vld [vmem:[%s6 + $0xb68] sm:$0xff]
  %v7246 = vld [vmem:[%s6 + $0xb70] sm:$0xff]
  %v7247 = vld [vmem:[%s6 + $0xb78] sm:$0xff]
  %v7248 = vld [vmem:[%s6 + $0xb80] sm:$0xff]
  %v7249 = vld [vmem:[%s6 + $0xb88] sm:$0xff]
  %v7250 = vld [vmem:[%s6 + $0xb90] sm:$0xff]
  %v7251 = vld [vmem:[%s6 + $0xb98] sm:$0xff]
  %v7252 = vld [vmem:[%s6 + $0xba0] sm:$0xff]
  %v7253 = vld [vmem:[%s6 + $0xba8] sm:$0xff]
  %v7254 = vld [vmem:[%s6 + $0xbb0] sm:$0xff]
  %v7255 = vld [vmem:[%s6 + $0xbb8] sm:$0xff]
  %v7256 = vld [vmem:[%s6 + $0xbc0] sm:$0xff]
  %v7257 = vld [vmem:[%s6 + $0xbc8] sm:$0xff]
  %v7258 = vld [vmem:[%s6 + $0xbd0] sm:$0xff]
  %v7259 = vld [vmem:[%s6 + $0xbd8] sm:$0xff]
  %v7260 = vld [vmem:[%s6 + $0xbe0] sm:$0xff]
  %v7261 = vld [vmem:[%s6 + $0xbe8] sm:$0xff]
  %v7262 = vld [vmem:[%s6 + $0xbf0] sm:$0xff]
  %v7263 = vld [vmem:[%s6 + $0xbf8] sm:$0xff]
  %v7265 = vsel %vm99, %v7237, 0
  %7267 = vmatprep.subr.mxu0 %v7241
  %7268 = vmatpush1.msra.mxu0 %v7240
  %7269 = vmatprep.subr.mxu0 %v7247
  %7270 = vmatpush1.msra.mxu0 %v7246
  %7271 = vmatprep.subr.mxu0 %v7253
  %7272 = vmatpush1.msra.mxu0 %v7252
  %7273 = vmatprep.subr.mxu0 %v7259
  %7274 = vmatpush1.msra.mxu0 %v7258
  %7275 = vmatprep.subr.mxu0 0.0
  %7276 = vmatpush1.msra.mxu0 0.0
  %7277 = vmatprep.subr.mxu0 0.0
  %7278 = vmatpush1.msra.mxu0 0.0
  %7279 = vmatprep.subr.mxu0 0.0
  %7280 = vmatpush1.msra.mxu0 0.0
  %7281 = vmatprep.subr.mxu0 0.0
  %7282 = vmatpush1.msra.mxu0 0.0
  %7283 = vmatprep.subr.mxu0 0.0
  %7284 = vmatpush1.msra.mxu0 0.0
  %7285 = vmatprep.subr.mxu0 0.0
  %7286 = vmatpush1.msra.mxu0 0.0
  %7287 = vmatprep.subr.mxu0 0.0
  %7288 = vmatpush1.msra.mxu0 0.0
  %7289 = vmatprep.subr.mxu0 0.0
  %7290 = vmatpush1.msra.mxu0 0.0
  %7291 = vmatprep.subr.mxu0 0.0
  %7292 = vmatpush1.msra.mxu0 0.0
  %7293 = vmatprep.subr.mxu0 0.0
  %7294 = vmatpush1.msra.mxu0 0.0
  %7295 = vmatprep.subr.mxu0 0.0
  %7296 = vmatpush1.msra.mxu0 0.0
  %7297 = vmatprep.subr.mxu0 0.0
  %7298 = vmatpush1.msra.mxu0 0.0
  %7299 = vmatprep.subr.mxu0 0.0
  %7300 = vmatpush1.msra.mxu0 0.0
  %7301 = vmatprep.subr.mxu0 0.0
  %7302 = vmatpush1.msra.mxu0 0.0
  %7303 = vmatprep.subr.mxu0 0.0
  %7304 = vmatpush1.msra.mxu0 0.0
  %7305 = vmatprep.subr.mxu0 0.0
  %7306 = vmatpush1.msra.mxu0 0.0
  %7307 = vmatprep.subr.mxu0 0.0
  %7308 = vmatpush1.msra.mxu0 0.0
  %7309 = vmatprep.subr.mxu0 0.0
  %7310 = vmatpush1.msra.mxu0 0.0
  %7311 = vmatprep.subr.mxu0 0.0
  %7312 = vmatpush1.msra.mxu0 0.0
  %7313 = vmatprep.subr.mxu0 0.0
  %7314 = vmatpush1.msra.mxu0 0.0
  %7315 = vmatprep.subr.mxu0 0.0
  %7316 = vmatpush1.msra.mxu0 0.0
  %7317 = vmatprep.subr.mxu0 0.0
  %7318 = vmatpush1.msra.mxu0 0.0
  %7319 = vmatprep.subr.mxu0 0.0
  %7320 = vmatpush1.msra.mxu0 0.0
  %7321 = vmatprep.subr.mxu0 0.0
  %7322 = vmatpush1.msra.mxu0 0.0
  %7323 = vmatprep.subr.mxu0 0.0
  %7324 = vmatpush1.msra.mxu0 0.0
  %7325 = vmatprep.subr.mxu0 0.0
  %7326 = vmatpush1.msra.mxu0 0.0
  %7327 = vmatprep.subr.mxu0 0.0
  %7328 = vmatpush1.msra.mxu0 0.0
  %7329 = vmatprep.subr.mxu0 0.0
  %7330 = vmatpush1.msra.mxu0 0.0
  %7331 = vmatprep.mubr.f32.mxu0 0.0
  %7332 = vmatmul.mubr.f32.gmra.mrb[0].mxu0 %v7265
  %v7333 = vpop.f32.mrb[0].mxu0
  %v7334 = vadd.f32 0.0, %v7333
  %v7335 = vpop.f32.mrb[0].mxu0
  %v7336 = vadd.f32 0.0, %v7335
  %7337 = vdwg.mxu0
  %7338 = vmatprep.subr.mxu0 %v7243
  %7339 = vmatpush1.msra.mxu0 %v7242
  %7340 = vmatprep.subr.mxu0 %v7249
  %7341 = vmatpush1.msra.mxu0 %v7248
  %7342 = vmatprep.subr.mxu0 %v7255
  %7343 = vmatpush1.msra.mxu0 %v7254
  %7344 = vmatprep.subr.mxu0 %v7261
  %7345 = vmatpush1.msra.mxu0 %v7260
  %7346 = vmatprep.subr.mxu0 0.0
  %7347 = vmatpush1.msra.mxu0 0.0
  %7348 = vmatprep.subr.mxu0 0.0
  %7349 = vmatpush1.msra.mxu0 0.0
  %7350 = vmatprep.subr.mxu0 0.0
  %7351 = vmatpush1.msra.mxu0 0.0
  %7352 = vmatprep.subr.mxu0 0.0
  %7353 = vmatpush1.msra.mxu0 0.0
  %7354 = vmatprep.subr.mxu0 0.0
  %7355 = vmatpush1.msra.mxu0 0.0
  %7356 = vmatprep.subr.mxu0 0.0
  %7357 = vmatpush1.msra.mxu0 0.0
  %7358 = vmatprep.subr.mxu0 0.0
  %7359 = vmatpush1.msra.mxu0 0.0
  %7360 = vmatprep.subr.mxu0 0.0
  %7361 = vmatpush1.msra.mxu0 0.0
  %7362 = vmatprep.subr.mxu0 0.0
  %7363 = vmatpush1.msra.mxu0 0.0
  %7364 = vmatprep.subr.mxu0 0.0
  %7365 = vmatpush1.msra.mxu0 0.0
  %7366 = vmatprep.subr.mxu0 0.0
  %7367 = vmatpush1.msra.mxu0 0.0
  %7368 = vmatprep.subr.mxu0 0.0
  %7369 = vmatpush1.msra.mxu0 0.0
  %7370 = vmatprep.subr.mxu0 0.0
  %7371 = vmatpush1.msra.mxu0 0.0
  %7372 = vmatprep.subr.mxu0 0.0
  %7373 = vmatpush1.msra.mxu0 0.0
  %7374 = vmatprep.subr.mxu0 0.0
  %7375 = vmatpush1.msra.mxu0 0.0
  %7376 = vmatprep.subr.mxu0 0.0
  %7377 = vmatpush1.msra.mxu0 0.0
  %7378 = vmatprep.subr.mxu0 0.0
  %7379 = vmatpush1.msra.mxu0 0.0
  %7380 = vmatprep.subr.mxu0 0.0
  %7381 = vmatpush1.msra.mxu0 0.0
  %7382 = vmatprep.subr.mxu0 0.0
  %7383 = vmatpush1.msra.mxu0 0.0
  %7384 = vmatprep.subr.mxu0 0.0
  %7385 = vmatpush1.msra.mxu0 0.0
  %7386 = vmatprep.subr.mxu0 0.0
  %7387 = vmatpush1.msra.mxu0 0.0
  %7388 = vmatprep.subr.mxu0 0.0
  %7389 = vmatpush1.msra.mxu0 0.0
  %7390 = vmatprep.subr.mxu0 0.0
  %7391 = vmatpush1.msra.mxu0 0.0
  %7392 = vmatprep.subr.mxu0 0.0
  %7393 = vmatpush1.msra.mxu0 0.0
  %7394 = vmatprep.subr.mxu0 0.0
  %7395 = vmatpush1.msra.mxu0 0.0
  %7396 = vmatprep.subr.mxu0 0.0
  %7397 = vmatpush1.msra.mxu0 0.0
  %7398 = vmatprep.subr.mxu0 0.0
  %7399 = vmatpush1.msra.mxu0 0.0
  %7400 = vmatprep.subr.mxu0 0.0
  %7401 = vmatpush1.msra.mxu0 0.0
  %7402 = vmatprep.mubr.f32.mxu0 0.0
  %7403 = vmatmul.mubr.f32.gmra.mrb[0].mxu0 %v7265
  %v7404 = vpop.f32.mrb[0].mxu0
  %v7405 = vadd.f32 0.0, %v7404
  %v7406 = vpop.f32.mrb[0].mxu0
  %v7407 = vadd.f32 0.0, %v7406
  %7408 = vdwg.mxu0
  %7409 = vmatprep.subr.mxu0 %v7245
  %7410 = vmatpush1.msra.mxu0 %v7244
  %7411 = vmatprep.subr.mxu0 %v7251
  %7412 = vmatpush1.msra.mxu0 %v7250
  %7413 = vmatprep.subr.mxu0 %v7257
  %7414 = vmatpush1.msra.mxu0 %v7256
  %7415 = vmatprep.subr.mxu0 %v7263
  %7416 = vmatpush1.msra.mxu0 %v7262
  %7417 = vmatprep.subr.mxu0 0.0
  %7418 = vmatpush1.msra.mxu0 0.0
  %7419 = vmatprep.subr.mxu0 0.0
  %7420 = vmatpush1.msra.mxu0 0.0
  %7421 = vmatprep.subr.mxu0 0.0
  %7422 = vmatpush1.msra.mxu0 0.0
  %7423 = vmatprep.subr.mxu0 0.0
  %7424 = vmatpush1.msra.mxu0 0.0
  %7425 = vmatprep.subr.mxu0 0.0
  %7426 = vmatpush1.msra.mxu0 0.0
  %7427 = vmatprep.subr.mxu0 0.0
  %7428 = vmatpush1.msra.mxu0 0.0
  %7429 = vmatprep.subr.mxu0 0.0
  %7430 = vmatpush1.msra.mxu0 0.0
  %7431 = vmatprep.subr.mxu0 0.0
  %7432 = vmatpush1.msra.mxu0 0.0
  %7433 = vmatprep.subr.mxu0 0.0
  %7434 = vmatpush1.msra.mxu0 0.0
  %7435 = vmatprep.subr.mxu0 0.0
  %7436 = vmatpush1.msra.mxu0 0.0
  %7437 = vmatprep.subr.mxu0 0.0
  %7438 = vmatpush1.msra.mxu0 0.0
  %7439 = vmatprep.subr.mxu0 0.0
  %7440 = vmatpush1.msra.mxu0 0.0
  %7441 = vmatprep.subr.mxu0 0.0
  %7442 = vmatpush1.msra.mxu0 0.0
  %7443 = vmatprep.subr.mxu0 0.0
  %7444 = vmatpush1.msra.mxu0 0.0
  %7445 = vmatprep.subr.mxu0 0.0
  %7446 = vmatpush1.msra.mxu0 0.0
  %7447 = vmatprep.subr.mxu0 0.0
  %7448 = vmatpush1.msra.mxu0 0.0
  %7449 = vmatprep.subr.mxu0 0.0
  %7450 = vmatpush1.msra.mxu0 0.0
  %7451 = vmatprep.subr.mxu0 0.0
  %7452 = vmatpush1.msra.mxu0 0.0
  %7453 = vmatprep.subr.mxu0 0.0
  %7454 = vmatpush1.msra.mxu0 0.0
  %7455 = vmatprep.subr.mxu0 0.0
  %7456 = vmatpush1.msra.mxu0 0.0
  %7457 = vmatprep.subr.mxu0 0.0
  %7458 = vmatpush1.msra.mxu0 0.0
  %7459 = vmatprep.subr.mxu0 0.0
  %7460 = vmatpush1.msra.mxu0 0.0
  %7461 = vmatprep.subr.mxu0 0.0
  %7462 = vmatpush1.msra.mxu0 0.0
  %7463 = vmatprep.subr.mxu0 0.0
  %7464 = vmatpush1.msra.mxu0 0.0
  %7465 = vmatprep.subr.mxu0 0.0
  %7466 = vmatpush1.msra.mxu0 0.0
  %7467 = vmatprep.subr.mxu0 0.0
  %7468 = vmatpush1.msra.mxu0 0.0
  %7469 = vmatprep.subr.mxu0 0.0
  %7470 = vmatpush1.msra.mxu0 0.0
  %7471 = vmatprep.subr.mxu0 0.0
  %7472 = vmatpush1.msra.mxu0 0.0
  %7473 = vmatprep.mubr.f32.mxu0 0.0
  %7474 = vmatmul.mubr.f32.gmra.mrb[0].mxu0 %v7265
  %v7475 = vpop.f32.mrb[0].mxu0
  %v7476 = vadd.f32 0.0, %v7475
  %v7477 = vpop.f32.mrb[0].mxu0
  %v7478 = vadd.f32 0.0, %v7477
  %7479 = vdwg.mxu0
  %v7480 = vadd.f32 %v7157, %v7334
  %v7481 = vadd.f32 %v7158, %v7336
  %v7482 = vadd.f32 %v7159, %v7405
  %v7483 = vadd.f32 %v7160, %v7407
  %v7484 = vadd.f32 %v7161, %v7476
  %v7485 = vadd.f32 %v7162, %v7478
  %v7486 = vld [vmem:[%s7] sm:$0x3f]
  %v7488 = vlaneseq
  %v7489 = vshrl.u32 %v7488, 7
  %v7490 = vsub.s32 0, %v7489
  %v7491 = vrot.slane %v7486, %v7490
  %v7492 = vlaneseq
  %v7493 = vshrl.u32 %v7492, 7
  %v7494 = vsub.s32 1, %v7493
  %v7495 = vrot.slane %v7486, %v7494
  %v7496 = vlaneseq
  %v7497 = vshrl.u32 %v7496, 7
  %v7498 = vsub.s32 2, %v7497
  %v7499 = vrot.slane %v7486, %v7498
  %v7500 = vlaneseq
  %v7501 = vshrl.u32 %v7500, 7
  %v7502 = vsub.s32 3, %v7501
  %v7503 = vrot.slane %v7486, %v7502
  %v7504 = vlaneseq
  %v7505 = vshrl.u32 %v7504, 7
  %v7506 = vsub.s32 4, %v7505
  %v7507 = vrot.slane %v7486, %v7506
  %v7508 = vlaneseq
  %v7509 = vshrl.u32 %v7508, 7
  %v7510 = vsub.s32 5, %v7509
  %v7511 = vrot.slane %v7486, %v7510
  %v7518 = vadd.f32 %v7480, %v7491
  %v7519 = vadd.f32 %v7481, %v7495
  %v7520 = vadd.f32 %v7482, %v7499
  %v7521 = vadd.f32 %v7483, %v7503
  %v7522 = vadd.f32 %v7484, %v7507
  %v7523 = vadd.f32 %v7485, %v7511
  %v7524 = vtanh.pop %v7518
  %v7525 = vtanh.pop %v7519
  %v7526 = vtanh.pop %v7520
  %v7527 = vtanh.pop %v7521
  %v7528 = vtanh.pop %v7522
  %v7529 = vtanh.pop %v7523
  %v7530 = vld [vmem:[%s8] sm:$0xff]
  %v7531 = vld [vmem:[%s8 + $0x8] sm:$0xff]
  %v7532 = vld [vmem:[%s8 + $0x10] sm:$0xff]
  %v7533 = vld [vmem:[%s8 + $0x18] sm:$0xff]
  %v7534 = vld [vmem:[%s8 + $0x20] sm:$0xff]
  %v7535 = vld [vmem:[%s8 + $0x28] sm:$0xff]
  %v7536 = vld [vmem:[%s8 + $0x30] sm:$0xff]
  %v7537 = vld [vmem:[%s8 + $0x38] sm:$0xff]
  %v7538 = vld [vmem:[%s8 + $0x40] sm:$0xff]
  %v7539 = vld [vmem:[%s8 + $0x48] sm:$0xff]
  %v7540 = vld [vmem:[%s8 + $0x50] sm:$0xff]
  %v7541 = vld [vmem:[%s8 + $0x58] sm:$0xff]
  %v7542 = vld [vmem:[%s8 + $0x60] sm:$0xff]
  %v7543 = vld [vmem:[%s8 + $0x68] sm:$0xff]
  %v7544 = vld [vmem:[%s8 + $0x70] sm:$0xff]
  %v7545 = vld [vmem:[%s8 + $0x78] sm:$0xff]
  %v7546 = vld [vmem:[%s8 + $0x80] sm:$0xff]
  %v7547 = vld [vmem:[%s8 + $0x88] sm:$0xff]
  %v7548 = vld [vmem:[%s8 + $0x90] sm:$0xff]
  %v7549 = vld [vmem:[%s8 + $0x98] sm:$0xff]
  %v7550 = vld [vmem:[%s8 + $0xa0] sm:$0xff]
  %v7551 = vld [vmem:[%s8 + $0xa8] sm:$0xff]
  %v7552 = vld [vmem:[%s8 + $0xb0] sm:$0xff]
  %v7553 = vld [vmem:[%s8 + $0xb8] sm:$0xff]
  %v7554 = vld [vmem:[%s8 + $0xc0] sm:$0xff]
  %v7555 = vld [vmem:[%s8 + $0xc8] sm:$0xff]
  %v7556 = vld [vmem:[%s8 + $0xd0] sm:$0xff]
  %v7557 = vld [vmem:[%s8 + $0xd8] sm:$0xff]
  %v7558 = vld [vmem:[%s8 + $0xe0] sm:$0xff]
  %v7559 = vld [vmem:[%s8 + $0xe8] sm:$0xff]
  %v7560 = vld [vmem:[%s8 + $0xf0] sm:$0xff]
  %v7561 = vld [vmem:[%s8 + $0xf8] sm:$0xff]
  %v7562 = vld [vmem:[%s8 + $0x100] sm:$0xff]
  %v7563 = vld [vmem:[%s8 + $0x108] sm:$0xff]
  %v7564 = vld [vmem:[%s8 + $0x110] sm:$0xff]
  %v7565 = vld [vmem:[%s8 + $0x118] sm:$0xff]
  %v7566 = vld [vmem:[%s8 + $0x120] sm:$0xff]
  %v7567 = vld [vmem:[%s8 + $0x128] sm:$0xff]
  %v7568 = vld [vmem:[%s8 + $0x130] sm:$0xff]
  %v7569 = vld [vmem:[%s8 + $0x138] sm:$0xff]
  %v7570 = vld [vmem:[%s8 + $0x140] sm:$0xff]
  %v7571 = vld [vmem:[%s8 + $0x148] sm:$0xff]
  %v7572 = vld [vmem:[%s8 + $0x150] sm:$0xff]
  %v7573 = vld [vmem:[%s8 + $0x158] sm:$0xff]
  %v7574 = vld [vmem:[%s8 + $0x160] sm:$0xff]
  %v7575 = vld [vmem:[%s8 + $0x168] sm:$0xff]
  %v7576 = vld [vmem:[%s8 + $0x170] sm:$0xff]
  %v7577 = vld [vmem:[%s8 + $0x178] sm:$0xff]
  %v7578 = vld [vmem:[%s8 + $0x180] sm:$0xff]
  %v7579 = vld [vmem:[%s8 + $0x188] sm:$0xff]
  %v7580 = vld [vmem:[%s8 + $0x190] sm:$0xff]
  %v7581 = vld [vmem:[%s8 + $0x198] sm:$0xff]
  %v7582 = vld [vmem:[%s8 + $0x1a0] sm:$0xff]
  %v7583 = vld [vmem:[%s8 + $0x1a8] sm:$0xff]
  %v7584 = vld [vmem:[%s8 + $0x1b0] sm:$0xff]
  %v7585 = vld [vmem:[%s8 + $0x1b8] sm:$0xff]
  %v7586 = vld [vmem:[%s8 + $0x1c0] sm:$0xff]
  %v7587 = vld [vmem:[%s8 + $0x1c8] sm:$0xff]
  %v7588 = vld [vmem:[%s8 + $0x1d0] sm:$0xff]
  %v7589 = vld [vmem:[%s8 + $0x1d8] sm:$0xff]
  %v7590 = vld [vmem:[%s8 + $0x1e0] sm:$0xff]
  %v7591 = vld [vmem:[%s8 + $0x1e8] sm:$0xff]
  %v7592 = vld [vmem:[%s8 + $0x1f0] sm:$0xff]
  %v7593 = vld [vmem:[%s8 + $0x1f8] sm:$0xff]
  %v7594 = vld [vmem:[%s8 + $0x200] sm:$0xff]
  %v7595 = vld [vmem:[%s8 + $0x208] sm:$0xff]
  %v7596 = vld [vmem:[%s8 + $0x210] sm:$0xff]
  %v7597 = vld [vmem:[%s8 + $0x218] sm:$0xff]
  %v7598 = vld [vmem:[%s8 + $0x220] sm:$0xff]
  %v7599 = vld [vmem:[%s8 + $0x228] sm:$0xff]
  %v7600 = vld [vmem:[%s8 + $0x230] sm:$0xff]
  %v7601 = vld [vmem:[%s8 + $0x238] sm:$0xff]
  %v7602 = vld [vmem:[%s8 + $0x240] sm:$0xff]
  %v7603 = vld [vmem:[%s8 + $0x248] sm:$0xff]
  %v7604 = vld [vmem:[%s8 + $0x250] sm:$0xff]
  %v7605 = vld [vmem:[%s8 + $0x258] sm:$0xff]
  %v7606 = vld [vmem:[%s8 + $0x260] sm:$0xff]
  %v7607 = vld [vmem:[%s8 + $0x268] sm:$0xff]
  %v7608 = vld [vmem:[%s8 + $0x270] sm:$0xff]
  %v7609 = vld [vmem:[%s8 + $0x278] sm:$0xff]
  %v7610 = vld [vmem:[%s8 + $0x280] sm:$0x3]
  %v7611 = vld [vmem:[%s9] sm:$0x1]
  %v7613 = vlaneseq
  %v7614 = vshrl.u32 %v7613, 7
  %v7615 = vsub.s32 0, %v7614
  %v7616 = vrot.slane %v7611, %v7615
  %vm7618 = vcmask 15360
  %v7620 = vsel %vm7618, %v7529, 0
  %vm7622 = vcmask 1041408
  %v7624 = vsel %vm7622, %v7610, 0
  %7626 = vmatprep.subr.mxu0 0.0
  %7627 = vmatpush1.msra.mxu0 %v7530
  %7628 = vmatprep.subr.mxu0 0.0
  %7629 = vmatpush1.msra.mxu0 %v7531
  %7630 = vmatprep.subr.mxu0 0.0
  %7631 = vmatpush1.msra.mxu0 %v7532
  %7632 = vmatprep.subr.mxu0 0.0
  %7633 = vmatpush1.msra.mxu0 %v7533
  %7634 = vmatprep.subr.mxu0 0.0
  %7635 = vmatpush1.msra.mxu0 %v7534
  %7636 = vmatprep.subr.mxu0 0.0
  %7637 = vmatpush1.msra.mxu0 %v7535
  %7638 = vmatprep.subr.mxu0 0.0
  %7639 = vmatpush1.msra.mxu0 %v7536
  %7640 = vmatprep.subr.mxu0 0.0
  %7641 = vmatpush1.msra.mxu0 %v7537
  %7642 = vmatprep.subr.mxu0 0.0
  %7643 = vmatpush1.msra.mxu0 %v7538
  %7644 = vmatprep.subr.mxu0 0.0
  %7645 = vmatpush1.msra.mxu0 %v7539
  %7646 = vmatprep.subr.mxu0 0.0
  %7647 = vmatpush1.msra.mxu0 %v7540
  %7648 = vmatprep.subr.mxu0 0.0
  %7649 = vmatpush1.msra.mxu0 %v7541
  %7650 = vmatprep.subr.mxu0 0.0
  %7651 = vmatpush1.msra.mxu0 %v7542
  %7652 = vmatprep.subr.mxu0 0.0
  %7653 = vmatpush1.msra.mxu0 %v7543
  %7654 = vmatprep.subr.mxu0 0.0
  %7655 = vmatpush1.msra.mxu0 %v7544
  %7656 = vmatprep.subr.mxu0 0.0
  %7657 = vmatpush1.msra.mxu0 %v7545
  %7658 = vmatprep.subr.mxu0 0.0
  %7659 = vmatpush1.msra.mxu0 %v7546
  %7660 = vmatprep.subr.mxu0 0.0
  %7661 = vmatpush1.msra.mxu0 %v7547
  %7662 = vmatprep.subr.mxu0 0.0
  %7663 = vmatpush1.msra.mxu0 %v7548
  %7664 = vmatprep.subr.mxu0 0.0
  %7665 = vmatpush1.msra.mxu0 %v7549
  %7666 = vmatprep.subr.mxu0 0.0
  %7667 = vmatpush1.msra.mxu0 %v7550
  %7668 = vmatprep.subr.mxu0 0.0
  %7669 = vmatpush1.msra.mxu0 %v7551
  %7670 = vmatprep.subr.mxu0 0.0
  %7671 = vmatpush1.msra.mxu0 %v7552
  %7672 = vmatprep.subr.mxu0 0.0
  %7673 = vmatpush1.msra.mxu0 %v7553
  %7674 = vmatprep.subr.mxu0 0.0
  %7675 = vmatpush1.msra.mxu0 %v7554
  %7676 = vmatprep.subr.mxu0 0.0
  %7677 = vmatpush1.msra.mxu0 %v7555
  %7678 = vmatprep.subr.mxu0 0.0
  %7679 = vmatpush1.msra.mxu0 %v7556
  %7680 = vmatprep.subr.mxu0 0.0
  %7681 = vmatpush1.msra.mxu0 %v7557
  %7682 = vmatprep.subr.mxu0 0.0
  %7683 = vmatpush1.msra.mxu0 %v7558
  %7684 = vmatprep.subr.mxu0 0.0
  %7685 = vmatpush1.msra.mxu0 %v7559
  %7686 = vmatprep.subr.mxu0 0.0
  %7687 = vmatpush1.msra.mxu0 %v7560
  %7688 = vmatprep.subr.mxu0 0.0
  %7689 = vmatpush1.msra.mxu0 %v7561
  %7690 = vmatprep.mubr.f32.mxu0 %v7525
  %7691 = vmatmul.mubr.f32.gmra.mrb[0].mxu0 %v7524
  %v7692 = vpop.f32.mrb[0].mxu0
  %v7693 = vadd.f32 %v7616, %v7692
  %v7694 = vpop.f32.mrb[0].mxu0
  %7695 = vdwg.mxu0
  %7696 = vmatprep.subr.mxu0 0.0
  %7697 = vmatpush1.msra.mxu0 %v7562
  %7698 = vmatprep.subr.mxu0 0.0
  %7699 = vmatpush1.msra.mxu0 %v7563
  %7700 = vmatprep.subr.mxu0 0.0
  %7701 = vmatpush1.msra.mxu0 %v7564
  %7702 = vmatprep.subr.mxu0 0.0
  %7703 = vmatpush1.msra.mxu0 %v7565
  %7704 = vmatprep.subr.mxu0 0.0
  %7705 = vmatpush1.msra.mxu0 %v7566
  %7706 = vmatprep.subr.mxu0 0.0
  %7707 = vmatpush1.msra.mxu0 %v7567
  %7708 = vmatprep.subr.mxu0 0.0
  %7709 = vmatpush1.msra.mxu0 %v7568
  %7710 = vmatprep.subr.mxu0 0.0
  %7711 = vmatpush1.msra.mxu0 %v7569
  %7712 = vmatprep.subr.mxu0 0.0
  %7713 = vmatpush1.msra.mxu0 %v7570
  %7714 = vmatprep.subr.mxu0 0.0
  %7715 = vmatpush1.msra.mxu0 %v7571
  %7716 = vmatprep.subr.mxu0 0.0
  %7717 = vmatpush1.msra.mxu0 %v7572
  %7718 = vmatprep.subr.mxu0 0.0
  %7719 = vmatpush1.msra.mxu0 %v7573
  %7720 = vmatprep.subr.mxu0 0.0
  %7721 = vmatpush1.msra.mxu0 %v7574
  %7722 = vmatprep.subr.mxu0 0.0
  %7723 = vmatpush1.msra.mxu0 %v7575
  %7724 = vmatprep.subr.mxu0 0.0
  %7725 = vmatpush1.msra.mxu0 %v7576
  %7726 = vmatprep.subr.mxu0 0.0
  %7727 = vmatpush1.msra.mxu0 %v7577
  %7728 = vmatprep.subr.mxu0 0.0
  %7729 = vmatpush1.msra.mxu0 %v7578
  %7730 = vmatprep.subr.mxu0 0.0
  %7731 = vmatpush1.msra.mxu0 %v7579
  %7732 = vmatprep.subr.mxu0 0.0
  %7733 = vmatpush1.msra.mxu0 %v7580
  %7734 = vmatprep.subr.mxu0 0.0
  %7735 = vmatpush1.msra.mxu0 %v7581
  %7736 = vmatprep.subr.mxu0 0.0
  %7737 = vmatpush1.msra.mxu0 %v7582
  %7738 = vmatprep.subr.mxu0 0.0
  %7739 = vmatpush1.msra.mxu0 %v7583
  %7740 = vmatprep.subr.mxu0 0.0
  %7741 = vmatpush1.msra.mxu0 %v7584
  %7742 = vmatprep.subr.mxu0 0.0
  %7743 = vmatpush1.msra.mxu0 %v7585
  %7744 = vmatprep.subr.mxu0 0.0
  %7745 = vmatpush1.msra.mxu0 %v7586
  %7746 = vmatprep.subr.mxu0 0.0
  %7747 = vmatpush1.msra.mxu0 %v7587
  %7748 = vmatprep.subr.mxu0 0.0
  %7749 = vmatpush1.msra.mxu0 %v7588
  %7750 = vmatprep.subr.mxu0 0.0
  %7751 = vmatpush1.msra.mxu0 %v7589
  %7752 = vmatprep.subr.mxu0 0.0
  %7753 = vmatpush1.msra.mxu0 %v7590
  %7754 = vmatprep.subr.mxu0 0.0
  %7755 = vmatpush1.msra.mxu0 %v7591
  %7756 = vmatprep.subr.mxu0 0.0
  %7757 = vmatpush1.msra.mxu0 %v7592
  %7758 = vmatprep.subr.mxu0 0.0
  %7759 = vmatpush1.msra.mxu0 %v7593
  %7760 = vmatprep.mubr.f32.mxu0 %v7527
  %7761 = vmatmul.mubr.f32.gmra.mrb[0].mxu0 %v7526
  %v7762 = vpop.f32.mrb[0].mxu0
  %v7763 = vadd.f32 %v7693, %v7762
  %v7764 = vpop.f32.mrb[0].mxu0
  %7765 = vdwg.mxu0
  %7766 = vmatprep.subr.mxu0 0.0
  %7767 = vmatpush1.msra.mxu0 %v7594
  %7768 = vmatprep.subr.mxu0 0.0
  %7769 = vmatpush1.msra.mxu0 %v7595
  %7770 = vmatprep.subr.mxu0 0.0
  %7771 = vmatpush1.msra.mxu0 %v7596
  %7772 = vmatprep.subr.mxu0 0.0
  %7773 = vmatpush1.msra.mxu0 %v7597
  %7774 = vmatprep.subr.mxu0 0.0
  %7775 = vmatpush1.msra.mxu0 %v7598
  %7776 = vmatprep.subr.mxu0 0.0
  %7777 = vmatpush1.msra.mxu0 %v7599
  %7778 = vmatprep.subr.mxu0 0.0
  %7779 = vmatpush1.msra.mxu0 %v7600
  %7780 = vmatprep.subr.mxu0 0.0
  %7781 = vmatpush1.msra.mxu0 %v7601
  %7782 = vmatprep.subr.mxu0 0.0
  %7783 = vmatpush1.msra.mxu0 %v7602
  %7784 = vmatprep.subr.mxu0 0.0
  %7785 = vmatpush1.msra.mxu0 %v7603
  %7786 = vmatprep.subr.mxu0 0.0
  %7787 = vmatpush1.msra.mxu0 %v7604
  %7788 = vmatprep.subr.mxu0 0.0
  %7789 = vmatpush1.msra.mxu0 %v7605
  %7790 = vmatprep.subr.mxu0 0.0
  %7791 = vmatpush1.msra.mxu0 %v7606
  %7792 = vmatprep.subr.mxu0 0.0
  %7793 = vmatpush1.msra.mxu0 %v7607
  %7794 = vmatprep.subr.mxu0 0.0
  %7795 = vmatpush1.msra.mxu0 %v7608
  %7796 = vmatprep.subr.mxu0 0.0
  %7797 = vmatpush1.msra.mxu0 %v7609
  %7798 = vmatprep.subr.mxu0 0.0
  %7799 = vmatpush1.msra.mxu0 %v7624
  %7800 = vmatprep.subr.mxu0 0.0
  %7801 = vmatpush1.msra.mxu0 0.0
  %7802 = vmatprep.subr.mxu0 0.0
  %7803 = vmatpush1.msra.mxu0 0.0
  %7804 = vmatprep.subr.mxu0 0.0
  %7805 = vmatpush1.msra.mxu0 0.0
  %7806 = vmatprep.subr.mxu0 0.0
  %7807 = vmatpush1.msra.mxu0 0.0
  %7808 = vmatprep.subr.mxu0 0.0
  %7809 = vmatpush1.msra.mxu0 0.0
  %7810 = vmatprep.subr.mxu0 0.0
  %7811 = vmatpush1.msra.mxu0 0.0
  %7812 = vmatprep.subr.mxu0 0.0
  %7813 = vmatpush1.msra.mxu0 0.0
  %7814 = vmatprep.subr.mxu0 0.0
  %7815 = vmatpush1.msra.mxu0 0.0
  %7816 = vmatprep.subr.mxu0 0.0
  %7817 = vmatpush1.msra.mxu0 0.0
  %7818 = vmatprep.subr.mxu0 0.0
  %7819 = vmatpush1.msra.mxu0 0.0
  %7820 = vmatprep.subr.mxu0 0.0
  %7821 = vmatpush1.msra.mxu0 0.0
  %7822 = vmatprep.subr.mxu0 0.0
  %7823 = vmatpush1.msra.mxu0 0.0
  %7824 = vmatprep.subr.mxu0 0.0
  %7825 = vmatpush1.msra.mxu0 0.0
  %7826 = vmatprep.subr.mxu0 0.0
  %7827 = vmatpush1.msra.mxu0 0.0
  %7828 = vmatprep.subr.mxu0 0.0
  %7829 = vmatpush1.msra.mxu0 0.0
  %7830 = vmatprep.mubr.f32.mxu0 %v7620
  %7831 = vmatmul.mubr.f32.gmra.mrb[0].mxu0 %v7528
  %v7832 = vpop.f32.mrb[0].mxu0
  %v7833 = vadd.f32 %v7763, %v7832
  %v7834 = vpop.f32.mrb[0].mxu0
  %7835 = vdwg.mxu0
  %v7836 = vtanh.pop %v7833
  %v7837 = vld [vmem:[%s10] sm:$0xff]
  %v7838 = vld [vmem:[%s10 + $0x8] sm:$0xff]
  %v7839 = vld [vmem:[%s10 + $0x10] sm:$0xff]
  %v7840 = vld [vmem:[%s10 + $0x18] sm:$0xff]
  %v7841 = vld [vmem:[%s10 + $0x20] sm:$0xff]
  %v7842 = vld [vmem:[%s10 + $0x28] sm:$0xff]
  %v7843 = vld [vmem:[%s10 + $0x30] sm:$0xff]
  %v7844 = vld [vmem:[%s10 + $0x38] sm:$0xff]
  %v7845 = vld [vmem:[%s10 + $0x40] sm:$0xff]
  %v7846 = vld [vmem:[%s10 + $0x48] sm:$0xff]
  %v7847 = vld [vmem:[%s10 + $0x50] sm:$0xff]
  %v7848 = vld [vmem:[%s10 + $0x58] sm:$0xff]
  %v7849 = vld [vmem:[%s10 + $0x60] sm:$0xff]
  %v7850 = vld [vmem:[%s10 + $0x68] sm:$0xff]
  %v7851 = vld [vmem:[%s10 + $0x70] sm:$0xff]
  %v7852 = vld [vmem:[%s10 + $0x78] sm:$0xff]
  %v7853 = vld [vmem:[#allocation3] sm:$0x1]
  %v7855 = vlaneseq
  %v7856 = vshrl.u32 %v7855, 7
  %v7857 = vsub.s32 0, %v7856
  %v7858 = vrot.slane %v7853, %v7857
  %7860 = vmatprep.subr.mxu0 0.0
  %7861 = vmatpush1.msra.mxu0 %v7837
  %7862 = vmatprep.subr.mxu0 0.0
  %7863 = vmatpush1.msra.mxu0 %v7838
  %7864 = vmatprep.subr.mxu0 0.0
  %7865 = vmatpush1.msra.mxu0 %v7839
  %7866 = vmatprep.subr.mxu0 0.0
  %7867 = vmatpush1.msra.mxu0 %v7840
  %7868 = vmatprep.subr.mxu0 0.0
  %7869 = vmatpush1.msra.mxu0 %v7841
  %7870 = vmatprep.subr.mxu0 0.0
  %7871 = vmatpush1.msra.mxu0 %v7842
  %7872 = vmatprep.subr.mxu0 0.0
  %7873 = vmatpush1.msra.mxu0 %v7843
  %7874 = vmatprep.subr.mxu0 0.0
  %7875 = vmatpush1.msra.mxu0 %v7844
  %7876 = vmatprep.subr.mxu0 0.0
  %7877 = vmatpush1.msra.mxu0 %v7845
  %7878 = vmatprep.subr.mxu0 0.0
  %7879 = vmatpush1.msra.mxu0 %v7846
  %7880 = vmatprep.subr.mxu0 0.0
  %7881 = vmatpush1.msra.mxu0 %v7847
  %7882 = vmatprep.subr.mxu0 0.0
  %7883 = vmatpush1.msra.mxu0 %v7848
  %7884 = vmatprep.subr.mxu0 0.0
  %7885 = vmatpush1.msra.mxu0 %v7849
  %7886 = vmatprep.subr.mxu0 0.0
  %7887 = vmatpush1.msra.mxu0 %v7850
  %7888 = vmatprep.subr.mxu0 0.0
  %7889 = vmatpush1.msra.mxu0 %v7851
  %7890 = vmatprep.subr.mxu0 0.0
  %7891 = vmatpush1.msra.mxu0 %v7852
  %7892 = vmatprep.subr.mxu0 0.0
  %7893 = vmatpush1.msra.mxu0 0.0
  %7894 = vmatprep.subr.mxu0 0.0
  %7895 = vmatpush1.msra.mxu0 0.0
  %7896 = vmatprep.subr.mxu0 0.0
  %7897 = vmatpush1.msra.mxu0 0.0
  %7898 = vmatprep.subr.mxu0 0.0
  %7899 = vmatpush1.msra.mxu0 0.0
  %7900 = vmatprep.subr.mxu0 0.0
  %7901 = vmatpush1.msra.mxu0 0.0
  %7902 = vmatprep.subr.mxu0 0.0
  %7903 = vmatpush1.msra.mxu0 0.0
  %7904 = vmatprep.subr.mxu0 0.0
  %7905 = vmatpush1.msra.mxu0 0.0
  %7906 = vmatprep.subr.mxu0 0.0
  %7907 = vmatpush1.msra.mxu0 0.0
  %7908 = vmatprep.subr.mxu0 0.0
  %7909 = vmatpush1.msra.mxu0 0.0
  %7910 = vmatprep.subr.mxu0 0.0
  %7911 = vmatpush1.msra.mxu0 0.0
  %7912 = vmatprep.subr.mxu0 0.0
  %7913 = vmatpush1.msra.mxu0 0.0
  %7914 = vmatprep.subr.mxu0 0.0
  %7915 = vmatpush1.msra.mxu0 0.0
  %7916 = vmatprep.subr.mxu0 0.0
  %7917 = vmatpush1.msra.mxu0 0.0
  %7918 = vmatprep.subr.mxu0 0.0
  %7919 = vmatpush1.msra.mxu0 0.0
  %7920 = vmatprep.subr.mxu0 0.0
  %7921 = vmatpush1.msra.mxu0 0.0
  %7922 = vmatprep.subr.mxu0 0.0
  %7923 = vmatpush1.msra.mxu0 0.0
  %7924 = vmatprep.mubr.f32.mxu0 0.0
  %7925 = vmatmul.mubr.f32.gmra.mrb[0].mxu0 %v7836
  %v7926 = vpop.f32.mrb[0].mxu0
  %v7927 = vadd.f32 %v7858, %v7926
  %v7928 = vpop.f32.mrb[0].mxu0
  %7929 = vdwg.mxu0
  %vm7930 = vcmask 1024
  %7931 = vst.msk [vmem:[%s12] sm:$0x3] %vm7930, %v7927
  // Predicated region
  $region50: #{critic_forward.1} parent=0 // pred_check
    _
  $region51: #{critic_forward.1} parent=0 // pred_check_branch
    %7933 = sbr.rel (0) target = $region53
  $region52: #{critic_forward.1} parent=0 // pred_region
    _
  $region53: #{critic_forward.1} parent=0 // pred_fallthru
    _
  // Predicated region
  $region54: #{critic_forward.1} parent=0 // pred_check
    _
  $region55: #{critic_forward.1} parent=0 // pred_check_branch
    %7935 = sbr.rel (0) target = $region57
  $region56: #{critic_forward.1} parent=0 // pred_region
    _
  $region57: #{critic_forward.1} parent=0 // pred_fallthru
    _

</llo_original>
